<compile_context>
chip_gen: v5e
topology: v5e:2x2
jax: 0.10.0
libtpu: 0.0.40
codegen_flags: <defaults>
</compile_context>

<pallas_src>
import functools
import math

import jax
import jax.numpy as jnp
from jax import lax
from jax.experimental import pallas as pl
from jax.experimental.pallas import tpu as pltpu


_SQRT_2_OVER_PI = math.sqrt(2.0 / math.pi)

# Rows of the stacked "misc" parameter slab (each of length L = P*C).
_ROW_POS_B, _ROW_ATTN_B, _ROW_C1_B, _ROW_C2_B, _ROW_G1, _ROW_FC2_B, _ROW_G2 = range(7)


def _gelu_tanh(v):
    # TODO(synk): nn.GELU() default is the exact erf GELU; the Mosaic-safe
    # tanh approximation is used (max deviation ~1e-3).
    return 0.5 * v * (1.0 + jnp.tanh(_SQRT_2_OVER_PI * v * (1.0 + 0.044715 * v * v)))


def _dw_conv_flat(v, w_ref, bias, k, W, off, pad_ref, masks):
    """Depthwise KxK conv, stride 1, zero pad k//2, on a token-flat (N, L) tile.

    v:       (N, L) f32 activations, N = H*W row-major over (h, w); L lanes are
             P packed images x C channels, depthwise so lanes are independent.
    w_ref:   (K*K, L) per-lane taps (tap index = i*K + j)
    bias:    (1, L)
    pad_ref: (off + N + off, L) zero-halo staging buffer; halo rows are zeroed
             once per kernel invocation, only the interior is (re)written here.
    masks:   dict {dw: (N, L) bool} horizontal-validity masks (hoisted).
    """
    N, L = v.shape
    p = k // 2
    pad_ref[off:off + N, :] = v                       # interior only
    acc = jnp.zeros((N, L), jnp.float32)
    for i in range(k):
        dh = i - p
        for j in range(k):
            dw = j - p
            start = off + dh * W + dw                 # static Python int
            tap = pad_ref[start:start + N, :]
            if dw != 0:
                tap = jnp.where(masks[dw], tap, 0.0)
            acc = acc + tap * w_ref[i * k + j:i * k + j + 1, :]
    return acc + bias


def _cblock_kernel(x_ref, pe_w, at_w, w1, w2, wf1, wf2, f1b, misc,
                   o_ref, pad_ref, *, W, off):
    f32 = jnp.float32
    N = x_ref.shape[1]
    L = x_ref.shape[2]

    # Zero only the halo rows of the staging buffer (interior is always fully
    # overwritten before any read); previously the whole buffer was zeroed
    # twice per image.
    top = off
    bot = pad_ref.shape[0] - off - N
    pad_ref[0:top, :] = jnp.zeros((top, L), f32)
    pad_ref[off + N:, :] = jnp.zeros((bot, L), f32)

    # Horizontal-validity masks, hoisted: one per distinct dw offset, shared
    # by the 3x3 (uses +-1) and the 5x5 (uses +-1, +-2).
    col = lax.broadcasted_iota(jnp.int32, (N, L), 0) % W
    masks = {-2: col >= 2, -1: col >= 1, 1: col < W - 1, 2: col < W - 2}

    def mrow(r):
        return misc[r:r + 1, :]

    x = x_ref[0].astype(f32)                                            # (N, L)

    # ---- x = x + pos_embed(x)  [depthwise 3x3, pad 1] ----
    x = x + _dw_conv_flat(x, pe_w, mrow(_ROW_POS_B), 3, W, off, pad_ref, masks)

    # ---- branch 1: gamma_1 * conv2(dw5x5(conv1(Aff1(x)))) ----
    # Aff1 (color/alpha/beta) is folded into conv1's weight & bias.
    n = jnp.dot(x, w1[...], preferred_element_type=f32) + mrow(_ROW_C1_B)
    n = _dw_conv_flat(n, at_w, mrow(_ROW_ATTN_B), 5, W, off, pad_ref, masks)
    n = jnp.dot(n, w2[...], preferred_element_type=f32) + mrow(_ROW_C2_B)
    x = x + mrow(_ROW_G1) * n

    # ---- branch 2: gamma_2 * fc2(gelu(fc1(Aff2(x)))) ----
    # Aff2 folded into fc1's weight & bias.
    h = jnp.dot(x, wf1[...], preferred_element_type=f32) + f1b[...]
    h = _gelu_tanh(h)
    n = jnp.dot(h, wf2[...], preferred_element_type=f32) + mrow(_ROW_FC2_B)
    x = x + mrow(_ROW_G2) * n

    o_ref[0] = x.astype(o_ref.dtype)


def _round_up(v, m):
    return ((v + m - 1) // m) * m


def cblock_ln_forward(x, params):
    """Fused CBlock_ln forward. x: (B, C, H, W) NCHW. Returns (B, C, H, W)."""
    B, C, H, W = x.shape
    N = H * W
    Ch = params["fc1_w"].shape[0]
    f32 = jnp.float32
    hp = lax.Precision.HIGHEST

    # ---- lane packing: process P images per grid step so the lane axis is
    # P*C wide (ideally 128).  Keep >= 2 grid steps when the batch allows so
    # v7x can shard the 'parallel' axis across its 2 TensorCores.
    P = min(max(1, 128 // C), B)
    while P > 1 and -(-B // P) < 2:
        P //= 2
    L = P * C
    G = -(-B // P)
    Bp = G * P

    # ---- host-side parameter prep (tiny) ----
    def tileL(v):                        # (C,) -> (1, P*C)
        return jnp.tile(jnp.asarray(v, f32).reshape(1, -1), (1, P))

    def blockdiag(w):                    # (a, b) -> (P*a, P*b), w on the diagonal
        return jnp.kron(jnp.eye(P, dtype=f32), jnp.asarray(w, f32))

    def fold_aff(color, alpha, beta, wT, b):
        # Aff (channel_first): n = (v @ color.T) * alpha + beta ; y = n @ wT + b
        w_eff = jnp.matmul(color.T * alpha.reshape(1, -1), wT, precision=hp)
        b_eff = jnp.matmul(beta.reshape(1, -1), wT, precision=hp)[0] + b
        return w_eff, b_eff

    w_eff1, b_eff1 = fold_aff(params["norm1_color"], params["norm1_alpha"],
                              params["norm1_beta"], params["conv1_w"].T,
                              params["conv1_b"])
    w_eff2, b_eff2 = fold_aff(params["norm2_color"], params["norm2_alpha"],
                              params["norm2_beta"], params["fc1_w"].T,
                              params["fc1_b"])

    pe_w = jnp.tile(params["pos_w"].reshape(C, 9).T, (1, P))     # (9, L)
    at_w = jnp.tile(params["attn_w"].reshape(C, 25).T, (1, P))   # (25, L)
    w1 = blockdiag(w_eff1)                                       # (L, L)
    w2 = blockdiag(params["conv2_w"].T)                          # (L, L)
    wf1 = blockdiag(w_eff2)                                      # (L, P*Ch)
    wf2 = blockdiag(params["fc2_w"].T)                           # (P*Ch, L)
    f1b = jnp.tile(b_eff2.reshape(1, -1), (1, P))                # (1, P*Ch)
    misc = jnp.concatenate([                                     # (7, L)
        tileL(params["pos_b"]), tileL(params["attn_b"]), tileL(b_eff1),
        tileL(params["conv2_b"]), tileL(params["gamma_1"]),
        tileL(params["fc2_b"]), tileL(params["gamma_2"])], axis=0)

    # ---- pack activations: (B, C, H, W) -> (G, N, P*C); lane index = p*C + c
    xf = jnp.transpose(x, (0, 2, 3, 1)).reshape(B, N, C)
    if Bp != B:
        xf = jnp.concatenate([xf, jnp.zeros((Bp - B, N, C), xf.dtype)], axis=0)
    xp = xf.reshape(G, P, N, C).transpose(0, 2, 1, 3).reshape(G, N, L)

    # ---- staging-buffer geometry for the depthwise convs ----
    halo = 2 * W + 2                       # max |dh*W + dw| for the 5x5
    off = _round_up(halo, 8)               # sublane-aligned interior offset
    pad_rows = off + N + _round_up(halo, 8)

    args = (xp, pe_w, at_w, w1, w2, wf1, wf2, f1b, misc)
    act_spec = pl.BlockSpec((1, N, L), lambda g: (g, 0, 0))
    # Weights: full blocks with constant index maps -> DMA'd once, VMEM-resident.
    in_specs = [act_spec] + [pl.BlockSpec(a.shape, lambda g: (0, 0))
                             for a in args[1:]]

    flops = 2 * Bp * N * (2 * C * C + 2 * C * Ch + 34 * C) + 20 * Bp * N * C
    bytes_accessed = 4 * (2 * Bp * N * C + 2 * C * C + 2 * C * Ch + 44 * C + Ch)
    vmem_est = 4 * (4 * N * L + pad_rows * L
                    + 2 * (2 * L * L + 2 * L * P * Ch)
                    + 3 * N * L + 2 * N * P * Ch)
    vmem_limit = int(min(60 * 1024 * 1024, max(32 * 1024 * 1024, 2 * vmem_est)))

    out = pl.pallas_call(
        functools.partial(_cblock_kernel, W=W, off=off),
        out_shape=jax.ShapeDtypeStruct((G, N, L), x.dtype),
        grid_spec=pltpu.PrefetchScalarGridSpec(
            num_scalar_prefetch=0,
            grid=(G,),
            in_specs=in_specs,
            out_specs=act_spec,
            scratch_shapes=[pltpu.VMEM((pad_rows, L), jnp.float32)],
        ),
        compiler_params=pltpu.CompilerParams(
            dimension_semantics=("parallel",),
            vmem_limit_bytes=vmem_limit,
        ),
        cost_estimate=pl.CostEstimate(
            flops=flops, transcendentals=Bp * N * Ch,
            bytes_accessed=bytes_accessed),
    )(*args)

    # unpack lanes -> batch and restore NCHW
    out = out.reshape(G, N, P, C).transpose(0, 2, 1, 3).reshape(Bp, N, C)[:B]
    return jnp.transpose(out.reshape(B, H, W, C), (0, 3, 1, 2))


def cblock_ln_reference(x, params):
    """Pure-JAX (XLA) reference mirroring the PyTorch module (NCHW)."""
    B, C, H, W = x.shape
    hp = lax.Precision.HIGHEST

    def dw(v, w, b):
        y = lax.conv_general_dilated(
            v, w, (1, 1), "SAME",
            dimension_numbers=("NCHW", "OIHW", "NCHW"),
            feature_group_count=C, precision=hp)
        return y + b.reshape(1, C, 1, 1)

    def pw(v, w, b):  # 1x1 conv, w: (O, I)
        y = jnp.einsum("oc,bchw->bohw", w, v, precision=hp)
        return y + b.reshape(1, w.shape[0], 1, 1)

    def aff(v, alpha, beta, color):  # v: (B, N, C), channel_first Aff_channel
        y = jnp.einsum("bnc,oc->bno", v, color, precision=hp)
        return y * alpha.reshape(1, 1, C) + beta.reshape(1, 1, C)

    x = x + dw(x, params["pos_w"], params["pos_b"])
    n = x.reshape(B, C, H * W).transpose(0, 2, 1)
    n = aff(n, params["norm1_alpha"], params["norm1_beta"], params["norm1_color"])
    n = n.transpose(0, 2, 1).reshape(B, C, H, W)
    br = pw(n, params["conv1_w"], params["conv1_b"])
    br = dw(br, params["attn_w"], params["attn_b"])
    br = pw(br, params["conv2_w"], params["conv2_b"])
    x = x + params["gamma_1"].reshape(1, C, 1, 1) * br

    n = x.reshape(B, C, H * W).transpose(0, 2, 1)
    n = aff(n, params["norm2_alpha"], params["norm2_beta"], params["norm2_color"])
    n = n.transpose(0, 2, 1).reshape(B, C, H, W)
    br = pw(n, params["fc1_w"], params["fc1_b"])
    br = _gelu_tanh(br)
    br = pw(br, params["fc2_w"], params["fc2_b"])
    x = x + params["gamma_2"].reshape(1, C, 1, 1) * br
    return x


if __name__ == "__main__":
    B, C, H, W = 8, 32, 16, 16   # B=8 -> lane pack P=4 (128 lanes), grid of 2
    Ch = int(C * 4.0)            # mlp_hidden_dim = dim * mlp_ratio
    f32 = jnp.float32

    key = jax.random.PRNGKey(0)
    ks = jax.random.split(key, 21)

    params = {
        "pos_w":       0.20 * jax.random.normal(ks[0], (C, 1, 3, 3), f32),
        "pos_b":       0.05 * jax.random.normal(ks[1], (C,), f32),
        "norm1_alpha": 1.0 + 0.10 * jax.random.normal(ks[2], (C,), f32),
        "norm1_beta":  0.10 * jax.random.normal(ks[3], (C,), f32),
        "norm1_color": jnp.eye(C, dtype=f32) + 0.05 * jax.random.normal(ks[4], (C, C), f32),
        "conv1_w":     0.15 * jax.random.normal(ks[5], (C, C), f32),
        "conv1_b":     0.05 * jax.random.normal(ks[6], (C,), f32),
        "attn_w":      0.20 * jax.random.normal(ks[7], (C, 1, 5, 5), f32),
        "attn_b":      0.05 * jax.random.normal(ks[8], (C,), f32),
        "conv2_w":     0.15 * jax.random.normal(ks[9], (C, C), f32),
        "conv2_b":     0.05 * jax.random.normal(ks[10], (C,), f32),
        "gamma_1":     0.10 * jax.random.normal(ks[11], (C,), f32),
        "norm2_alpha": 1.0 + 0.10 * jax.random.normal(ks[12], (C,), f32),
        "norm2_beta":  0.10 * jax.random.normal(ks[13], (C,), f32),
        "norm2_color": jnp.eye(C, dtype=f32) + 0.05 * jax.random.normal(ks[14], (C, C), f32),
        "fc1_w":       0.15 * jax.random.normal(ks[15], (Ch, C), f32),
        "fc1_b":       0.05 * jax.random.normal(ks[16], (Ch,), f32),
        "fc2_w":       0.10 * jax.random.normal(ks[17], (C, Ch), f32),
        "fc2_b":       0.05 * jax.random.normal(ks[18], (C,), f32),
        "gamma_2":     0.10 * jax.random.normal(ks[19], (C,), f32),
    }
    x = jax.random.normal(ks[20], (B, C, H, W), f32)

    out = jax.block_until_ready(cblock_ln_forward(x, params))
    ref = jax.block_until_ready(cblock_ln_reference(x, params))

    assert out.shape == x.shape
    assert jnp.allclose(out, ref, atol=1e-2, rtol=1e-2), float(
        jnp.max(jnp.abs(out - ref)))

    print("KERNEL_OK")
</pallas_src>

<mosaic_0001>
module attributes {stable_mosaic.version = 11 : i64} {
  func.func @_cblock_kernel(%arg0: i32, %arg1: memref<1x256x128xf32, #tpu.memory_space<vmem>>, %arg2: memref<9x128xf32, #tpu.memory_space<vmem>>, %arg3: memref<25x128xf32, #tpu.memory_space<vmem>>, %arg4: memref<128x128xf32, #tpu.memory_space<vmem>>, %arg5: memref<128x128xf32, #tpu.memory_space<vmem>>, %arg6: memref<128x512xf32, #tpu.memory_space<vmem>>, %arg7: memref<512x128xf32, #tpu.memory_space<vmem>>, %arg8: memref<1x512xf32, #tpu.memory_space<vmem>>, %arg9: memref<7x128xf32, #tpu.memory_space<vmem>>, %arg10: memref<1x256x128xf32, #tpu.memory_space<vmem>>, %arg11: memref<336x128xf32, #tpu.memory_space<vmem>>) attributes {dimension_semantics = [#tpu.dimension_semantics<parallel>], iteration_bounds = array<i64: 2>, scalar_prefetch = 0 : i64, scratch_operands = 1 : i64, tpu.core_type = #tpu.core_type<tc>, window_params = [{transform_indices = @transform_0, window_bounds = array<i64: 1, 256, 128>}, {pipeline_mode = #tpu.pipeline_mode<synchronous>, transform_indices = @transform_1, window_bounds = array<i64: 9, 128>}, {pipeline_mode = #tpu.pipeline_mode<synchronous>, transform_indices = @transform_2, window_bounds = array<i64: 25, 128>}, {pipeline_mode = #tpu.pipeline_mode<synchronous>, transform_indices = @transform_3, window_bounds = array<i64: 128, 128>}, {pipeline_mode = #tpu.pipeline_mode<synchronous>, transform_indices = @transform_4, window_bounds = array<i64: 128, 128>}, {pipeline_mode = #tpu.pipeline_mode<synchronous>, transform_indices = @transform_5, window_bounds = array<i64: 128, 512>}, {pipeline_mode = #tpu.pipeline_mode<synchronous>, transform_indices = @transform_6, window_bounds = array<i64: 512, 128>}, {pipeline_mode = #tpu.pipeline_mode<synchronous>, transform_indices = @transform_7, window_bounds = array<i64: 1, 512>}, {pipeline_mode = #tpu.pipeline_mode<synchronous>, transform_indices = @transform_8, window_bounds = array<i64: 7, 128>}, {transform_indices = @transform_9, window_bounds = array<i64: 1, 256, 128>}]} {
    %cst = arith.constant 0.000000e+00 : f32
    %0 = vector.broadcast %cst : f32 to vector<40x128xf32>
    %c0 = arith.constant 0 : index
    %c0_0 = arith.constant 0 : index
    %1 = vector.load %arg11[%c0, %c0_0] : memref<336x128xf32, #tpu.memory_space<vmem>>, vector<40x128xf32>
    tpu.vector_store %arg11[%c0, %c0_0], %0 {strides = array<i32>} : memref<336x128xf32, #tpu.memory_space<vmem>>, vector<40x128xf32>,
    %cst_1 = arith.constant 0.000000e+00 : f32
    %2 = vector.broadcast %cst_1 : f32 to vector<40x128xf32>
    %c296 = arith.constant 296 : index
    %c0_2 = arith.constant 0 : index
    %3 = vector.load %arg11[%c296, %c0_2] : memref<336x128xf32, #tpu.memory_space<vmem>>, vector<40x128xf32>
    tpu.vector_store %arg11[%c296, %c0_2], %2 {strides = array<i32>} : memref<336x128xf32, #tpu.memory_space<vmem>>, vector<40x128xf32>,
    %4 = tpu.iota {dimensions = array<i32: 0>} : vector<256x128xi32>
    %c16_i32 = arith.constant 16 : i32
    %c0_i32 = arith.constant 0 : i32
    %5 = arith.cmpi eq, %c16_i32, %c0_i32 : i32
    %c1_i32 = arith.constant 1 : i32
    %6 = arith.select %5, %c1_i32, %c16_i32 : i32
    %7 = vector.broadcast %6 : i32 to vector<256x128xi32>
    %8 = arith.remsi %4, %7 : vector<256x128xi32>
    %c0_i32_3 = arith.constant 0 : i32
    %9 = vector.broadcast %c0_i32_3 : i32 to vector<256x128xi32>
    %10 = arith.cmpi ne, %8, %9 : vector<256x128xi32>
    %c0_i32_4 = arith.constant 0 : i32
    %11 = vector.broadcast %c0_i32_4 : i32 to vector<256x128xi32>
    %12 = arith.cmpi slt, %8, %11 : vector<256x128xi32>
    %c0_i32_5 = arith.constant 0 : i32
    %13 = arith.cmpi slt, %6, %c0_i32_5 : i32
    %14 = vector.broadcast %13 : i1 to vector<256x128xi1>
    %15 = vector.broadcast %14 : vector<256x128xi1> to vector<256x128xi1>
    %16 = arith.xori %12, %15 : vector<256x128xi1>
    %17 = arith.andi %16, %10 : vector<256x128xi1>
    %18 = vector.broadcast %6 : i32 to vector<256x128xi32>
    %19 = arith.addi %8, %18 : vector<256x128xi32>
    %20 = arith.select %17, %19, %8 : vector<256x128xi1>, vector<256x128xi32>
    %c2_i32 = arith.constant 2 : i32
    %21 = vector.broadcast %c2_i32 : i32 to vector<256x128xi32>
    %22 = arith.cmpi sge, %20, %21 : vector<256x128xi32>
    %c1_i32_6 = arith.constant 1 : i32
    %23 = vector.broadcast %c1_i32_6 : i32 to vector<256x128xi32>
    %24 = arith.cmpi sge, %20, %23 : vector<256x128xi32>
    %c15_i32 = arith.constant 15 : i32
    %25 = vector.broadcast %c15_i32 : i32 to vector<256x128xi32>
    %26 = arith.cmpi slt, %20, %25 : vector<256x128xi32>
    %c14_i32 = arith.constant 14 : i32
    %27 = vector.broadcast %c14_i32 : i32 to vector<256x128xi32>
    %28 = arith.cmpi slt, %20, %27 : vector<256x128xi32>
    %c0_7 = arith.constant 0 : index
    %c0_8 = arith.constant 0 : index
    %c0_9 = arith.constant 0 : index
    %29 = vector.load %arg1[%c0_7, %c0_8, %c0_9] : memref<1x256x128xf32, #tpu.memory_space<vmem>>, vector<1x256x128xf32>
    %30 = vector.shape_cast %29 : vector<1x256x128xf32> to vector<256x128xf32>
    %c0_10 = arith.constant 0 : index
    %c0_11 = arith.constant 0 : index
    %31 = vector.load %arg9[%c0_10, %c0_11] : memref<7x128xf32, #tpu.memory_space<vmem>>, vector<1x128xf32>
    %c40 = arith.constant 40 : index
    %c0_12 = arith.constant 0 : index
    %32 = vector.load %arg11[%c40, %c0_12] : memref<336x128xf32, #tpu.memory_space<vmem>>, vector<256x128xf32>
    tpu.vector_store %arg11[%c40, %c0_12], %30 {strides = array<i32>} : memref<336x128xf32, #tpu.memory_space<vmem>>, vector<256x128xf32>,
    %cst_13 = arith.constant 0.000000e+00 : f32
    %33 = vector.broadcast %cst_13 : f32 to vector<256x128xf32>
    %c23 = arith.constant 23 : index
    %c0_14 = arith.constant 0 : index
    %34 = vector.load %arg11[%c23, %c0_14] : memref<336x128xf32, #tpu.memory_space<vmem>>, vector<256x128xf32>
    %cst_15 = arith.constant 0.000000e+00 : f32
    %35 = vector.broadcast %cst_15 : f32 to vector<256x128xf32>
    %36 = arith.select %24, %34, %35 : vector<256x128xi1>, vector<256x128xf32>
    %c0_16 = arith.constant 0 : index
    %c0_17 = arith.constant 0 : index
    %37 = vector.load %arg2[%c0_16, %c0_17] : memref<9x128xf32, #tpu.memory_space<vmem>>, vector<1x128xf32>
    %38 = vector.broadcast %37 : vector<1x128xf32> to vector<256x128xf32>
    %39 = arith.mulf %36, %38 : vector<256x128xf32>
    %40 = arith.addf %33, %39 : vector<256x128xf32>
    %c24 = arith.constant 24 : index
    %c0_18 = arith.constant 0 : index
    %41 = vector.load %arg11[%c24, %c0_18] : memref<336x128xf32, #tpu.memory_space<vmem>>, vector<256x128xf32>
    %c1 = arith.constant 1 : index
    %c0_19 = arith.constant 0 : index
    %42 = vector.load %arg2[%c1, %c0_19] : memref<9x128xf32, #tpu.memory_space<vmem>>, vector<1x128xf32>
    %43 = vector.broadcast %42 : vector<1x128xf32> to vector<256x128xf32>
    %44 = arith.mulf %41, %43 : vector<256x128xf32>
    %45 = arith.addf %40, %44 : vector<256x128xf32>
    %c25 = arith.constant 25 : index
    %c0_20 = arith.constant 0 : index
    %46 = vector.load %arg11[%c25, %c0_20] : memref<336x128xf32, #tpu.memory_space<vmem>>, vector<256x128xf32>
    %cst_21 = arith.constant 0.000000e+00 : f32
    %47 = vector.broadcast %cst_21 : f32 to vector<256x128xf32>
    %48 = arith.select %26, %46, %47 : vector<256x128xi1>, vector<256x128xf32>
    %c2 = arith.constant 2 : index
    %c0_22 = arith.constant 0 : index
    %49 = vector.load %arg2[%c2, %c0_22] : memref<9x128xf32, #tpu.memory_space<vmem>>, vector<1x128xf32>
    %50 = vector.broadcast %49 : vector<1x128xf32> to vector<256x128xf32>
    %51 = arith.mulf %48, %50 : vector<256x128xf32>
    %52 = arith.addf %45, %51 : vector<256x128xf32>
    %c39 = arith.constant 39 : index
    %c0_23 = arith.constant 0 : index
    %53 = vector.load %arg11[%c39, %c0_23] : memref<336x128xf32, #tpu.memory_space<vmem>>, vector<256x128xf32>
    %cst_24 = arith.constant 0.000000e+00 : f32
    %54 = vector.broadcast %cst_24 : f32 to vector<256x128xf32>
    %55 = arith.select %24, %53, %54 : vector<256x128xi1>, vector<256x128xf32>
    %c3 = arith.constant 3 : index
    %c0_25 = arith.constant 0 : index
    %56 = vector.load %arg2[%c3, %c0_25] : memref<9x128xf32, #tpu.memory_space<vmem>>, vector<1x128xf32>
    %57 = vector.broadcast %56 : vector<1x128xf32> to vector<256x128xf32>
    %58 = arith.mulf %55, %57 : vector<256x128xf32>
    %59 = arith.addf %52, %58 : vector<256x128xf32>
    %c40_26 = arith.constant 40 : index
    %c0_27 = arith.constant 0 : index
    %60 = vector.load %arg11[%c40_26, %c0_27] : memref<336x128xf32, #tpu.memory_space<vmem>>, vector<256x128xf32>
    %c4 = arith.constant 4 : index
    %c0_28 = arith.constant 0 : index
    %61 = vector.load %arg2[%c4, %c0_28] : memref<9x128xf32, #tpu.memory_space<vmem>>, vector<1x128xf32>
    %62 = vector.broadcast %61 : vector<1x128xf32> to vector<256x128xf32>
    %63 = arith.mulf %60, %62 : vector<256x128xf32>
    %64 = arith.addf %59, %63 : vector<256x128xf32>
    %c41 = arith.constant 41 : index
    %c0_29 = arith.constant 0 : index
    %65 = vector.load %arg11[%c41, %c0_29] : memref<336x128xf32, #tpu.memory_space<vmem>>, vector<256x128xf32>
    %cst_30 = arith.constant 0.000000e+00 : f32
    %66 = vector.broadcast %cst_30 : f32 to vector<256x128xf32>
    %67 = arith.select %26, %65, %66 : vector<256x128xi1>, vector<256x128xf32>
    %c5 = arith.constant 5 : index
    %c0_31 = arith.constant 0 : index
    %68 = vector.load %arg2[%c5, %c0_31] : memref<9x128xf32, #tpu.memory_space<vmem>>, vector<1x128xf32>
    %69 = vector.broadcast %68 : vector<1x128xf32> to vector<256x128xf32>
    %70 = arith.mulf %67, %69 : vector<256x128xf32>
    %71 = arith.addf %64, %70 : vector<256x128xf32>
    %c55 = arith.constant 55 : index
    %c0_32 = arith.constant 0 : index
    %72 = vector.load %arg11[%c55, %c0_32] : memref<336x128xf32, #tpu.memory_space<vmem>>, vector<256x128xf32>
    %cst_33 = arith.constant 0.000000e+00 : f32
    %73 = vector.broadcast %cst_33 : f32 to vector<256x128xf32>
    %74 = arith.select %24, %72, %73 : vector<256x128xi1>, vector<256x128xf32>
    %c6 = arith.constant 6 : index
    %c0_34 = arith.constant 0 : index
    %75 = vector.load %arg2[%c6, %c0_34] : memref<9x128xf32, #tpu.memory_space<vmem>>, vector<1x128xf32>
    %76 = vector.broadcast %75 : vector<1x128xf32> to vector<256x128xf32>
    %77 = arith.mulf %74, %76 : vector<256x128xf32>
    %78 = arith.addf %71, %77 : vector<256x128xf32>
    %c56 = arith.constant 56 : index
    %c0_35 = arith.constant 0 : index
    %79 = vector.load %arg11[%c56, %c0_35] : memref<336x128xf32, #tpu.memory_space<vmem>>, vector<256x128xf32>
    %c7 = arith.constant 7 : index
    %c0_36 = arith.constant 0 : index
    %80 = vector.load %arg2[%c7, %c0_36] : memref<9x128xf32, #tpu.memory_space<vmem>>, vector<1x128xf32>
    %81 = vector.broadcast %80 : vector<1x128xf32> to vector<256x128xf32>
    %82 = arith.mulf %79, %81 : vector<256x128xf32>
    %83 = arith.addf %78, %82 : vector<256x128xf32>
    %c57 = arith.constant 57 : index
    %c0_37 = arith.constant 0 : index
    %84 = vector.load %arg11[%c57, %c0_37] : memref<336x128xf32, #tpu.memory_space<vmem>>, vector<256x128xf32>
    %cst_38 = arith.constant 0.000000e+00 : f32
    %85 = vector.broadcast %cst_38 : f32 to vector<256x128xf32>
    %86 = arith.select %26, %84, %85 : vector<256x128xi1>, vector<256x128xf32>
    %c8 = arith.constant 8 : index
    %c0_39 = arith.constant 0 : index
    %87 = vector.load %arg2[%c8, %c0_39] : memref<9x128xf32, #tpu.memory_space<vmem>>, vector<1x128xf32>
    %88 = vector.broadcast %87 : vector<1x128xf32> to vector<256x128xf32>
    %89 = arith.mulf %86, %88 : vector<256x128xf32>
    %90 = arith.addf %83, %89 : vector<256x128xf32>
    %91 = vector.broadcast %31 : vector<1x128xf32> to vector<256x128xf32>
    %92 = arith.addf %90, %91 : vector<256x128xf32>
    %93 = arith.addf %30, %92 : vector<256x128xf32>
    %c0_40 = arith.constant 0 : index
    %c0_41 = arith.constant 0 : index
    %94 = vector.load %arg4[%c0_40, %c0_41] : memref<128x128xf32, #tpu.memory_space<vmem>>, vector<128x128xf32>
    %cst_42 = arith.constant dense<0.000000e+00> : vector<256x128xf32>
    %95 = tpu.matmul %93, %94, %cst_42 {dimension_numbers = #tpu.dot_dimension_numbers<[1], [0], [0], [1], [0, 0, 1, 1], [], []>} : vector<256x128xf32>, vector<128x128xf32>, vector<256x128xf32> -> vector<256x128xf32>
    %c2_43 = arith.constant 2 : index
    %c0_44 = arith.constant 0 : index
    %96 = vector.load %arg9[%c2_43, %c0_44] : memref<7x128xf32, #tpu.memory_space<vmem>>, vector<1x128xf32>
    %97 = vector.broadcast %96 : vector<1x128xf32> to vector<256x128xf32>
    %98 = arith.addf %95, %97 : vector<256x128xf32>
    %c1_45 = arith.constant 1 : index
    %c0_46 = arith.constant 0 : index
    %99 = vector.load %arg9[%c1_45, %c0_46] : memref<7x128xf32, #tpu.memory_space<vmem>>, vector<1x128xf32>
    %c40_47 = arith.constant 40 : index
    %c0_48 = arith.constant 0 : index
    %100 = vector.load %arg11[%c40_47, %c0_48] : memref<336x128xf32, #tpu.memory_space<vmem>>, vector<256x128xf32>
    tpu.vector_store %arg11[%c40_47, %c0_48], %98 {strides = array<i32>} : memref<336x128xf32, #tpu.memory_space<vmem>>, vector<256x128xf32>,
    %cst_49 = arith.constant 0.000000e+00 : f32
    %101 = vector.broadcast %cst_49 : f32 to vector<256x128xf32>
    %c6_50 = arith.constant 6 : index
    %c0_51 = arith.constant 0 : index
    %102 = vector.load %arg11[%c6_50, %c0_51] : memref<336x128xf32, #tpu.memory_space<vmem>>, vector<256x128xf32>
    %cst_52 = arith.constant 0.000000e+00 : f32
    %103 = vector.broadcast %cst_52 : f32 to vector<256x128xf32>
    %104 = arith.select %22, %102, %103 : vector<256x128xi1>, vector<256x128xf32>
    %c0_53 = arith.constant 0 : index
    %c0_54 = arith.constant 0 : index
    %105 = vector.load %arg3[%c0_53, %c0_54] : memref<25x128xf32, #tpu.memory_space<vmem>>, vector<1x128xf32>
    %106 = vector.broadcast %105 : vector<1x128xf32> to vector<256x128xf32>
    %107 = arith.mulf %104, %106 : vector<256x128xf32>
    %108 = arith.addf %101, %107 : vector<256x128xf32>
    %c7_55 = arith.constant 7 : index
    %c0_56 = arith.constant 0 : index
    %109 = vector.load %arg11[%c7_55, %c0_56] : memref<336x128xf32, #tpu.memory_space<vmem>>, vector<256x128xf32>
    %cst_57 = arith.constant 0.000000e+00 : f32
    %110 = vector.broadcast %cst_57 : f32 to vector<256x128xf32>
    %111 = arith.select %24, %109, %110 : vector<256x128xi1>, vector<256x128xf32>
    %c1_58 = arith.constant 1 : index
    %c0_59 = arith.constant 0 : index
    %112 = vector.load %arg3[%c1_58, %c0_59] : memref<25x128xf32, #tpu.memory_space<vmem>>, vector<1x128xf32>
    %113 = vector.broadcast %112 : vector<1x128xf32> to vector<256x128xf32>
    %114 = arith.mulf %111, %113 : vector<256x128xf32>
    %115 = arith.addf %108, %114 : vector<256x128xf32>
    %c8_60 = arith.constant 8 : index
    %c0_61 = arith.constant 0 : index
    %116 = vector.load %arg11[%c8_60, %c0_61] : memref<336x128xf32, #tpu.memory_space<vmem>>, vector<256x128xf32>
    %c2_62 = arith.constant 2 : index
    %c0_63 = arith.constant 0 : index
    %117 = vector.load %arg3[%c2_62, %c0_63] : memref<25x128xf32, #tpu.memory_space<vmem>>, vector<1x128xf32>
    %118 = vector.broadcast %117 : vector<1x128xf32> to vector<256x128xf32>
    %119 = arith.mulf %116, %118 : vector<256x128xf32>
    %120 = arith.addf %115, %119 : vector<256x128xf32>
    %c9 = arith.constant 9 : index
    %c0_64 = arith.constant 0 : index
    %121 = vector.load %arg11[%c9, %c0_64] : memref<336x128xf32, #tpu.memory_space<vmem>>, vector<256x128xf32>
    %cst_65 = arith.constant 0.000000e+00 : f32
    %122 = vector.broadcast %cst_65 : f32 to vector<256x128xf32>
    %123 = arith.select %26, %121, %122 : vector<256x128xi1>, vector<256x128xf32>
    %c3_66 = arith.constant 3 : index
    %c0_67 = arith.constant 0 : index
    %124 = vector.load %arg3[%c3_66, %c0_67] : memref<25x128xf32, #tpu.memory_space<vmem>>, vector<1x128xf32>
    %125 = vector.broadcast %124 : vector<1x128xf32> to vector<256x128xf32>
    %126 = arith.mulf %123, %125 : vector<256x128xf32>
    %127 = arith.addf %120, %126 : vector<256x128xf32>
    %c10 = arith.constant 10 : index
    %c0_68 = arith.constant 0 : index
    %128 = vector.load %arg11[%c10, %c0_68] : memref<336x128xf32, #tpu.memory_space<vmem>>, vector<256x128xf32>
    %cst_69 = arith.constant 0.000000e+00 : f32
    %129 = vector.broadcast %cst_69 : f32 to vector<256x128xf32>
    %130 = arith.select %28, %128, %129 : vector<256x128xi1>, vector<256x128xf32>
    %c4_70 = arith.constant 4 : index
    %c0_71 = arith.constant 0 : index
    %131 = vector.load %arg3[%c4_70, %c0_71] : memref<25x128xf32, #tpu.memory_space<vmem>>, vector<1x128xf32>
    %132 = vector.broadcast %131 : vector<1x128xf32> to vector<256x128xf32>
    %133 = arith.mulf %130, %132 : vector<256x128xf32>
    %134 = arith.addf %127, %133 : vector<256x128xf32>
    %c22 = arith.constant 22 : index
    %c0_72 = arith.constant 0 : index
    %135 = vector.load %arg11[%c22, %c0_72] : memref<336x128xf32, #tpu.memory_space<vmem>>, vector<256x128xf32>
    %cst_73 = arith.constant 0.000000e+00 : f32
    %136 = vector.broadcast %cst_73 : f32 to vector<256x128xf32>
    %137 = arith.select %22, %135, %136 : vector<256x128xi1>, vector<256x128xf32>
    %c5_74 = arith.constant 5 : index
    %c0_75 = arith.constant 0 : index
    %138 = vector.load %arg3[%c5_74, %c0_75] : memref<25x128xf32, #tpu.memory_space<vmem>>, vector<1x128xf32>
    %139 = vector.broadcast %138 : vector<1x128xf32> to vector<256x128xf32>
    %140 = arith.mulf %137, %139 : vector<256x128xf32>
    %141 = arith.addf %134, %140 : vector<256x128xf32>
    %c23_76 = arith.constant 23 : index
    %c0_77 = arith.constant 0 : index
    %142 = vector.load %arg11[%c23_76, %c0_77] : memref<336x128xf32, #tpu.memory_space<vmem>>, vector<256x128xf32>
    %cst_78 = arith.constant 0.000000e+00 : f32
    %143 = vector.broadcast %cst_78 : f32 to vector<256x128xf32>
    %144 = arith.select %24, %142, %143 : vector<256x128xi1>, vector<256x128xf32>
    %c6_79 = arith.constant 6 : index
    %c0_80 = arith.constant 0 : index
    %145 = vector.load %arg3[%c6_79, %c0_80] : memref<25x128xf32, #tpu.memory_space<vmem>>, vector<1x128xf32>
    %146 = vector.broadcast %145 : vector<1x128xf32> to vector<256x128xf32>
    %147 = arith.mulf %144, %146 : vector<256x128xf32>
    %148 = arith.addf %141, %147 : vector<256x128xf32>
    %c24_81 = arith.constant 24 : index
    %c0_82 = arith.constant 0 : index
    %149 = vector.load %arg11[%c24_81, %c0_82] : memref<336x128xf32, #tpu.memory_space<vmem>>, vector<256x128xf32>
    %c7_83 = arith.constant 7 : index
    %c0_84 = arith.constant 0 : index
    %150 = vector.load %arg3[%c7_83, %c0_84] : memref<25x128xf32, #tpu.memory_space<vmem>>, vector<1x128xf32>
    %151 = vector.broadcast %150 : vector<1x128xf32> to vector<256x128xf32>
    %152 = arith.mulf %149, %151 : vector<256x128xf32>
    %153 = arith.addf %148, %152 : vector<256x128xf32>
    %c25_85 = arith.constant 25 : index
    %c0_86 = arith.constant 0 : index
    %154 = vector.load %arg11[%c25_85, %c0_86] : memref<336x128xf32, #tpu.memory_space<vmem>>, vector<256x128xf32>
    %cst_87 = arith.constant 0.000000e+00 : f32
    %155 = vector.broadcast %cst_87 : f32 to vector<256x128xf32>
    %156 = arith.select %26, %154, %155 : vector<256x128xi1>, vector<256x128xf32>
    %c8_88 = arith.constant 8 : index
    %c0_89 = arith.constant 0 : index
    %157 = vector.load %arg3[%c8_88, %c0_89] : memref<25x128xf32, #tpu.memory_space<vmem>>, vector<1x128xf32>
    %158 = vector.broadcast %157 : vector<1x128xf32> to vector<256x128xf32>
    %159 = arith.mulf %156, %158 : vector<256x128xf32>
    %160 = arith.addf %153, %159 : vector<256x128xf32>
    %c26 = arith.constant 26 : index
    %c0_90 = arith.constant 0 : index
    %161 = vector.load %arg11[%c26, %c0_90] : memref<336x128xf32, #tpu.memory_space<vmem>>, vector<256x128xf32>
    %cst_91 = arith.constant 0.000000e+00 : f32
    %162 = vector.broadcast %cst_91 : f32 to vector<256x128xf32>
    %163 = arith.select %28, %161, %162 : vector<256x128xi1>, vector<256x128xf32>
    %c9_92 = arith.constant 9 : index
    %c0_93 = arith.constant 0 : index
    %164 = vector.load %arg3[%c9_92, %c0_93] : memref<25x128xf32, #tpu.memory_space<vmem>>, vector<1x128xf32>
    %165 = vector.broadcast %164 : vector<1x128xf32> to vector<256x128xf32>
    %166 = arith.mulf %163, %165 : vector<256x128xf32>
    %167 = arith.addf %160, %166 : vector<256x128xf32>
    %c38 = arith.constant 38 : index
    %c0_94 = arith.constant 0 : index
    %168 = vector.load %arg11[%c38, %c0_94] : memref<336x128xf32, #tpu.memory_space<vmem>>, vector<256x128xf32>
    %cst_95 = arith.constant 0.000000e+00 : f32
    %169 = vector.broadcast %cst_95 : f32 to vector<256x128xf32>
    %170 = arith.select %22, %168, %169 : vector<256x128xi1>, vector<256x128xf32>
    %c10_96 = arith.constant 10 : index
    %c0_97 = arith.constant 0 : index
    %171 = vector.load %arg3[%c10_96, %c0_97] : memref<25x128xf32, #tpu.memory_space<vmem>>, vector<1x128xf32>
    %172 = vector.broadcast %171 : vector<1x128xf32> to vector<256x128xf32>
    %173 = arith.mulf %170, %172 : vector<256x128xf32>
    %174 = arith.addf %167, %173 : vector<256x128xf32>
    %c39_98 = arith.constant 39 : index
    %c0_99 = arith.constant 0 : index
    %175 = vector.load %arg11[%c39_98, %c0_99] : memref<336x128xf32, #tpu.memory_space<vmem>>, vector<256x128xf32>
    %cst_100 = arith.constant 0.000000e+00 : f32
    %176 = vector.broadcast %cst_100 : f32 to vector<256x128xf32>
    %177 = arith.select %24, %175, %176 : vector<256x128xi1>, vector<256x128xf32>
    %c11 = arith.constant 11 : index
    %c0_101 = arith.constant 0 : index
    %178 = vector.load %arg3[%c11, %c0_101] : memref<25x128xf32, #tpu.memory_space<vmem>>, vector<1x128xf32>
    %179 = vector.broadcast %178 : vector<1x128xf32> to vector<256x128xf32>
    %180 = arith.mulf %177, %179 : vector<256x128xf32>
    %181 = arith.addf %174, %180 : vector<256x128xf32>
    %c40_102 = arith.constant 40 : index
    %c0_103 = arith.constant 0 : index
    %182 = vector.load %arg11[%c40_102, %c0_103] : memref<336x128xf32, #tpu.memory_space<vmem>>, vector<256x128xf32>
    %c12 = arith.constant 12 : index
    %c0_104 = arith.constant 0 : index
    %183 = vector.load %arg3[%c12, %c0_104] : memref<25x128xf32, #tpu.memory_space<vmem>>, vector<1x128xf32>
    %184 = vector.broadcast %183 : vector<1x128xf32> to vector<256x128xf32>
    %185 = arith.mulf %182, %184 : vector<256x128xf32>
    %186 = arith.addf %181, %185 : vector<256x128xf32>
    %c41_105 = arith.constant 41 : index
    %c0_106 = arith.constant 0 : index
    %187 = vector.load %arg11[%c41_105, %c0_106] : memref<336x128xf32, #tpu.memory_space<vmem>>, vector<256x128xf32>
    %cst_107 = arith.constant 0.000000e+00 : f32
    %188 = vector.broadcast %cst_107 : f32 to vector<256x128xf32>
    %189 = arith.select %26, %187, %188 : vector<256x128xi1>, vector<256x128xf32>
    %c13 = arith.constant 13 : index
    %c0_108 = arith.constant 0 : index
    %190 = vector.load %arg3[%c13, %c0_108] : memref<25x128xf32, #tpu.memory_space<vmem>>, vector<1x128xf32>
    %191 = vector.broadcast %190 : vector<1x128xf32> to vector<256x128xf32>
    %192 = arith.mulf %189, %191 : vector<256x128xf32>
    %193 = arith.addf %186, %192 : vector<256x128xf32>
    %c42 = arith.constant 42 : index
    %c0_109 = arith.constant 0 : index
    %194 = vector.load %arg11[%c42, %c0_109] : memref<336x128xf32, #tpu.memory_space<vmem>>, vector<256x128xf32>
    %cst_110 = arith.constant 0.000000e+00 : f32
    %195 = vector.broadcast %cst_110 : f32 to vector<256x128xf32>
    %196 = arith.select %28, %194, %195 : vector<256x128xi1>, vector<256x128xf32>
    %c14 = arith.constant 14 : index
    %c0_111 = arith.constant 0 : index
    %197 = vector.load %arg3[%c14, %c0_111] : memref<25x128xf32, #tpu.memory_space<vmem>>, vector<1x128xf32>
    %198 = vector.broadcast %197 : vector<1x128xf32> to vector<256x128xf32>
    %199 = arith.mulf %196, %198 : vector<256x128xf32>
    %200 = arith.addf %193, %199 : vector<256x128xf32>
    %c54 = arith.constant 54 : index
    %c0_112 = arith.constant 0 : index
    %201 = vector.load %arg11[%c54, %c0_112] : memref<336x128xf32, #tpu.memory_space<vmem>>, vector<256x128xf32>
    %cst_113 = arith.constant 0.000000e+00 : f32
    %202 = vector.broadcast %cst_113 : f32 to vector<256x128xf32>
    %203 = arith.select %22, %201, %202 : vector<256x128xi1>, vector<256x128xf32>
    %c15 = arith.constant 15 : index
    %c0_114 = arith.constant 0 : index
    %204 = vector.load %arg3[%c15, %c0_114] : memref<25x128xf32, #tpu.memory_space<vmem>>, vector<1x128xf32>
    %205 = vector.broadcast %204 : vector<1x128xf32> to vector<256x128xf32>
    %206 = arith.mulf %203, %205 : vector<256x128xf32>
    %207 = arith.addf %200, %206 : vector<256x128xf32>
    %c55_115 = arith.constant 55 : index
    %c0_116 = arith.constant 0 : index
    %208 = vector.load %arg11[%c55_115, %c0_116] : memref<336x128xf32, #tpu.memory_space<vmem>>, vector<256x128xf32>
    %cst_117 = arith.constant 0.000000e+00 : f32
    %209 = vector.broadcast %cst_117 : f32 to vector<256x128xf32>
    %210 = arith.select %24, %208, %209 : vector<256x128xi1>, vector<256x128xf32>
    %c16 = arith.constant 16 : index
    %c0_118 = arith.constant 0 : index
    %211 = vector.load %arg3[%c16, %c0_118] : memref<25x128xf32, #tpu.memory_space<vmem>>, vector<1x128xf32>
    %212 = vector.broadcast %211 : vector<1x128xf32> to vector<256x128xf32>
    %213 = arith.mulf %210, %212 : vector<256x128xf32>
    %214 = arith.addf %207, %213 : vector<256x128xf32>
    %c56_119 = arith.constant 56 : index
    %c0_120 = arith.constant 0 : index
    %215 = vector.load %arg11[%c56_119, %c0_120] : memref<336x128xf32, #tpu.memory_space<vmem>>, vector<256x128xf32>
    %c17 = arith.constant 17 : index
    %c0_121 = arith.constant 0 : index
    %216 = vector.load %arg3[%c17, %c0_121] : memref<25x128xf32, #tpu.memory_space<vmem>>, vector<1x128xf32>
    %217 = vector.broadcast %216 : vector<1x128xf32> to vector<256x128xf32>
    %218 = arith.mulf %215, %217 : vector<256x128xf32>
    %219 = arith.addf %214, %218 : vector<256x128xf32>
    %c57_122 = arith.constant 57 : index
    %c0_123 = arith.constant 0 : index
    %220 = vector.load %arg11[%c57_122, %c0_123] : memref<336x128xf32, #tpu.memory_space<vmem>>, vector<256x128xf32>
    %cst_124 = arith.constant 0.000000e+00 : f32
    %221 = vector.broadcast %cst_124 : f32 to vector<256x128xf32>
    %222 = arith.select %26, %220, %221 : vector<256x128xi1>, vector<256x128xf32>
    %c18 = arith.constant 18 : index
    %c0_125 = arith.constant 0 : index
    %223 = vector.load %arg3[%c18, %c0_125] : memref<25x128xf32, #tpu.memory_space<vmem>>, vector<1x128xf32>
    %224 = vector.broadcast %223 : vector<1x128xf32> to vector<256x128xf32>
    %225 = arith.mulf %222, %224 : vector<256x128xf32>
    %226 = arith.addf %219, %225 : vector<256x128xf32>
    %c58 = arith.constant 58 : index
    %c0_126 = arith.constant 0 : index
    %227 = vector.load %arg11[%c58, %c0_126] : memref<336x128xf32, #tpu.memory_space<vmem>>, vector<256x128xf32>
    %cst_127 = arith.constant 0.000000e+00 : f32
    %228 = vector.broadcast %cst_127 : f32 to vector<256x128xf32>
    %229 = arith.select %28, %227, %228 : vector<256x128xi1>, vector<256x128xf32>
    %c19 = arith.constant 19 : index
    %c0_128 = arith.constant 0 : index
    %230 = vector.load %arg3[%c19, %c0_128] : memref<25x128xf32, #tpu.memory_space<vmem>>, vector<1x128xf32>
    %231 = vector.broadcast %230 : vector<1x128xf32> to vector<256x128xf32>
    %232 = arith.mulf %229, %231 : vector<256x128xf32>
    %233 = arith.addf %226, %232 : vector<256x128xf32>
    %c70 = arith.constant 70 : index
    %c0_129 = arith.constant 0 : index
    %234 = vector.load %arg11[%c70, %c0_129] : memref<336x128xf32, #tpu.memory_space<vmem>>, vector<256x128xf32>
    %cst_130 = arith.constant 0.000000e+00 : f32
    %235 = vector.broadcast %cst_130 : f32 to vector<256x128xf32>
    %236 = arith.select %22, %234, %235 : vector<256x128xi1>, vector<256x128xf32>
    %c20 = arith.constant 20 : index
    %c0_131 = arith.constant 0 : index
    %237 = vector.load %arg3[%c20, %c0_131] : memref<25x128xf32, #tpu.memory_space<vmem>>, vector<1x128xf32>
    %238 = vector.broadcast %237 : vector<1x128xf32> to vector<256x128xf32>
    %239 = arith.mulf %236, %238 : vector<256x128xf32>
    %240 = arith.addf %233, %239 : vector<256x128xf32>
    %c71 = arith.constant 71 : index
    %c0_132 = arith.constant 0 : index
    %241 = vector.load %arg11[%c71, %c0_132] : memref<336x128xf32, #tpu.memory_space<vmem>>, vector<256x128xf32>
    %cst_133 = arith.constant 0.000000e+00 : f32
    %242 = vector.broadcast %cst_133 : f32 to vector<256x128xf32>
    %243 = arith.select %24, %241, %242 : vector<256x128xi1>, vector<256x128xf32>
    %c21 = arith.constant 21 : index
    %c0_134 = arith.constant 0 : index
    %244 = vector.load %arg3[%c21, %c0_134] : memref<25x128xf32, #tpu.memory_space<vmem>>, vector<1x128xf32>
    %245 = vector.broadcast %244 : vector<1x128xf32> to vector<256x128xf32>
    %246 = arith.mulf %243, %245 : vector<256x128xf32>
    %247 = arith.addf %240, %246 : vector<256x128xf32>
    %c72 = arith.constant 72 : index
    %c0_135 = arith.constant 0 : index
    %248 = vector.load %arg11[%c72, %c0_135] : memref<336x128xf32, #tpu.memory_space<vmem>>, vector<256x128xf32>
    %c22_136 = arith.constant 22 : index
    %c0_137 = arith.constant 0 : index
    %249 = vector.load %arg3[%c22_136, %c0_137] : memref<25x128xf32, #tpu.memory_space<vmem>>, vector<1x128xf32>
    %250 = vector.broadcast %249 : vector<1x128xf32> to vector<256x128xf32>
    %251 = arith.mulf %248, %250 : vector<256x128xf32>
    %252 = arith.addf %247, %251 : vector<256x128xf32>
    %c73 = arith.constant 73 : index
    %c0_138 = arith.constant 0 : index
    %253 = vector.load %arg11[%c73, %c0_138] : memref<336x128xf32, #tpu.memory_space<vmem>>, vector<256x128xf32>
    %cst_139 = arith.constant 0.000000e+00 : f32
    %254 = vector.broadcast %cst_139 : f32 to vector<256x128xf32>
    %255 = arith.select %26, %253, %254 : vector<256x128xi1>, vector<256x128xf32>
    %c23_140 = arith.constant 23 : index
    %c0_141 = arith.constant 0 : index
    %256 = vector.load %arg3[%c23_140, %c0_141] : memref<25x128xf32, #tpu.memory_space<vmem>>, vector<1x128xf32>
    %257 = vector.broadcast %256 : vector<1x128xf32> to vector<256x128xf32>
    %258 = arith.mulf %255, %257 : vector<256x128xf32>
    %259 = arith.addf %252, %258 : vector<256x128xf32>
    %c74 = arith.constant 74 : index
    %c0_142 = arith.constant 0 : index
    %260 = vector.load %arg11[%c74, %c0_142] : memref<336x128xf32, #tpu.memory_space<vmem>>, vector<256x128xf32>
    %cst_143 = arith.constant 0.000000e+00 : f32
    %261 = vector.broadcast %cst_143 : f32 to vector<256x128xf32>
    %262 = arith.select %28, %260, %261 : vector<256x128xi1>, vector<256x128xf32>
    %c24_144 = arith.constant 24 : index
    %c0_145 = arith.constant 0 : index
    %263 = vector.load %arg3[%c24_144, %c0_145] : memref<25x128xf32, #tpu.memory_space<vmem>>, vector<1x128xf32>
    %264 = vector.broadcast %263 : vector<1x128xf32> to vector<256x128xf32>
    %265 = arith.mulf %262, %264 : vector<256x128xf32>
    %266 = arith.addf %259, %265 : vector<256x128xf32>
    %267 = vector.broadcast %99 : vector<1x128xf32> to vector<256x128xf32>
    %268 = arith.addf %266, %267 : vector<256x128xf32>
    %c0_146 = arith.constant 0 : index
    %c0_147 = arith.constant 0 : index
    %269 = vector.load %arg5[%c0_146, %c0_147] : memref<128x128xf32, #tpu.memory_space<vmem>>, vector<128x128xf32>
    %cst_148 = arith.constant dense<0.000000e+00> : vector<256x128xf32>
    %270 = tpu.matmul %268, %269, %cst_148 {dimension_numbers = #tpu.dot_dimension_numbers<[1], [0], [0], [1], [0, 0, 1, 1], [], []>} : vector<256x128xf32>, vector<128x128xf32>, vector<256x128xf32> -> vector<256x128xf32>
    %c3_149 = arith.constant 3 : index
    %c0_150 = arith.constant 0 : index
    %271 = vector.load %arg9[%c3_149, %c0_150] : memref<7x128xf32, #tpu.memory_space<vmem>>, vector<1x128xf32>
    %272 = vector.broadcast %271 : vector<1x128xf32> to vector<256x128xf32>
    %273 = arith.addf %270, %272 : vector<256x128xf32>
    %c4_151 = arith.constant 4 : index
    %c0_152 = arith.constant 0 : index
    %274 = vector.load %arg9[%c4_151, %c0_152] : memref<7x128xf32, #tpu.memory_space<vmem>>, vector<1x128xf32>
    %275 = vector.broadcast %274 : vector<1x128xf32> to vector<256x128xf32>
    %276 = arith.mulf %275, %273 : vector<256x128xf32>
    %277 = arith.addf %93, %276 : vector<256x128xf32>
    %c0_153 = arith.constant 0 : index
    %c0_154 = arith.constant 0 : index
    %278 = vector.load %arg6[%c0_153, %c0_154] : memref<128x512xf32, #tpu.memory_space<vmem>>, vector<128x512xf32>
    %cst_155 = arith.constant dense<0.000000e+00> : vector<256x512xf32>
    %279 = tpu.matmul %277, %278, %cst_155 {dimension_numbers = #tpu.dot_dimension_numbers<[1], [0], [0], [1], [0, 0, 1, 1], [], []>} : vector<256x128xf32>, vector<128x512xf32>, vector<256x512xf32> -> vector<256x512xf32>
    %c0_156 = arith.constant 0 : index
    %c0_157 = arith.constant 0 : index
    %280 = vector.load %arg8[%c0_156, %c0_157] : memref<1x512xf32, #tpu.memory_space<vmem>>, vector<1x512xf32>
    %281 = vector.broadcast %280 : vector<1x512xf32> to vector<256x512xf32>
    %282 = arith.addf %279, %281 : vector<256x512xf32>
    %cst_158 = arith.constant 5.000000e-01 : f32
    %283 = vector.broadcast %cst_158 : f32 to vector<256x512xf32>
    %284 = arith.mulf %283, %282 : vector<256x512xf32>
    %cst_159 = arith.constant 0.797884583 : f32
    %285 = vector.broadcast %cst_159 : f32 to vector<256x512xf32>
    %286 = arith.mulf %285, %282 : vector<256x512xf32>
    %cst_160 = arith.constant 4.471500e-02 : f32
    %287 = vector.broadcast %cst_160 : f32 to vector<256x512xf32>
    %288 = arith.mulf %287, %282 : vector<256x512xf32>
    %289 = arith.mulf %288, %282 : vector<256x512xf32>
    %cst_161 = arith.constant 1.000000e+00 : f32
    %290 = vector.broadcast %cst_161 : f32 to vector<256x512xf32>
    %291 = arith.addf %290, %289 : vector<256x512xf32>
    %292 = arith.mulf %286, %291 : vector<256x512xf32>
    %293 = math.tanh %292 : vector<256x512xf32>
    %cst_162 = arith.constant 1.000000e+00 : f32
    %294 = vector.broadcast %cst_162 : f32 to vector<256x512xf32>
    %295 = arith.addf %294, %293 : vector<256x512xf32>
    %296 = arith.mulf %284, %295 : vector<256x512xf32>
    %c0_163 = arith.constant 0 : index
    %c0_164 = arith.constant 0 : index
    %297 = vector.load %arg7[%c0_163, %c0_164] : memref<512x128xf32, #tpu.memory_space<vmem>>, vector<512x128xf32>
    %cst_165 = arith.constant dense<0.000000e+00> : vector<256x128xf32>
    %298 = tpu.matmul %296, %297, %cst_165 {dimension_numbers = #tpu.dot_dimension_numbers<[1], [0], [0], [1], [0, 0, 1, 1], [], []>} : vector<256x512xf32>, vector<512x128xf32>, vector<256x128xf32> -> vector<256x128xf32>
    %c5_166 = arith.constant 5 : index
    %c0_167 = arith.constant 0 : index
    %299 = vector.load %arg9[%c5_166, %c0_167] : memref<7x128xf32, #tpu.memory_space<vmem>>, vector<1x128xf32>
    %300 = vector.broadcast %299 : vector<1x128xf32> to vector<256x128xf32>
    %301 = arith.addf %298, %300 : vector<256x128xf32>
    %c6_168 = arith.constant 6 : index
    %c0_169 = arith.constant 0 : index
    %302 = vector.load %arg9[%c6_168, %c0_169] : memref<7x128xf32, #tpu.memory_space<vmem>>, vector<1x128xf32>
    %303 = vector.broadcast %302 : vector<1x128xf32> to vector<256x128xf32>
    %304 = arith.mulf %303, %301 : vector<256x128xf32>
    %305 = arith.addf %277, %304 : vector<256x128xf32>
    %c0_170 = arith.constant 0 : index
    %c0_171 = arith.constant 0 : index
    %c0_172 = arith.constant 0 : index
    %306 = vector.load %arg10[%c0_170, %c0_171, %c0_172] : memref<1x256x128xf32, #tpu.memory_space<vmem>>, vector<1x256x128xf32>
    %307 = vector.shape_cast %306 : vector<1x256x128xf32> to vector<256x128xf32>
    %308 = vector.shape_cast %305 : vector<256x128xf32> to vector<1x256x128xf32>
    tpu.vector_store %arg10[%c0_170, %c0_171, %c0_172], %308 {strides = array<i32>} : memref<1x256x128xf32, #tpu.memory_space<vmem>>, vector<1x256x128xf32>,
    return
  }
  func.func @transform_0(%arg0: i32) -> (i32, i32, i32) {
    %c0_i32 = arith.constant 0 : i32
    %c0_i32_0 = arith.constant 0 : i32
    %c0_i32_1 = arith.constant 0 : i32
    return %arg0, %c0_i32, %c0_i32_0 : i32, i32, i32
  }
  func.func @transform_1(%arg0: i32) -> (i32, i32) {
    %c0_i32 = arith.constant 0 : i32
    %c0_i32_0 = arith.constant 0 : i32
    %c0_i32_1 = arith.constant 0 : i32
    return %c0_i32, %c0_i32_0 : i32, i32
  }
  func.func @transform_2(%arg0: i32) -> (i32, i32) {
    %c0_i32 = arith.constant 0 : i32
    %c0_i32_0 = arith.constant 0 : i32
    %c0_i32_1 = arith.constant 0 : i32
    return %c0_i32, %c0_i32_0 : i32, i32
  }
  func.func @transform_3(%arg0: i32) -> (i32, i32) {
    %c0_i32 = arith.constant 0 : i32
    %c0_i32_0 = arith.constant 0 : i32
    %c0_i32_1 = arith.constant 0 : i32
    return %c0_i32, %c0_i32_0 : i32, i32
  }
  func.func @transform_4(%arg0: i32) -> (i32, i32) {
    %c0_i32 = arith.constant 0 : i32
    %c0_i32_0 = arith.constant 0 : i32
    %c0_i32_1 = arith.constant 0 : i32
    return %c0_i32, %c0_i32_0 : i32, i32
  }
  func.func @transform_5(%arg0: i32) -> (i32, i32) {
    %c0_i32 = arith.constant 0 : i32
    %c0_i32_0 = arith.constant 0 : i32
    %c0_i32_1 = arith.constant 0 : i32
    return %c0_i32, %c0_i32_0 : i32, i32
  }
  func.func @transform_6(%arg0: i32) -> (i32, i32) {
    %c0_i32 = arith.constant 0 : i32
    %c0_i32_0 = arith.constant 0 : i32
    %c0_i32_1 = arith.constant 0 : i32
    return %c0_i32, %c0_i32_0 : i32, i32
  }
  func.func @transform_7(%arg0: i32) -> (i32, i32) {
    %c0_i32 = arith.constant 0 : i32
    %c0_i32_0 = arith.constant 0 : i32
    %c0_i32_1 = arith.constant 0 : i32
    return %c0_i32, %c0_i32_0 : i32, i32
  }
  func.func @transform_8(%arg0: i32) -> (i32, i32) {
    %c0_i32 = arith.constant 0 : i32
    %c0_i32_0 = arith.constant 0 : i32
    %c0_i32_1 = arith.constant 0 : i32
    return %c0_i32, %c0_i32_0 : i32, i32
  }
  func.func @transform_9(%arg0: i32) -> (i32, i32, i32) {
    %c0_i32 = arith.constant 0 : i32
    %c0_i32_0 = arith.constant 0 : i32
    %c0_i32_1 = arith.constant 0 : i32
    return %arg0, %c0_i32, %c0_i32_0 : i32, i32, i32
  }
}

</mosaic_0001>

<llo_original>
// kernel: tpu_custom_call.1
$region0: #{tpu_custom_call.1}
  #allocation0 [shape = 'u32[]', space=smem, size = 0x4, offset = 0x4, fixed_abs, tag = 'smem constant byte address 0x4 - core index']
  #allocation1 [shape = 'u32[72,128]{1,0:T(1,128)}', space=vmem, size = 0x9000, scoped, tag = 'internal scratch']
  #allocation2 [shape = 'f32[336,128]{1,0:T(8,128)}', space=vmem, size = 0x2a000, scoped, tag = 'scratch operand']
  %s0 = inlined_call_operand.hbm [shape: f32[2,256,128], index: 0, kind: input, shape index: {}]
  %s1 = inlined_call_operand.hbm [shape: f32[9,128], index: 1, kind: input, shape index: {}]
  %s2 = inlined_call_operand.hbm [shape: f32[25,128], index: 2, kind: input, shape index: {}]
  %s3 = inlined_call_operand.hbm [shape: f32[128,128], index: 3, kind: input, shape index: {}]
  %s4 = inlined_call_operand.hbm [shape: f32[128,128], index: 4, kind: input, shape index: {}]
  %s5 = inlined_call_operand.hbm [shape: f32[128,512], index: 5, kind: input, shape index: {}]
  %s6 = inlined_call_operand.hbm [shape: f32[512,128], index: 6, kind: input, shape index: {}]
  %s7 = inlined_call_operand.vmem [shape: f32[1,512], index: 7, kind: input, shape index: {}]
  %s8 = inlined_call_operand.hbm [shape: f32[7,128], index: 8, kind: input, shape index: {}]
  %s9 = inlined_call_operand.hbm [shape: f32[2,256,128], index: 9, kind: output, shape index: {}]
  %s10 = sld [smem:[#allocation0]]
  $region101: #{tpu_custom_call.1} parent=0
    _
  %s12 = ssub.s32 1, %s10
  %s13 = scalar_select 0, %s12, %s10
  $region1: #{tpu_custom_call.1} parent=0
    #allocation3 [shape = 'u8[262144]{0}', space=vmem, size = 0x40000, scoped, tag = 'input window, operand 0']
    #allocation4 [shape = 's32[2]{0}', space=sflag, size = 0x8, scoped, tag = 'scoped memory for tpu_custom_call.1']
    #allocation5 [shape = 's32[2]{0}', space=sflag, size = 0x8, scoped, tag = 'scoped memory for tpu_custom_call.1']
    #allocation6 [shape = 'u8[8192]{0}', space=vmem, size = 0x2000, scoped, tag = 'input window, operand 1, single buffered']
    #allocation7 [shape = 's32[1]{0}', space=sflag, size = 0x4, scoped, tag = 'scoped memory for tpu_custom_call.1']
    #allocation8 [shape = 'u8[16384]{0}', space=vmem, size = 0x4000, scoped, tag = 'input window, operand 2, single buffered']
    #allocation9 [shape = 'u8[65536]{0}', space=vmem, size = 0x10000, scoped, tag = 'input window, operand 3, single buffered']
    #allocation10 [shape = 's32[1]{0}', space=sflag, size = 0x4, scoped, tag = 'scoped memory for tpu_custom_call.1']
    #allocation11 [shape = 'u8[65536]{0}', space=vmem, size = 0x10000, scoped, tag = 'input window, operand 4, single buffered']
    #allocation12 [shape = 'u8[262144]{0}', space=vmem, size = 0x40000, scoped, tag = 'input window, operand 5, single buffered']
    #allocation13 [shape = 's32[1]{0}', space=sflag, size = 0x4, scoped, tag = 'scoped memory for tpu_custom_call.1']
    #allocation14 [shape = 'u8[262144]{0}', space=vmem, size = 0x40000, scoped, tag = 'input window, operand 6, single buffered']
    #allocation15 [shape = 'u8[4096]{0}', space=vmem, size = 0x1000, scoped, tag = 'input window, operand 8, single buffered']
    #allocation16 [shape = 's32[1]{0}', space=sflag, size = 0x4, scoped, tag = 'scoped memory for tpu_custom_call.1']
    #allocation17 [shape = 'u8[262144]{0}', space=vmem, size = 0x40000, scoped, tag = 'output window, operand 0']
    %14 = vsyncpa [#allocation4], 0
    %s15 = scalar_lea.sflag [#allocation4], 1
    %16 = vsyncpa %s15, 0
    %17 = vsyncpa [#allocation7], 0
    %18 = vsyncpa [#allocation10], 0
    %19 = vsyncpa [#allocation13], 0
    %20 = vsyncpa [#allocation16], 0
    %21 = vsyncpa [#allocation5], 0
    %s22 = scalar_lea.sflag [#allocation5], 1
    %23 = vsyncpa %s22, 0
    loop: start=0, step=1, limit=4
    $region2: #{tpu_custom_call.1} parent=1 // loop_pre_header
      _
    $region3: #{tpu_custom_call.1} parent=1 // loop_header
      %s25 = sphi 0, %s29
      %p26 = scmp.ge.s32.totalorder %s25, 4
      %s35 = sphi 0, %s37
      %s38 = sphi 0, %s35
      %s39 = sphi 0, %s38
      %s55 = sphi 0, %s39
      %s59 = sphi 0, %s59
      %s61 = sphi 0, %s59
      %s62 = sphi 0, %s61
      %s76 = sphi 0, %s62
      %s80 = sphi 0, %s80
      %s82 = sphi 0, %s80
      %s83 = sphi 0, %s82
      %s97 = sphi 0, %s83
      %s101 = sphi 0, %s101
      %s103 = sphi 0, %s101
      %s104 = sphi 0, %s103
      %s118 = sphi 0, %s104
      %s122 = sphi 0, %s122
      %s124 = sphi 0, %s122
      %s125 = sphi 0, %s124
      %s139 = sphi 0, %s125
      %s143 = sphi 0, %s143
      %s145 = sphi 0, %s143
      %s146 = sphi 0, %s145
      %s160 = sphi 0, %s146
      %s164 = sphi 0, %s164
      %s166 = sphi 0, %s164
      %s167 = sphi 0, %s166
      %s181 = sphi 0, %s167
      %s185 = sphi 0, %s185
      %s187 = sphi 0, %s185
      %s188 = sphi 0, %s187
      %s202 = sphi 0, %s188
      %s206 = sphi 0, %s206
      %s208 = sphi 0, %s206
      %s209 = sphi 0, %s208
      %s223 = sphi 0, %s209
      %s229 = sphi 0, %s231
      %s232 = sphi 0, %s229
      %s233 = sphi 0, %s232
      %s249 = sphi 0, %s233
    $region4: #{tpu_custom_call.1} parent=1 // loop_header_branch
      %28 = sbr.rel (%p26) target = $region8
    $region5: #{tpu_custom_call.1} parent=1 // loop_body
      %s30 = ssub.s32 %s25, 1
      %s31 = ssub.s32 %s25, 2
      %s32 = sadd.s32 %s25, 1
      %s33 = ssub.s32 %s25, %s32
      %p34 = scmp.eq.s32.totalorder %s33, 0
      %s36 = sadd.s32 %s35, 1
      %s37 = scalar_select %p34, %s35, %s36
      %p40 = pneg %p34
      %p41 = scmp.eq.s32.totalorder %s25, 1
      %p42 = por %p40, %p41
      %p43 = scmp.ne.s32.totalorder %s35, %s38
      %p44 = scmp.eq.s32.totalorder %s25, 0
      %p45 = por %p43, %p44
      %p46 = scmp.ne.s32.totalorder %s35, %s38
      %p47 = scmp.eq.s32.totalorder %s30, 1
      %p48 = por %p46, %p47
      %p49 = scmp.ne.s32.totalorder %s38, %s39
      %p50 = scmp.eq.s32.totalorder %s30, 0
      %p51 = por %p49, %p50
      %p52 = scmp.ne.s32.totalorder %s38, %s39
      %p53 = scmp.eq.s32.totalorder %s31, 1
      %p54 = por %p52, %p53
      %p56 = scmp.ne.s32.totalorder %s39, %s55
      %p57 = scmp.eq.s32.totalorder %s31, 0
      %p58 = por %p56, %p57
      %s60 = sadd.s32 %s59, 1
      %p63 = scmp.eq.s32.totalorder %s25, 1
      %p64 = scmp.ne.s32.totalorder %s59, %s61
      %p65 = scmp.eq.s32.totalorder %s25, 0
      %p66 = por %p64, %p65
      %p67 = scmp.ne.s32.totalorder %s59, %s61
      %p68 = scmp.eq.s32.totalorder %s30, 1
      %p69 = por %p67, %p68
      %p70 = scmp.ne.s32.totalorder %s61, %s62
      %p71 = scmp.eq.s32.totalorder %s30, 0
      %p72 = por %p70, %p71
      %p73 = scmp.ne.s32.totalorder %s61, %s62
      %p74 = scmp.eq.s32.totalorder %s31, 1
      %p75 = por %p73, %p74
      %p77 = scmp.ne.s32.totalorder %s62, %s76
      %p78 = scmp.eq.s32.totalorder %s31, 0
      %p79 = por %p77, %p78
      %s81 = sadd.s32 %s80, 1
      %p84 = scmp.eq.s32.totalorder %s25, 1
      %p85 = scmp.ne.s32.totalorder %s80, %s82
      %p86 = scmp.eq.s32.totalorder %s25, 0
      %p87 = por %p85, %p86
      %p88 = scmp.ne.s32.totalorder %s80, %s82
      %p89 = scmp.eq.s32.totalorder %s30, 1
      %p90 = por %p88, %p89
      %p91 = scmp.ne.s32.totalorder %s82, %s83
      %p92 = scmp.eq.s32.totalorder %s30, 0
      %p93 = por %p91, %p92
      %p94 = scmp.ne.s32.totalorder %s82, %s83
      %p95 = scmp.eq.s32.totalorder %s31, 1
      %p96 = por %p94, %p95
      %p98 = scmp.ne.s32.totalorder %s83, %s97
      %p99 = scmp.eq.s32.totalorder %s31, 0
      %p100 = por %p98, %p99
      %s102 = sadd.s32 %s101, 1
      %p105 = scmp.eq.s32.totalorder %s25, 1
      %p106 = scmp.ne.s32.totalorder %s101, %s103
      %p107 = scmp.eq.s32.totalorder %s25, 0
      %p108 = por %p106, %p107
      %p109 = scmp.ne.s32.totalorder %s101, %s103
      %p110 = scmp.eq.s32.totalorder %s30, 1
      %p111 = por %p109, %p110
      %p112 = scmp.ne.s32.totalorder %s103, %s104
      %p113 = scmp.eq.s32.totalorder %s30, 0
      %p114 = por %p112, %p113
      %p115 = scmp.ne.s32.totalorder %s103, %s104
      %p116 = scmp.eq.s32.totalorder %s31, 1
      %p117 = por %p115, %p116
      %p119 = scmp.ne.s32.totalorder %s104, %s118
      %p120 = scmp.eq.s32.totalorder %s31, 0
      %p121 = por %p119, %p120
      %s123 = sadd.s32 %s122, 1
      %p126 = scmp.eq.s32.totalorder %s25, 1
      %p127 = scmp.ne.s32.totalorder %s122, %s124
      %p128 = scmp.eq.s32.totalorder %s25, 0
      %p129 = por %p127, %p128
      %p130 = scmp.ne.s32.totalorder %s122, %s124
      %p131 = scmp.eq.s32.totalorder %s30, 1
      %p132 = por %p130, %p131
      %p133 = scmp.ne.s32.totalorder %s124, %s125
      %p134 = scmp.eq.s32.totalorder %s30, 0
      %p135 = por %p133, %p134
      %p136 = scmp.ne.s32.totalorder %s124, %s125
      %p137 = scmp.eq.s32.totalorder %s31, 1
      %p138 = por %p136, %p137
      %p140 = scmp.ne.s32.totalorder %s125, %s139
      %p141 = scmp.eq.s32.totalorder %s31, 0
      %p142 = por %p140, %p141
      %s144 = sadd.s32 %s143, 1
      %p147 = scmp.eq.s32.totalorder %s25, 1
      %p148 = scmp.ne.s32.totalorder %s143, %s145
      %p149 = scmp.eq.s32.totalorder %s25, 0
      %p150 = por %p148, %p149
      %p151 = scmp.ne.s32.totalorder %s143, %s145
      %p152 = scmp.eq.s32.totalorder %s30, 1
      %p153 = por %p151, %p152
      %p154 = scmp.ne.s32.totalorder %s145, %s146
      %p155 = scmp.eq.s32.totalorder %s30, 0
      %p156 = por %p154, %p155
      %p157 = scmp.ne.s32.totalorder %s145, %s146
      %p158 = scmp.eq.s32.totalorder %s31, 1
      %p159 = por %p157, %p158
      %p161 = scmp.ne.s32.totalorder %s146, %s160
      %p162 = scmp.eq.s32.totalorder %s31, 0
      %p163 = por %p161, %p162
      %s165 = sadd.s32 %s164, 1
      %p168 = scmp.eq.s32.totalorder %s25, 1
      %p169 = scmp.ne.s32.totalorder %s164, %s166
      %p170 = scmp.eq.s32.totalorder %s25, 0
      %p171 = por %p169, %p170
      %p172 = scmp.ne.s32.totalorder %s164, %s166
      %p173 = scmp.eq.s32.totalorder %s30, 1
      %p174 = por %p172, %p173
      %p175 = scmp.ne.s32.totalorder %s166, %s167
      %p176 = scmp.eq.s32.totalorder %s30, 0
      %p177 = por %p175, %p176
      %p178 = scmp.ne.s32.totalorder %s166, %s167
      %p179 = scmp.eq.s32.totalorder %s31, 1
      %p180 = por %p178, %p179
      %p182 = scmp.ne.s32.totalorder %s167, %s181
      %p183 = scmp.eq.s32.totalorder %s31, 0
      %p184 = por %p182, %p183
      %s186 = sadd.s32 %s185, 1
      %p189 = scmp.eq.s32.totalorder %s25, 1
      %p190 = scmp.ne.s32.totalorder %s185, %s187
      %p191 = scmp.eq.s32.totalorder %s25, 0
      %p192 = por %p190, %p191
      %p193 = scmp.ne.s32.totalorder %s185, %s187
      %p194 = scmp.eq.s32.totalorder %s30, 1
      %p195 = por %p193, %p194
      %p196 = scmp.ne.s32.totalorder %s187, %s188
      %p197 = scmp.eq.s32.totalorder %s30, 0
      %p198 = por %p196, %p197
      %p199 = scmp.ne.s32.totalorder %s187, %s188
      %p200 = scmp.eq.s32.totalorder %s31, 1
      %p201 = por %p199, %p200
      %p203 = scmp.ne.s32.totalorder %s188, %s202
      %p204 = scmp.eq.s32.totalorder %s31, 0
      %p205 = por %p203, %p204
      %s207 = sadd.s32 %s206, 1
      %p210 = scmp.eq.s32.totalorder %s25, 1
      %p211 = scmp.ne.s32.totalorder %s206, %s208
      %p212 = scmp.eq.s32.totalorder %s25, 0
      %p213 = por %p211, %p212
      %p214 = scmp.ne.s32.totalorder %s206, %s208
      %p215 = scmp.eq.s32.totalorder %s30, 1
      %p216 = por %p214, %p215
      %p217 = scmp.ne.s32.totalorder %s208, %s209
      %p218 = scmp.eq.s32.totalorder %s30, 0
      %p219 = por %p217, %p218
      %p220 = scmp.ne.s32.totalorder %s208, %s209
      %p221 = scmp.eq.s32.totalorder %s31, 1
      %p222 = por %p220, %p221
      %p224 = scmp.ne.s32.totalorder %s209, %s223
      %p225 = scmp.eq.s32.totalorder %s31, 0
      %p226 = por %p224, %p225
      %s227 = ssub.s32 %s25, %s32
      %p228 = scmp.eq.s32.totalorder %s227, 0
      %s230 = sadd.s32 %s229, 1
      %s231 = scalar_select %p228, %s229, %s230
      %p234 = pneg %p228
      %p235 = scmp.eq.s32.totalorder %s25, 1
      %p236 = por %p234, %p235
      %p237 = scmp.ne.s32.totalorder %s229, %s232
      %p238 = scmp.eq.s32.totalorder %s25, 0
      %p239 = por %p237, %p238
      %p240 = scmp.ne.s32.totalorder %s229, %s232
      %p241 = scmp.eq.s32.totalorder %s30, 1
      %p242 = por %p240, %p241
      %p243 = scmp.ne.s32.totalorder %s232, %s233
      %p244 = scmp.eq.s32.totalorder %s30, 0
      %p245 = por %p243, %p244
      %p246 = scmp.ne.s32.totalorder %s232, %s233
      %p247 = scmp.eq.s32.totalorder %s31, 1
      %p248 = por %p246, %p247
      %p250 = scmp.ne.s32.totalorder %s233, %s249
      %p251 = scmp.eq.s32.totalorder %s31, 0
      %p252 = por %p250, %p251
      %p253 = scmp.le.s32.totalorder 1, %s25
      %p254 = scmp.lt.s32.totalorder %s25, 3
      %p255 = pnand %p253, %p254
      %p256 = pneg %p255
      // Predicated region
      $region9: #{tpu_custom_call.1} parent=5 // pred_check
        _
      $region10: #{tpu_custom_call.1} parent=5 // pred_check_branch
        %258 = sbr.rel (%p255) target = $region12
      $region11: #{tpu_custom_call.1} parent=5 // pred_region
        %s259 = ssub.s32 %s25, 1
        // Predicated region
        $region13: #{tpu_custom_call.1} parent=11 // pred_check
          %p260 = pneg %p72
        $region14: #{tpu_custom_call.1} parent=11 // pred_check_branch
          %262 = sbr.rel (%p260) target = $region16
        $region15: #{tpu_custom_call.1} parent=11 // pred_region
          %264 = vsyncadd [#allocation7], 0
          %s265 = sshll.u32 %s1, 4
          %s266 = int_to_ptr.hbm [resolvable:$true] %s265
          %s267 = sshll.u32 [#allocation6], 4
          %s268 = int_to_ptr.vmem [resolvable:$true] %s267
          %273 = dma.hbm_to_vmem [thread:$0]  %s266, 256, %s268, [#allocation7], 128, 128, 8
        $region16: #{tpu_custom_call.1} parent=11 // pred_fallthru
          _
        // Predicated region
        $region17: #{tpu_custom_call.1} parent=11 // pred_check
          %p274 = pneg %p93
        $region18: #{tpu_custom_call.1} parent=11 // pred_check_branch
          %276 = sbr.rel (%p274) target = $region20
        $region19: #{tpu_custom_call.1} parent=11 // pred_region
          %278 = vsyncadd [#allocation7], 0
          %s279 = sshll.u32 %s2, 4
          %s280 = int_to_ptr.hbm [resolvable:$true] %s279
          %s281 = sshll.u32 [#allocation8], 4
          %s282 = int_to_ptr.vmem [resolvable:$true] %s281
          %287 = dma.hbm_to_vmem [thread:$0]  %s280, 512, %s282, [#allocation7], 128, 128, 8
        $region20: #{tpu_custom_call.1} parent=11 // pred_fallthru
          _
        // Predicated region
        $region21: #{tpu_custom_call.1} parent=11 // pred_check
          %p288 = pneg %p114
        $region22: #{tpu_custom_call.1} parent=11 // pred_check_branch
          %290 = sbr.rel (%p288) target = $region24
        $region23: #{tpu_custom_call.1} parent=11 // pred_region
          %292 = vsyncadd [#allocation10], 0
          %s293 = sshll.u32 %s3, 4
          %s294 = int_to_ptr.hbm [resolvable:$true] %s293
          %s295 = sshll.u32 [#allocation9], 4
          %s296 = int_to_ptr.vmem [resolvable:$true] %s295
          %301 = dma.hbm_to_vmem [thread:$0]  %s294, 2048, %s296, [#allocation10], 128, 128, 8
        $region24: #{tpu_custom_call.1} parent=11 // pred_fallthru
          _
        // Predicated region
        $region25: #{tpu_custom_call.1} parent=11 // pred_check
          %p302 = pneg %p135
        $region26: #{tpu_custom_call.1} parent=11 // pred_check_branch
          %304 = sbr.rel (%p302) target = $region28
        $region27: #{tpu_custom_call.1} parent=11 // pred_region
          %306 = vsyncadd [#allocation10], 0
          %s307 = sshll.u32 %s4, 4
          %s308 = int_to_ptr.hbm [resolvable:$true] %s307
          %s309 = sshll.u32 [#allocation11], 4
          %s310 = int_to_ptr.vmem [resolvable:$true] %s309
          %315 = dma.hbm_to_vmem [thread:$0]  %s308, 2048, %s310, [#allocation10], 128, 128, 8
        $region28: #{tpu_custom_call.1} parent=11 // pred_fallthru
          _
        // Predicated region
        $region29: #{tpu_custom_call.1} parent=11 // pred_check
          %p316 = pneg %p156
        $region30: #{tpu_custom_call.1} parent=11 // pred_check_branch
          %318 = sbr.rel (%p316) target = $region32
        $region31: #{tpu_custom_call.1} parent=11 // pred_region
          %320 = vsyncadd [#allocation13], 0
          %s321 = sshll.u32 %s5, 4
          %s322 = int_to_ptr.hbm [resolvable:$true] %s321
          %s323 = sshll.u32 [#allocation12], 4
          %s324 = int_to_ptr.vmem [resolvable:$true] %s323
          %329 = dma.hbm_to_vmem [thread:$0]  %s322, 8192, %s324, [#allocation13], 512, 512, 32
        $region32: #{tpu_custom_call.1} parent=11 // pred_fallthru
          _
        // Predicated region
        $region33: #{tpu_custom_call.1} parent=11 // pred_check
          %p330 = pneg %p177
        $region34: #{tpu_custom_call.1} parent=11 // pred_check_branch
          %332 = sbr.rel (%p330) target = $region36
        $region35: #{tpu_custom_call.1} parent=11 // pred_region
          %334 = vsyncadd [#allocation13], 0
          %s335 = sshll.u32 %s6, 4
          %s336 = int_to_ptr.hbm [resolvable:$true] %s335
          %s337 = sshll.u32 [#allocation14], 4
          %s338 = int_to_ptr.vmem [resolvable:$true] %s337
          %343 = dma.hbm_to_vmem [thread:$0]  %s336, 8192, %s338, [#allocation13], 128, 128, 8
        $region36: #{tpu_custom_call.1} parent=11 // pred_fallthru
          _
        // Predicated region
        $region37: #{tpu_custom_call.1} parent=11 // pred_check
          %p344 = pneg %p198
        $region38: #{tpu_custom_call.1} parent=11 // pred_check_branch
          %346 = sbr.rel (%p344) target = $region40
        $region39: #{tpu_custom_call.1} parent=11 // pred_region
          _
        $region40: #{tpu_custom_call.1} parent=11 // pred_fallthru
          _
        // Predicated region
        $region41: #{tpu_custom_call.1} parent=11 // pred_check
          %p347 = pneg %p219
        $region42: #{tpu_custom_call.1} parent=11 // pred_check_branch
          %349 = sbr.rel (%p347) target = $region44
        $region43: #{tpu_custom_call.1} parent=11 // pred_region
          %351 = vsyncadd [#allocation16], 0
          %s353 = sshll.u32 %s8, 4
          %s354 = int_to_ptr.hbm [resolvable:$true] %s353
          %s355 = sshll.u32 [#allocation15], 4
          %s356 = int_to_ptr.vmem [resolvable:$true] %s355
          %358 = dma.hbm_to_vmem [thread:$0]  %s354, 128, %s356, [#allocation16]
        $region44: #{tpu_custom_call.1} parent=11 // pred_fallthru
          _
      $region12: #{tpu_custom_call.1} parent=5 // pred_fallthru
        _
      %p359 = scmp.lt.s32.totalorder %s25, 2
      // Predicated region
      $region45: #{tpu_custom_call.1} parent=5 // pred_check
        %p360 = pneg %p359
      $region46: #{tpu_custom_call.1} parent=5 // pred_check_branch
        %362 = sbr.rel (%p360) target = $region48
      $region47: #{tpu_custom_call.1} parent=5 // pred_region
        // Predicated region
        $region49: #{tpu_custom_call.1} parent=47 // pred_check
          %p363 = pneg %p45
        $region50: #{tpu_custom_call.1} parent=47 // pred_check_branch
          %365 = sbr.rel (%p363) target = $region52
        $region51: #{tpu_custom_call.1} parent=47 // pred_region
          %s366 = sand.u32 %s35, 1
          %s367 = scalar_lea.sflag [#allocation4], %s366
          %s368 = sand.u32 %s35, 1
          %s369 = smul.addr %s368, 256
          %s370 = scalar_lea.vmem [#allocation3], %s369
          %372 = vsyncadd %s367, 0
          %s373 = smul.addr %s25, 32
          %s374 = smul.addr %s373, 8
          %s375 = scalar_lea.hbm %s0, %s374
          %s376 = sshll.u32 %s375, 4
          %s377 = int_to_ptr.hbm [resolvable:$true] %s376
          %s378 = sshll.u32 %s370, 4
          %s379 = int_to_ptr.vmem [resolvable:$true] %s378
          %384 = dma.hbm_to_vmem [thread:$0]  %s377, 4096, %s379, %s367, 128, 128, 8
        $region52: #{tpu_custom_call.1} parent=47 // pred_fallthru
          _
      $region48: #{tpu_custom_call.1} parent=5 // pred_fallthru
        _
      %p385 = scmp.le.s32.totalorder 1, %s25
      %p386 = scmp.lt.s32.totalorder %s25, 3
      %p387 = pnand %p385, %p386
      %p388 = pneg %p387
      // Predicated region
      $region53: #{tpu_custom_call.1} parent=5 // pred_check
        _
      $region54: #{tpu_custom_call.1} parent=5 // pred_check_branch
        %390 = sbr.rel (%p387) target = $region56
      $region55: #{tpu_custom_call.1} parent=5 // pred_region
        %s391 = ssub.s32 %s25, 1
        %s392 = sand.u32 %s38, 1
        %s393 = scalar_lea.sflag [#allocation4], %s392
        %s394 = sand.u32 %s38, 1
        %s395 = smul.addr %s394, 256
        %s396 = scalar_lea.vmem [#allocation3], %s395
        // Predicated region
        $region57: #{tpu_custom_call.1} parent=55 // pred_check
          %p397 = pneg %p51
        $region58: #{tpu_custom_call.1} parent=55 // pred_check_branch
          %399 = sbr.rel (%p397) target = $region60
        $region59: #{tpu_custom_call.1} parent=55 // pred_region
          %401 = dma.done %s393, 4096
        $region60: #{tpu_custom_call.1} parent=55 // pred_fallthru
          _
        // Predicated region
        $region61: #{tpu_custom_call.1} parent=55 // pred_check
          %p402 = pneg %p72
        $region62: #{tpu_custom_call.1} parent=55 // pred_check_branch
          %404 = sbr.rel (%p402) target = $region64
        $region63: #{tpu_custom_call.1} parent=55 // pred_region
          %406 = dma.done [#allocation7], 256
        $region64: #{tpu_custom_call.1} parent=55 // pred_fallthru
          _
        // Predicated region
        $region65: #{tpu_custom_call.1} parent=55 // pred_check
          %p407 = pneg %p93
        $region66: #{tpu_custom_call.1} parent=55 // pred_check_branch
          %409 = sbr.rel (%p407) target = $region68
        $region67: #{tpu_custom_call.1} parent=55 // pred_region
          %411 = dma.done [#allocation7], 512
        $region68: #{tpu_custom_call.1} parent=55 // pred_fallthru
          _
        // Predicated region
        $region69: #{tpu_custom_call.1} parent=55 // pred_check
          %p412 = pneg %p114
        $region70: #{tpu_custom_call.1} parent=55 // pred_check_branch
          %414 = sbr.rel (%p412) target = $region72
        $region71: #{tpu_custom_call.1} parent=55 // pred_region
          %416 = dma.done [#allocation10], 2048
        $region72: #{tpu_custom_call.1} parent=55 // pred_fallthru
          _
        // Predicated region
        $region73: #{tpu_custom_call.1} parent=55 // pred_check
          %p417 = pneg %p135
        $region74: #{tpu_custom_call.1} parent=55 // pred_check_branch
          %419 = sbr.rel (%p417) target = $region76
        $region75: #{tpu_custom_call.1} parent=55 // pred_region
          %421 = dma.done [#allocation10], 2048
        $region76: #{tpu_custom_call.1} parent=55 // pred_fallthru
          _
        // Predicated region
        $region77: #{tpu_custom_call.1} parent=55 // pred_check
          %p422 = pneg %p156
        $region78: #{tpu_custom_call.1} parent=55 // pred_check_branch
          %424 = sbr.rel (%p422) target = $region80
        $region79: #{tpu_custom_call.1} parent=55 // pred_region
          %426 = dma.done [#allocation13], 8192
        $region80: #{tpu_custom_call.1} parent=55 // pred_fallthru
          _
        // Predicated region
        $region81: #{tpu_custom_call.1} parent=55 // pred_check
          %p427 = pneg %p177
        $region82: #{tpu_custom_call.1} parent=55 // pred_check_branch
          %429 = sbr.rel (%p427) target = $region84
        $region83: #{tpu_custom_call.1} parent=55 // pred_region
          %431 = dma.done [#allocation13], 8192
        $region84: #{tpu_custom_call.1} parent=55 // pred_fallthru
          _
        // Predicated region
        $region85: #{tpu_custom_call.1} parent=55 // pred_check
          %p432 = pneg %p219
        $region86: #{tpu_custom_call.1} parent=55 // pred_check_branch
          %434 = sbr.rel (%p432) target = $region88
        $region87: #{tpu_custom_call.1} parent=55 // pred_region
          %436 = dma.done [#allocation16], 128
        $region88: #{tpu_custom_call.1} parent=55 // pred_fallthru
          _
        %s437 = sand.u32 %s38, 1
        %s438 = scalar_lea.sflag [#allocation4], %s437
        %s439 = sand.u32 %s38, 1
        %s440 = smul.addr %s439, 256
        %s441 = scalar_lea.vmem [#allocation3], %s440
        %p442 = pneg %p51
        %p443 = pneg %p48
        %p444 = pneg %p72
        %p445 = pneg %p69
        %p446 = pneg %p93
        %p447 = pneg %p90
        %p448 = pneg %p114
        %p449 = pneg %p111
        %p450 = pneg %p135
        %p451 = pneg %p132
        %p452 = pneg %p156
        %p453 = pneg %p153
        %p454 = pneg %p177
        %p455 = pneg %p174
        %p456 = pneg %p198
        %p457 = pneg %p195
        %p458 = pneg %p219
        %p459 = pneg %p216
        %p460 = pneg %p245
        %p461 = pneg %p242
        %s462 = sand.u32 %s232, 1
        %s463 = scalar_lea.sflag [#allocation5], %s462
        %s464 = sand.u32 %s232, 1
        %s465 = smul.addr %s464, 256
        %s466 = scalar_lea.vmem [#allocation17], %s465
        %467 = vst [vmem:[#allocation2] sm:$0xff] 0.0
        %468 = vst [vmem:[#allocation2 + $0x8] sm:$0xff] 0.0
        %469 = vst [vmem:[#allocation2 + $0x10] sm:$0xff] 0.0
        %470 = vst [vmem:[#allocation2 + $0x18] sm:$0xff] 0.0
        %471 = vst [vmem:[#allocation2 + $0x20] sm:$0xff] 0.0
        %472 = vst [vmem:[#allocation2 + $0x128] sm:$0xff] 0.0
        %473 = vst [vmem:[#allocation2 + $0x130] sm:$0xff] 0.0
        %474 = vst [vmem:[#allocation2 + $0x138] sm:$0xff] 0.0
        %475 = vst [vmem:[#allocation2 + $0x140] sm:$0xff] 0.0
        %476 = vst [vmem:[#allocation2 + $0x148] sm:$0xff] 0.0
        %v477 = vlaneseq
        %v478 = vshrl.u32 %v477, 7
        %v479 = vadd.s32 %v478, 8
        %v480 = vadd.s32 %v478, 16
        %v481 = vadd.s32 %v478, 24
        %v482 = vadd.s32 %v478, 32
        %v483 = vadd.s32 %v478, 40
        %v484 = vadd.s32 %v478, 48
        %v485 = vadd.s32 %v478, 56
        %v486 = vadd.s32 %v478, 64
        %v487 = vadd.s32 %v478, 72
        %v488 = vadd.s32 %v478, 80
        %v489 = vadd.s32 %v478, 88
        %v490 = vadd.s32 %v478, 96
        %v491 = vadd.s32 %v478, 104
        %v492 = vadd.s32 %v478, 112
        %v493 = vadd.s32 %v478, 120
        %v494 = vadd.s32 %v478, 128
        %v495 = vadd.s32 %v478, 136
        %v496 = vadd.s32 %v478, 144
        %v497 = vadd.s32 %v478, 152
        %v498 = vadd.s32 %v478, 160
        %v499 = vadd.s32 %v478, 168
        %v500 = vadd.s32 %v478, 176
        %v501 = vadd.s32 %v478, 184
        %v502 = vadd.s32 %v478, 192
        %v503 = vadd.s32 %v478, 200
        %v504 = vadd.s32 %v478, 208
        %v505 = vadd.s32 %v478, 216
        %v506 = vadd.s32 %v478, 224
        %v507 = vadd.s32 %v478, 232
        %v508 = vadd.s32 %v478, 240
        %v509 = vadd.s32 %v478, 248
        %vm510 = vcmp.lt.s32.totalorder %v478, 0
        %v511 = vsub.s32 0, %v478
        %v512 = vsel %vm510, %v511, %v478
        %v513 = vshrl.u32 %v512, 4
        %v514 = vand.u32 %v512, 15
        %v515 = vsub.s32 0, %v514
        %v516 = vsel %vm510, %v515, %v514
        %vm517 = vcmp.lt.s32.totalorder %v479, 0
        %v518 = vsub.s32 0, %v479
        %v519 = vsel %vm517, %v518, %v479
        %v520 = vshrl.u32 %v519, 4
        %v521 = vand.u32 %v519, 15
        %v522 = vsub.s32 0, %v521
        %v523 = vsel %vm517, %v522, %v521
        %vm524 = vcmp.lt.s32.totalorder %v480, 0
        %v525 = vsub.s32 0, %v480
        %v526 = vsel %vm524, %v525, %v480
        %v527 = vshrl.u32 %v526, 4
        %v528 = vand.u32 %v526, 15
        %v529 = vsub.s32 0, %v528
        %v530 = vsel %vm524, %v529, %v528
        %vm531 = vcmp.lt.s32.totalorder %v481, 0
        %v532 = vsub.s32 0, %v481
        %v533 = vsel %vm531, %v532, %v481
        %v534 = vshrl.u32 %v533, 4
        %v535 = vand.u32 %v533, 15
        %v536 = vsub.s32 0, %v535
        %v537 = vsel %vm531, %v536, %v535
        %vm538 = vcmp.lt.s32.totalorder %v482, 0
        %v539 = vsub.s32 0, %v482
        %v540 = vsel %vm538, %v539, %v482
        %v541 = vshrl.u32 %v540, 4
        %v542 = vand.u32 %v540, 15
        %v543 = vsub.s32 0, %v542
        %v544 = vsel %vm538, %v543, %v542
        %vm545 = vcmp.lt.s32.totalorder %v483, 0
        %v546 = vsub.s32 0, %v483
        %v547 = vsel %vm545, %v546, %v483
        %v548 = vshrl.u32 %v547, 4
        %v549 = vand.u32 %v547, 15
        %v550 = vsub.s32 0, %v549
        %v551 = vsel %vm545, %v550, %v549
        %vm552 = vcmp.lt.s32.totalorder %v484, 0
        %v553 = vsub.s32 0, %v484
        %v554 = vsel %vm552, %v553, %v484
        %v555 = vshrl.u32 %v554, 4
        %v556 = vand.u32 %v554, 15
        %v557 = vsub.s32 0, %v556
        %v558 = vsel %vm552, %v557, %v556
        %vm559 = vcmp.lt.s32.totalorder %v485, 0
        %v560 = vsub.s32 0, %v485
        %v561 = vsel %vm559, %v560, %v485
        %v562 = vshrl.u32 %v561, 4
        %v563 = vand.u32 %v561, 15
        %v564 = vsub.s32 0, %v563
        %v565 = vsel %vm559, %v564, %v563
        %vm566 = vcmp.lt.s32.totalorder %v486, 0
        %v567 = vsub.s32 0, %v486
        %v568 = vsel %vm566, %v567, %v486
        %v569 = vshrl.u32 %v568, 4
        %v570 = vand.u32 %v568, 15
        %v571 = vsub.s32 0, %v570
        %v572 = vsel %vm566, %v571, %v570
        %vm573 = vcmp.lt.s32.totalorder %v487, 0
        %v574 = vsub.s32 0, %v487
        %v575 = vsel %vm573, %v574, %v487
        %v576 = vshrl.u32 %v575, 4
        %v577 = vand.u32 %v575, 15
        %v578 = vsub.s32 0, %v577
        %v579 = vsel %vm573, %v578, %v577
        %vm580 = vcmp.lt.s32.totalorder %v488, 0
        %v581 = vsub.s32 0, %v488
        %v582 = vsel %vm580, %v581, %v488
        %v583 = vshrl.u32 %v582, 4
        %v584 = vand.u32 %v582, 15
        %v585 = vsub.s32 0, %v584
        %v586 = vsel %vm580, %v585, %v584
        %vm587 = vcmp.lt.s32.totalorder %v489, 0
        %v588 = vsub.s32 0, %v489
        %v589 = vsel %vm587, %v588, %v489
        %v590 = vshrl.u32 %v589, 4
        %v591 = vand.u32 %v589, 15
        %v592 = vsub.s32 0, %v591
        %v593 = vsel %vm587, %v592, %v591
        %vm594 = vcmp.lt.s32.totalorder %v490, 0
        %v595 = vsub.s32 0, %v490
        %v596 = vsel %vm594, %v595, %v490
        %v597 = vshrl.u32 %v596, 4
        %v598 = vand.u32 %v596, 15
        %v599 = vsub.s32 0, %v598
        %v600 = vsel %vm594, %v599, %v598
        %vm601 = vcmp.lt.s32.totalorder %v491, 0
        %v602 = vsub.s32 0, %v491
        %v603 = vsel %vm601, %v602, %v491
        %v604 = vshrl.u32 %v603, 4
        %v605 = vand.u32 %v603, 15
        %v606 = vsub.s32 0, %v605
        %v607 = vsel %vm601, %v606, %v605
        %vm608 = vcmp.lt.s32.totalorder %v492, 0
        %v609 = vsub.s32 0, %v492
        %v610 = vsel %vm608, %v609, %v492
        %v611 = vshrl.u32 %v610, 4
        %v612 = vand.u32 %v610, 15
        %v613 = vsub.s32 0, %v612
        %v614 = vsel %vm608, %v613, %v612
        %vm615 = vcmp.lt.s32.totalorder %v493, 0
        %v616 = vsub.s32 0, %v493
        %v617 = vsel %vm615, %v616, %v493
        %v618 = vshrl.u32 %v617, 4
        %v619 = vand.u32 %v617, 15
        %v620 = vsub.s32 0, %v619
        %v621 = vsel %vm615, %v620, %v619
        %vm622 = vcmp.lt.s32.totalorder %v494, 0
        %v623 = vsub.s32 0, %v494
        %v624 = vsel %vm622, %v623, %v494
        %v625 = vshrl.u32 %v624, 4
        %v626 = vand.u32 %v624, 15
        %v627 = vsub.s32 0, %v626
        %v628 = vsel %vm622, %v627, %v626
        %vm629 = vcmp.lt.s32.totalorder %v495, 0
        %v630 = vsub.s32 0, %v495
        %v631 = vsel %vm629, %v630, %v495
        %v632 = vshrl.u32 %v631, 4
        %v633 = vand.u32 %v631, 15
        %v634 = vsub.s32 0, %v633
        %v635 = vsel %vm629, %v634, %v633
        %vm636 = vcmp.lt.s32.totalorder %v496, 0
        %v637 = vsub.s32 0, %v496
        %v638 = vsel %vm636, %v637, %v496
        %v639 = vshrl.u32 %v638, 4
        %v640 = vand.u32 %v638, 15
        %v641 = vsub.s32 0, %v640
        %v642 = vsel %vm636, %v641, %v640
        %vm643 = vcmp.lt.s32.totalorder %v497, 0
        %v644 = vsub.s32 0, %v497
        %v645 = vsel %vm643, %v644, %v497
        %v646 = vshrl.u32 %v645, 4
        %v647 = vand.u32 %v645, 15
        %v648 = vsub.s32 0, %v647
        %v649 = vsel %vm643, %v648, %v647
        %vm650 = vcmp.lt.s32.totalorder %v498, 0
        %v651 = vsub.s32 0, %v498
        %v652 = vsel %vm650, %v651, %v498
        %v653 = vshrl.u32 %v652, 4
        %v654 = vand.u32 %v652, 15
        %v655 = vsub.s32 0, %v654
        %v656 = vsel %vm650, %v655, %v654
        %vm657 = vcmp.lt.s32.totalorder %v499, 0
        %v658 = vsub.s32 0, %v499
        %v659 = vsel %vm657, %v658, %v499
        %v660 = vshrl.u32 %v659, 4
        %v661 = vand.u32 %v659, 15
        %v662 = vsub.s32 0, %v661
        %v663 = vsel %vm657, %v662, %v661
        %vm664 = vcmp.lt.s32.totalorder %v500, 0
        %v665 = vsub.s32 0, %v500
        %v666 = vsel %vm664, %v665, %v500
        %v667 = vshrl.u32 %v666, 4
        %v668 = vand.u32 %v666, 15
        %v669 = vsub.s32 0, %v668
        %v670 = vsel %vm664, %v669, %v668
        %vm671 = vcmp.lt.s32.totalorder %v501, 0
        %v672 = vsub.s32 0, %v501
        %v673 = vsel %vm671, %v672, %v501
        %v674 = vshrl.u32 %v673, 4
        %v675 = vand.u32 %v673, 15
        %v676 = vsub.s32 0, %v675
        %v677 = vsel %vm671, %v676, %v675
        %vm678 = vcmp.lt.s32.totalorder %v502, 0
        %v679 = vsub.s32 0, %v502
        %v680 = vsel %vm678, %v679, %v502
        %v681 = vshrl.u32 %v680, 4
        %v682 = vand.u32 %v680, 15
        %v683 = vsub.s32 0, %v682
        %v684 = vsel %vm678, %v683, %v682
        %vm685 = vcmp.lt.s32.totalorder %v503, 0
        %v686 = vsub.s32 0, %v503
        %v687 = vsel %vm685, %v686, %v503
        %v688 = vshrl.u32 %v687, 4
        %v689 = vand.u32 %v687, 15
        %v690 = vsub.s32 0, %v689
        %v691 = vsel %vm685, %v690, %v689
        %vm692 = vcmp.lt.s32.totalorder %v504, 0
        %v693 = vsub.s32 0, %v504
        %v694 = vsel %vm692, %v693, %v504
        %v695 = vshrl.u32 %v694, 4
        %v696 = vand.u32 %v694, 15
        %v697 = vsub.s32 0, %v696
        %v698 = vsel %vm692, %v697, %v696
        %vm699 = vcmp.lt.s32.totalorder %v505, 0
        %v700 = vsub.s32 0, %v505
        %v701 = vsel %vm699, %v700, %v505
        %v702 = vshrl.u32 %v701, 4
        %v703 = vand.u32 %v701, 15
        %v704 = vsub.s32 0, %v703
        %v705 = vsel %vm699, %v704, %v703
        %vm706 = vcmp.lt.s32.totalorder %v506, 0
        %v707 = vsub.s32 0, %v506
        %v708 = vsel %vm706, %v707, %v506
        %v709 = vshrl.u32 %v708, 4
        %v710 = vand.u32 %v708, 15
        %v711 = vsub.s32 0, %v710
        %v712 = vsel %vm706, %v711, %v710
        %vm713 = vcmp.lt.s32.totalorder %v507, 0
        %v714 = vsub.s32 0, %v507
        %v715 = vsel %vm713, %v714, %v507
        %v716 = vshrl.u32 %v715, 4
        %v717 = vand.u32 %v715, 15
        %v718 = vsub.s32 0, %v717
        %v719 = vsel %vm713, %v718, %v717
        %vm720 = vcmp.lt.s32.totalorder %v508, 0
        %v721 = vsub.s32 0, %v508
        %v722 = vsel %vm720, %v721, %v508
        %v723 = vshrl.u32 %v722, 4
        %v724 = vand.u32 %v722, 15
        %v725 = vsub.s32 0, %v724
        %v726 = vsel %vm720, %v725, %v724
        %vm727 = vcmp.lt.s32.totalorder %v509, 0
        %v728 = vsub.s32 0, %v509
        %v729 = vsel %vm727, %v728, %v509
        %v730 = vshrl.u32 %v729, 4
        %v731 = vand.u32 %v729, 15
        %v732 = vsub.s32 0, %v731
        %v733 = vsel %vm727, %v732, %v731
        %vm734 = vcmp.ne.s32.totalorder %v516, 0
        %vm735 = vcmp.ne.s32.totalorder %v523, 0
        %vm736 = vcmp.ne.s32.totalorder %v530, 0
        %vm737 = vcmp.ne.s32.totalorder %v537, 0
        %vm738 = vcmp.ne.s32.totalorder %v544, 0
        %vm739 = vcmp.ne.s32.totalorder %v551, 0
        %vm740 = vcmp.ne.s32.totalorder %v558, 0
        %vm741 = vcmp.ne.s32.totalorder %v565, 0
        %vm742 = vcmp.ne.s32.totalorder %v572, 0
        %vm743 = vcmp.ne.s32.totalorder %v579, 0
        %vm744 = vcmp.ne.s32.totalorder %v586, 0
        %vm745 = vcmp.ne.s32.totalorder %v593, 0
        %vm746 = vcmp.ne.s32.totalorder %v600, 0
        %vm747 = vcmp.ne.s32.totalorder %v607, 0
        %vm748 = vcmp.ne.s32.totalorder %v614, 0
        %vm749 = vcmp.ne.s32.totalorder %v621, 0
        %vm750 = vcmp.ne.s32.totalorder %v628, 0
        %vm751 = vcmp.ne.s32.totalorder %v635, 0
        %vm752 = vcmp.ne.s32.totalorder %v642, 0
        %vm753 = vcmp.ne.s32.totalorder %v649, 0
        %vm754 = vcmp.ne.s32.totalorder %v656, 0
        %vm755 = vcmp.ne.s32.totalorder %v663, 0
        %vm756 = vcmp.ne.s32.totalorder %v670, 0
        %vm757 = vcmp.ne.s32.totalorder %v677, 0
        %vm758 = vcmp.ne.s32.totalorder %v684, 0
        %vm759 = vcmp.ne.s32.totalorder %v691, 0
        %vm760 = vcmp.ne.s32.totalorder %v698, 0
        %vm761 = vcmp.ne.s32.totalorder %v705, 0
        %vm762 = vcmp.ne.s32.totalorder %v712, 0
        %vm763 = vcmp.ne.s32.totalorder %v719, 0
        %vm764 = vcmp.ne.s32.totalorder %v726, 0
        %vm765 = vcmp.ne.s32.totalorder %v733, 0
        %vm766 = vcmp.lt.s32.totalorder %v516, 0
        %vm767 = vcmp.lt.s32.totalorder %v523, 0
        %vm768 = vcmp.lt.s32.totalorder %v530, 0
        %vm769 = vcmp.lt.s32.totalorder %v537, 0
        %vm770 = vcmp.lt.s32.totalorder %v544, 0
        %vm771 = vcmp.lt.s32.totalorder %v551, 0
        %vm772 = vcmp.lt.s32.totalorder %v558, 0
        %vm773 = vcmp.lt.s32.totalorder %v565, 0
        %vm774 = vcmp.lt.s32.totalorder %v572, 0
        %vm775 = vcmp.lt.s32.totalorder %v579, 0
        %vm776 = vcmp.lt.s32.totalorder %v586, 0
        %vm777 = vcmp.lt.s32.totalorder %v593, 0
        %vm778 = vcmp.lt.s32.totalorder %v600, 0
        %vm779 = vcmp.lt.s32.totalorder %v607, 0
        %vm780 = vcmp.lt.s32.totalorder %v614, 0
        %vm781 = vcmp.lt.s32.totalorder %v621, 0
        %vm782 = vcmp.lt.s32.totalorder %v628, 0
        %vm783 = vcmp.lt.s32.totalorder %v635, 0
        %vm784 = vcmp.lt.s32.totalorder %v642, 0
        %vm785 = vcmp.lt.s32.totalorder %v649, 0
        %vm786 = vcmp.lt.s32.totalorder %v656, 0
        %vm787 = vcmp.lt.s32.totalorder %v663, 0
        %vm788 = vcmp.lt.s32.totalorder %v670, 0
        %vm789 = vcmp.lt.s32.totalorder %v677, 0
        %vm790 = vcmp.lt.s32.totalorder %v684, 0
        %vm791 = vcmp.lt.s32.totalorder %v691, 0
        %vm792 = vcmp.lt.s32.totalorder %v698, 0
        %vm793 = vcmp.lt.s32.totalorder %v705, 0
        %vm794 = vcmp.lt.s32.totalorder %v712, 0
        %vm795 = vcmp.lt.s32.totalorder %v719, 0
        %vm796 = vcmp.lt.s32.totalorder %v726, 0
        %vm797 = vcmp.lt.s32.totalorder %v733, 0
        %vm798 = vmand %vm766, %vm734
        %vm799 = vmand %vm767, %vm735
        %vm800 = vmand %vm768, %vm736
        %vm801 = vmand %vm769, %vm737
        %vm802 = vmand %vm770, %vm738
        %vm803 = vmand %vm771, %vm739
        %vm804 = vmand %vm772, %vm740
        %vm805 = vmand %vm773, %vm741
        %vm806 = vmand %vm774, %vm742
        %vm807 = vmand %vm775, %vm743
        %vm808 = vmand %vm776, %vm744
        %vm809 = vmand %vm777, %vm745
        %vm810 = vmand %vm778, %vm746
        %vm811 = vmand %vm779, %vm747
        %vm812 = vmand %vm780, %vm748
        %vm813 = vmand %vm781, %vm749
        %vm814 = vmand %vm782, %vm750
        %vm815 = vmand %vm783, %vm751
        %vm816 = vmand %vm784, %vm752
        %vm817 = vmand %vm785, %vm753
        %vm818 = vmand %vm786, %vm754
        %vm819 = vmand %vm787, %vm755
        %vm820 = vmand %vm788, %vm756
        %vm821 = vmand %vm789, %vm757
        %vm822 = vmand %vm790, %vm758
        %vm823 = vmand %vm791, %vm759
        %vm824 = vmand %vm792, %vm760
        %vm825 = vmand %vm793, %vm761
        %vm826 = vmand %vm794, %vm762
        %vm827 = vmand %vm795, %vm763
        %vm828 = vmand %vm796, %vm764
        %vm829 = vmand %vm797, %vm765
        %v830 = vadd.s32 %v516, 16
        %v831 = vadd.s32 %v523, 16
        %v832 = vadd.s32 %v530, 16
        %v833 = vadd.s32 %v537, 16
        %v834 = vadd.s32 %v544, 16
        %v835 = vadd.s32 %v551, 16
        %v836 = vadd.s32 %v558, 16
        %v837 = vadd.s32 %v565, 16
        %v838 = vadd.s32 %v572, 16
        %v839 = vadd.s32 %v579, 16
        %v840 = vadd.s32 %v586, 16
        %v841 = vadd.s32 %v593, 16
        %v842 = vadd.s32 %v600, 16
        %v843 = vadd.s32 %v607, 16
        %v844 = vadd.s32 %v614, 16
        %v845 = vadd.s32 %v621, 16
        %v846 = vadd.s32 %v628, 16
        %v847 = vadd.s32 %v635, 16
        %v848 = vadd.s32 %v642, 16
        %v849 = vadd.s32 %v649, 16
        %v850 = vadd.s32 %v656, 16
        %v851 = vadd.s32 %v663, 16
        %v852 = vadd.s32 %v670, 16
        %v853 = vadd.s32 %v677, 16
        %v854 = vadd.s32 %v684, 16
        %v855 = vadd.s32 %v691, 16
        %v856 = vadd.s32 %v698, 16
        %v857 = vadd.s32 %v705, 16
        %v858 = vadd.s32 %v712, 16
        %v859 = vadd.s32 %v719, 16
        %v860 = vadd.s32 %v726, 16
        %v861 = vadd.s32 %v733, 16
        %v862 = vsel %vm798, %v830, %v516
        %v863 = vsel %vm799, %v831, %v523
        %v864 = vsel %vm800, %v832, %v530
        %v865 = vsel %vm801, %v833, %v537
        %v866 = vsel %vm802, %v834, %v544
        %v867 = vsel %vm803, %v835, %v551
        %v868 = vsel %vm804, %v836, %v558
        %v869 = vsel %vm805, %v837, %v565
        %v870 = vsel %vm806, %v838, %v572
        %v871 = vsel %vm807, %v839, %v579
        %v872 = vsel %vm808, %v840, %v586
        %v873 = vsel %vm809, %v841, %v593
        %v874 = vsel %vm810, %v842, %v600
        %v875 = vsel %vm811, %v843, %v607
        %v876 = vsel %vm812, %v844, %v614
        %v877 = vsel %vm813, %v845, %v621
        %v878 = vsel %vm814, %v846, %v628
        %v879 = vsel %vm815, %v847, %v635
        %v880 = vsel %vm816, %v848, %v642
        %v881 = vsel %vm817, %v849, %v649
        %v882 = vsel %vm818, %v850, %v656
        %v883 = vsel %vm819, %v851, %v663
        %v884 = vsel %vm820, %v852, %v670
        %v885 = vsel %vm821, %v853, %v677
        %v886 = vsel %vm822, %v854, %v684
        %v887 = vsel %vm823, %v855, %v691
        %v888 = vsel %vm824, %v856, %v698
        %v889 = vsel %vm825, %v857, %v705
        %v890 = vsel %vm826, %v858, %v712
        %v891 = vsel %vm827, %v859, %v719
        %v892 = vsel %vm828, %v860, %v726
        %v893 = vsel %vm829, %v861, %v733
        %vm894 = vcmp.ge.s32.totalorder %v862, 2
        %vm895 = vcmp.ge.s32.totalorder %v863, 2
        %vm896 = vcmp.ge.s32.totalorder %v864, 2
        %vm897 = vcmp.ge.s32.totalorder %v865, 2
        %vm898 = vcmp.ge.s32.totalorder %v866, 2
        %vm899 = vcmp.ge.s32.totalorder %v867, 2
        %vm900 = vcmp.ge.s32.totalorder %v868, 2
        %vm901 = vcmp.ge.s32.totalorder %v869, 2
        %vm902 = vcmp.ge.s32.totalorder %v870, 2
        %vm903 = vcmp.ge.s32.totalorder %v871, 2
        %vm904 = vcmp.ge.s32.totalorder %v872, 2
        %vm905 = vcmp.ge.s32.totalorder %v873, 2
        %vm906 = vcmp.ge.s32.totalorder %v874, 2
        %vm907 = vcmp.ge.s32.totalorder %v875, 2
        %vm908 = vcmp.ge.s32.totalorder %v876, 2
        %vm909 = vcmp.ge.s32.totalorder %v877, 2
        %vm910 = vcmp.ge.s32.totalorder %v878, 2
        %vm911 = vcmp.ge.s32.totalorder %v879, 2
        %vm912 = vcmp.ge.s32.totalorder %v880, 2
        %vm913 = vcmp.ge.s32.totalorder %v881, 2
        %vm914 = vcmp.ge.s32.totalorder %v882, 2
        %vm915 = vcmp.ge.s32.totalorder %v883, 2
        %vm916 = vcmp.ge.s32.totalorder %v884, 2
        %vm917 = vcmp.ge.s32.totalorder %v885, 2
        %vm918 = vcmp.ge.s32.totalorder %v886, 2
        %vm919 = vcmp.ge.s32.totalorder %v887, 2
        %vm920 = vcmp.ge.s32.totalorder %v888, 2
        %vm921 = vcmp.ge.s32.totalorder %v889, 2
        %vm922 = vcmp.ge.s32.totalorder %v890, 2
        %vm923 = vcmp.ge.s32.totalorder %v891, 2
        %vm924 = vcmp.ge.s32.totalorder %v892, 2
        %vm925 = vcmp.ge.s32.totalorder %v893, 2
        %vm926 = vcmp.ge.s32.totalorder %v862, 1
        %vm927 = vcmp.ge.s32.totalorder %v863, 1
        %vm928 = vcmp.ge.s32.totalorder %v864, 1
        %vm929 = vcmp.ge.s32.totalorder %v865, 1
        %vm930 = vcmp.ge.s32.totalorder %v866, 1
        %vm931 = vcmp.ge.s32.totalorder %v867, 1
        %vm932 = vcmp.ge.s32.totalorder %v868, 1
        %vm933 = vcmp.ge.s32.totalorder %v869, 1
        %vm934 = vcmp.ge.s32.totalorder %v870, 1
        %vm935 = vcmp.ge.s32.totalorder %v871, 1
        %vm936 = vcmp.ge.s32.totalorder %v872, 1
        %vm937 = vcmp.ge.s32.totalorder %v873, 1
        %vm938 = vcmp.ge.s32.totalorder %v874, 1
        %vm939 = vcmp.ge.s32.totalorder %v875, 1
        %vm940 = vcmp.ge.s32.totalorder %v876, 1
        %vm941 = vcmp.ge.s32.totalorder %v877, 1
        %vm942 = vcmp.ge.s32.totalorder %v878, 1
        %vm943 = vcmp.ge.s32.totalorder %v879, 1
        %vm944 = vcmp.ge.s32.totalorder %v880, 1
        %vm945 = vcmp.ge.s32.totalorder %v881, 1
        %vm946 = vcmp.ge.s32.totalorder %v882, 1
        %vm947 = vcmp.ge.s32.totalorder %v883, 1
        %vm948 = vcmp.ge.s32.totalorder %v884, 1
        %vm949 = vcmp.ge.s32.totalorder %v885, 1
        %vm950 = vcmp.ge.s32.totalorder %v886, 1
        %vm951 = vcmp.ge.s32.totalorder %v887, 1
        %vm952 = vcmp.ge.s32.totalorder %v888, 1
        %vm953 = vcmp.ge.s32.totalorder %v889, 1
        %vm954 = vcmp.ge.s32.totalorder %v890, 1
        %vm955 = vcmp.ge.s32.totalorder %v891, 1
        %vm956 = vcmp.ge.s32.totalorder %v892, 1
        %vm957 = vcmp.ge.s32.totalorder %v893, 1
        %vm958 = vcmp.lt.s32.totalorder %v862, 15
        %vm959 = vcmp.lt.s32.totalorder %v863, 15
        %vm960 = vcmp.lt.s32.totalorder %v864, 15
        %vm961 = vcmp.lt.s32.totalorder %v865, 15
        %vm962 = vcmp.lt.s32.totalorder %v866, 15
        %vm963 = vcmp.lt.s32.totalorder %v867, 15
        %vm964 = vcmp.lt.s32.totalorder %v868, 15
        %vm965 = vcmp.lt.s32.totalorder %v869, 15
        %vm966 = vcmp.lt.s32.totalorder %v870, 15
        %vm967 = vcmp.lt.s32.totalorder %v871, 15
        %vm968 = vcmp.lt.s32.totalorder %v872, 15
        %vm969 = vcmp.lt.s32.totalorder %v873, 15
        %vm970 = vcmp.lt.s32.totalorder %v874, 15
        %vm971 = vcmp.lt.s32.totalorder %v875, 15
        %vm972 = vcmp.lt.s32.totalorder %v876, 15
        %vm973 = vcmp.lt.s32.totalorder %v877, 15
        %vm974 = vcmp.lt.s32.totalorder %v878, 15
        %vm975 = vcmp.lt.s32.totalorder %v879, 15
        %vm976 = vcmp.lt.s32.totalorder %v880, 15
        %vm977 = vcmp.lt.s32.totalorder %v881, 15
        %vm978 = vcmp.lt.s32.totalorder %v882, 15
        %vm979 = vcmp.lt.s32.totalorder %v883, 15
        %vm980 = vcmp.lt.s32.totalorder %v884, 15
        %vm981 = vcmp.lt.s32.totalorder %v885, 15
        %vm982 = vcmp.lt.s32.totalorder %v886, 15
        %vm983 = vcmp.lt.s32.totalorder %v887, 15
        %vm984 = vcmp.lt.s32.totalorder %v888, 15
        %vm985 = vcmp.lt.s32.totalorder %v889, 15
        %vm986 = vcmp.lt.s32.totalorder %v890, 15
        %vm987 = vcmp.lt.s32.totalorder %v891, 15
        %vm988 = vcmp.lt.s32.totalorder %v892, 15
        %vm989 = vcmp.lt.s32.totalorder %v893, 15
        %vm990 = vcmp.lt.s32.totalorder %v862, 14
        %vm991 = vcmp.lt.s32.totalorder %v863, 14
        %vm992 = vcmp.lt.s32.totalorder %v864, 14
        %vm993 = vcmp.lt.s32.totalorder %v865, 14
        %vm994 = vcmp.lt.s32.totalorder %v866, 14
        %vm995 = vcmp.lt.s32.totalorder %v867, 14
        %vm996 = vcmp.lt.s32.totalorder %v868, 14
        %vm997 = vcmp.lt.s32.totalorder %v869, 14
        %vm998 = vcmp.lt.s32.totalorder %v870, 14
        %vm999 = vcmp.lt.s32.totalorder %v871, 14
        %vm1000 = vcmp.lt.s32.totalorder %v872, 14
        %vm1001 = vcmp.lt.s32.totalorder %v873, 14
        %vm1002 = vcmp.lt.s32.totalorder %v874, 14
        %vm1003 = vcmp.lt.s32.totalorder %v875, 14
        %vm1004 = vcmp.lt.s32.totalorder %v876, 14
        %vm1005 = vcmp.lt.s32.totalorder %v877, 14
        %vm1006 = vcmp.lt.s32.totalorder %v878, 14
        %vm1007 = vcmp.lt.s32.totalorder %v879, 14
        %vm1008 = vcmp.lt.s32.totalorder %v880, 14
        %vm1009 = vcmp.lt.s32.totalorder %v881, 14
        %vm1010 = vcmp.lt.s32.totalorder %v882, 14
        %vm1011 = vcmp.lt.s32.totalorder %v883, 14
        %vm1012 = vcmp.lt.s32.totalorder %v884, 14
        %vm1013 = vcmp.lt.s32.totalorder %v885, 14
        %vm1014 = vcmp.lt.s32.totalorder %v886, 14
        %vm1015 = vcmp.lt.s32.totalorder %v887, 14
        %vm1016 = vcmp.lt.s32.totalorder %v888, 14
        %vm1017 = vcmp.lt.s32.totalorder %v889, 14
        %vm1018 = vcmp.lt.s32.totalorder %v890, 14
        %vm1019 = vcmp.lt.s32.totalorder %v891, 14
        %vm1020 = vcmp.lt.s32.totalorder %v892, 14
        %vm1021 = vcmp.lt.s32.totalorder %v893, 14
        %v1022 = vld [vmem:[%s396] sm:$0xff]
        %v1023 = vld [vmem:[%s396 + $0x8] sm:$0xff]
        %v1024 = vld [vmem:[%s396 + $0x10] sm:$0xff]
        %v1025 = vld [vmem:[%s396 + $0x18] sm:$0xff]
        %v1026 = vld [vmem:[%s396 + $0x20] sm:$0xff]
        %v1027 = vld [vmem:[%s396 + $0x28] sm:$0xff]
        %v1028 = vld [vmem:[%s396 + $0x30] sm:$0xff]
        %v1029 = vld [vmem:[%s396 + $0x38] sm:$0xff]
        %v1030 = vld [vmem:[%s396 + $0x40] sm:$0xff]
        %v1031 = vld [vmem:[%s396 + $0x48] sm:$0xff]
        %v1032 = vld [vmem:[%s396 + $0x50] sm:$0xff]
        %v1033 = vld [vmem:[%s396 + $0x58] sm:$0xff]
        %v1034 = vld [vmem:[%s396 + $0x60] sm:$0xff]
        %v1035 = vld [vmem:[%s396 + $0x68] sm:$0xff]
        %v1036 = vld [vmem:[%s396 + $0x70] sm:$0xff]
        %v1037 = vld [vmem:[%s396 + $0x78] sm:$0xff]
        %v1038 = vld [vmem:[%s396 + $0x80] sm:$0xff]
        %v1039 = vld [vmem:[%s396 + $0x88] sm:$0xff]
        %v1040 = vld [vmem:[%s396 + $0x90] sm:$0xff]
        %v1041 = vld [vmem:[%s396 + $0x98] sm:$0xff]
        %v1042 = vld [vmem:[%s396 + $0xa0] sm:$0xff]
        %v1043 = vld [vmem:[%s396 + $0xa8] sm:$0xff]
        %v1044 = vld [vmem:[%s396 + $0xb0] sm:$0xff]
        %v1045 = vld [vmem:[%s396 + $0xb8] sm:$0xff]
        %v1046 = vld [vmem:[%s396 + $0xc0] sm:$0xff]
        %v1047 = vld [vmem:[%s396 + $0xc8] sm:$0xff]
        %v1048 = vld [vmem:[%s396 + $0xd0] sm:$0xff]
        %v1049 = vld [vmem:[%s396 + $0xd8] sm:$0xff]
        %v1050 = vld [vmem:[%s396 + $0xe0] sm:$0xff]
        %v1051 = vld [vmem:[%s396 + $0xe8] sm:$0xff]
        %v1052 = vld [vmem:[%s396 + $0xf0] sm:$0xff]
        %v1053 = vld [vmem:[%s396 + $0xf8] sm:$0xff]
        %v1054 = vld [vmem:[#allocation15] sm:$0x1]
        %1055 = vst [vmem:[#allocation2 + $0x28] sm:$0xff] %v1022
        %1056 = vst [vmem:[#allocation2 + $0x30] sm:$0xff] %v1023
        %1057 = vst [vmem:[#allocation2 + $0x38] sm:$0xff] %v1024
        %1058 = vst [vmem:[#allocation2 + $0x40] sm:$0xff] %v1025
        %1059 = vst [vmem:[#allocation2 + $0x48] sm:$0xff] %v1026
        %1060 = vst [vmem:[#allocation2 + $0x50] sm:$0xff] %v1027
        %1061 = vst [vmem:[#allocation2 + $0x58] sm:$0xff] %v1028
        %1062 = vst [vmem:[#allocation2 + $0x60] sm:$0xff] %v1029
        %1063 = vst [vmem:[#allocation2 + $0x68] sm:$0xff] %v1030
        %1064 = vst [vmem:[#allocation2 + $0x70] sm:$0xff] %v1031
        %1065 = vst [vmem:[#allocation2 + $0x78] sm:$0xff] %v1032
        %1066 = vst [vmem:[#allocation2 + $0x80] sm:$0xff] %v1033
        %1067 = vst [vmem:[#allocation2 + $0x88] sm:$0xff] %v1034
        %1068 = vst [vmem:[#allocation2 + $0x90] sm:$0xff] %v1035
        %1069 = vst [vmem:[#allocation2 + $0x98] sm:$0xff] %v1036
        %1070 = vst [vmem:[#allocation2 + $0xa0] sm:$0xff] %v1037
        %1071 = vst [vmem:[#allocation2 + $0xa8] sm:$0xff] %v1038
        %1072 = vst [vmem:[#allocation2 + $0xb0] sm:$0xff] %v1039
        %1073 = vst [vmem:[#allocation2 + $0xb8] sm:$0xff] %v1040
        %1074 = vst [vmem:[#allocation2 + $0xc0] sm:$0xff] %v1041
        %1075 = vst [vmem:[#allocation2 + $0xc8] sm:$0xff] %v1042
        %1076 = vst [vmem:[#allocation2 + $0xd0] sm:$0xff] %v1043
        %1077 = vst [vmem:[#allocation2 + $0xd8] sm:$0xff] %v1044
        %1078 = vst [vmem:[#allocation2 + $0xe0] sm:$0xff] %v1045
        %1079 = vst [vmem:[#allocation2 + $0xe8] sm:$0xff] %v1046
        %1080 = vst [vmem:[#allocation2 + $0xf0] sm:$0xff] %v1047
        %1081 = vst [vmem:[#allocation2 + $0xf8] sm:$0xff] %v1048
        %1082 = vst [vmem:[#allocation2 + $0x100] sm:$0xff] %v1049
        %1083 = vst [vmem:[#allocation2 + $0x108] sm:$0xff] %v1050
        %1084 = vst [vmem:[#allocation2 + $0x110] sm:$0xff] %v1051
        %1085 = vst [vmem:[#allocation2 + $0x118] sm:$0xff] %v1052
        %1086 = vst [vmem:[#allocation2 + $0x120] sm:$0xff] %v1053
        %v1087 = vld [vmem:[#allocation2 + $0x17] sm:$0xff]
        %v1088 = vld [vmem:[#allocation2 + $0x1f] sm:$0xff]
        %v1089 = vld [vmem:[#allocation2 + $0x27] sm:$0xff]
        %v1090 = vld [vmem:[#allocation2 + $0x2f] sm:$0xff]
        %v1091 = vld [vmem:[#allocation2 + $0x37] sm:$0xff]
        %v1092 = vld [vmem:[#allocation2 + $0x3f] sm:$0xff]
        %v1093 = vld [vmem:[#allocation2 + $0x47] sm:$0xff]
        %v1094 = vld [vmem:[#allocation2 + $0x4f] sm:$0xff]
        %v1095 = vld [vmem:[#allocation2 + $0x57] sm:$0xff]
        %v1096 = vld [vmem:[#allocation2 + $0x5f] sm:$0xff]
        %v1097 = vld [vmem:[#allocation2 + $0x67] sm:$0xff]
        %v1098 = vld [vmem:[#allocation2 + $0x6f] sm:$0xff]
        %v1099 = vld [vmem:[#allocation2 + $0x77] sm:$0xff]
        %v1100 = vld [vmem:[#allocation2 + $0x7f] sm:$0xff]
        %v1101 = vld [vmem:[#allocation2 + $0x87] sm:$0xff]
        %v1102 = vld [vmem:[#allocation2 + $0x8f] sm:$0xff]
        %v1103 = vld [vmem:[#allocation2 + $0x97] sm:$0xff]
        %v1104 = vld [vmem:[#allocation2 + $0x9f] sm:$0xff]
        %v1105 = vld [vmem:[#allocation2 + $0xa7] sm:$0xff]
        %v1106 = vld [vmem:[#allocation2 + $0xaf] sm:$0xff]
        %v1107 = vld [vmem:[#allocation2 + $0xb7] sm:$0xff]
        %v1108 = vld [vmem:[#allocation2 + $0xbf] sm:$0xff]
        %v1109 = vld [vmem:[#allocation2 + $0xc7] sm:$0xff]
        %v1110 = vld [vmem:[#allocation2 + $0xcf] sm:$0xff]
        %v1111 = vld [vmem:[#allocation2 + $0xd7] sm:$0xff]
        %v1112 = vld [vmem:[#allocation2 + $0xdf] sm:$0xff]
        %v1113 = vld [vmem:[#allocation2 + $0xe7] sm:$0xff]
        %v1114 = vld [vmem:[#allocation2 + $0xef] sm:$0xff]
        %v1115 = vld [vmem:[#allocation2 + $0xf7] sm:$0xff]
        %v1116 = vld [vmem:[#allocation2 + $0xff] sm:$0xff]
        %v1117 = vld [vmem:[#allocation2 + $0x107] sm:$0xff]
        %v1118 = vld [vmem:[#allocation2 + $0x10f] sm:$0xff]
        %v1119 = vsel %vm926, %v1087, 0.0
        %v1120 = vsel %vm927, %v1088, 0.0
        %v1121 = vsel %vm928, %v1089, 0.0
        %v1122 = vsel %vm929, %v1090, 0.0
        %v1123 = vsel %vm930, %v1091, 0.0
        %v1124 = vsel %vm931, %v1092, 0.0
        %v1125 = vsel %vm932, %v1093, 0.0
        %v1126 = vsel %vm933, %v1094, 0.0
        %v1127 = vsel %vm934, %v1095, 0.0
        %v1128 = vsel %vm935, %v1096, 0.0
        %v1129 = vsel %vm936, %v1097, 0.0
        %v1130 = vsel %vm937, %v1098, 0.0
        %v1131 = vsel %vm938, %v1099, 0.0
        %v1132 = vsel %vm939, %v1100, 0.0
        %v1133 = vsel %vm940, %v1101, 0.0
        %v1134 = vsel %vm941, %v1102, 0.0
        %v1135 = vsel %vm942, %v1103, 0.0
        %v1136 = vsel %vm943, %v1104, 0.0
        %v1137 = vsel %vm944, %v1105, 0.0
        %v1138 = vsel %vm945, %v1106, 0.0
        %v1139 = vsel %vm946, %v1107, 0.0
        %v1140 = vsel %vm947, %v1108, 0.0
        %v1141 = vsel %vm948, %v1109, 0.0
        %v1142 = vsel %vm949, %v1110, 0.0
        %v1143 = vsel %vm950, %v1111, 0.0
        %v1144 = vsel %vm951, %v1112, 0.0
        %v1145 = vsel %vm952, %v1113, 0.0
        %v1146 = vsel %vm953, %v1114, 0.0
        %v1147 = vsel %vm954, %v1115, 0.0
        %v1148 = vsel %vm955, %v1116, 0.0
        %v1149 = vsel %vm956, %v1117, 0.0
        %v1150 = vsel %vm957, %v1118, 0.0
        %v1151 = vld [vmem:[#allocation6] sm:$0x1]
        %v1152 = vperm.slane %v1151, 0
        %v1153 = vmul.f32 %v1119, %v1152
        %v1154 = vmul.f32 %v1120, %v1152
        %v1155 = vmul.f32 %v1121, %v1152
        %v1156 = vmul.f32 %v1122, %v1152
        %v1157 = vmul.f32 %v1123, %v1152
        %v1158 = vmul.f32 %v1124, %v1152
        %v1159 = vmul.f32 %v1125, %v1152
        %v1160 = vmul.f32 %v1126, %v1152
        %v1161 = vmul.f32 %v1127, %v1152
        %v1162 = vmul.f32 %v1128, %v1152
        %v1163 = vmul.f32 %v1129, %v1152
        %v1164 = vmul.f32 %v1130, %v1152
        %v1165 = vmul.f32 %v1131, %v1152
        %v1166 = vmul.f32 %v1132, %v1152
        %v1167 = vmul.f32 %v1133, %v1152
        %v1168 = vmul.f32 %v1134, %v1152
        %v1169 = vmul.f32 %v1135, %v1152
        %v1170 = vmul.f32 %v1136, %v1152
        %v1171 = vmul.f32 %v1137, %v1152
        %v1172 = vmul.f32 %v1138, %v1152
        %v1173 = vmul.f32 %v1139, %v1152
        %v1174 = vmul.f32 %v1140, %v1152
        %v1175 = vmul.f32 %v1141, %v1152
        %v1176 = vmul.f32 %v1142, %v1152
        %v1177 = vmul.f32 %v1143, %v1152
        %v1178 = vmul.f32 %v1144, %v1152
        %v1179 = vmul.f32 %v1145, %v1152
        %v1180 = vmul.f32 %v1146, %v1152
        %v1181 = vmul.f32 %v1147, %v1152
        %v1182 = vmul.f32 %v1148, %v1152
        %v1183 = vmul.f32 %v1149, %v1152
        %v1184 = vmul.f32 %v1150, %v1152
        %v1185 = vadd.f32 %v1153, 0.0
        %v1186 = vadd.f32 %v1154, 0.0
        %v1187 = vadd.f32 %v1155, 0.0
        %v1188 = vadd.f32 %v1156, 0.0
        %v1189 = vadd.f32 %v1157, 0.0
        %v1190 = vadd.f32 %v1158, 0.0
        %v1191 = vadd.f32 %v1159, 0.0
        %v1192 = vadd.f32 %v1160, 0.0
        %v1193 = vadd.f32 %v1161, 0.0
        %v1194 = vadd.f32 %v1162, 0.0
        %v1195 = vadd.f32 %v1163, 0.0
        %v1196 = vadd.f32 %v1164, 0.0
        %v1197 = vadd.f32 %v1165, 0.0
        %v1198 = vadd.f32 %v1166, 0.0
        %v1199 = vadd.f32 %v1167, 0.0
        %v1200 = vadd.f32 %v1168, 0.0
        %v1201 = vadd.f32 %v1169, 0.0
        %v1202 = vadd.f32 %v1170, 0.0
        %v1203 = vadd.f32 %v1171, 0.0
        %v1204 = vadd.f32 %v1172, 0.0
        %v1205 = vadd.f32 %v1173, 0.0
        %v1206 = vadd.f32 %v1174, 0.0
        %v1207 = vadd.f32 %v1175, 0.0
        %v1208 = vadd.f32 %v1176, 0.0
        %v1209 = vadd.f32 %v1177, 0.0
        %v1210 = vadd.f32 %v1178, 0.0
        %v1211 = vadd.f32 %v1179, 0.0
        %v1212 = vadd.f32 %v1180, 0.0
        %v1213 = vadd.f32 %v1181, 0.0
        %v1214 = vadd.f32 %v1182, 0.0
        %v1215 = vadd.f32 %v1183, 0.0
        %v1216 = vadd.f32 %v1184, 0.0
        %v1217 = vld [vmem:[#allocation2 + $0x18] sm:$0xff]
        %v1218 = vld [vmem:[#allocation2 + $0x20] sm:$0xff]
        %v1219 = vld [vmem:[#allocation2 + $0x28] sm:$0xff]
        %v1220 = vld [vmem:[#allocation2 + $0x30] sm:$0xff]
        %v1221 = vld [vmem:[#allocation2 + $0x38] sm:$0xff]
        %v1222 = vld [vmem:[#allocation2 + $0x40] sm:$0xff]
        %v1223 = vld [vmem:[#allocation2 + $0x48] sm:$0xff]
        %v1224 = vld [vmem:[#allocation2 + $0x50] sm:$0xff]
        %v1225 = vld [vmem:[#allocation2 + $0x58] sm:$0xff]
        %v1226 = vld [vmem:[#allocation2 + $0x60] sm:$0xff]
        %v1227 = vld [vmem:[#allocation2 + $0x68] sm:$0xff]
        %v1228 = vld [vmem:[#allocation2 + $0x70] sm:$0xff]
        %v1229 = vld [vmem:[#allocation2 + $0x78] sm:$0xff]
        %v1230 = vld [vmem:[#allocation2 + $0x80] sm:$0xff]
        %v1231 = vld [vmem:[#allocation2 + $0x88] sm:$0xff]
        %v1232 = vld [vmem:[#allocation2 + $0x90] sm:$0xff]
        %v1233 = vld [vmem:[#allocation2 + $0x98] sm:$0xff]
        %v1234 = vld [vmem:[#allocation2 + $0xa0] sm:$0xff]
        %v1235 = vld [vmem:[#allocation2 + $0xa8] sm:$0xff]
        %v1236 = vld [vmem:[#allocation2 + $0xb0] sm:$0xff]
        %v1237 = vld [vmem:[#allocation2 + $0xb8] sm:$0xff]
        %v1238 = vld [vmem:[#allocation2 + $0xc0] sm:$0xff]
        %v1239 = vld [vmem:[#allocation2 + $0xc8] sm:$0xff]
        %v1240 = vld [vmem:[#allocation2 + $0xd0] sm:$0xff]
        %v1241 = vld [vmem:[#allocation2 + $0xd8] sm:$0xff]
        %v1242 = vld [vmem:[#allocation2 + $0xe0] sm:$0xff]
        %v1243 = vld [vmem:[#allocation2 + $0xe8] sm:$0xff]
        %v1244 = vld [vmem:[#allocation2 + $0xf0] sm:$0xff]
        %v1245 = vld [vmem:[#allocation2 + $0xf8] sm:$0xff]
        %v1246 = vld [vmem:[#allocation2 + $0x100] sm:$0xff]
        %v1247 = vld [vmem:[#allocation2 + $0x108] sm:$0xff]
        %v1248 = vld [vmem:[#allocation2 + $0x110] sm:$0xff]
        %v1249 = vld [vmem:[#allocation6 + $0x1] sm:$0x1]
        %v1250 = vperm.slane %v1249, 0
        %v1251 = vmul.f32 %v1217, %v1250
        %v1252 = vmul.f32 %v1218, %v1250
        %v1253 = vmul.f32 %v1219, %v1250
        %v1254 = vmul.f32 %v1220, %v1250
        %v1255 = vmul.f32 %v1221, %v1250
        %v1256 = vmul.f32 %v1222, %v1250
        %v1257 = vmul.f32 %v1223, %v1250
        %v1258 = vmul.f32 %v1224, %v1250
        %v1259 = vmul.f32 %v1225, %v1250
        %v1260 = vmul.f32 %v1226, %v1250
        %v1261 = vmul.f32 %v1227, %v1250
        %v1262 = vmul.f32 %v1228, %v1250
        %v1263 = vmul.f32 %v1229, %v1250
        %v1264 = vmul.f32 %v1230, %v1250
        %v1265 = vmul.f32 %v1231, %v1250
        %v1266 = vmul.f32 %v1232, %v1250
        %v1267 = vmul.f32 %v1233, %v1250
        %v1268 = vmul.f32 %v1234, %v1250
        %v1269 = vmul.f32 %v1235, %v1250
        %v1270 = vmul.f32 %v1236, %v1250
        %v1271 = vmul.f32 %v1237, %v1250
        %v1272 = vmul.f32 %v1238, %v1250
        %v1273 = vmul.f32 %v1239, %v1250
        %v1274 = vmul.f32 %v1240, %v1250
        %v1275 = vmul.f32 %v1241, %v1250
        %v1276 = vmul.f32 %v1242, %v1250
        %v1277 = vmul.f32 %v1243, %v1250
        %v1278 = vmul.f32 %v1244, %v1250
        %v1279 = vmul.f32 %v1245, %v1250
        %v1280 = vmul.f32 %v1246, %v1250
        %v1281 = vmul.f32 %v1247, %v1250
        %v1282 = vmul.f32 %v1248, %v1250
        %v1283 = vadd.f32 %v1185, %v1251
        %v1284 = vadd.f32 %v1186, %v1252
        %v1285 = vadd.f32 %v1187, %v1253
        %v1286 = vadd.f32 %v1188, %v1254
        %v1287 = vadd.f32 %v1189, %v1255
        %v1288 = vadd.f32 %v1190, %v1256
        %v1289 = vadd.f32 %v1191, %v1257
        %v1290 = vadd.f32 %v1192, %v1258
        %v1291 = vadd.f32 %v1193, %v1259
        %v1292 = vadd.f32 %v1194, %v1260
        %v1293 = vadd.f32 %v1195, %v1261
        %v1294 = vadd.f32 %v1196, %v1262
        %v1295 = vadd.f32 %v1197, %v1263
        %v1296 = vadd.f32 %v1198, %v1264
        %v1297 = vadd.f32 %v1199, %v1265
        %v1298 = vadd.f32 %v1200, %v1266
        %v1299 = vadd.f32 %v1201, %v1267
        %v1300 = vadd.f32 %v1202, %v1268
        %v1301 = vadd.f32 %v1203, %v1269
        %v1302 = vadd.f32 %v1204, %v1270
        %v1303 = vadd.f32 %v1205, %v1271
        %v1304 = vadd.f32 %v1206, %v1272
        %v1305 = vadd.f32 %v1207, %v1273
        %v1306 = vadd.f32 %v1208, %v1274
        %v1307 = vadd.f32 %v1209, %v1275
        %v1308 = vadd.f32 %v1210, %v1276
        %v1309 = vadd.f32 %v1211, %v1277
        %v1310 = vadd.f32 %v1212, %v1278
        %v1311 = vadd.f32 %v1213, %v1279
        %v1312 = vadd.f32 %v1214, %v1280
        %v1313 = vadd.f32 %v1215, %v1281
        %v1314 = vadd.f32 %v1216, %v1282
        %v1315 = vld [vmem:[#allocation2 + $0x19] sm:$0xff]
        %v1316 = vld [vmem:[#allocation2 + $0x21] sm:$0xff]
        %v1317 = vld [vmem:[#allocation2 + $0x29] sm:$0xff]
        %v1318 = vld [vmem:[#allocation2 + $0x31] sm:$0xff]
        %v1319 = vld [vmem:[#allocation2 + $0x39] sm:$0xff]
        %v1320 = vld [vmem:[#allocation2 + $0x41] sm:$0xff]
        %v1321 = vld [vmem:[#allocation2 + $0x49] sm:$0xff]
        %v1322 = vld [vmem:[#allocation2 + $0x51] sm:$0xff]
        %v1323 = vld [vmem:[#allocation2 + $0x59] sm:$0xff]
        %v1324 = vld [vmem:[#allocation2 + $0x61] sm:$0xff]
        %v1325 = vld [vmem:[#allocation2 + $0x69] sm:$0xff]
        %v1326 = vld [vmem:[#allocation2 + $0x71] sm:$0xff]
        %v1327 = vld [vmem:[#allocation2 + $0x79] sm:$0xff]
        %v1328 = vld [vmem:[#allocation2 + $0x81] sm:$0xff]
        %v1329 = vld [vmem:[#allocation2 + $0x89] sm:$0xff]
        %v1330 = vld [vmem:[#allocation2 + $0x91] sm:$0xff]
        %v1331 = vld [vmem:[#allocation2 + $0x99] sm:$0xff]
        %v1332 = vld [vmem:[#allocation2 + $0xa1] sm:$0xff]
        %v1333 = vld [vmem:[#allocation2 + $0xa9] sm:$0xff]
        %v1334 = vld [vmem:[#allocation2 + $0xb1] sm:$0xff]
        %v1335 = vld [vmem:[#allocation2 + $0xb9] sm:$0xff]
        %v1336 = vld [vmem:[#allocation2 + $0xc1] sm:$0xff]
        %v1337 = vld [vmem:[#allocation2 + $0xc9] sm:$0xff]
        %v1338 = vld [vmem:[#allocation2 + $0xd1] sm:$0xff]
        %v1339 = vld [vmem:[#allocation2 + $0xd9] sm:$0xff]
        %v1340 = vld [vmem:[#allocation2 + $0xe1] sm:$0xff]
        %v1341 = vld [vmem:[#allocation2 + $0xe9] sm:$0xff]
        %v1342 = vld [vmem:[#allocation2 + $0xf1] sm:$0xff]
        %v1343 = vld [vmem:[#allocation2 + $0xf9] sm:$0xff]
        %v1344 = vld [vmem:[#allocation2 + $0x101] sm:$0xff]
        %v1345 = vld [vmem:[#allocation2 + $0x109] sm:$0xff]
        %v1346 = vld [vmem:[#allocation2 + $0x111] sm:$0xff]
        %v1347 = vsel %vm958, %v1315, 0.0
        %v1348 = vsel %vm959, %v1316, 0.0
        %v1349 = vsel %vm960, %v1317, 0.0
        %v1350 = vsel %vm961, %v1318, 0.0
        %v1351 = vsel %vm962, %v1319, 0.0
        %v1352 = vsel %vm963, %v1320, 0.0
        %v1353 = vsel %vm964, %v1321, 0.0
        %v1354 = vsel %vm965, %v1322, 0.0
        %v1355 = vsel %vm966, %v1323, 0.0
        %v1356 = vsel %vm967, %v1324, 0.0
        %v1357 = vsel %vm968, %v1325, 0.0
        %v1358 = vsel %vm969, %v1326, 0.0
        %v1359 = vsel %vm970, %v1327, 0.0
        %v1360 = vsel %vm971, %v1328, 0.0
        %v1361 = vsel %vm972, %v1329, 0.0
        %v1362 = vsel %vm973, %v1330, 0.0
        %v1363 = vsel %vm974, %v1331, 0.0
        %v1364 = vsel %vm975, %v1332, 0.0
        %v1365 = vsel %vm976, %v1333, 0.0
        %v1366 = vsel %vm977, %v1334, 0.0
        %v1367 = vsel %vm978, %v1335, 0.0
        %v1368 = vsel %vm979, %v1336, 0.0
        %v1369 = vsel %vm980, %v1337, 0.0
        %v1370 = vsel %vm981, %v1338, 0.0
        %v1371 = vsel %vm982, %v1339, 0.0
        %v1372 = vsel %vm983, %v1340, 0.0
        %v1373 = vsel %vm984, %v1341, 0.0
        %v1374 = vsel %vm985, %v1342, 0.0
        %v1375 = vsel %vm986, %v1343, 0.0
        %v1376 = vsel %vm987, %v1344, 0.0
        %v1377 = vsel %vm988, %v1345, 0.0
        %v1378 = vsel %vm989, %v1346, 0.0
        %v1379 = vld [vmem:[#allocation6 + $0x2] sm:$0x1]
        %v1380 = vperm.slane %v1379, 0
        %v1381 = vmul.f32 %v1347, %v1380
        %v1382 = vmul.f32 %v1348, %v1380
        %v1383 = vmul.f32 %v1349, %v1380
        %v1384 = vmul.f32 %v1350, %v1380
        %v1385 = vmul.f32 %v1351, %v1380
        %v1386 = vmul.f32 %v1352, %v1380
        %v1387 = vmul.f32 %v1353, %v1380
        %v1388 = vmul.f32 %v1354, %v1380
        %v1389 = vmul.f32 %v1355, %v1380
        %v1390 = vmul.f32 %v1356, %v1380
        %v1391 = vmul.f32 %v1357, %v1380
        %v1392 = vmul.f32 %v1358, %v1380
        %v1393 = vmul.f32 %v1359, %v1380
        %v1394 = vmul.f32 %v1360, %v1380
        %v1395 = vmul.f32 %v1361, %v1380
        %v1396 = vmul.f32 %v1362, %v1380
        %v1397 = vmul.f32 %v1363, %v1380
        %v1398 = vmul.f32 %v1364, %v1380
        %v1399 = vmul.f32 %v1365, %v1380
        %v1400 = vmul.f32 %v1366, %v1380
        %v1401 = vmul.f32 %v1367, %v1380
        %v1402 = vmul.f32 %v1368, %v1380
        %v1403 = vmul.f32 %v1369, %v1380
        %v1404 = vmul.f32 %v1370, %v1380
        %v1405 = vmul.f32 %v1371, %v1380
        %v1406 = vmul.f32 %v1372, %v1380
        %v1407 = vmul.f32 %v1373, %v1380
        %v1408 = vmul.f32 %v1374, %v1380
        %v1409 = vmul.f32 %v1375, %v1380
        %v1410 = vmul.f32 %v1376, %v1380
        %v1411 = vmul.f32 %v1377, %v1380
        %v1412 = vmul.f32 %v1378, %v1380
        %v1413 = vadd.f32 %v1283, %v1381
        %v1414 = vadd.f32 %v1284, %v1382
        %v1415 = vadd.f32 %v1285, %v1383
        %v1416 = vadd.f32 %v1286, %v1384
        %v1417 = vadd.f32 %v1287, %v1385
        %v1418 = vadd.f32 %v1288, %v1386
        %v1419 = vadd.f32 %v1289, %v1387
        %v1420 = vadd.f32 %v1290, %v1388
        %v1421 = vadd.f32 %v1291, %v1389
        %v1422 = vadd.f32 %v1292, %v1390
        %v1423 = vadd.f32 %v1293, %v1391
        %v1424 = vadd.f32 %v1294, %v1392
        %v1425 = vadd.f32 %v1295, %v1393
        %v1426 = vadd.f32 %v1296, %v1394
        %v1427 = vadd.f32 %v1297, %v1395
        %v1428 = vadd.f32 %v1298, %v1396
        %v1429 = vadd.f32 %v1299, %v1397
        %v1430 = vadd.f32 %v1300, %v1398
        %v1431 = vadd.f32 %v1301, %v1399
        %v1432 = vadd.f32 %v1302, %v1400
        %v1433 = vadd.f32 %v1303, %v1401
        %v1434 = vadd.f32 %v1304, %v1402
        %v1435 = vadd.f32 %v1305, %v1403
        %v1436 = vadd.f32 %v1306, %v1404
        %v1437 = vadd.f32 %v1307, %v1405
        %v1438 = vadd.f32 %v1308, %v1406
        %v1439 = vadd.f32 %v1309, %v1407
        %v1440 = vadd.f32 %v1310, %v1408
        %v1441 = vadd.f32 %v1311, %v1409
        %v1442 = vadd.f32 %v1312, %v1410
        %v1443 = vadd.f32 %v1313, %v1411
        %v1444 = vadd.f32 %v1314, %v1412
        %v1445 = vld [vmem:[#allocation2 + $0x117] sm:$0xff]
        %v1446 = vld [vmem:[#allocation2 + $0x11f] sm:$0xff]
        %v1447 = vsel %vm926, %v1089, 0.0
        %v1448 = vsel %vm927, %v1090, 0.0
        %v1449 = vsel %vm928, %v1091, 0.0
        %v1450 = vsel %vm929, %v1092, 0.0
        %v1451 = vsel %vm930, %v1093, 0.0
        %v1452 = vsel %vm931, %v1094, 0.0
        %v1453 = vsel %vm932, %v1095, 0.0
        %v1454 = vsel %vm933, %v1096, 0.0
        %v1455 = vsel %vm934, %v1097, 0.0
        %v1456 = vsel %vm935, %v1098, 0.0
        %v1457 = vsel %vm936, %v1099, 0.0
        %v1458 = vsel %vm937, %v1100, 0.0
        %v1459 = vsel %vm938, %v1101, 0.0
        %v1460 = vsel %vm939, %v1102, 0.0
        %v1461 = vsel %vm940, %v1103, 0.0
        %v1462 = vsel %vm941, %v1104, 0.0
        %v1463 = vsel %vm942, %v1105, 0.0
        %v1464 = vsel %vm943, %v1106, 0.0
        %v1465 = vsel %vm944, %v1107, 0.0
        %v1466 = vsel %vm945, %v1108, 0.0
        %v1467 = vsel %vm946, %v1109, 0.0
        %v1468 = vsel %vm947, %v1110, 0.0
        %v1469 = vsel %vm948, %v1111, 0.0
        %v1470 = vsel %vm949, %v1112, 0.0
        %v1471 = vsel %vm950, %v1113, 0.0
        %v1472 = vsel %vm951, %v1114, 0.0
        %v1473 = vsel %vm952, %v1115, 0.0
        %v1474 = vsel %vm953, %v1116, 0.0
        %v1475 = vsel %vm954, %v1117, 0.0
        %v1476 = vsel %vm955, %v1118, 0.0
        %v1477 = vsel %vm956, %v1445, 0.0
        %v1478 = vsel %vm957, %v1446, 0.0
        %v1479 = vld [vmem:[#allocation6 + $0x3] sm:$0x1]
        %v1480 = vperm.slane %v1479, 0
        %v1481 = vmul.f32 %v1447, %v1480
        %v1482 = vmul.f32 %v1448, %v1480
        %v1483 = vmul.f32 %v1449, %v1480
        %v1484 = vmul.f32 %v1450, %v1480
        %v1485 = vmul.f32 %v1451, %v1480
        %v1486 = vmul.f32 %v1452, %v1480
        %v1487 = vmul.f32 %v1453, %v1480
        %v1488 = vmul.f32 %v1454, %v1480
        %v1489 = vmul.f32 %v1455, %v1480
        %v1490 = vmul.f32 %v1456, %v1480
        %v1491 = vmul.f32 %v1457, %v1480
        %v1492 = vmul.f32 %v1458, %v1480
        %v1493 = vmul.f32 %v1459, %v1480
        %v1494 = vmul.f32 %v1460, %v1480
        %v1495 = vmul.f32 %v1461, %v1480
        %v1496 = vmul.f32 %v1462, %v1480
        %v1497 = vmul.f32 %v1463, %v1480
        %v1498 = vmul.f32 %v1464, %v1480
        %v1499 = vmul.f32 %v1465, %v1480
        %v1500 = vmul.f32 %v1466, %v1480
        %v1501 = vmul.f32 %v1467, %v1480
        %v1502 = vmul.f32 %v1468, %v1480
        %v1503 = vmul.f32 %v1469, %v1480
        %v1504 = vmul.f32 %v1470, %v1480
        %v1505 = vmul.f32 %v1471, %v1480
        %v1506 = vmul.f32 %v1472, %v1480
        %v1507 = vmul.f32 %v1473, %v1480
        %v1508 = vmul.f32 %v1474, %v1480
        %v1509 = vmul.f32 %v1475, %v1480
        %v1510 = vmul.f32 %v1476, %v1480
        %v1511 = vmul.f32 %v1477, %v1480
        %v1512 = vmul.f32 %v1478, %v1480
        %v1513 = vadd.f32 %v1413, %v1481
        %v1514 = vadd.f32 %v1414, %v1482
        %v1515 = vadd.f32 %v1415, %v1483
        %v1516 = vadd.f32 %v1416, %v1484
        %v1517 = vadd.f32 %v1417, %v1485
        %v1518 = vadd.f32 %v1418, %v1486
        %v1519 = vadd.f32 %v1419, %v1487
        %v1520 = vadd.f32 %v1420, %v1488
        %v1521 = vadd.f32 %v1421, %v1489
        %v1522 = vadd.f32 %v1422, %v1490
        %v1523 = vadd.f32 %v1423, %v1491
        %v1524 = vadd.f32 %v1424, %v1492
        %v1525 = vadd.f32 %v1425, %v1493
        %v1526 = vadd.f32 %v1426, %v1494
        %v1527 = vadd.f32 %v1427, %v1495
        %v1528 = vadd.f32 %v1428, %v1496
        %v1529 = vadd.f32 %v1429, %v1497
        %v1530 = vadd.f32 %v1430, %v1498
        %v1531 = vadd.f32 %v1431, %v1499
        %v1532 = vadd.f32 %v1432, %v1500
        %v1533 = vadd.f32 %v1433, %v1501
        %v1534 = vadd.f32 %v1434, %v1502
        %v1535 = vadd.f32 %v1435, %v1503
        %v1536 = vadd.f32 %v1436, %v1504
        %v1537 = vadd.f32 %v1437, %v1505
        %v1538 = vadd.f32 %v1438, %v1506
        %v1539 = vadd.f32 %v1439, %v1507
        %v1540 = vadd.f32 %v1440, %v1508
        %v1541 = vadd.f32 %v1441, %v1509
        %v1542 = vadd.f32 %v1442, %v1510
        %v1543 = vadd.f32 %v1443, %v1511
        %v1544 = vadd.f32 %v1444, %v1512
        %v1545 = vld [vmem:[#allocation2 + $0x118] sm:$0xff]
        %v1546 = vld [vmem:[#allocation2 + $0x120] sm:$0xff]
        %v1547 = vld [vmem:[#allocation6 + $0x4] sm:$0x1]
        %v1548 = vperm.slane %v1547, 0
        %v1549 = vmul.f32 %v1219, %v1548
        %v1550 = vmul.f32 %v1220, %v1548
        %v1551 = vmul.f32 %v1221, %v1548
        %v1552 = vmul.f32 %v1222, %v1548
        %v1553 = vmul.f32 %v1223, %v1548
        %v1554 = vmul.f32 %v1224, %v1548
        %v1555 = vmul.f32 %v1225, %v1548
        %v1556 = vmul.f32 %v1226, %v1548
        %v1557 = vmul.f32 %v1227, %v1548
        %v1558 = vmul.f32 %v1228, %v1548
        %v1559 = vmul.f32 %v1229, %v1548
        %v1560 = vmul.f32 %v1230, %v1548
        %v1561 = vmul.f32 %v1231, %v1548
        %v1562 = vmul.f32 %v1232, %v1548
        %v1563 = vmul.f32 %v1233, %v1548
        %v1564 = vmul.f32 %v1234, %v1548
        %v1565 = vmul.f32 %v1235, %v1548
        %v1566 = vmul.f32 %v1236, %v1548
        %v1567 = vmul.f32 %v1237, %v1548
        %v1568 = vmul.f32 %v1238, %v1548
        %v1569 = vmul.f32 %v1239, %v1548
        %v1570 = vmul.f32 %v1240, %v1548
        %v1571 = vmul.f32 %v1241, %v1548
        %v1572 = vmul.f32 %v1242, %v1548
        %v1573 = vmul.f32 %v1243, %v1548
        %v1574 = vmul.f32 %v1244, %v1548
        %v1575 = vmul.f32 %v1245, %v1548
        %v1576 = vmul.f32 %v1246, %v1548
        %v1577 = vmul.f32 %v1247, %v1548
        %v1578 = vmul.f32 %v1248, %v1548
        %v1579 = vmul.f32 %v1545, %v1548
        %v1580 = vmul.f32 %v1546, %v1548
        %v1581 = vadd.f32 %v1513, %v1549
        %v1582 = vadd.f32 %v1514, %v1550
        %v1583 = vadd.f32 %v1515, %v1551
        %v1584 = vadd.f32 %v1516, %v1552
        %v1585 = vadd.f32 %v1517, %v1553
        %v1586 = vadd.f32 %v1518, %v1554
        %v1587 = vadd.f32 %v1519, %v1555
        %v1588 = vadd.f32 %v1520, %v1556
        %v1589 = vadd.f32 %v1521, %v1557
        %v1590 = vadd.f32 %v1522, %v1558
        %v1591 = vadd.f32 %v1523, %v1559
        %v1592 = vadd.f32 %v1524, %v1560
        %v1593 = vadd.f32 %v1525, %v1561
        %v1594 = vadd.f32 %v1526, %v1562
        %v1595 = vadd.f32 %v1527, %v1563
        %v1596 = vadd.f32 %v1528, %v1564
        %v1597 = vadd.f32 %v1529, %v1565
        %v1598 = vadd.f32 %v1530, %v1566
        %v1599 = vadd.f32 %v1531, %v1567
        %v1600 = vadd.f32 %v1532, %v1568
        %v1601 = vadd.f32 %v1533, %v1569
        %v1602 = vadd.f32 %v1534, %v1570
        %v1603 = vadd.f32 %v1535, %v1571
        %v1604 = vadd.f32 %v1536, %v1572
        %v1605 = vadd.f32 %v1537, %v1573
        %v1606 = vadd.f32 %v1538, %v1574
        %v1607 = vadd.f32 %v1539, %v1575
        %v1608 = vadd.f32 %v1540, %v1576
        %v1609 = vadd.f32 %v1541, %v1577
        %v1610 = vadd.f32 %v1542, %v1578
        %v1611 = vadd.f32 %v1543, %v1579
        %v1612 = vadd.f32 %v1544, %v1580
        %v1613 = vld [vmem:[#allocation2 + $0x119] sm:$0xff]
        %v1614 = vld [vmem:[#allocation2 + $0x121] sm:$0xff]
        %v1615 = vsel %vm958, %v1317, 0.0
        %v1616 = vsel %vm959, %v1318, 0.0
        %v1617 = vsel %vm960, %v1319, 0.0
        %v1618 = vsel %vm961, %v1320, 0.0
        %v1619 = vsel %vm962, %v1321, 0.0
        %v1620 = vsel %vm963, %v1322, 0.0
        %v1621 = vsel %vm964, %v1323, 0.0
        %v1622 = vsel %vm965, %v1324, 0.0
        %v1623 = vsel %vm966, %v1325, 0.0
        %v1624 = vsel %vm967, %v1326, 0.0
        %v1625 = vsel %vm968, %v1327, 0.0
        %v1626 = vsel %vm969, %v1328, 0.0
        %v1627 = vsel %vm970, %v1329, 0.0
        %v1628 = vsel %vm971, %v1330, 0.0
        %v1629 = vsel %vm972, %v1331, 0.0
        %v1630 = vsel %vm973, %v1332, 0.0
        %v1631 = vsel %vm974, %v1333, 0.0
        %v1632 = vsel %vm975, %v1334, 0.0
        %v1633 = vsel %vm976, %v1335, 0.0
        %v1634 = vsel %vm977, %v1336, 0.0
        %v1635 = vsel %vm978, %v1337, 0.0
        %v1636 = vsel %vm979, %v1338, 0.0
        %v1637 = vsel %vm980, %v1339, 0.0
        %v1638 = vsel %vm981, %v1340, 0.0
        %v1639 = vsel %vm982, %v1341, 0.0
        %v1640 = vsel %vm983, %v1342, 0.0
        %v1641 = vsel %vm984, %v1343, 0.0
        %v1642 = vsel %vm985, %v1344, 0.0
        %v1643 = vsel %vm986, %v1345, 0.0
        %v1644 = vsel %vm987, %v1346, 0.0
        %v1645 = vsel %vm988, %v1613, 0.0
        %v1646 = vsel %vm989, %v1614, 0.0
        %v1647 = vld [vmem:[#allocation6 + $0x5] sm:$0x1]
        %v1648 = vperm.slane %v1647, 0
        %v1649 = vmul.f32 %v1615, %v1648
        %v1650 = vmul.f32 %v1616, %v1648
        %v1651 = vmul.f32 %v1617, %v1648
        %v1652 = vmul.f32 %v1618, %v1648
        %v1653 = vmul.f32 %v1619, %v1648
        %v1654 = vmul.f32 %v1620, %v1648
        %v1655 = vmul.f32 %v1621, %v1648
        %v1656 = vmul.f32 %v1622, %v1648
        %v1657 = vmul.f32 %v1623, %v1648
        %v1658 = vmul.f32 %v1624, %v1648
        %v1659 = vmul.f32 %v1625, %v1648
        %v1660 = vmul.f32 %v1626, %v1648
        %v1661 = vmul.f32 %v1627, %v1648
        %v1662 = vmul.f32 %v1628, %v1648
        %v1663 = vmul.f32 %v1629, %v1648
        %v1664 = vmul.f32 %v1630, %v1648
        %v1665 = vmul.f32 %v1631, %v1648
        %v1666 = vmul.f32 %v1632, %v1648
        %v1667 = vmul.f32 %v1633, %v1648
        %v1668 = vmul.f32 %v1634, %v1648
        %v1669 = vmul.f32 %v1635, %v1648
        %v1670 = vmul.f32 %v1636, %v1648
        %v1671 = vmul.f32 %v1637, %v1648
        %v1672 = vmul.f32 %v1638, %v1648
        %v1673 = vmul.f32 %v1639, %v1648
        %v1674 = vmul.f32 %v1640, %v1648
        %v1675 = vmul.f32 %v1641, %v1648
        %v1676 = vmul.f32 %v1642, %v1648
        %v1677 = vmul.f32 %v1643, %v1648
        %v1678 = vmul.f32 %v1644, %v1648
        %v1679 = vmul.f32 %v1645, %v1648
        %v1680 = vmul.f32 %v1646, %v1648
        %v1681 = vadd.f32 %v1581, %v1649
        %v1682 = vadd.f32 %v1582, %v1650
        %v1683 = vadd.f32 %v1583, %v1651
        %v1684 = vadd.f32 %v1584, %v1652
        %v1685 = vadd.f32 %v1585, %v1653
        %v1686 = vadd.f32 %v1586, %v1654
        %v1687 = vadd.f32 %v1587, %v1655
        %v1688 = vadd.f32 %v1588, %v1656
        %v1689 = vadd.f32 %v1589, %v1657
        %v1690 = vadd.f32 %v1590, %v1658
        %v1691 = vadd.f32 %v1591, %v1659
        %v1692 = vadd.f32 %v1592, %v1660
        %v1693 = vadd.f32 %v1593, %v1661
        %v1694 = vadd.f32 %v1594, %v1662
        %v1695 = vadd.f32 %v1595, %v1663
        %v1696 = vadd.f32 %v1596, %v1664
        %v1697 = vadd.f32 %v1597, %v1665
        %v1698 = vadd.f32 %v1598, %v1666
        %v1699 = vadd.f32 %v1599, %v1667
        %v1700 = vadd.f32 %v1600, %v1668
        %v1701 = vadd.f32 %v1601, %v1669
        %v1702 = vadd.f32 %v1602, %v1670
        %v1703 = vadd.f32 %v1603, %v1671
        %v1704 = vadd.f32 %v1604, %v1672
        %v1705 = vadd.f32 %v1605, %v1673
        %v1706 = vadd.f32 %v1606, %v1674
        %v1707 = vadd.f32 %v1607, %v1675
        %v1708 = vadd.f32 %v1608, %v1676
        %v1709 = vadd.f32 %v1609, %v1677
        %v1710 = vadd.f32 %v1610, %v1678
        %v1711 = vadd.f32 %v1611, %v1679
        %v1712 = vadd.f32 %v1612, %v1680
        %v1713 = vld [vmem:[#allocation2 + $0x127] sm:$0xff]
        %v1714 = vld [vmem:[#allocation2 + $0x12f] sm:$0xff]
        %v1715 = vsel %vm926, %v1091, 0.0
        %v1716 = vsel %vm927, %v1092, 0.0
        %v1717 = vsel %vm928, %v1093, 0.0
        %v1718 = vsel %vm929, %v1094, 0.0
        %v1719 = vsel %vm930, %v1095, 0.0
        %v1720 = vsel %vm931, %v1096, 0.0
        %v1721 = vsel %vm932, %v1097, 0.0
        %v1722 = vsel %vm933, %v1098, 0.0
        %v1723 = vsel %vm934, %v1099, 0.0
        %v1724 = vsel %vm935, %v1100, 0.0
        %v1725 = vsel %vm936, %v1101, 0.0
        %v1726 = vsel %vm937, %v1102, 0.0
        %v1727 = vsel %vm938, %v1103, 0.0
        %v1728 = vsel %vm939, %v1104, 0.0
        %v1729 = vsel %vm940, %v1105, 0.0
        %v1730 = vsel %vm941, %v1106, 0.0
        %v1731 = vsel %vm942, %v1107, 0.0
        %v1732 = vsel %vm943, %v1108, 0.0
        %v1733 = vsel %vm944, %v1109, 0.0
        %v1734 = vsel %vm945, %v1110, 0.0
        %v1735 = vsel %vm946, %v1111, 0.0
        %v1736 = vsel %vm947, %v1112, 0.0
        %v1737 = vsel %vm948, %v1113, 0.0
        %v1738 = vsel %vm949, %v1114, 0.0
        %v1739 = vsel %vm950, %v1115, 0.0
        %v1740 = vsel %vm951, %v1116, 0.0
        %v1741 = vsel %vm952, %v1117, 0.0
        %v1742 = vsel %vm953, %v1118, 0.0
        %v1743 = vsel %vm954, %v1445, 0.0
        %v1744 = vsel %vm955, %v1446, 0.0
        %v1745 = vsel %vm956, %v1713, 0.0
        %v1746 = vsel %vm957, %v1714, 0.0
        %v1747 = vld [vmem:[#allocation6 + $0x6] sm:$0x1]
        %v1748 = vperm.slane %v1747, 0
        %v1749 = vmul.f32 %v1715, %v1748
        %v1750 = vmul.f32 %v1716, %v1748
        %v1751 = vmul.f32 %v1717, %v1748
        %v1752 = vmul.f32 %v1718, %v1748
        %v1753 = vmul.f32 %v1719, %v1748
        %v1754 = vmul.f32 %v1720, %v1748
        %v1755 = vmul.f32 %v1721, %v1748
        %v1756 = vmul.f32 %v1722, %v1748
        %v1757 = vmul.f32 %v1723, %v1748
        %v1758 = vmul.f32 %v1724, %v1748
        %v1759 = vmul.f32 %v1725, %v1748
        %v1760 = vmul.f32 %v1726, %v1748
        %v1761 = vmul.f32 %v1727, %v1748
        %v1762 = vmul.f32 %v1728, %v1748
        %v1763 = vmul.f32 %v1729, %v1748
        %v1764 = vmul.f32 %v1730, %v1748
        %v1765 = vmul.f32 %v1731, %v1748
        %v1766 = vmul.f32 %v1732, %v1748
        %v1767 = vmul.f32 %v1733, %v1748
        %v1768 = vmul.f32 %v1734, %v1748
        %v1769 = vmul.f32 %v1735, %v1748
        %v1770 = vmul.f32 %v1736, %v1748
        %v1771 = vmul.f32 %v1737, %v1748
        %v1772 = vmul.f32 %v1738, %v1748
        %v1773 = vmul.f32 %v1739, %v1748
        %v1774 = vmul.f32 %v1740, %v1748
        %v1775 = vmul.f32 %v1741, %v1748
        %v1776 = vmul.f32 %v1742, %v1748
        %v1777 = vmul.f32 %v1743, %v1748
        %v1778 = vmul.f32 %v1744, %v1748
        %v1779 = vmul.f32 %v1745, %v1748
        %v1780 = vmul.f32 %v1746, %v1748
        %v1781 = vadd.f32 %v1681, %v1749
        %v1782 = vadd.f32 %v1682, %v1750
        %v1783 = vadd.f32 %v1683, %v1751
        %v1784 = vadd.f32 %v1684, %v1752
        %v1785 = vadd.f32 %v1685, %v1753
        %v1786 = vadd.f32 %v1686, %v1754
        %v1787 = vadd.f32 %v1687, %v1755
        %v1788 = vadd.f32 %v1688, %v1756
        %v1789 = vadd.f32 %v1689, %v1757
        %v1790 = vadd.f32 %v1690, %v1758
        %v1791 = vadd.f32 %v1691, %v1759
        %v1792 = vadd.f32 %v1692, %v1760
        %v1793 = vadd.f32 %v1693, %v1761
        %v1794 = vadd.f32 %v1694, %v1762
        %v1795 = vadd.f32 %v1695, %v1763
        %v1796 = vadd.f32 %v1696, %v1764
        %v1797 = vadd.f32 %v1697, %v1765
        %v1798 = vadd.f32 %v1698, %v1766
        %v1799 = vadd.f32 %v1699, %v1767
        %v1800 = vadd.f32 %v1700, %v1768
        %v1801 = vadd.f32 %v1701, %v1769
        %v1802 = vadd.f32 %v1702, %v1770
        %v1803 = vadd.f32 %v1703, %v1771
        %v1804 = vadd.f32 %v1704, %v1772
        %v1805 = vadd.f32 %v1705, %v1773
        %v1806 = vadd.f32 %v1706, %v1774
        %v1807 = vadd.f32 %v1707, %v1775
        %v1808 = vadd.f32 %v1708, %v1776
        %v1809 = vadd.f32 %v1709, %v1777
        %v1810 = vadd.f32 %v1710, %v1778
        %v1811 = vadd.f32 %v1711, %v1779
        %v1812 = vadd.f32 %v1712, %v1780
        %v1813 = vld [vmem:[#allocation2 + $0x128] sm:$0xff]
        %v1814 = vld [vmem:[#allocation2 + $0x130] sm:$0xff]
        %v1815 = vld [vmem:[#allocation6 + $0x7] sm:$0x1]
        %v1816 = vperm.slane %v1815, 0
        %v1817 = vmul.f32 %v1221, %v1816
        %v1818 = vmul.f32 %v1222, %v1816
        %v1819 = vmul.f32 %v1223, %v1816
        %v1820 = vmul.f32 %v1224, %v1816
        %v1821 = vmul.f32 %v1225, %v1816
        %v1822 = vmul.f32 %v1226, %v1816
        %v1823 = vmul.f32 %v1227, %v1816
        %v1824 = vmul.f32 %v1228, %v1816
        %v1825 = vmul.f32 %v1229, %v1816
        %v1826 = vmul.f32 %v1230, %v1816
        %v1827 = vmul.f32 %v1231, %v1816
        %v1828 = vmul.f32 %v1232, %v1816
        %v1829 = vmul.f32 %v1233, %v1816
        %v1830 = vmul.f32 %v1234, %v1816
        %v1831 = vmul.f32 %v1235, %v1816
        %v1832 = vmul.f32 %v1236, %v1816
        %v1833 = vmul.f32 %v1237, %v1816
        %v1834 = vmul.f32 %v1238, %v1816
        %v1835 = vmul.f32 %v1239, %v1816
        %v1836 = vmul.f32 %v1240, %v1816
        %v1837 = vmul.f32 %v1241, %v1816
        %v1838 = vmul.f32 %v1242, %v1816
        %v1839 = vmul.f32 %v1243, %v1816
        %v1840 = vmul.f32 %v1244, %v1816
        %v1841 = vmul.f32 %v1245, %v1816
        %v1842 = vmul.f32 %v1246, %v1816
        %v1843 = vmul.f32 %v1247, %v1816
        %v1844 = vmul.f32 %v1248, %v1816
        %v1845 = vmul.f32 %v1545, %v1816
        %v1846 = vmul.f32 %v1546, %v1816
        %v1847 = vmul.f32 %v1813, %v1816
        %v1848 = vmul.f32 %v1814, %v1816
        %v1849 = vadd.f32 %v1781, %v1817
        %v1850 = vadd.f32 %v1782, %v1818
        %v1851 = vadd.f32 %v1783, %v1819
        %v1852 = vadd.f32 %v1784, %v1820
        %v1853 = vadd.f32 %v1785, %v1821
        %v1854 = vadd.f32 %v1786, %v1822
        %v1855 = vadd.f32 %v1787, %v1823
        %v1856 = vadd.f32 %v1788, %v1824
        %v1857 = vadd.f32 %v1789, %v1825
        %v1858 = vadd.f32 %v1790, %v1826
        %v1859 = vadd.f32 %v1791, %v1827
        %v1860 = vadd.f32 %v1792, %v1828
        %v1861 = vadd.f32 %v1793, %v1829
        %v1862 = vadd.f32 %v1794, %v1830
        %v1863 = vadd.f32 %v1795, %v1831
        %v1864 = vadd.f32 %v1796, %v1832
        %v1865 = vadd.f32 %v1797, %v1833
        %v1866 = vadd.f32 %v1798, %v1834
        %v1867 = vadd.f32 %v1799, %v1835
        %v1868 = vadd.f32 %v1800, %v1836
        %v1869 = vadd.f32 %v1801, %v1837
        %v1870 = vadd.f32 %v1802, %v1838
        %v1871 = vadd.f32 %v1803, %v1839
        %v1872 = vadd.f32 %v1804, %v1840
        %v1873 = vadd.f32 %v1805, %v1841
        %v1874 = vadd.f32 %v1806, %v1842
        %v1875 = vadd.f32 %v1807, %v1843
        %v1876 = vadd.f32 %v1808, %v1844
        %v1877 = vadd.f32 %v1809, %v1845
        %v1878 = vadd.f32 %v1810, %v1846
        %v1879 = vadd.f32 %v1811, %v1847
        %v1880 = vadd.f32 %v1812, %v1848
        %v1881 = vld [vmem:[#allocation2 + $0x129] sm:$0xff]
        %v1882 = vld [vmem:[#allocation2 + $0x131] sm:$0xff]
        %v1883 = vsel %vm958, %v1319, 0.0
        %v1884 = vsel %vm959, %v1320, 0.0
        %v1885 = vsel %vm960, %v1321, 0.0
        %v1886 = vsel %vm961, %v1322, 0.0
        %v1887 = vsel %vm962, %v1323, 0.0
        %v1888 = vsel %vm963, %v1324, 0.0
        %v1889 = vsel %vm964, %v1325, 0.0
        %v1890 = vsel %vm965, %v1326, 0.0
        %v1891 = vsel %vm966, %v1327, 0.0
        %v1892 = vsel %vm967, %v1328, 0.0
        %v1893 = vsel %vm968, %v1329, 0.0
        %v1894 = vsel %vm969, %v1330, 0.0
        %v1895 = vsel %vm970, %v1331, 0.0
        %v1896 = vsel %vm971, %v1332, 0.0
        %v1897 = vsel %vm972, %v1333, 0.0
        %v1898 = vsel %vm973, %v1334, 0.0
        %v1899 = vsel %vm974, %v1335, 0.0
        %v1900 = vsel %vm975, %v1336, 0.0
        %v1901 = vsel %vm976, %v1337, 0.0
        %v1902 = vsel %vm977, %v1338, 0.0
        %v1903 = vsel %vm978, %v1339, 0.0
        %v1904 = vsel %vm979, %v1340, 0.0
        %v1905 = vsel %vm980, %v1341, 0.0
        %v1906 = vsel %vm981, %v1342, 0.0
        %v1907 = vsel %vm982, %v1343, 0.0
        %v1908 = vsel %vm983, %v1344, 0.0
        %v1909 = vsel %vm984, %v1345, 0.0
        %v1910 = vsel %vm985, %v1346, 0.0
        %v1911 = vsel %vm986, %v1613, 0.0
        %v1912 = vsel %vm987, %v1614, 0.0
        %v1913 = vsel %vm988, %v1881, 0.0
        %v1914 = vsel %vm989, %v1882, 0.0
        %v1915 = vld [vmem:[#allocation6 + $0x8] sm:$0x1]
        %v1916 = vperm.slane %v1915, 0
        %v1917 = vmul.f32 %v1883, %v1916
        %v1918 = vmul.f32 %v1884, %v1916
        %v1919 = vmul.f32 %v1885, %v1916
        %v1920 = vmul.f32 %v1886, %v1916
        %v1921 = vmul.f32 %v1887, %v1916
        %v1922 = vmul.f32 %v1888, %v1916
        %v1923 = vmul.f32 %v1889, %v1916
        %v1924 = vmul.f32 %v1890, %v1916
        %v1925 = vmul.f32 %v1891, %v1916
        %v1926 = vmul.f32 %v1892, %v1916
        %v1927 = vmul.f32 %v1893, %v1916
        %v1928 = vmul.f32 %v1894, %v1916
        %v1929 = vmul.f32 %v1895, %v1916
        %v1930 = vmul.f32 %v1896, %v1916
        %v1931 = vmul.f32 %v1897, %v1916
        %v1932 = vmul.f32 %v1898, %v1916
        %v1933 = vmul.f32 %v1899, %v1916
        %v1934 = vmul.f32 %v1900, %v1916
        %v1935 = vmul.f32 %v1901, %v1916
        %v1936 = vmul.f32 %v1902, %v1916
        %v1937 = vmul.f32 %v1903, %v1916
        %v1938 = vmul.f32 %v1904, %v1916
        %v1939 = vmul.f32 %v1905, %v1916
        %v1940 = vmul.f32 %v1906, %v1916
        %v1941 = vmul.f32 %v1907, %v1916
        %v1942 = vmul.f32 %v1908, %v1916
        %v1943 = vmul.f32 %v1909, %v1916
        %v1944 = vmul.f32 %v1910, %v1916
        %v1945 = vmul.f32 %v1911, %v1916
        %v1946 = vmul.f32 %v1912, %v1916
        %v1947 = vmul.f32 %v1913, %v1916
        %v1948 = vmul.f32 %v1914, %v1916
        %v1949 = vadd.f32 %v1849, %v1917
        %v1950 = vadd.f32 %v1850, %v1918
        %v1951 = vadd.f32 %v1851, %v1919
        %v1952 = vadd.f32 %v1852, %v1920
        %v1953 = vadd.f32 %v1853, %v1921
        %v1954 = vadd.f32 %v1854, %v1922
        %v1955 = vadd.f32 %v1855, %v1923
        %v1956 = vadd.f32 %v1856, %v1924
        %v1957 = vadd.f32 %v1857, %v1925
        %v1958 = vadd.f32 %v1858, %v1926
        %v1959 = vadd.f32 %v1859, %v1927
        %v1960 = vadd.f32 %v1860, %v1928
        %v1961 = vadd.f32 %v1861, %v1929
        %v1962 = vadd.f32 %v1862, %v1930
        %v1963 = vadd.f32 %v1863, %v1931
        %v1964 = vadd.f32 %v1864, %v1932
        %v1965 = vadd.f32 %v1865, %v1933
        %v1966 = vadd.f32 %v1866, %v1934
        %v1967 = vadd.f32 %v1867, %v1935
        %v1968 = vadd.f32 %v1868, %v1936
        %v1969 = vadd.f32 %v1869, %v1937
        %v1970 = vadd.f32 %v1870, %v1938
        %v1971 = vadd.f32 %v1871, %v1939
        %v1972 = vadd.f32 %v1872, %v1940
        %v1973 = vadd.f32 %v1873, %v1941
        %v1974 = vadd.f32 %v1874, %v1942
        %v1975 = vadd.f32 %v1875, %v1943
        %v1976 = vadd.f32 %v1876, %v1944
        %v1977 = vadd.f32 %v1877, %v1945
        %v1978 = vadd.f32 %v1878, %v1946
        %v1979 = vadd.f32 %v1879, %v1947
        %v1980 = vadd.f32 %v1880, %v1948
        %v1981 = vperm.slane %v1054, 0
        %v1982 = vadd.f32 %v1949, %v1981
        %v1983 = vadd.f32 %v1950, %v1981
        %v1984 = vadd.f32 %v1951, %v1981
        %v1985 = vadd.f32 %v1952, %v1981
        %v1986 = vadd.f32 %v1953, %v1981
        %v1987 = vadd.f32 %v1954, %v1981
        %v1988 = vadd.f32 %v1955, %v1981
        %v1989 = vadd.f32 %v1956, %v1981
        %v1990 = vadd.f32 %v1957, %v1981
        %v1991 = vadd.f32 %v1958, %v1981
        %v1992 = vadd.f32 %v1959, %v1981
        %v1993 = vadd.f32 %v1960, %v1981
        %v1994 = vadd.f32 %v1961, %v1981
        %v1995 = vadd.f32 %v1962, %v1981
        %v1996 = vadd.f32 %v1963, %v1981
        %v1997 = vadd.f32 %v1964, %v1981
        %v1998 = vadd.f32 %v1965, %v1981
        %v1999 = vadd.f32 %v1966, %v1981
        %v2000 = vadd.f32 %v1967, %v1981
        %v2001 = vadd.f32 %v1968, %v1981
        %v2002 = vadd.f32 %v1969, %v1981
        %v2003 = vadd.f32 %v1970, %v1981
        %v2004 = vadd.f32 %v1971, %v1981
        %v2005 = vadd.f32 %v1972, %v1981
        %v2006 = vadd.f32 %v1973, %v1981
        %v2007 = vadd.f32 %v1974, %v1981
        %v2008 = vadd.f32 %v1975, %v1981
        %v2009 = vadd.f32 %v1976, %v1981
        %v2010 = vadd.f32 %v1977, %v1981
        %v2011 = vadd.f32 %v1978, %v1981
        %v2012 = vadd.f32 %v1979, %v1981
        %v2013 = vadd.f32 %v1980, %v1981
        %v2014 = vadd.f32 %v1022, %v1982
        %v2015 = vadd.f32 %v1023, %v1983
        %v2016 = vadd.f32 %v1024, %v1984
        %v2017 = vadd.f32 %v1025, %v1985
        %v2018 = vadd.f32 %v1026, %v1986
        %v2019 = vadd.f32 %v1027, %v1987
        %v2020 = vadd.f32 %v1028, %v1988
        %v2021 = vadd.f32 %v1029, %v1989
        %v2022 = vadd.f32 %v1030, %v1990
        %v2023 = vadd.f32 %v1031, %v1991
        %v2024 = vadd.f32 %v1032, %v1992
        %v2025 = vadd.f32 %v1033, %v1993
        %v2026 = vadd.f32 %v1034, %v1994
        %v2027 = vadd.f32 %v1035, %v1995
        %v2028 = vadd.f32 %v1036, %v1996
        %v2029 = vadd.f32 %v1037, %v1997
        %v2030 = vadd.f32 %v1038, %v1998
        %v2031 = vadd.f32 %v1039, %v1999
        %v2032 = vadd.f32 %v1040, %v2000
        %v2033 = vadd.f32 %v1041, %v2001
        %v2034 = vadd.f32 %v1042, %v2002
        %v2035 = vadd.f32 %v1043, %v2003
        %v2036 = vadd.f32 %v1044, %v2004
        %v2037 = vadd.f32 %v1045, %v2005
        %v2038 = vadd.f32 %v1046, %v2006
        %v2039 = vadd.f32 %v1047, %v2007
        %v2040 = vadd.f32 %v1048, %v2008
        %v2041 = vadd.f32 %v1049, %v2009
        %v2042 = vadd.f32 %v1050, %v2010
        %v2043 = vadd.f32 %v1051, %v2011
        %v2044 = vadd.f32 %v1052, %v2012
        %v2045 = vadd.f32 %v1053, %v2013
        %v2046 = vld [vmem:[#allocation9] sm:$0xff]
        %v2047 = vld [vmem:[#allocation9 + $0x8] sm:$0xff]
        %v2048 = vld [vmem:[#allocation9 + $0x10] sm:$0xff]
        %v2049 = vld [vmem:[#allocation9 + $0x18] sm:$0xff]
        %v2050 = vld [vmem:[#allocation9 + $0x20] sm:$0xff]
        %v2051 = vld [vmem:[#allocation9 + $0x28] sm:$0xff]
        %v2052 = vld [vmem:[#allocation9 + $0x30] sm:$0xff]
        %v2053 = vld [vmem:[#allocation9 + $0x38] sm:$0xff]
        %v2054 = vld [vmem:[#allocation9 + $0x40] sm:$0xff]
        %v2055 = vld [vmem:[#allocation9 + $0x48] sm:$0xff]
        %v2056 = vld [vmem:[#allocation9 + $0x50] sm:$0xff]
        %v2057 = vld [vmem:[#allocation9 + $0x58] sm:$0xff]
        %v2058 = vld [vmem:[#allocation9 + $0x60] sm:$0xff]
        %v2059 = vld [vmem:[#allocation9 + $0x68] sm:$0xff]
        %v2060 = vld [vmem:[#allocation9 + $0x70] sm:$0xff]
        %v2061 = vld [vmem:[#allocation9 + $0x78] sm:$0xff]
        %v2062 = vld [vmem:[#allocation15 + $0x2] sm:$0x1]
        %v2063 = vperm.slane %v2062, 0
        %2064 = vmatpush.msra.mxu0 %v2061
        %2065 = vmatpush.msra.mxu0 %v2060
        %2066 = vmatpush.msra.mxu0 %v2059
        %2067 = vmatpush.msra.mxu0 %v2058
        %2068 = vmatpush.msra.mxu0 %v2057
        %2069 = vmatpush.msra.mxu0 %v2056
        %2070 = vmatpush.msra.mxu0 %v2055
        %2071 = vmatpush.msra.mxu0 %v2054
        %2072 = vmatpush.msra.mxu0 %v2053
        %2073 = vmatpush.msra.mxu0 %v2052
        %2074 = vmatpush.msra.mxu0 %v2051
        %2075 = vmatpush.msra.mxu0 %v2050
        %2076 = vmatpush.msra.mxu0 %v2049
        %2077 = vmatpush.msra.mxu0 %v2048
        %2078 = vmatpush.msra.mxu0 %v2047
        %2079 = vmatpush.msra.mxu0 %v2046
        %2080 = vmatmul.f32.gmra.mxu0 %v2014
        %v2081 = vpop.f32.mrf.mxu0
        %v2082 = vadd.f32 %v2063, %v2081
        %2083 = vmatmul.f32.gmra.mxu0 %v2015
        %v2084 = vpop.f32.mrf.mxu0
        %v2085 = vadd.f32 %v2063, %v2084
        %2086 = vmatmul.f32.gmra.mxu0 %v2016
        %v2087 = vpop.f32.mrf.mxu0
        %v2088 = vadd.f32 %v2063, %v2087
        %2089 = vmatmul.f32.gmra.mxu0 %v2017
        %v2090 = vpop.f32.mrf.mxu0
        %v2091 = vadd.f32 %v2063, %v2090
        %2092 = vmatmul.f32.gmra.mxu0 %v2018
        %v2093 = vpop.f32.mrf.mxu0
        %v2094 = vadd.f32 %v2063, %v2093
        %2095 = vmatmul.f32.gmra.mxu0 %v2019
        %v2096 = vpop.f32.mrf.mxu0
        %v2097 = vadd.f32 %v2063, %v2096
        %2098 = vmatmul.f32.gmra.mxu0 %v2020
        %v2099 = vpop.f32.mrf.mxu0
        %v2100 = vadd.f32 %v2063, %v2099
        %2101 = vmatmul.f32.gmra.mxu0 %v2021
        %v2102 = vpop.f32.mrf.mxu0
        %v2103 = vadd.f32 %v2063, %v2102
        %2104 = vmatmul.f32.gmra.mxu0 %v2022
        %v2105 = vpop.f32.mrf.mxu0
        %v2106 = vadd.f32 %v2063, %v2105
        %2107 = vmatmul.f32.gmra.mxu0 %v2023
        %v2108 = vpop.f32.mrf.mxu0
        %v2109 = vadd.f32 %v2063, %v2108
        %2110 = vmatmul.f32.gmra.mxu0 %v2024
        %v2111 = vpop.f32.mrf.mxu0
        %v2112 = vadd.f32 %v2063, %v2111
        %2113 = vmatmul.f32.gmra.mxu0 %v2025
        %v2114 = vpop.f32.mrf.mxu0
        %v2115 = vadd.f32 %v2063, %v2114
        %2116 = vmatmul.f32.gmra.mxu0 %v2026
        %v2117 = vpop.f32.mrf.mxu0
        %v2118 = vadd.f32 %v2063, %v2117
        %2119 = vmatmul.f32.gmra.mxu0 %v2027
        %v2120 = vpop.f32.mrf.mxu0
        %v2121 = vadd.f32 %v2063, %v2120
        %2122 = vmatmul.f32.gmra.mxu0 %v2028
        %v2123 = vpop.f32.mrf.mxu0
        %v2124 = vadd.f32 %v2063, %v2123
        %2125 = vmatmul.f32.gmra.mxu0 %v2029
        %v2126 = vpop.f32.mrf.mxu0
        %v2127 = vadd.f32 %v2063, %v2126
        %2128 = vmatmul.f32.gmra.mxu0 %v2030
        %v2129 = vpop.f32.mrf.mxu0
        %v2130 = vadd.f32 %v2063, %v2129
        %2131 = vmatmul.f32.gmra.mxu0 %v2031
        %v2132 = vpop.f32.mrf.mxu0
        %v2133 = vadd.f32 %v2063, %v2132
        %2134 = vmatmul.f32.gmra.mxu0 %v2032
        %v2135 = vpop.f32.mrf.mxu0
        %v2136 = vadd.f32 %v2063, %v2135
        %2137 = vmatmul.f32.gmra.mxu0 %v2033
        %v2138 = vpop.f32.mrf.mxu0
        %v2139 = vadd.f32 %v2063, %v2138
        %2140 = vmatmul.f32.gmra.mxu0 %v2034
        %v2141 = vpop.f32.mrf.mxu0
        %v2142 = vadd.f32 %v2063, %v2141
        %2143 = vmatmul.f32.gmra.mxu0 %v2035
        %v2144 = vpop.f32.mrf.mxu0
        %v2145 = vadd.f32 %v2063, %v2144
        %2146 = vmatmul.f32.gmra.mxu0 %v2036
        %v2147 = vpop.f32.mrf.mxu0
        %v2148 = vadd.f32 %v2063, %v2147
        %2149 = vmatmul.f32.gmra.mxu0 %v2037
        %v2150 = vpop.f32.mrf.mxu0
        %v2151 = vadd.f32 %v2063, %v2150
        %2152 = vmatmul.f32.gmra.mxu0 %v2038
        %v2153 = vpop.f32.mrf.mxu0
        %v2154 = vadd.f32 %v2063, %v2153
        %2155 = vmatmul.f32.gmra.mxu0 %v2039
        %v2156 = vpop.f32.mrf.mxu0
        %v2157 = vadd.f32 %v2063, %v2156
        %2158 = vmatmul.f32.gmra.mxu0 %v2040
        %v2159 = vpop.f32.mrf.mxu0
        %v2160 = vadd.f32 %v2063, %v2159
        %2161 = vmatmul.f32.gmra.mxu0 %v2041
        %v2162 = vpop.f32.mrf.mxu0
        %v2163 = vadd.f32 %v2063, %v2162
        %2164 = vmatmul.f32.gmra.mxu0 %v2042
        %v2165 = vpop.f32.mrf.mxu0
        %v2166 = vadd.f32 %v2063, %v2165
        %2167 = vmatmul.f32.gmra.mxu0 %v2043
        %v2168 = vpop.f32.mrf.mxu0
        %v2169 = vadd.f32 %v2063, %v2168
        %2170 = vmatmul.f32.gmra.mxu0 %v2044
        %v2171 = vpop.f32.mrf.mxu0
        %v2172 = vadd.f32 %v2063, %v2171
        %2173 = vmatmul.f32.gmra.mxu0 %v2045
        %v2174 = vpop.f32.mrf.mxu0
        %v2175 = vadd.f32 %v2063, %v2174
        %2176 = vdwg.mxu0
        %v2177 = vld [vmem:[#allocation15 + $0x1] sm:$0x1]
        %2178 = vst [vmem:[#allocation2 + $0x28] sm:$0xff] %v2082
        %2179 = vst [vmem:[#allocation2 + $0x30] sm:$0xff] %v2085
        %2180 = vst [vmem:[#allocation2 + $0x38] sm:$0xff] %v2088
        %2181 = vst [vmem:[#allocation2 + $0x40] sm:$0xff] %v2091
        %2182 = vst [vmem:[#allocation2 + $0x48] sm:$0xff] %v2094
        %2183 = vst [vmem:[#allocation2 + $0x50] sm:$0xff] %v2097
        %2184 = vst [vmem:[#allocation2 + $0x58] sm:$0xff] %v2100
        %2185 = vst [vmem:[#allocation2 + $0x60] sm:$0xff] %v2103
        %2186 = vst [vmem:[#allocation2 + $0x68] sm:$0xff] %v2106
        %2187 = vst [vmem:[#allocation2 + $0x70] sm:$0xff] %v2109
        %2188 = vst [vmem:[#allocation2 + $0x78] sm:$0xff] %v2112
        %2189 = vst [vmem:[#allocation2 + $0x80] sm:$0xff] %v2115
        %2190 = vst [vmem:[#allocation2 + $0x88] sm:$0xff] %v2118
        %2191 = vst [vmem:[#allocation2 + $0x90] sm:$0xff] %v2121
        %2192 = vst [vmem:[#allocation2 + $0x98] sm:$0xff] %v2124
        %2193 = vst [vmem:[#allocation2 + $0xa0] sm:$0xff] %v2127
        %2194 = vst [vmem:[#allocation2 + $0xa8] sm:$0xff] %v2130
        %2195 = vst [vmem:[#allocation2 + $0xb0] sm:$0xff] %v2133
        %2196 = vst [vmem:[#allocation2 + $0xb8] sm:$0xff] %v2136
        %2197 = vst [vmem:[#allocation2 + $0xc0] sm:$0xff] %v2139
        %2198 = vst [vmem:[#allocation2 + $0xc8] sm:$0xff] %v2142
        %2199 = vst [vmem:[#allocation2 + $0xd0] sm:$0xff] %v2145
        %2200 = vst [vmem:[#allocation2 + $0xd8] sm:$0xff] %v2148
        %2201 = vst [vmem:[#allocation2 + $0xe0] sm:$0xff] %v2151
        %2202 = vst [vmem:[#allocation2 + $0xe8] sm:$0xff] %v2154
        %2203 = vst [vmem:[#allocation2 + $0xf0] sm:$0xff] %v2157
        %2204 = vst [vmem:[#allocation2 + $0xf8] sm:$0xff] %v2160
        %2205 = vst [vmem:[#allocation2 + $0x100] sm:$0xff] %v2163
        %2206 = vst [vmem:[#allocation2 + $0x108] sm:$0xff] %v2166
        %2207 = vst [vmem:[#allocation2 + $0x110] sm:$0xff] %v2169
        %2208 = vst [vmem:[#allocation2 + $0x118] sm:$0xff] %v2172
        %2209 = vst [vmem:[#allocation2 + $0x120] sm:$0xff] %v2175
        %v2210 = vld [vmem:[#allocation2 + $0x6] sm:$0xff]
        %v2211 = vld [vmem:[#allocation2 + $0xe] sm:$0xff]
        %v2212 = vld [vmem:[#allocation2 + $0x16] sm:$0xff]
        %v2213 = vld [vmem:[#allocation2 + $0x1e] sm:$0xff]
        %v2214 = vld [vmem:[#allocation2 + $0x26] sm:$0xff]
        %v2215 = vld [vmem:[#allocation2 + $0x2e] sm:$0xff]
        %v2216 = vld [vmem:[#allocation2 + $0x36] sm:$0xff]
        %v2217 = vld [vmem:[#allocation2 + $0x3e] sm:$0xff]
        %v2218 = vld [vmem:[#allocation2 + $0x46] sm:$0xff]
        %v2219 = vld [vmem:[#allocation2 + $0x4e] sm:$0xff]
        %v2220 = vld [vmem:[#allocation2 + $0x56] sm:$0xff]
        %v2221 = vld [vmem:[#allocation2 + $0x5e] sm:$0xff]
        %v2222 = vld [vmem:[#allocation2 + $0x66] sm:$0xff]
        %v2223 = vld [vmem:[#allocation2 + $0x6e] sm:$0xff]
        %v2224 = vld [vmem:[#allocation2 + $0x76] sm:$0xff]
        %v2225 = vld [vmem:[#allocation2 + $0x7e] sm:$0xff]
        %v2226 = vld [vmem:[#allocation2 + $0x86] sm:$0xff]
        %v2227 = vld [vmem:[#allocation2 + $0x8e] sm:$0xff]
        %v2228 = vld [vmem:[#allocation2 + $0x96] sm:$0xff]
        %v2229 = vld [vmem:[#allocation2 + $0x9e] sm:$0xff]
        %v2230 = vld [vmem:[#allocation2 + $0xa6] sm:$0xff]
        %v2231 = vld [vmem:[#allocation2 + $0xae] sm:$0xff]
        %v2232 = vld [vmem:[#allocation2 + $0xb6] sm:$0xff]
        %v2233 = vld [vmem:[#allocation2 + $0xbe] sm:$0xff]
        %v2234 = vld [vmem:[#allocation2 + $0xc6] sm:$0xff]
        %v2235 = vld [vmem:[#allocation2 + $0xce] sm:$0xff]
        %v2236 = vld [vmem:[#allocation2 + $0xd6] sm:$0xff]
        %v2237 = vld [vmem:[#allocation2 + $0xde] sm:$0xff]
        %v2238 = vld [vmem:[#allocation2 + $0xe6] sm:$0xff]
        %v2239 = vld [vmem:[#allocation2 + $0xee] sm:$0xff]
        %v2240 = vld [vmem:[#allocation2 + $0xf6] sm:$0xff]
        %v2241 = vld [vmem:[#allocation2 + $0xfe] sm:$0xff]
        %v2242 = vsel %vm894, %v2210, 0.0
        %v2243 = vsel %vm895, %v2211, 0.0
        %v2244 = vsel %vm896, %v2212, 0.0
        %v2245 = vsel %vm897, %v2213, 0.0
        %v2246 = vsel %vm898, %v2214, 0.0
        %v2247 = vsel %vm899, %v2215, 0.0
        %v2248 = vsel %vm900, %v2216, 0.0
        %v2249 = vsel %vm901, %v2217, 0.0
        %v2250 = vsel %vm902, %v2218, 0.0
        %v2251 = vsel %vm903, %v2219, 0.0
        %v2252 = vsel %vm904, %v2220, 0.0
        %v2253 = vsel %vm905, %v2221, 0.0
        %v2254 = vsel %vm906, %v2222, 0.0
        %v2255 = vsel %vm907, %v2223, 0.0
        %v2256 = vsel %vm908, %v2224, 0.0
        %v2257 = vsel %vm909, %v2225, 0.0
        %v2258 = vsel %vm910, %v2226, 0.0
        %v2259 = vsel %vm911, %v2227, 0.0
        %v2260 = vsel %vm912, %v2228, 0.0
        %v2261 = vsel %vm913, %v2229, 0.0
        %v2262 = vsel %vm914, %v2230, 0.0
        %v2263 = vsel %vm915, %v2231, 0.0
        %v2264 = vsel %vm916, %v2232, 0.0
        %v2265 = vsel %vm917, %v2233, 0.0
        %v2266 = vsel %vm918, %v2234, 0.0
        %v2267 = vsel %vm919, %v2235, 0.0
        %v2268 = vsel %vm920, %v2236, 0.0
        %v2269 = vsel %vm921, %v2237, 0.0
        %v2270 = vsel %vm922, %v2238, 0.0
        %v2271 = vsel %vm923, %v2239, 0.0
        %v2272 = vsel %vm924, %v2240, 0.0
        %v2273 = vsel %vm925, %v2241, 0.0
        %v2274 = vld [vmem:[#allocation8] sm:$0x1]
        %v2275 = vperm.slane %v2274, 0
        %v2276 = vmul.f32 %v2242, %v2275
        %v2277 = vmul.f32 %v2243, %v2275
        %v2278 = vmul.f32 %v2244, %v2275
        %v2279 = vmul.f32 %v2245, %v2275
        %v2280 = vmul.f32 %v2246, %v2275
        %v2281 = vmul.f32 %v2247, %v2275
        %v2282 = vmul.f32 %v2248, %v2275
        %v2283 = vmul.f32 %v2249, %v2275
        %v2284 = vmul.f32 %v2250, %v2275
        %v2285 = vmul.f32 %v2251, %v2275
        %v2286 = vmul.f32 %v2252, %v2275
        %v2287 = vmul.f32 %v2253, %v2275
        %v2288 = vmul.f32 %v2254, %v2275
        %v2289 = vmul.f32 %v2255, %v2275
        %v2290 = vmul.f32 %v2256, %v2275
        %v2291 = vmul.f32 %v2257, %v2275
        %v2292 = vmul.f32 %v2258, %v2275
        %v2293 = vmul.f32 %v2259, %v2275
        %v2294 = vmul.f32 %v2260, %v2275
        %v2295 = vmul.f32 %v2261, %v2275
        %v2296 = vmul.f32 %v2262, %v2275
        %v2297 = vmul.f32 %v2263, %v2275
        %v2298 = vmul.f32 %v2264, %v2275
        %v2299 = vmul.f32 %v2265, %v2275
        %v2300 = vmul.f32 %v2266, %v2275
        %v2301 = vmul.f32 %v2267, %v2275
        %v2302 = vmul.f32 %v2268, %v2275
        %v2303 = vmul.f32 %v2269, %v2275
        %v2304 = vmul.f32 %v2270, %v2275
        %v2305 = vmul.f32 %v2271, %v2275
        %v2306 = vmul.f32 %v2272, %v2275
        %v2307 = vmul.f32 %v2273, %v2275
        %v2308 = vadd.f32 %v2276, 0.0
        %v2309 = vadd.f32 %v2277, 0.0
        %v2310 = vadd.f32 %v2278, 0.0
        %v2311 = vadd.f32 %v2279, 0.0
        %v2312 = vadd.f32 %v2280, 0.0
        %v2313 = vadd.f32 %v2281, 0.0
        %v2314 = vadd.f32 %v2282, 0.0
        %v2315 = vadd.f32 %v2283, 0.0
        %v2316 = vadd.f32 %v2284, 0.0
        %v2317 = vadd.f32 %v2285, 0.0
        %v2318 = vadd.f32 %v2286, 0.0
        %v2319 = vadd.f32 %v2287, 0.0
        %v2320 = vadd.f32 %v2288, 0.0
        %v2321 = vadd.f32 %v2289, 0.0
        %v2322 = vadd.f32 %v2290, 0.0
        %v2323 = vadd.f32 %v2291, 0.0
        %v2324 = vadd.f32 %v2292, 0.0
        %v2325 = vadd.f32 %v2293, 0.0
        %v2326 = vadd.f32 %v2294, 0.0
        %v2327 = vadd.f32 %v2295, 0.0
        %v2328 = vadd.f32 %v2296, 0.0
        %v2329 = vadd.f32 %v2297, 0.0
        %v2330 = vadd.f32 %v2298, 0.0
        %v2331 = vadd.f32 %v2299, 0.0
        %v2332 = vadd.f32 %v2300, 0.0
        %v2333 = vadd.f32 %v2301, 0.0
        %v2334 = vadd.f32 %v2302, 0.0
        %v2335 = vadd.f32 %v2303, 0.0
        %v2336 = vadd.f32 %v2304, 0.0
        %v2337 = vadd.f32 %v2305, 0.0
        %v2338 = vadd.f32 %v2306, 0.0
        %v2339 = vadd.f32 %v2307, 0.0
        %v2340 = vld [vmem:[#allocation2 + $0x7] sm:$0xff]
        %v2341 = vld [vmem:[#allocation2 + $0xf] sm:$0xff]
        %v2342 = vld [vmem:[#allocation2 + $0x17] sm:$0xff]
        %v2343 = vld [vmem:[#allocation2 + $0x1f] sm:$0xff]
        %v2344 = vld [vmem:[#allocation2 + $0x27] sm:$0xff]
        %v2345 = vld [vmem:[#allocation2 + $0x2f] sm:$0xff]
        %v2346 = vld [vmem:[#allocation2 + $0x37] sm:$0xff]
        %v2347 = vld [vmem:[#allocation2 + $0x3f] sm:$0xff]
        %v2348 = vld [vmem:[#allocation2 + $0x47] sm:$0xff]
        %v2349 = vld [vmem:[#allocation2 + $0x4f] sm:$0xff]
        %v2350 = vld [vmem:[#allocation2 + $0x57] sm:$0xff]
        %v2351 = vld [vmem:[#allocation2 + $0x5f] sm:$0xff]
        %v2352 = vld [vmem:[#allocation2 + $0x67] sm:$0xff]
        %v2353 = vld [vmem:[#allocation2 + $0x6f] sm:$0xff]
        %v2354 = vld [vmem:[#allocation2 + $0x77] sm:$0xff]
        %v2355 = vld [vmem:[#allocation2 + $0x7f] sm:$0xff]
        %v2356 = vld [vmem:[#allocation2 + $0x87] sm:$0xff]
        %v2357 = vld [vmem:[#allocation2 + $0x8f] sm:$0xff]
        %v2358 = vld [vmem:[#allocation2 + $0x97] sm:$0xff]
        %v2359 = vld [vmem:[#allocation2 + $0x9f] sm:$0xff]
        %v2360 = vld [vmem:[#allocation2 + $0xa7] sm:$0xff]
        %v2361 = vld [vmem:[#allocation2 + $0xaf] sm:$0xff]
        %v2362 = vld [vmem:[#allocation2 + $0xb7] sm:$0xff]
        %v2363 = vld [vmem:[#allocation2 + $0xbf] sm:$0xff]
        %v2364 = vld [vmem:[#allocation2 + $0xc7] sm:$0xff]
        %v2365 = vld [vmem:[#allocation2 + $0xcf] sm:$0xff]
        %v2366 = vld [vmem:[#allocation2 + $0xd7] sm:$0xff]
        %v2367 = vld [vmem:[#allocation2 + $0xdf] sm:$0xff]
        %v2368 = vld [vmem:[#allocation2 + $0xe7] sm:$0xff]
        %v2369 = vld [vmem:[#allocation2 + $0xef] sm:$0xff]
        %v2370 = vld [vmem:[#allocation2 + $0xf7] sm:$0xff]
        %v2371 = vld [vmem:[#allocation2 + $0xff] sm:$0xff]
        %v2372 = vsel %vm926, %v2340, 0.0
        %v2373 = vsel %vm927, %v2341, 0.0
        %v2374 = vsel %vm928, %v2342, 0.0
        %v2375 = vsel %vm929, %v2343, 0.0
        %v2376 = vsel %vm930, %v2344, 0.0
        %v2377 = vsel %vm931, %v2345, 0.0
        %v2378 = vsel %vm932, %v2346, 0.0
        %v2379 = vsel %vm933, %v2347, 0.0
        %v2380 = vsel %vm934, %v2348, 0.0
        %v2381 = vsel %vm935, %v2349, 0.0
        %v2382 = vsel %vm936, %v2350, 0.0
        %v2383 = vsel %vm937, %v2351, 0.0
        %v2384 = vsel %vm938, %v2352, 0.0
        %v2385 = vsel %vm939, %v2353, 0.0
        %v2386 = vsel %vm940, %v2354, 0.0
        %v2387 = vsel %vm941, %v2355, 0.0
        %v2388 = vsel %vm942, %v2356, 0.0
        %v2389 = vsel %vm943, %v2357, 0.0
        %v2390 = vsel %vm944, %v2358, 0.0
        %v2391 = vsel %vm945, %v2359, 0.0
        %v2392 = vsel %vm946, %v2360, 0.0
        %v2393 = vsel %vm947, %v2361, 0.0
        %v2394 = vsel %vm948, %v2362, 0.0
        %v2395 = vsel %vm949, %v2363, 0.0
        %v2396 = vsel %vm950, %v2364, 0.0
        %v2397 = vsel %vm951, %v2365, 0.0
        %v2398 = vsel %vm952, %v2366, 0.0
        %v2399 = vsel %vm953, %v2367, 0.0
        %v2400 = vsel %vm954, %v2368, 0.0
        %v2401 = vsel %vm955, %v2369, 0.0
        %v2402 = vsel %vm956, %v2370, 0.0
        %v2403 = vsel %vm957, %v2371, 0.0
        %v2404 = vld [vmem:[#allocation8 + $0x1] sm:$0x1]
        %v2405 = vperm.slane %v2404, 0
        %v2406 = vmul.f32 %v2372, %v2405
        %v2407 = vmul.f32 %v2373, %v2405
        %v2408 = vmul.f32 %v2374, %v2405
        %v2409 = vmul.f32 %v2375, %v2405
        %v2410 = vmul.f32 %v2376, %v2405
        %v2411 = vmul.f32 %v2377, %v2405
        %v2412 = vmul.f32 %v2378, %v2405
        %v2413 = vmul.f32 %v2379, %v2405
        %v2414 = vmul.f32 %v2380, %v2405
        %v2415 = vmul.f32 %v2381, %v2405
        %v2416 = vmul.f32 %v2382, %v2405
        %v2417 = vmul.f32 %v2383, %v2405
        %v2418 = vmul.f32 %v2384, %v2405
        %v2419 = vmul.f32 %v2385, %v2405
        %v2420 = vmul.f32 %v2386, %v2405
        %v2421 = vmul.f32 %v2387, %v2405
        %v2422 = vmul.f32 %v2388, %v2405
        %v2423 = vmul.f32 %v2389, %v2405
        %v2424 = vmul.f32 %v2390, %v2405
        %v2425 = vmul.f32 %v2391, %v2405
        %v2426 = vmul.f32 %v2392, %v2405
        %v2427 = vmul.f32 %v2393, %v2405
        %v2428 = vmul.f32 %v2394, %v2405
        %v2429 = vmul.f32 %v2395, %v2405
        %v2430 = vmul.f32 %v2396, %v2405
        %v2431 = vmul.f32 %v2397, %v2405
        %v2432 = vmul.f32 %v2398, %v2405
        %v2433 = vmul.f32 %v2399, %v2405
        %v2434 = vmul.f32 %v2400, %v2405
        %v2435 = vmul.f32 %v2401, %v2405
        %v2436 = vmul.f32 %v2402, %v2405
        %v2437 = vmul.f32 %v2403, %v2405
        %v2438 = vadd.f32 %v2308, %v2406
        %v2439 = vadd.f32 %v2309, %v2407
        %v2440 = vadd.f32 %v2310, %v2408
        %v2441 = vadd.f32 %v2311, %v2409
        %v2442 = vadd.f32 %v2312, %v2410
        %v2443 = vadd.f32 %v2313, %v2411
        %v2444 = vadd.f32 %v2314, %v2412
        %v2445 = vadd.f32 %v2315, %v2413
        %v2446 = vadd.f32 %v2316, %v2414
        %v2447 = vadd.f32 %v2317, %v2415
        %v2448 = vadd.f32 %v2318, %v2416
        %v2449 = vadd.f32 %v2319, %v2417
        %v2450 = vadd.f32 %v2320, %v2418
        %v2451 = vadd.f32 %v2321, %v2419
        %v2452 = vadd.f32 %v2322, %v2420
        %v2453 = vadd.f32 %v2323, %v2421
        %v2454 = vadd.f32 %v2324, %v2422
        %v2455 = vadd.f32 %v2325, %v2423
        %v2456 = vadd.f32 %v2326, %v2424
        %v2457 = vadd.f32 %v2327, %v2425
        %v2458 = vadd.f32 %v2328, %v2426
        %v2459 = vadd.f32 %v2329, %v2427
        %v2460 = vadd.f32 %v2330, %v2428
        %v2461 = vadd.f32 %v2331, %v2429
        %v2462 = vadd.f32 %v2332, %v2430
        %v2463 = vadd.f32 %v2333, %v2431
        %v2464 = vadd.f32 %v2334, %v2432
        %v2465 = vadd.f32 %v2335, %v2433
        %v2466 = vadd.f32 %v2336, %v2434
        %v2467 = vadd.f32 %v2337, %v2435
        %v2468 = vadd.f32 %v2338, %v2436
        %v2469 = vadd.f32 %v2339, %v2437
        %v2470 = vld [vmem:[#allocation2 + $0x8] sm:$0xff]
        %v2471 = vld [vmem:[#allocation2 + $0x10] sm:$0xff]
        %v2472 = vld [vmem:[#allocation2 + $0x18] sm:$0xff]
        %v2473 = vld [vmem:[#allocation2 + $0x20] sm:$0xff]
        %v2474 = vld [vmem:[#allocation2 + $0x28] sm:$0xff]
        %v2475 = vld [vmem:[#allocation2 + $0x30] sm:$0xff]
        %v2476 = vld [vmem:[#allocation2 + $0x38] sm:$0xff]
        %v2477 = vld [vmem:[#allocation2 + $0x40] sm:$0xff]
        %v2478 = vld [vmem:[#allocation2 + $0x48] sm:$0xff]
        %v2479 = vld [vmem:[#allocation2 + $0x50] sm:$0xff]
        %v2480 = vld [vmem:[#allocation2 + $0x58] sm:$0xff]
        %v2481 = vld [vmem:[#allocation2 + $0x60] sm:$0xff]
        %v2482 = vld [vmem:[#allocation2 + $0x68] sm:$0xff]
        %v2483 = vld [vmem:[#allocation2 + $0x70] sm:$0xff]
        %v2484 = vld [vmem:[#allocation2 + $0x78] sm:$0xff]
        %v2485 = vld [vmem:[#allocation2 + $0x80] sm:$0xff]
        %v2486 = vld [vmem:[#allocation2 + $0x88] sm:$0xff]
        %v2487 = vld [vmem:[#allocation2 + $0x90] sm:$0xff]
        %v2488 = vld [vmem:[#allocation2 + $0x98] sm:$0xff]
        %v2489 = vld [vmem:[#allocation2 + $0xa0] sm:$0xff]
        %v2490 = vld [vmem:[#allocation2 + $0xa8] sm:$0xff]
        %v2491 = vld [vmem:[#allocation2 + $0xb0] sm:$0xff]
        %v2492 = vld [vmem:[#allocation2 + $0xb8] sm:$0xff]
        %v2493 = vld [vmem:[#allocation2 + $0xc0] sm:$0xff]
        %v2494 = vld [vmem:[#allocation2 + $0xc8] sm:$0xff]
        %v2495 = vld [vmem:[#allocation2 + $0xd0] sm:$0xff]
        %v2496 = vld [vmem:[#allocation2 + $0xd8] sm:$0xff]
        %v2497 = vld [vmem:[#allocation2 + $0xe0] sm:$0xff]
        %v2498 = vld [vmem:[#allocation2 + $0xe8] sm:$0xff]
        %v2499 = vld [vmem:[#allocation2 + $0xf0] sm:$0xff]
        %v2500 = vld [vmem:[#allocation2 + $0xf8] sm:$0xff]
        %v2501 = vld [vmem:[#allocation2 + $0x100] sm:$0xff]
        %v2502 = vld [vmem:[#allocation8 + $0x2] sm:$0x1]
        %v2503 = vperm.slane %v2502, 0
        %v2504 = vmul.f32 %v2470, %v2503
        %v2505 = vmul.f32 %v2471, %v2503
        %v2506 = vmul.f32 %v2472, %v2503
        %v2507 = vmul.f32 %v2473, %v2503
        %v2508 = vmul.f32 %v2474, %v2503
        %v2509 = vmul.f32 %v2475, %v2503
        %v2510 = vmul.f32 %v2476, %v2503
        %v2511 = vmul.f32 %v2477, %v2503
        %v2512 = vmul.f32 %v2478, %v2503
        %v2513 = vmul.f32 %v2479, %v2503
        %v2514 = vmul.f32 %v2480, %v2503
        %v2515 = vmul.f32 %v2481, %v2503
        %v2516 = vmul.f32 %v2482, %v2503
        %v2517 = vmul.f32 %v2483, %v2503
        %v2518 = vmul.f32 %v2484, %v2503
        %v2519 = vmul.f32 %v2485, %v2503
        %v2520 = vmul.f32 %v2486, %v2503
        %v2521 = vmul.f32 %v2487, %v2503
        %v2522 = vmul.f32 %v2488, %v2503
        %v2523 = vmul.f32 %v2489, %v2503
        %v2524 = vmul.f32 %v2490, %v2503
        %v2525 = vmul.f32 %v2491, %v2503
        %v2526 = vmul.f32 %v2492, %v2503
        %v2527 = vmul.f32 %v2493, %v2503
        %v2528 = vmul.f32 %v2494, %v2503
        %v2529 = vmul.f32 %v2495, %v2503
        %v2530 = vmul.f32 %v2496, %v2503
        %v2531 = vmul.f32 %v2497, %v2503
        %v2532 = vmul.f32 %v2498, %v2503
        %v2533 = vmul.f32 %v2499, %v2503
        %v2534 = vmul.f32 %v2500, %v2503
        %v2535 = vmul.f32 %v2501, %v2503
        %v2536 = vadd.f32 %v2438, %v2504
        %v2537 = vadd.f32 %v2439, %v2505
        %v2538 = vadd.f32 %v2440, %v2506
        %v2539 = vadd.f32 %v2441, %v2507
        %v2540 = vadd.f32 %v2442, %v2508
        %v2541 = vadd.f32 %v2443, %v2509
        %v2542 = vadd.f32 %v2444, %v2510
        %v2543 = vadd.f32 %v2445, %v2511
        %v2544 = vadd.f32 %v2446, %v2512
        %v2545 = vadd.f32 %v2447, %v2513
        %v2546 = vadd.f32 %v2448, %v2514
        %v2547 = vadd.f32 %v2449, %v2515
        %v2548 = vadd.f32 %v2450, %v2516
        %v2549 = vadd.f32 %v2451, %v2517
        %v2550 = vadd.f32 %v2452, %v2518
        %v2551 = vadd.f32 %v2453, %v2519
        %v2552 = vadd.f32 %v2454, %v2520
        %v2553 = vadd.f32 %v2455, %v2521
        %v2554 = vadd.f32 %v2456, %v2522
        %v2555 = vadd.f32 %v2457, %v2523
        %v2556 = vadd.f32 %v2458, %v2524
        %v2557 = vadd.f32 %v2459, %v2525
        %v2558 = vadd.f32 %v2460, %v2526
        %v2559 = vadd.f32 %v2461, %v2527
        %v2560 = vadd.f32 %v2462, %v2528
        %v2561 = vadd.f32 %v2463, %v2529
        %v2562 = vadd.f32 %v2464, %v2530
        %v2563 = vadd.f32 %v2465, %v2531
        %v2564 = vadd.f32 %v2466, %v2532
        %v2565 = vadd.f32 %v2467, %v2533
        %v2566 = vadd.f32 %v2468, %v2534
        %v2567 = vadd.f32 %v2469, %v2535
        %v2568 = vld [vmem:[#allocation2 + $0x9] sm:$0xff]
        %v2569 = vld [vmem:[#allocation2 + $0x11] sm:$0xff]
        %v2570 = vld [vmem:[#allocation2 + $0x19] sm:$0xff]
        %v2571 = vld [vmem:[#allocation2 + $0x21] sm:$0xff]
        %v2572 = vld [vmem:[#allocation2 + $0x29] sm:$0xff]
        %v2573 = vld [vmem:[#allocation2 + $0x31] sm:$0xff]
        %v2574 = vld [vmem:[#allocation2 + $0x39] sm:$0xff]
        %v2575 = vld [vmem:[#allocation2 + $0x41] sm:$0xff]
        %v2576 = vld [vmem:[#allocation2 + $0x49] sm:$0xff]
        %v2577 = vld [vmem:[#allocation2 + $0x51] sm:$0xff]
        %v2578 = vld [vmem:[#allocation2 + $0x59] sm:$0xff]
        %v2579 = vld [vmem:[#allocation2 + $0x61] sm:$0xff]
        %v2580 = vld [vmem:[#allocation2 + $0x69] sm:$0xff]
        %v2581 = vld [vmem:[#allocation2 + $0x71] sm:$0xff]
        %v2582 = vld [vmem:[#allocation2 + $0x79] sm:$0xff]
        %v2583 = vld [vmem:[#allocation2 + $0x81] sm:$0xff]
        %v2584 = vld [vmem:[#allocation2 + $0x89] sm:$0xff]
        %v2585 = vld [vmem:[#allocation2 + $0x91] sm:$0xff]
        %v2586 = vld [vmem:[#allocation2 + $0x99] sm:$0xff]
        %v2587 = vld [vmem:[#allocation2 + $0xa1] sm:$0xff]
        %v2588 = vld [vmem:[#allocation2 + $0xa9] sm:$0xff]
        %v2589 = vld [vmem:[#allocation2 + $0xb1] sm:$0xff]
        %v2590 = vld [vmem:[#allocation2 + $0xb9] sm:$0xff]
        %v2591 = vld [vmem:[#allocation2 + $0xc1] sm:$0xff]
        %v2592 = vld [vmem:[#allocation2 + $0xc9] sm:$0xff]
        %v2593 = vld [vmem:[#allocation2 + $0xd1] sm:$0xff]
        %v2594 = vld [vmem:[#allocation2 + $0xd9] sm:$0xff]
        %v2595 = vld [vmem:[#allocation2 + $0xe1] sm:$0xff]
        %v2596 = vld [vmem:[#allocation2 + $0xe9] sm:$0xff]
        %v2597 = vld [vmem:[#allocation2 + $0xf1] sm:$0xff]
        %v2598 = vld [vmem:[#allocation2 + $0xf9] sm:$0xff]
        %v2599 = vld [vmem:[#allocation2 + $0x101] sm:$0xff]
        %v2600 = vsel %vm958, %v2568, 0.0
        %v2601 = vsel %vm959, %v2569, 0.0
        %v2602 = vsel %vm960, %v2570, 0.0
        %v2603 = vsel %vm961, %v2571, 0.0
        %v2604 = vsel %vm962, %v2572, 0.0
        %v2605 = vsel %vm963, %v2573, 0.0
        %v2606 = vsel %vm964, %v2574, 0.0
        %v2607 = vsel %vm965, %v2575, 0.0
        %v2608 = vsel %vm966, %v2576, 0.0
        %v2609 = vsel %vm967, %v2577, 0.0
        %v2610 = vsel %vm968, %v2578, 0.0
        %v2611 = vsel %vm969, %v2579, 0.0
        %v2612 = vsel %vm970, %v2580, 0.0
        %v2613 = vsel %vm971, %v2581, 0.0
        %v2614 = vsel %vm972, %v2582, 0.0
        %v2615 = vsel %vm973, %v2583, 0.0
        %v2616 = vsel %vm974, %v2584, 0.0
        %v2617 = vsel %vm975, %v2585, 0.0
        %v2618 = vsel %vm976, %v2586, 0.0
        %v2619 = vsel %vm977, %v2587, 0.0
        %v2620 = vsel %vm978, %v2588, 0.0
        %v2621 = vsel %vm979, %v2589, 0.0
        %v2622 = vsel %vm980, %v2590, 0.0
        %v2623 = vsel %vm981, %v2591, 0.0
        %v2624 = vsel %vm982, %v2592, 0.0
        %v2625 = vsel %vm983, %v2593, 0.0
        %v2626 = vsel %vm984, %v2594, 0.0
        %v2627 = vsel %vm985, %v2595, 0.0
        %v2628 = vsel %vm986, %v2596, 0.0
        %v2629 = vsel %vm987, %v2597, 0.0
        %v2630 = vsel %vm988, %v2598, 0.0
        %v2631 = vsel %vm989, %v2599, 0.0
        %v2632 = vld [vmem:[#allocation8 + $0x3] sm:$0x1]
        %v2633 = vperm.slane %v2632, 0
        %v2634 = vmul.f32 %v2600, %v2633
        %v2635 = vmul.f32 %v2601, %v2633
        %v2636 = vmul.f32 %v2602, %v2633
        %v2637 = vmul.f32 %v2603, %v2633
        %v2638 = vmul.f32 %v2604, %v2633
        %v2639 = vmul.f32 %v2605, %v2633
        %v2640 = vmul.f32 %v2606, %v2633
        %v2641 = vmul.f32 %v2607, %v2633
        %v2642 = vmul.f32 %v2608, %v2633
        %v2643 = vmul.f32 %v2609, %v2633
        %v2644 = vmul.f32 %v2610, %v2633
        %v2645 = vmul.f32 %v2611, %v2633
        %v2646 = vmul.f32 %v2612, %v2633
        %v2647 = vmul.f32 %v2613, %v2633
        %v2648 = vmul.f32 %v2614, %v2633
        %v2649 = vmul.f32 %v2615, %v2633
        %v2650 = vmul.f32 %v2616, %v2633
        %v2651 = vmul.f32 %v2617, %v2633
        %v2652 = vmul.f32 %v2618, %v2633
        %v2653 = vmul.f32 %v2619, %v2633
        %v2654 = vmul.f32 %v2620, %v2633
        %v2655 = vmul.f32 %v2621, %v2633
        %v2656 = vmul.f32 %v2622, %v2633
        %v2657 = vmul.f32 %v2623, %v2633
        %v2658 = vmul.f32 %v2624, %v2633
        %v2659 = vmul.f32 %v2625, %v2633
        %v2660 = vmul.f32 %v2626, %v2633
        %v2661 = vmul.f32 %v2627, %v2633
        %v2662 = vmul.f32 %v2628, %v2633
        %v2663 = vmul.f32 %v2629, %v2633
        %v2664 = vmul.f32 %v2630, %v2633
        %v2665 = vmul.f32 %v2631, %v2633
        %v2666 = vadd.f32 %v2536, %v2634
        %v2667 = vadd.f32 %v2537, %v2635
        %v2668 = vadd.f32 %v2538, %v2636
        %v2669 = vadd.f32 %v2539, %v2637
        %v2670 = vadd.f32 %v2540, %v2638
        %v2671 = vadd.f32 %v2541, %v2639
        %v2672 = vadd.f32 %v2542, %v2640
        %v2673 = vadd.f32 %v2543, %v2641
        %v2674 = vadd.f32 %v2544, %v2642
        %v2675 = vadd.f32 %v2545, %v2643
        %v2676 = vadd.f32 %v2546, %v2644
        %v2677 = vadd.f32 %v2547, %v2645
        %v2678 = vadd.f32 %v2548, %v2646
        %v2679 = vadd.f32 %v2549, %v2647
        %v2680 = vadd.f32 %v2550, %v2648
        %v2681 = vadd.f32 %v2551, %v2649
        %v2682 = vadd.f32 %v2552, %v2650
        %v2683 = vadd.f32 %v2553, %v2651
        %v2684 = vadd.f32 %v2554, %v2652
        %v2685 = vadd.f32 %v2555, %v2653
        %v2686 = vadd.f32 %v2556, %v2654
        %v2687 = vadd.f32 %v2557, %v2655
        %v2688 = vadd.f32 %v2558, %v2656
        %v2689 = vadd.f32 %v2559, %v2657
        %v2690 = vadd.f32 %v2560, %v2658
        %v2691 = vadd.f32 %v2561, %v2659
        %v2692 = vadd.f32 %v2562, %v2660
        %v2693 = vadd.f32 %v2563, %v2661
        %v2694 = vadd.f32 %v2564, %v2662
        %v2695 = vadd.f32 %v2565, %v2663
        %v2696 = vadd.f32 %v2566, %v2664
        %v2697 = vadd.f32 %v2567, %v2665
        %v2698 = vld [vmem:[#allocation2 + $0xa] sm:$0xff]
        %v2699 = vld [vmem:[#allocation2 + $0x12] sm:$0xff]
        %v2700 = vld [vmem:[#allocation2 + $0x1a] sm:$0xff]
        %v2701 = vld [vmem:[#allocation2 + $0x22] sm:$0xff]
        %v2702 = vld [vmem:[#allocation2 + $0x2a] sm:$0xff]
        %v2703 = vld [vmem:[#allocation2 + $0x32] sm:$0xff]
        %v2704 = vld [vmem:[#allocation2 + $0x3a] sm:$0xff]
        %v2705 = vld [vmem:[#allocation2 + $0x42] sm:$0xff]
        %v2706 = vld [vmem:[#allocation2 + $0x4a] sm:$0xff]
        %v2707 = vld [vmem:[#allocation2 + $0x52] sm:$0xff]
        %v2708 = vld [vmem:[#allocation2 + $0x5a] sm:$0xff]
        %v2709 = vld [vmem:[#allocation2 + $0x62] sm:$0xff]
        %v2710 = vld [vmem:[#allocation2 + $0x6a] sm:$0xff]
        %v2711 = vld [vmem:[#allocation2 + $0x72] sm:$0xff]
        %v2712 = vld [vmem:[#allocation2 + $0x7a] sm:$0xff]
        %v2713 = vld [vmem:[#allocation2 + $0x82] sm:$0xff]
        %v2714 = vld [vmem:[#allocation2 + $0x8a] sm:$0xff]
        %v2715 = vld [vmem:[#allocation2 + $0x92] sm:$0xff]
        %v2716 = vld [vmem:[#allocation2 + $0x9a] sm:$0xff]
        %v2717 = vld [vmem:[#allocation2 + $0xa2] sm:$0xff]
        %v2718 = vld [vmem:[#allocation2 + $0xaa] sm:$0xff]
        %v2719 = vld [vmem:[#allocation2 + $0xb2] sm:$0xff]
        %v2720 = vld [vmem:[#allocation2 + $0xba] sm:$0xff]
        %v2721 = vld [vmem:[#allocation2 + $0xc2] sm:$0xff]
        %v2722 = vld [vmem:[#allocation2 + $0xca] sm:$0xff]
        %v2723 = vld [vmem:[#allocation2 + $0xd2] sm:$0xff]
        %v2724 = vld [vmem:[#allocation2 + $0xda] sm:$0xff]
        %v2725 = vld [vmem:[#allocation2 + $0xe2] sm:$0xff]
        %v2726 = vld [vmem:[#allocation2 + $0xea] sm:$0xff]
        %v2727 = vld [vmem:[#allocation2 + $0xf2] sm:$0xff]
        %v2728 = vld [vmem:[#allocation2 + $0xfa] sm:$0xff]
        %v2729 = vld [vmem:[#allocation2 + $0x102] sm:$0xff]
        %v2730 = vsel %vm990, %v2698, 0.0
        %v2731 = vsel %vm991, %v2699, 0.0
        %v2732 = vsel %vm992, %v2700, 0.0
        %v2733 = vsel %vm993, %v2701, 0.0
        %v2734 = vsel %vm994, %v2702, 0.0
        %v2735 = vsel %vm995, %v2703, 0.0
        %v2736 = vsel %vm996, %v2704, 0.0
        %v2737 = vsel %vm997, %v2705, 0.0
        %v2738 = vsel %vm998, %v2706, 0.0
        %v2739 = vsel %vm999, %v2707, 0.0
        %v2740 = vsel %vm1000, %v2708, 0.0
        %v2741 = vsel %vm1001, %v2709, 0.0
        %v2742 = vsel %vm1002, %v2710, 0.0
        %v2743 = vsel %vm1003, %v2711, 0.0
        %v2744 = vsel %vm1004, %v2712, 0.0
        %v2745 = vsel %vm1005, %v2713, 0.0
        %v2746 = vsel %vm1006, %v2714, 0.0
        %v2747 = vsel %vm1007, %v2715, 0.0
        %v2748 = vsel %vm1008, %v2716, 0.0
        %v2749 = vsel %vm1009, %v2717, 0.0
        %v2750 = vsel %vm1010, %v2718, 0.0
        %v2751 = vsel %vm1011, %v2719, 0.0
        %v2752 = vsel %vm1012, %v2720, 0.0
        %v2753 = vsel %vm1013, %v2721, 0.0
        %v2754 = vsel %vm1014, %v2722, 0.0
        %v2755 = vsel %vm1015, %v2723, 0.0
        %v2756 = vsel %vm1016, %v2724, 0.0
        %v2757 = vsel %vm1017, %v2725, 0.0
        %v2758 = vsel %vm1018, %v2726, 0.0
        %v2759 = vsel %vm1019, %v2727, 0.0
        %v2760 = vsel %vm1020, %v2728, 0.0
        %v2761 = vsel %vm1021, %v2729, 0.0
        %v2762 = vld [vmem:[#allocation8 + $0x4] sm:$0x1]
        %v2763 = vperm.slane %v2762, 0
        %v2764 = vmul.f32 %v2730, %v2763
        %v2765 = vmul.f32 %v2731, %v2763
        %v2766 = vmul.f32 %v2732, %v2763
        %v2767 = vmul.f32 %v2733, %v2763
        %v2768 = vmul.f32 %v2734, %v2763
        %v2769 = vmul.f32 %v2735, %v2763
        %v2770 = vmul.f32 %v2736, %v2763
        %v2771 = vmul.f32 %v2737, %v2763
        %v2772 = vmul.f32 %v2738, %v2763
        %v2773 = vmul.f32 %v2739, %v2763
        %v2774 = vmul.f32 %v2740, %v2763
        %v2775 = vmul.f32 %v2741, %v2763
        %v2776 = vmul.f32 %v2742, %v2763
        %v2777 = vmul.f32 %v2743, %v2763
        %v2778 = vmul.f32 %v2744, %v2763
        %v2779 = vmul.f32 %v2745, %v2763
        %v2780 = vmul.f32 %v2746, %v2763
        %v2781 = vmul.f32 %v2747, %v2763
        %v2782 = vmul.f32 %v2748, %v2763
        %v2783 = vmul.f32 %v2749, %v2763
        %v2784 = vmul.f32 %v2750, %v2763
        %v2785 = vmul.f32 %v2751, %v2763
        %v2786 = vmul.f32 %v2752, %v2763
        %v2787 = vmul.f32 %v2753, %v2763
        %v2788 = vmul.f32 %v2754, %v2763
        %v2789 = vmul.f32 %v2755, %v2763
        %v2790 = vmul.f32 %v2756, %v2763
        %v2791 = vmul.f32 %v2757, %v2763
        %v2792 = vmul.f32 %v2758, %v2763
        %v2793 = vmul.f32 %v2759, %v2763
        %v2794 = vmul.f32 %v2760, %v2763
        %v2795 = vmul.f32 %v2761, %v2763
        %v2796 = vadd.f32 %v2666, %v2764
        %v2797 = vadd.f32 %v2667, %v2765
        %v2798 = vadd.f32 %v2668, %v2766
        %v2799 = vadd.f32 %v2669, %v2767
        %v2800 = vadd.f32 %v2670, %v2768
        %v2801 = vadd.f32 %v2671, %v2769
        %v2802 = vadd.f32 %v2672, %v2770
        %v2803 = vadd.f32 %v2673, %v2771
        %v2804 = vadd.f32 %v2674, %v2772
        %v2805 = vadd.f32 %v2675, %v2773
        %v2806 = vadd.f32 %v2676, %v2774
        %v2807 = vadd.f32 %v2677, %v2775
        %v2808 = vadd.f32 %v2678, %v2776
        %v2809 = vadd.f32 %v2679, %v2777
        %v2810 = vadd.f32 %v2680, %v2778
        %v2811 = vadd.f32 %v2681, %v2779
        %v2812 = vadd.f32 %v2682, %v2780
        %v2813 = vadd.f32 %v2683, %v2781
        %v2814 = vadd.f32 %v2684, %v2782
        %v2815 = vadd.f32 %v2685, %v2783
        %v2816 = vadd.f32 %v2686, %v2784
        %v2817 = vadd.f32 %v2687, %v2785
        %v2818 = vadd.f32 %v2688, %v2786
        %v2819 = vadd.f32 %v2689, %v2787
        %v2820 = vadd.f32 %v2690, %v2788
        %v2821 = vadd.f32 %v2691, %v2789
        %v2822 = vadd.f32 %v2692, %v2790
        %v2823 = vadd.f32 %v2693, %v2791
        %v2824 = vadd.f32 %v2694, %v2792
        %v2825 = vadd.f32 %v2695, %v2793
        %v2826 = vadd.f32 %v2696, %v2794
        %v2827 = vadd.f32 %v2697, %v2795
        %v2828 = vld [vmem:[#allocation2 + $0x106] sm:$0xff]
        %v2829 = vld [vmem:[#allocation2 + $0x10e] sm:$0xff]
        %v2830 = vsel %vm894, %v2212, 0.0
        %v2831 = vsel %vm895, %v2213, 0.0
        %v2832 = vsel %vm896, %v2214, 0.0
        %v2833 = vsel %vm897, %v2215, 0.0
        %v2834 = vsel %vm898, %v2216, 0.0
        %v2835 = vsel %vm899, %v2217, 0.0
        %v2836 = vsel %vm900, %v2218, 0.0
        %v2837 = vsel %vm901, %v2219, 0.0
        %v2838 = vsel %vm902, %v2220, 0.0
        %v2839 = vsel %vm903, %v2221, 0.0
        %v2840 = vsel %vm904, %v2222, 0.0
        %v2841 = vsel %vm905, %v2223, 0.0
        %v2842 = vsel %vm906, %v2224, 0.0
        %v2843 = vsel %vm907, %v2225, 0.0
        %v2844 = vsel %vm908, %v2226, 0.0
        %v2845 = vsel %vm909, %v2227, 0.0
        %v2846 = vsel %vm910, %v2228, 0.0
        %v2847 = vsel %vm911, %v2229, 0.0
        %v2848 = vsel %vm912, %v2230, 0.0
        %v2849 = vsel %vm913, %v2231, 0.0
        %v2850 = vsel %vm914, %v2232, 0.0
        %v2851 = vsel %vm915, %v2233, 0.0
        %v2852 = vsel %vm916, %v2234, 0.0
        %v2853 = vsel %vm917, %v2235, 0.0
        %v2854 = vsel %vm918, %v2236, 0.0
        %v2855 = vsel %vm919, %v2237, 0.0
        %v2856 = vsel %vm920, %v2238, 0.0
        %v2857 = vsel %vm921, %v2239, 0.0
        %v2858 = vsel %vm922, %v2240, 0.0
        %v2859 = vsel %vm923, %v2241, 0.0
        %v2860 = vsel %vm924, %v2828, 0.0
        %v2861 = vsel %vm925, %v2829, 0.0
        %v2862 = vld [vmem:[#allocation8 + $0x5] sm:$0x1]
        %v2863 = vperm.slane %v2862, 0
        %v2864 = vmul.f32 %v2830, %v2863
        %v2865 = vmul.f32 %v2831, %v2863
        %v2866 = vmul.f32 %v2832, %v2863
        %v2867 = vmul.f32 %v2833, %v2863
        %v2868 = vmul.f32 %v2834, %v2863
        %v2869 = vmul.f32 %v2835, %v2863
        %v2870 = vmul.f32 %v2836, %v2863
        %v2871 = vmul.f32 %v2837, %v2863
        %v2872 = vmul.f32 %v2838, %v2863
        %v2873 = vmul.f32 %v2839, %v2863
        %v2874 = vmul.f32 %v2840, %v2863
        %v2875 = vmul.f32 %v2841, %v2863
        %v2876 = vmul.f32 %v2842, %v2863
        %v2877 = vmul.f32 %v2843, %v2863
        %v2878 = vmul.f32 %v2844, %v2863
        %v2879 = vmul.f32 %v2845, %v2863
        %v2880 = vmul.f32 %v2846, %v2863
        %v2881 = vmul.f32 %v2847, %v2863
        %v2882 = vmul.f32 %v2848, %v2863
        %v2883 = vmul.f32 %v2849, %v2863
        %v2884 = vmul.f32 %v2850, %v2863
        %v2885 = vmul.f32 %v2851, %v2863
        %v2886 = vmul.f32 %v2852, %v2863
        %v2887 = vmul.f32 %v2853, %v2863
        %v2888 = vmul.f32 %v2854, %v2863
        %v2889 = vmul.f32 %v2855, %v2863
        %v2890 = vmul.f32 %v2856, %v2863
        %v2891 = vmul.f32 %v2857, %v2863
        %v2892 = vmul.f32 %v2858, %v2863
        %v2893 = vmul.f32 %v2859, %v2863
        %v2894 = vmul.f32 %v2860, %v2863
        %v2895 = vmul.f32 %v2861, %v2863
        %v2896 = vadd.f32 %v2796, %v2864
        %v2897 = vadd.f32 %v2797, %v2865
        %v2898 = vadd.f32 %v2798, %v2866
        %v2899 = vadd.f32 %v2799, %v2867
        %v2900 = vadd.f32 %v2800, %v2868
        %v2901 = vadd.f32 %v2801, %v2869
        %v2902 = vadd.f32 %v2802, %v2870
        %v2903 = vadd.f32 %v2803, %v2871
        %v2904 = vadd.f32 %v2804, %v2872
        %v2905 = vadd.f32 %v2805, %v2873
        %v2906 = vadd.f32 %v2806, %v2874
        %v2907 = vadd.f32 %v2807, %v2875
        %v2908 = vadd.f32 %v2808, %v2876
        %v2909 = vadd.f32 %v2809, %v2877
        %v2910 = vadd.f32 %v2810, %v2878
        %v2911 = vadd.f32 %v2811, %v2879
        %v2912 = vadd.f32 %v2812, %v2880
        %v2913 = vadd.f32 %v2813, %v2881
        %v2914 = vadd.f32 %v2814, %v2882
        %v2915 = vadd.f32 %v2815, %v2883
        %v2916 = vadd.f32 %v2816, %v2884
        %v2917 = vadd.f32 %v2817, %v2885
        %v2918 = vadd.f32 %v2818, %v2886
        %v2919 = vadd.f32 %v2819, %v2887
        %v2920 = vadd.f32 %v2820, %v2888
        %v2921 = vadd.f32 %v2821, %v2889
        %v2922 = vadd.f32 %v2822, %v2890
        %v2923 = vadd.f32 %v2823, %v2891
        %v2924 = vadd.f32 %v2824, %v2892
        %v2925 = vadd.f32 %v2825, %v2893
        %v2926 = vadd.f32 %v2826, %v2894
        %v2927 = vadd.f32 %v2827, %v2895
        %v2928 = vld [vmem:[#allocation2 + $0x107] sm:$0xff]
        %v2929 = vld [vmem:[#allocation2 + $0x10f] sm:$0xff]
        %v2930 = vsel %vm926, %v2342, 0.0
        %v2931 = vsel %vm927, %v2343, 0.0
        %v2932 = vsel %vm928, %v2344, 0.0
        %v2933 = vsel %vm929, %v2345, 0.0
        %v2934 = vsel %vm930, %v2346, 0.0
        %v2935 = vsel %vm931, %v2347, 0.0
        %v2936 = vsel %vm932, %v2348, 0.0
        %v2937 = vsel %vm933, %v2349, 0.0
        %v2938 = vsel %vm934, %v2350, 0.0
        %v2939 = vsel %vm935, %v2351, 0.0
        %v2940 = vsel %vm936, %v2352, 0.0
        %v2941 = vsel %vm937, %v2353, 0.0
        %v2942 = vsel %vm938, %v2354, 0.0
        %v2943 = vsel %vm939, %v2355, 0.0
        %v2944 = vsel %vm940, %v2356, 0.0
        %v2945 = vsel %vm941, %v2357, 0.0
        %v2946 = vsel %vm942, %v2358, 0.0
        %v2947 = vsel %vm943, %v2359, 0.0
        %v2948 = vsel %vm944, %v2360, 0.0
        %v2949 = vsel %vm945, %v2361, 0.0
        %v2950 = vsel %vm946, %v2362, 0.0
        %v2951 = vsel %vm947, %v2363, 0.0
        %v2952 = vsel %vm948, %v2364, 0.0
        %v2953 = vsel %vm949, %v2365, 0.0
        %v2954 = vsel %vm950, %v2366, 0.0
        %v2955 = vsel %vm951, %v2367, 0.0
        %v2956 = vsel %vm952, %v2368, 0.0
        %v2957 = vsel %vm953, %v2369, 0.0
        %v2958 = vsel %vm954, %v2370, 0.0
        %v2959 = vsel %vm955, %v2371, 0.0
        %v2960 = vsel %vm956, %v2928, 0.0
        %v2961 = vsel %vm957, %v2929, 0.0
        %v2962 = vld [vmem:[#allocation8 + $0x6] sm:$0x1]
        %v2963 = vperm.slane %v2962, 0
        %v2964 = vmul.f32 %v2930, %v2963
        %v2965 = vmul.f32 %v2931, %v2963
        %v2966 = vmul.f32 %v2932, %v2963
        %v2967 = vmul.f32 %v2933, %v2963
        %v2968 = vmul.f32 %v2934, %v2963
        %v2969 = vmul.f32 %v2935, %v2963
        %v2970 = vmul.f32 %v2936, %v2963
        %v2971 = vmul.f32 %v2937, %v2963
        %v2972 = vmul.f32 %v2938, %v2963
        %v2973 = vmul.f32 %v2939, %v2963
        %v2974 = vmul.f32 %v2940, %v2963
        %v2975 = vmul.f32 %v2941, %v2963
        %v2976 = vmul.f32 %v2942, %v2963
        %v2977 = vmul.f32 %v2943, %v2963
        %v2978 = vmul.f32 %v2944, %v2963
        %v2979 = vmul.f32 %v2945, %v2963
        %v2980 = vmul.f32 %v2946, %v2963
        %v2981 = vmul.f32 %v2947, %v2963
        %v2982 = vmul.f32 %v2948, %v2963
        %v2983 = vmul.f32 %v2949, %v2963
        %v2984 = vmul.f32 %v2950, %v2963
        %v2985 = vmul.f32 %v2951, %v2963
        %v2986 = vmul.f32 %v2952, %v2963
        %v2987 = vmul.f32 %v2953, %v2963
        %v2988 = vmul.f32 %v2954, %v2963
        %v2989 = vmul.f32 %v2955, %v2963
        %v2990 = vmul.f32 %v2956, %v2963
        %v2991 = vmul.f32 %v2957, %v2963
        %v2992 = vmul.f32 %v2958, %v2963
        %v2993 = vmul.f32 %v2959, %v2963
        %v2994 = vmul.f32 %v2960, %v2963
        %v2995 = vmul.f32 %v2961, %v2963
        %v2996 = vadd.f32 %v2896, %v2964
        %v2997 = vadd.f32 %v2897, %v2965
        %v2998 = vadd.f32 %v2898, %v2966
        %v2999 = vadd.f32 %v2899, %v2967
        %v3000 = vadd.f32 %v2900, %v2968
        %v3001 = vadd.f32 %v2901, %v2969
        %v3002 = vadd.f32 %v2902, %v2970
        %v3003 = vadd.f32 %v2903, %v2971
        %v3004 = vadd.f32 %v2904, %v2972
        %v3005 = vadd.f32 %v2905, %v2973
        %v3006 = vadd.f32 %v2906, %v2974
        %v3007 = vadd.f32 %v2907, %v2975
        %v3008 = vadd.f32 %v2908, %v2976
        %v3009 = vadd.f32 %v2909, %v2977
        %v3010 = vadd.f32 %v2910, %v2978
        %v3011 = vadd.f32 %v2911, %v2979
        %v3012 = vadd.f32 %v2912, %v2980
        %v3013 = vadd.f32 %v2913, %v2981
        %v3014 = vadd.f32 %v2914, %v2982
        %v3015 = vadd.f32 %v2915, %v2983
        %v3016 = vadd.f32 %v2916, %v2984
        %v3017 = vadd.f32 %v2917, %v2985
        %v3018 = vadd.f32 %v2918, %v2986
        %v3019 = vadd.f32 %v2919, %v2987
        %v3020 = vadd.f32 %v2920, %v2988
        %v3021 = vadd.f32 %v2921, %v2989
        %v3022 = vadd.f32 %v2922, %v2990
        %v3023 = vadd.f32 %v2923, %v2991
        %v3024 = vadd.f32 %v2924, %v2992
        %v3025 = vadd.f32 %v2925, %v2993
        %v3026 = vadd.f32 %v2926, %v2994
        %v3027 = vadd.f32 %v2927, %v2995
        %v3028 = vld [vmem:[#allocation2 + $0x108] sm:$0xff]
        %v3029 = vld [vmem:[#allocation2 + $0x110] sm:$0xff]
        %v3030 = vld [vmem:[#allocation8 + $0x7] sm:$0x1]
        %v3031 = vperm.slane %v3030, 0
        %v3032 = vmul.f32 %v2472, %v3031
        %v3033 = vmul.f32 %v2473, %v3031
        %v3034 = vmul.f32 %v2474, %v3031
        %v3035 = vmul.f32 %v2475, %v3031
        %v3036 = vmul.f32 %v2476, %v3031
        %v3037 = vmul.f32 %v2477, %v3031
        %v3038 = vmul.f32 %v2478, %v3031
        %v3039 = vmul.f32 %v2479, %v3031
        %v3040 = vmul.f32 %v2480, %v3031
        %v3041 = vmul.f32 %v2481, %v3031
        %v3042 = vmul.f32 %v2482, %v3031
        %v3043 = vmul.f32 %v2483, %v3031
        %v3044 = vmul.f32 %v2484, %v3031
        %v3045 = vmul.f32 %v2485, %v3031
        %v3046 = vmul.f32 %v2486, %v3031
        %v3047 = vmul.f32 %v2487, %v3031
        %v3048 = vmul.f32 %v2488, %v3031
        %v3049 = vmul.f32 %v2489, %v3031
        %v3050 = vmul.f32 %v2490, %v3031
        %v3051 = vmul.f32 %v2491, %v3031
        %v3052 = vmul.f32 %v2492, %v3031
        %v3053 = vmul.f32 %v2493, %v3031
        %v3054 = vmul.f32 %v2494, %v3031
        %v3055 = vmul.f32 %v2495, %v3031
        %v3056 = vmul.f32 %v2496, %v3031
        %v3057 = vmul.f32 %v2497, %v3031
        %v3058 = vmul.f32 %v2498, %v3031
        %v3059 = vmul.f32 %v2499, %v3031
        %v3060 = vmul.f32 %v2500, %v3031
        %v3061 = vmul.f32 %v2501, %v3031
        %v3062 = vmul.f32 %v3028, %v3031
        %v3063 = vmul.f32 %v3029, %v3031
        %v3064 = vadd.f32 %v2996, %v3032
        %v3065 = vadd.f32 %v2997, %v3033
        %v3066 = vadd.f32 %v2998, %v3034
        %v3067 = vadd.f32 %v2999, %v3035
        %v3068 = vadd.f32 %v3000, %v3036
        %v3069 = vadd.f32 %v3001, %v3037
        %v3070 = vadd.f32 %v3002, %v3038
        %v3071 = vadd.f32 %v3003, %v3039
        %v3072 = vadd.f32 %v3004, %v3040
        %v3073 = vadd.f32 %v3005, %v3041
        %v3074 = vadd.f32 %v3006, %v3042
        %v3075 = vadd.f32 %v3007, %v3043
        %v3076 = vadd.f32 %v3008, %v3044
        %v3077 = vadd.f32 %v3009, %v3045
        %v3078 = vadd.f32 %v3010, %v3046
        %v3079 = vadd.f32 %v3011, %v3047
        %v3080 = vadd.f32 %v3012, %v3048
        %v3081 = vadd.f32 %v3013, %v3049
        %v3082 = vadd.f32 %v3014, %v3050
        %v3083 = vadd.f32 %v3015, %v3051
        %v3084 = vadd.f32 %v3016, %v3052
        %v3085 = vadd.f32 %v3017, %v3053
        %v3086 = vadd.f32 %v3018, %v3054
        %v3087 = vadd.f32 %v3019, %v3055
        %v3088 = vadd.f32 %v3020, %v3056
        %v3089 = vadd.f32 %v3021, %v3057
        %v3090 = vadd.f32 %v3022, %v3058
        %v3091 = vadd.f32 %v3023, %v3059
        %v3092 = vadd.f32 %v3024, %v3060
        %v3093 = vadd.f32 %v3025, %v3061
        %v3094 = vadd.f32 %v3026, %v3062
        %v3095 = vadd.f32 %v3027, %v3063
        %v3096 = vld [vmem:[#allocation2 + $0x109] sm:$0xff]
        %v3097 = vld [vmem:[#allocation2 + $0x111] sm:$0xff]
        %v3098 = vsel %vm958, %v2570, 0.0
        %v3099 = vsel %vm959, %v2571, 0.0
        %v3100 = vsel %vm960, %v2572, 0.0
        %v3101 = vsel %vm961, %v2573, 0.0
        %v3102 = vsel %vm962, %v2574, 0.0
        %v3103 = vsel %vm963, %v2575, 0.0
        %v3104 = vsel %vm964, %v2576, 0.0
        %v3105 = vsel %vm965, %v2577, 0.0
        %v3106 = vsel %vm966, %v2578, 0.0
        %v3107 = vsel %vm967, %v2579, 0.0
        %v3108 = vsel %vm968, %v2580, 0.0
        %v3109 = vsel %vm969, %v2581, 0.0
        %v3110 = vsel %vm970, %v2582, 0.0
        %v3111 = vsel %vm971, %v2583, 0.0
        %v3112 = vsel %vm972, %v2584, 0.0
        %v3113 = vsel %vm973, %v2585, 0.0
        %v3114 = vsel %vm974, %v2586, 0.0
        %v3115 = vsel %vm975, %v2587, 0.0
        %v3116 = vsel %vm976, %v2588, 0.0
        %v3117 = vsel %vm977, %v2589, 0.0
        %v3118 = vsel %vm978, %v2590, 0.0
        %v3119 = vsel %vm979, %v2591, 0.0
        %v3120 = vsel %vm980, %v2592, 0.0
        %v3121 = vsel %vm981, %v2593, 0.0
        %v3122 = vsel %vm982, %v2594, 0.0
        %v3123 = vsel %vm983, %v2595, 0.0
        %v3124 = vsel %vm984, %v2596, 0.0
        %v3125 = vsel %vm985, %v2597, 0.0
        %v3126 = vsel %vm986, %v2598, 0.0
        %v3127 = vsel %vm987, %v2599, 0.0
        %v3128 = vsel %vm988, %v3096, 0.0
        %v3129 = vsel %vm989, %v3097, 0.0
        %v3130 = vld [vmem:[#allocation8 + $0x8] sm:$0x1]
        %v3131 = vperm.slane %v3130, 0
        %v3132 = vmul.f32 %v3098, %v3131
        %v3133 = vmul.f32 %v3099, %v3131
        %v3134 = vmul.f32 %v3100, %v3131
        %v3135 = vmul.f32 %v3101, %v3131
        %v3136 = vmul.f32 %v3102, %v3131
        %v3137 = vmul.f32 %v3103, %v3131
        %v3138 = vmul.f32 %v3104, %v3131
        %v3139 = vmul.f32 %v3105, %v3131
        %v3140 = vmul.f32 %v3106, %v3131
        %v3141 = vmul.f32 %v3107, %v3131
        %v3142 = vmul.f32 %v3108, %v3131
        %v3143 = vmul.f32 %v3109, %v3131
        %v3144 = vmul.f32 %v3110, %v3131
        %v3145 = vmul.f32 %v3111, %v3131
        %v3146 = vmul.f32 %v3112, %v3131
        %v3147 = vmul.f32 %v3113, %v3131
        %v3148 = vmul.f32 %v3114, %v3131
        %v3149 = vmul.f32 %v3115, %v3131
        %v3150 = vmul.f32 %v3116, %v3131
        %v3151 = vmul.f32 %v3117, %v3131
        %v3152 = vmul.f32 %v3118, %v3131
        %v3153 = vmul.f32 %v3119, %v3131
        %v3154 = vmul.f32 %v3120, %v3131
        %v3155 = vmul.f32 %v3121, %v3131
        %v3156 = vmul.f32 %v3122, %v3131
        %v3157 = vmul.f32 %v3123, %v3131
        %v3158 = vmul.f32 %v3124, %v3131
        %v3159 = vmul.f32 %v3125, %v3131
        %v3160 = vmul.f32 %v3126, %v3131
        %v3161 = vmul.f32 %v3127, %v3131
        %v3162 = vmul.f32 %v3128, %v3131
        %v3163 = vmul.f32 %v3129, %v3131
        %v3164 = vadd.f32 %v3064, %v3132
        %v3165 = vadd.f32 %v3065, %v3133
        %v3166 = vadd.f32 %v3066, %v3134
        %v3167 = vadd.f32 %v3067, %v3135
        %v3168 = vadd.f32 %v3068, %v3136
        %v3169 = vadd.f32 %v3069, %v3137
        %v3170 = vadd.f32 %v3070, %v3138
        %v3171 = vadd.f32 %v3071, %v3139
        %v3172 = vadd.f32 %v3072, %v3140
        %v3173 = vadd.f32 %v3073, %v3141
        %v3174 = vadd.f32 %v3074, %v3142
        %v3175 = vadd.f32 %v3075, %v3143
        %v3176 = vadd.f32 %v3076, %v3144
        %v3177 = vadd.f32 %v3077, %v3145
        %v3178 = vadd.f32 %v3078, %v3146
        %v3179 = vadd.f32 %v3079, %v3147
        %v3180 = vadd.f32 %v3080, %v3148
        %v3181 = vadd.f32 %v3081, %v3149
        %v3182 = vadd.f32 %v3082, %v3150
        %v3183 = vadd.f32 %v3083, %v3151
        %v3184 = vadd.f32 %v3084, %v3152
        %v3185 = vadd.f32 %v3085, %v3153
        %v3186 = vadd.f32 %v3086, %v3154
        %v3187 = vadd.f32 %v3087, %v3155
        %v3188 = vadd.f32 %v3088, %v3156
        %v3189 = vadd.f32 %v3089, %v3157
        %v3190 = vadd.f32 %v3090, %v3158
        %v3191 = vadd.f32 %v3091, %v3159
        %v3192 = vadd.f32 %v3092, %v3160
        %v3193 = vadd.f32 %v3093, %v3161
        %v3194 = vadd.f32 %v3094, %v3162
        %v3195 = vadd.f32 %v3095, %v3163
        %v3196 = vld [vmem:[#allocation2 + $0x10a] sm:$0xff]
        %v3197 = vld [vmem:[#allocation2 + $0x112] sm:$0xff]
        %v3198 = vsel %vm990, %v2700, 0.0
        %v3199 = vsel %vm991, %v2701, 0.0
        %v3200 = vsel %vm992, %v2702, 0.0
        %v3201 = vsel %vm993, %v2703, 0.0
        %v3202 = vsel %vm994, %v2704, 0.0
        %v3203 = vsel %vm995, %v2705, 0.0
        %v3204 = vsel %vm996, %v2706, 0.0
        %v3205 = vsel %vm997, %v2707, 0.0
        %v3206 = vsel %vm998, %v2708, 0.0
        %v3207 = vsel %vm999, %v2709, 0.0
        %v3208 = vsel %vm1000, %v2710, 0.0
        %v3209 = vsel %vm1001, %v2711, 0.0
        %v3210 = vsel %vm1002, %v2712, 0.0
        %v3211 = vsel %vm1003, %v2713, 0.0
        %v3212 = vsel %vm1004, %v2714, 0.0
        %v3213 = vsel %vm1005, %v2715, 0.0
        %v3214 = vsel %vm1006, %v2716, 0.0
        %v3215 = vsel %vm1007, %v2717, 0.0
        %v3216 = vsel %vm1008, %v2718, 0.0
        %v3217 = vsel %vm1009, %v2719, 0.0
        %v3218 = vsel %vm1010, %v2720, 0.0
        %v3219 = vsel %vm1011, %v2721, 0.0
        %v3220 = vsel %vm1012, %v2722, 0.0
        %v3221 = vsel %vm1013, %v2723, 0.0
        %v3222 = vsel %vm1014, %v2724, 0.0
        %v3223 = vsel %vm1015, %v2725, 0.0
        %v3224 = vsel %vm1016, %v2726, 0.0
        %v3225 = vsel %vm1017, %v2727, 0.0
        %v3226 = vsel %vm1018, %v2728, 0.0
        %v3227 = vsel %vm1019, %v2729, 0.0
        %v3228 = vsel %vm1020, %v3196, 0.0
        %v3229 = vsel %vm1021, %v3197, 0.0
        %v3230 = vld [vmem:[#allocation8 + $0x9] sm:$0x1]
        %v3231 = vperm.slane %v3230, 0
        %v3232 = vmul.f32 %v3198, %v3231
        %v3233 = vmul.f32 %v3199, %v3231
        %v3234 = vmul.f32 %v3200, %v3231
        %v3235 = vmul.f32 %v3201, %v3231
        %v3236 = vmul.f32 %v3202, %v3231
        %v3237 = vmul.f32 %v3203, %v3231
        %v3238 = vmul.f32 %v3204, %v3231
        %v3239 = vmul.f32 %v3205, %v3231
        %v3240 = vmul.f32 %v3206, %v3231
        %v3241 = vmul.f32 %v3207, %v3231
        %v3242 = vmul.f32 %v3208, %v3231
        %v3243 = vmul.f32 %v3209, %v3231
        %v3244 = vmul.f32 %v3210, %v3231
        %v3245 = vmul.f32 %v3211, %v3231
        %v3246 = vmul.f32 %v3212, %v3231
        %v3247 = vmul.f32 %v3213, %v3231
        %v3248 = vmul.f32 %v3214, %v3231
        %v3249 = vmul.f32 %v3215, %v3231
        %v3250 = vmul.f32 %v3216, %v3231
        %v3251 = vmul.f32 %v3217, %v3231
        %v3252 = vmul.f32 %v3218, %v3231
        %v3253 = vmul.f32 %v3219, %v3231
        %v3254 = vmul.f32 %v3220, %v3231
        %v3255 = vmul.f32 %v3221, %v3231
        %v3256 = vmul.f32 %v3222, %v3231
        %v3257 = vmul.f32 %v3223, %v3231
        %v3258 = vmul.f32 %v3224, %v3231
        %v3259 = vmul.f32 %v3225, %v3231
        %v3260 = vmul.f32 %v3226, %v3231
        %v3261 = vmul.f32 %v3227, %v3231
        %v3262 = vmul.f32 %v3228, %v3231
        %v3263 = vmul.f32 %v3229, %v3231
        %v3264 = vadd.f32 %v3164, %v3232
        %v3265 = vadd.f32 %v3165, %v3233
        %v3266 = vadd.f32 %v3166, %v3234
        %v3267 = vadd.f32 %v3167, %v3235
        %v3268 = vadd.f32 %v3168, %v3236
        %v3269 = vadd.f32 %v3169, %v3237
        %v3270 = vadd.f32 %v3170, %v3238
        %v3271 = vadd.f32 %v3171, %v3239
        %v3272 = vadd.f32 %v3172, %v3240
        %v3273 = vadd.f32 %v3173, %v3241
        %v3274 = vadd.f32 %v3174, %v3242
        %v3275 = vadd.f32 %v3175, %v3243
        %v3276 = vadd.f32 %v3176, %v3244
        %v3277 = vadd.f32 %v3177, %v3245
        %v3278 = vadd.f32 %v3178, %v3246
        %v3279 = vadd.f32 %v3179, %v3247
        %v3280 = vadd.f32 %v3180, %v3248
        %v3281 = vadd.f32 %v3181, %v3249
        %v3282 = vadd.f32 %v3182, %v3250
        %v3283 = vadd.f32 %v3183, %v3251
        %v3284 = vadd.f32 %v3184, %v3252
        %v3285 = vadd.f32 %v3185, %v3253
        %v3286 = vadd.f32 %v3186, %v3254
        %v3287 = vadd.f32 %v3187, %v3255
        %v3288 = vadd.f32 %v3188, %v3256
        %v3289 = vadd.f32 %v3189, %v3257
        %v3290 = vadd.f32 %v3190, %v3258
        %v3291 = vadd.f32 %v3191, %v3259
        %v3292 = vadd.f32 %v3192, %v3260
        %v3293 = vadd.f32 %v3193, %v3261
        %v3294 = vadd.f32 %v3194, %v3262
        %v3295 = vadd.f32 %v3195, %v3263
        %v3296 = vld [vmem:[#allocation2 + $0x116] sm:$0xff]
        %v3297 = vld [vmem:[#allocation2 + $0x11e] sm:$0xff]
        %v3298 = vsel %vm894, %v2214, 0.0
        %v3299 = vsel %vm895, %v2215, 0.0
        %v3300 = vsel %vm896, %v2216, 0.0
        %v3301 = vsel %vm897, %v2217, 0.0
        %v3302 = vsel %vm898, %v2218, 0.0
        %v3303 = vsel %vm899, %v2219, 0.0
        %v3304 = vsel %vm900, %v2220, 0.0
        %v3305 = vsel %vm901, %v2221, 0.0
        %v3306 = vsel %vm902, %v2222, 0.0
        %v3307 = vsel %vm903, %v2223, 0.0
        %v3308 = vsel %vm904, %v2224, 0.0
        %v3309 = vsel %vm905, %v2225, 0.0
        %v3310 = vsel %vm906, %v2226, 0.0
        %v3311 = vsel %vm907, %v2227, 0.0
        %v3312 = vsel %vm908, %v2228, 0.0
        %v3313 = vsel %vm909, %v2229, 0.0
        %v3314 = vsel %vm910, %v2230, 0.0
        %v3315 = vsel %vm911, %v2231, 0.0
        %v3316 = vsel %vm912, %v2232, 0.0
        %v3317 = vsel %vm913, %v2233, 0.0
        %v3318 = vsel %vm914, %v2234, 0.0
        %v3319 = vsel %vm915, %v2235, 0.0
        %v3320 = vsel %vm916, %v2236, 0.0
        %v3321 = vsel %vm917, %v2237, 0.0
        %v3322 = vsel %vm918, %v2238, 0.0
        %v3323 = vsel %vm919, %v2239, 0.0
        %v3324 = vsel %vm920, %v2240, 0.0
        %v3325 = vsel %vm921, %v2241, 0.0
        %v3326 = vsel %vm922, %v2828, 0.0
        %v3327 = vsel %vm923, %v2829, 0.0
        %v3328 = vsel %vm924, %v3296, 0.0
        %v3329 = vsel %vm925, %v3297, 0.0
        %v3330 = vld [vmem:[#allocation8 + $0xa] sm:$0x1]
        %v3331 = vperm.slane %v3330, 0
        %v3332 = vmul.f32 %v3298, %v3331
        %v3333 = vmul.f32 %v3299, %v3331
        %v3334 = vmul.f32 %v3300, %v3331
        %v3335 = vmul.f32 %v3301, %v3331
        %v3336 = vmul.f32 %v3302, %v3331
        %v3337 = vmul.f32 %v3303, %v3331
        %v3338 = vmul.f32 %v3304, %v3331
        %v3339 = vmul.f32 %v3305, %v3331
        %v3340 = vmul.f32 %v3306, %v3331
        %v3341 = vmul.f32 %v3307, %v3331
        %v3342 = vmul.f32 %v3308, %v3331
        %v3343 = vmul.f32 %v3309, %v3331
        %v3344 = vmul.f32 %v3310, %v3331
        %v3345 = vmul.f32 %v3311, %v3331
        %v3346 = vmul.f32 %v3312, %v3331
        %v3347 = vmul.f32 %v3313, %v3331
        %v3348 = vmul.f32 %v3314, %v3331
        %v3349 = vmul.f32 %v3315, %v3331
        %v3350 = vmul.f32 %v3316, %v3331
        %v3351 = vmul.f32 %v3317, %v3331
        %v3352 = vmul.f32 %v3318, %v3331
        %v3353 = vmul.f32 %v3319, %v3331
        %v3354 = vmul.f32 %v3320, %v3331
        %v3355 = vmul.f32 %v3321, %v3331
        %v3356 = vmul.f32 %v3322, %v3331
        %v3357 = vmul.f32 %v3323, %v3331
        %v3358 = vmul.f32 %v3324, %v3331
        %v3359 = vmul.f32 %v3325, %v3331
        %v3360 = vmul.f32 %v3326, %v3331
        %v3361 = vmul.f32 %v3327, %v3331
        %v3362 = vmul.f32 %v3328, %v3331
        %v3363 = vmul.f32 %v3329, %v3331
        %v3364 = vadd.f32 %v3264, %v3332
        %v3365 = vadd.f32 %v3265, %v3333
        %v3366 = vadd.f32 %v3266, %v3334
        %v3367 = vadd.f32 %v3267, %v3335
        %v3368 = vadd.f32 %v3268, %v3336
        %v3369 = vadd.f32 %v3269, %v3337
        %v3370 = vadd.f32 %v3270, %v3338
        %v3371 = vadd.f32 %v3271, %v3339
        %v3372 = vadd.f32 %v3272, %v3340
        %v3373 = vadd.f32 %v3273, %v3341
        %v3374 = vadd.f32 %v3274, %v3342
        %v3375 = vadd.f32 %v3275, %v3343
        %v3376 = vadd.f32 %v3276, %v3344
        %v3377 = vadd.f32 %v3277, %v3345
        %v3378 = vadd.f32 %v3278, %v3346
        %v3379 = vadd.f32 %v3279, %v3347
        %v3380 = vadd.f32 %v3280, %v3348
        %v3381 = vadd.f32 %v3281, %v3349
        %v3382 = vadd.f32 %v3282, %v3350
        %v3383 = vadd.f32 %v3283, %v3351
        %v3384 = vadd.f32 %v3284, %v3352
        %v3385 = vadd.f32 %v3285, %v3353
        %v3386 = vadd.f32 %v3286, %v3354
        %v3387 = vadd.f32 %v3287, %v3355
        %v3388 = vadd.f32 %v3288, %v3356
        %v3389 = vadd.f32 %v3289, %v3357
        %v3390 = vadd.f32 %v3290, %v3358
        %v3391 = vadd.f32 %v3291, %v3359
        %v3392 = vadd.f32 %v3292, %v3360
        %v3393 = vadd.f32 %v3293, %v3361
        %v3394 = vadd.f32 %v3294, %v3362
        %v3395 = vadd.f32 %v3295, %v3363
        %v3396 = vld [vmem:[#allocation2 + $0x117] sm:$0xff]
        %v3397 = vld [vmem:[#allocation2 + $0x11f] sm:$0xff]
        %v3398 = vsel %vm926, %v2344, 0.0
        %v3399 = vsel %vm927, %v2345, 0.0
        %v3400 = vsel %vm928, %v2346, 0.0
        %v3401 = vsel %vm929, %v2347, 0.0
        %v3402 = vsel %vm930, %v2348, 0.0
        %v3403 = vsel %vm931, %v2349, 0.0
        %v3404 = vsel %vm932, %v2350, 0.0
        %v3405 = vsel %vm933, %v2351, 0.0
        %v3406 = vsel %vm934, %v2352, 0.0
        %v3407 = vsel %vm935, %v2353, 0.0
        %v3408 = vsel %vm936, %v2354, 0.0
        %v3409 = vsel %vm937, %v2355, 0.0
        %v3410 = vsel %vm938, %v2356, 0.0
        %v3411 = vsel %vm939, %v2357, 0.0
        %v3412 = vsel %vm940, %v2358, 0.0
        %v3413 = vsel %vm941, %v2359, 0.0
        %v3414 = vsel %vm942, %v2360, 0.0
        %v3415 = vsel %vm943, %v2361, 0.0
        %v3416 = vsel %vm944, %v2362, 0.0
        %v3417 = vsel %vm945, %v2363, 0.0
        %v3418 = vsel %vm946, %v2364, 0.0
        %v3419 = vsel %vm947, %v2365, 0.0
        %v3420 = vsel %vm948, %v2366, 0.0
        %v3421 = vsel %vm949, %v2367, 0.0
        %v3422 = vsel %vm950, %v2368, 0.0
        %v3423 = vsel %vm951, %v2369, 0.0
        %v3424 = vsel %vm952, %v2370, 0.0
        %v3425 = vsel %vm953, %v2371, 0.0
        %v3426 = vsel %vm954, %v2928, 0.0
        %v3427 = vsel %vm955, %v2929, 0.0
        %v3428 = vsel %vm956, %v3396, 0.0
        %v3429 = vsel %vm957, %v3397, 0.0
        %v3430 = vld [vmem:[#allocation8 + $0xb] sm:$0x1]
        %v3431 = vperm.slane %v3430, 0
        %v3432 = vmul.f32 %v3398, %v3431
        %v3433 = vmul.f32 %v3399, %v3431
        %v3434 = vmul.f32 %v3400, %v3431
        %v3435 = vmul.f32 %v3401, %v3431
        %v3436 = vmul.f32 %v3402, %v3431
        %v3437 = vmul.f32 %v3403, %v3431
        %v3438 = vmul.f32 %v3404, %v3431
        %v3439 = vmul.f32 %v3405, %v3431
        %v3440 = vmul.f32 %v3406, %v3431
        %v3441 = vmul.f32 %v3407, %v3431
        %v3442 = vmul.f32 %v3408, %v3431
        %v3443 = vmul.f32 %v3409, %v3431
        %v3444 = vmul.f32 %v3410, %v3431
        %v3445 = vmul.f32 %v3411, %v3431
        %v3446 = vmul.f32 %v3412, %v3431
        %v3447 = vmul.f32 %v3413, %v3431
        %v3448 = vmul.f32 %v3414, %v3431
        %v3449 = vmul.f32 %v3415, %v3431
        %v3450 = vmul.f32 %v3416, %v3431
        %v3451 = vmul.f32 %v3417, %v3431
        %v3452 = vmul.f32 %v3418, %v3431
        %v3453 = vmul.f32 %v3419, %v3431
        %v3454 = vmul.f32 %v3420, %v3431
        %v3455 = vmul.f32 %v3421, %v3431
        %v3456 = vmul.f32 %v3422, %v3431
        %v3457 = vmul.f32 %v3423, %v3431
        %v3458 = vmul.f32 %v3424, %v3431
        %v3459 = vmul.f32 %v3425, %v3431
        %v3460 = vmul.f32 %v3426, %v3431
        %v3461 = vmul.f32 %v3427, %v3431
        %v3462 = vmul.f32 %v3428, %v3431
        %v3463 = vmul.f32 %v3429, %v3431
        %v3464 = vadd.f32 %v3364, %v3432
        %v3465 = vadd.f32 %v3365, %v3433
        %v3466 = vadd.f32 %v3366, %v3434
        %v3467 = vadd.f32 %v3367, %v3435
        %v3468 = vadd.f32 %v3368, %v3436
        %v3469 = vadd.f32 %v3369, %v3437
        %v3470 = vadd.f32 %v3370, %v3438
        %v3471 = vadd.f32 %v3371, %v3439
        %v3472 = vadd.f32 %v3372, %v3440
        %v3473 = vadd.f32 %v3373, %v3441
        %v3474 = vadd.f32 %v3374, %v3442
        %v3475 = vadd.f32 %v3375, %v3443
        %v3476 = vadd.f32 %v3376, %v3444
        %v3477 = vadd.f32 %v3377, %v3445
        %v3478 = vadd.f32 %v3378, %v3446
        %v3479 = vadd.f32 %v3379, %v3447
        %v3480 = vadd.f32 %v3380, %v3448
        %v3481 = vadd.f32 %v3381, %v3449
        %v3482 = vadd.f32 %v3382, %v3450
        %v3483 = vadd.f32 %v3383, %v3451
        %v3484 = vadd.f32 %v3384, %v3452
        %v3485 = vadd.f32 %v3385, %v3453
        %v3486 = vadd.f32 %v3386, %v3454
        %v3487 = vadd.f32 %v3387, %v3455
        %v3488 = vadd.f32 %v3388, %v3456
        %v3489 = vadd.f32 %v3389, %v3457
        %v3490 = vadd.f32 %v3390, %v3458
        %v3491 = vadd.f32 %v3391, %v3459
        %v3492 = vadd.f32 %v3392, %v3460
        %v3493 = vadd.f32 %v3393, %v3461
        %v3494 = vadd.f32 %v3394, %v3462
        %v3495 = vadd.f32 %v3395, %v3463
        %v3496 = vld [vmem:[#allocation2 + $0x118] sm:$0xff]
        %v3497 = vld [vmem:[#allocation2 + $0x120] sm:$0xff]
        %v3498 = vld [vmem:[#allocation8 + $0xc] sm:$0x1]
        %v3499 = vperm.slane %v3498, 0
        %v3500 = vmul.f32 %v2474, %v3499
        %v3501 = vmul.f32 %v2475, %v3499
        %v3502 = vmul.f32 %v2476, %v3499
        %v3503 = vmul.f32 %v2477, %v3499
        %v3504 = vmul.f32 %v2478, %v3499
        %v3505 = vmul.f32 %v2479, %v3499
        %v3506 = vmul.f32 %v2480, %v3499
        %v3507 = vmul.f32 %v2481, %v3499
        %v3508 = vmul.f32 %v2482, %v3499
        %v3509 = vmul.f32 %v2483, %v3499
        %v3510 = vmul.f32 %v2484, %v3499
        %v3511 = vmul.f32 %v2485, %v3499
        %v3512 = vmul.f32 %v2486, %v3499
        %v3513 = vmul.f32 %v2487, %v3499
        %v3514 = vmul.f32 %v2488, %v3499
        %v3515 = vmul.f32 %v2489, %v3499
        %v3516 = vmul.f32 %v2490, %v3499
        %v3517 = vmul.f32 %v2491, %v3499
        %v3518 = vmul.f32 %v2492, %v3499
        %v3519 = vmul.f32 %v2493, %v3499
        %v3520 = vmul.f32 %v2494, %v3499
        %v3521 = vmul.f32 %v2495, %v3499
        %v3522 = vmul.f32 %v2496, %v3499
        %v3523 = vmul.f32 %v2497, %v3499
        %v3524 = vmul.f32 %v2498, %v3499
        %v3525 = vmul.f32 %v2499, %v3499
        %v3526 = vmul.f32 %v2500, %v3499
        %v3527 = vmul.f32 %v2501, %v3499
        %v3528 = vmul.f32 %v3028, %v3499
        %v3529 = vmul.f32 %v3029, %v3499
        %v3530 = vmul.f32 %v3496, %v3499
        %v3531 = vmul.f32 %v3497, %v3499
        %v3532 = vadd.f32 %v3464, %v3500
        %v3533 = vadd.f32 %v3465, %v3501
        %v3534 = vadd.f32 %v3466, %v3502
        %v3535 = vadd.f32 %v3467, %v3503
        %v3536 = vadd.f32 %v3468, %v3504
        %v3537 = vadd.f32 %v3469, %v3505
        %v3538 = vadd.f32 %v3470, %v3506
        %v3539 = vadd.f32 %v3471, %v3507
        %v3540 = vadd.f32 %v3472, %v3508
        %v3541 = vadd.f32 %v3473, %v3509
        %v3542 = vadd.f32 %v3474, %v3510
        %v3543 = vadd.f32 %v3475, %v3511
        %v3544 = vadd.f32 %v3476, %v3512
        %v3545 = vadd.f32 %v3477, %v3513
        %v3546 = vadd.f32 %v3478, %v3514
        %v3547 = vadd.f32 %v3479, %v3515
        %v3548 = vadd.f32 %v3480, %v3516
        %v3549 = vadd.f32 %v3481, %v3517
        %v3550 = vadd.f32 %v3482, %v3518
        %v3551 = vadd.f32 %v3483, %v3519
        %v3552 = vadd.f32 %v3484, %v3520
        %v3553 = vadd.f32 %v3485, %v3521
        %v3554 = vadd.f32 %v3486, %v3522
        %v3555 = vadd.f32 %v3487, %v3523
        %v3556 = vadd.f32 %v3488, %v3524
        %v3557 = vadd.f32 %v3489, %v3525
        %v3558 = vadd.f32 %v3490, %v3526
        %v3559 = vadd.f32 %v3491, %v3527
        %v3560 = vadd.f32 %v3492, %v3528
        %v3561 = vadd.f32 %v3493, %v3529
        %v3562 = vadd.f32 %v3494, %v3530
        %v3563 = vadd.f32 %v3495, %v3531
        %v3564 = vld [vmem:[#allocation2 + $0x119] sm:$0xff]
        %v3565 = vld [vmem:[#allocation2 + $0x121] sm:$0xff]
        %v3566 = vsel %vm958, %v2572, 0.0
        %v3567 = vsel %vm959, %v2573, 0.0
        %v3568 = vsel %vm960, %v2574, 0.0
        %v3569 = vsel %vm961, %v2575, 0.0
        %v3570 = vsel %vm962, %v2576, 0.0
        %v3571 = vsel %vm963, %v2577, 0.0
        %v3572 = vsel %vm964, %v2578, 0.0
        %v3573 = vsel %vm965, %v2579, 0.0
        %v3574 = vsel %vm966, %v2580, 0.0
        %v3575 = vsel %vm967, %v2581, 0.0
        %v3576 = vsel %vm968, %v2582, 0.0
        %v3577 = vsel %vm969, %v2583, 0.0
        %v3578 = vsel %vm970, %v2584, 0.0
        %v3579 = vsel %vm971, %v2585, 0.0
        %v3580 = vsel %vm972, %v2586, 0.0
        %v3581 = vsel %vm973, %v2587, 0.0
        %v3582 = vsel %vm974, %v2588, 0.0
        %v3583 = vsel %vm975, %v2589, 0.0
        %v3584 = vsel %vm976, %v2590, 0.0
        %v3585 = vsel %vm977, %v2591, 0.0
        %v3586 = vsel %vm978, %v2592, 0.0
        %v3587 = vsel %vm979, %v2593, 0.0
        %v3588 = vsel %vm980, %v2594, 0.0
        %v3589 = vsel %vm981, %v2595, 0.0
        %v3590 = vsel %vm982, %v2596, 0.0
        %v3591 = vsel %vm983, %v2597, 0.0
        %v3592 = vsel %vm984, %v2598, 0.0
        %v3593 = vsel %vm985, %v2599, 0.0
        %v3594 = vsel %vm986, %v3096, 0.0
        %v3595 = vsel %vm987, %v3097, 0.0
        %v3596 = vsel %vm988, %v3564, 0.0
        %v3597 = vsel %vm989, %v3565, 0.0
        %v3598 = vld [vmem:[#allocation8 + $0xd] sm:$0x1]
        %v3599 = vperm.slane %v3598, 0
        %v3600 = vmul.f32 %v3566, %v3599
        %v3601 = vmul.f32 %v3567, %v3599
        %v3602 = vmul.f32 %v3568, %v3599
        %v3603 = vmul.f32 %v3569, %v3599
        %v3604 = vmul.f32 %v3570, %v3599
        %v3605 = vmul.f32 %v3571, %v3599
        %v3606 = vmul.f32 %v3572, %v3599
        %v3607 = vmul.f32 %v3573, %v3599
        %v3608 = vmul.f32 %v3574, %v3599
        %v3609 = vmul.f32 %v3575, %v3599
        %v3610 = vmul.f32 %v3576, %v3599
        %v3611 = vmul.f32 %v3577, %v3599
        %v3612 = vmul.f32 %v3578, %v3599
        %v3613 = vmul.f32 %v3579, %v3599
        %v3614 = vmul.f32 %v3580, %v3599
        %v3615 = vmul.f32 %v3581, %v3599
        %v3616 = vmul.f32 %v3582, %v3599
        %v3617 = vmul.f32 %v3583, %v3599
        %v3618 = vmul.f32 %v3584, %v3599
        %v3619 = vmul.f32 %v3585, %v3599
        %v3620 = vmul.f32 %v3586, %v3599
        %v3621 = vmul.f32 %v3587, %v3599
        %v3622 = vmul.f32 %v3588, %v3599
        %v3623 = vmul.f32 %v3589, %v3599
        %v3624 = vmul.f32 %v3590, %v3599
        %v3625 = vmul.f32 %v3591, %v3599
        %v3626 = vmul.f32 %v3592, %v3599
        %v3627 = vmul.f32 %v3593, %v3599
        %v3628 = vmul.f32 %v3594, %v3599
        %v3629 = vmul.f32 %v3595, %v3599
        %v3630 = vmul.f32 %v3596, %v3599
        %v3631 = vmul.f32 %v3597, %v3599
        %v3632 = vadd.f32 %v3532, %v3600
        %v3633 = vadd.f32 %v3533, %v3601
        %v3634 = vadd.f32 %v3534, %v3602
        %v3635 = vadd.f32 %v3535, %v3603
        %v3636 = vadd.f32 %v3536, %v3604
        %v3637 = vadd.f32 %v3537, %v3605
        %v3638 = vadd.f32 %v3538, %v3606
        %v3639 = vadd.f32 %v3539, %v3607
        %v3640 = vadd.f32 %v3540, %v3608
        %v3641 = vadd.f32 %v3541, %v3609
        %v3642 = vadd.f32 %v3542, %v3610
        %v3643 = vadd.f32 %v3543, %v3611
        %v3644 = vadd.f32 %v3544, %v3612
        %v3645 = vadd.f32 %v3545, %v3613
        %v3646 = vadd.f32 %v3546, %v3614
        %v3647 = vadd.f32 %v3547, %v3615
        %v3648 = vadd.f32 %v3548, %v3616
        %v3649 = vadd.f32 %v3549, %v3617
        %v3650 = vadd.f32 %v3550, %v3618
        %v3651 = vadd.f32 %v3551, %v3619
        %v3652 = vadd.f32 %v3552, %v3620
        %v3653 = vadd.f32 %v3553, %v3621
        %v3654 = vadd.f32 %v3554, %v3622
        %v3655 = vadd.f32 %v3555, %v3623
        %v3656 = vadd.f32 %v3556, %v3624
        %v3657 = vadd.f32 %v3557, %v3625
        %v3658 = vadd.f32 %v3558, %v3626
        %v3659 = vadd.f32 %v3559, %v3627
        %v3660 = vadd.f32 %v3560, %v3628
        %v3661 = vadd.f32 %v3561, %v3629
        %v3662 = vadd.f32 %v3562, %v3630
        %v3663 = vadd.f32 %v3563, %v3631
        %v3664 = vld [vmem:[#allocation2 + $0x11a] sm:$0xff]
        %v3665 = vld [vmem:[#allocation2 + $0x122] sm:$0xff]
        %v3666 = vsel %vm990, %v2702, 0.0
        %v3667 = vsel %vm991, %v2703, 0.0
        %v3668 = vsel %vm992, %v2704, 0.0
        %v3669 = vsel %vm993, %v2705, 0.0
        %v3670 = vsel %vm994, %v2706, 0.0
        %v3671 = vsel %vm995, %v2707, 0.0
        %v3672 = vsel %vm996, %v2708, 0.0
        %v3673 = vsel %vm997, %v2709, 0.0
        %v3674 = vsel %vm998, %v2710, 0.0
        %v3675 = vsel %vm999, %v2711, 0.0
        %v3676 = vsel %vm1000, %v2712, 0.0
        %v3677 = vsel %vm1001, %v2713, 0.0
        %v3678 = vsel %vm1002, %v2714, 0.0
        %v3679 = vsel %vm1003, %v2715, 0.0
        %v3680 = vsel %vm1004, %v2716, 0.0
        %v3681 = vsel %vm1005, %v2717, 0.0
        %v3682 = vsel %vm1006, %v2718, 0.0
        %v3683 = vsel %vm1007, %v2719, 0.0
        %v3684 = vsel %vm1008, %v2720, 0.0
        %v3685 = vsel %vm1009, %v2721, 0.0
        %v3686 = vsel %vm1010, %v2722, 0.0
        %v3687 = vsel %vm1011, %v2723, 0.0
        %v3688 = vsel %vm1012, %v2724, 0.0
        %v3689 = vsel %vm1013, %v2725, 0.0
        %v3690 = vsel %vm1014, %v2726, 0.0
        %v3691 = vsel %vm1015, %v2727, 0.0
        %v3692 = vsel %vm1016, %v2728, 0.0
        %v3693 = vsel %vm1017, %v2729, 0.0
        %v3694 = vsel %vm1018, %v3196, 0.0
        %v3695 = vsel %vm1019, %v3197, 0.0
        %v3696 = vsel %vm1020, %v3664, 0.0
        %v3697 = vsel %vm1021, %v3665, 0.0
        %v3698 = vld [vmem:[#allocation8 + $0xe] sm:$0x1]
        %v3699 = vperm.slane %v3698, 0
        %v3700 = vmul.f32 %v3666, %v3699
        %v3701 = vmul.f32 %v3667, %v3699
        %v3702 = vmul.f32 %v3668, %v3699
        %v3703 = vmul.f32 %v3669, %v3699
        %v3704 = vmul.f32 %v3670, %v3699
        %v3705 = vmul.f32 %v3671, %v3699
        %v3706 = vmul.f32 %v3672, %v3699
        %v3707 = vmul.f32 %v3673, %v3699
        %v3708 = vmul.f32 %v3674, %v3699
        %v3709 = vmul.f32 %v3675, %v3699
        %v3710 = vmul.f32 %v3676, %v3699
        %v3711 = vmul.f32 %v3677, %v3699
        %v3712 = vmul.f32 %v3678, %v3699
        %v3713 = vmul.f32 %v3679, %v3699
        %v3714 = vmul.f32 %v3680, %v3699
        %v3715 = vmul.f32 %v3681, %v3699
        %v3716 = vmul.f32 %v3682, %v3699
        %v3717 = vmul.f32 %v3683, %v3699
        %v3718 = vmul.f32 %v3684, %v3699
        %v3719 = vmul.f32 %v3685, %v3699
        %v3720 = vmul.f32 %v3686, %v3699
        %v3721 = vmul.f32 %v3687, %v3699
        %v3722 = vmul.f32 %v3688, %v3699
        %v3723 = vmul.f32 %v3689, %v3699
        %v3724 = vmul.f32 %v3690, %v3699
        %v3725 = vmul.f32 %v3691, %v3699
        %v3726 = vmul.f32 %v3692, %v3699
        %v3727 = vmul.f32 %v3693, %v3699
        %v3728 = vmul.f32 %v3694, %v3699
        %v3729 = vmul.f32 %v3695, %v3699
        %v3730 = vmul.f32 %v3696, %v3699
        %v3731 = vmul.f32 %v3697, %v3699
        %v3732 = vadd.f32 %v3632, %v3700
        %v3733 = vadd.f32 %v3633, %v3701
        %v3734 = vadd.f32 %v3634, %v3702
        %v3735 = vadd.f32 %v3635, %v3703
        %v3736 = vadd.f32 %v3636, %v3704
        %v3737 = vadd.f32 %v3637, %v3705
        %v3738 = vadd.f32 %v3638, %v3706
        %v3739 = vadd.f32 %v3639, %v3707
        %v3740 = vadd.f32 %v3640, %v3708
        %v3741 = vadd.f32 %v3641, %v3709
        %v3742 = vadd.f32 %v3642, %v3710
        %v3743 = vadd.f32 %v3643, %v3711
        %v3744 = vadd.f32 %v3644, %v3712
        %v3745 = vadd.f32 %v3645, %v3713
        %v3746 = vadd.f32 %v3646, %v3714
        %v3747 = vadd.f32 %v3647, %v3715
        %v3748 = vadd.f32 %v3648, %v3716
        %v3749 = vadd.f32 %v3649, %v3717
        %v3750 = vadd.f32 %v3650, %v3718
        %v3751 = vadd.f32 %v3651, %v3719
        %v3752 = vadd.f32 %v3652, %v3720
        %v3753 = vadd.f32 %v3653, %v3721
        %v3754 = vadd.f32 %v3654, %v3722
        %v3755 = vadd.f32 %v3655, %v3723
        %v3756 = vadd.f32 %v3656, %v3724
        %v3757 = vadd.f32 %v3657, %v3725
        %v3758 = vadd.f32 %v3658, %v3726
        %v3759 = vadd.f32 %v3659, %v3727
        %v3760 = vadd.f32 %v3660, %v3728
        %v3761 = vadd.f32 %v3661, %v3729
        %v3762 = vadd.f32 %v3662, %v3730
        %v3763 = vadd.f32 %v3663, %v3731
        %v3764 = vld [vmem:[#allocation2 + $0x126] sm:$0xff]
        %v3765 = vld [vmem:[#allocation2 + $0x12e] sm:$0xff]
        %v3766 = vsel %vm894, %v2216, 0.0
        %v3767 = vsel %vm895, %v2217, 0.0
        %v3768 = vsel %vm896, %v2218, 0.0
        %v3769 = vsel %vm897, %v2219, 0.0
        %v3770 = vsel %vm898, %v2220, 0.0
        %v3771 = vsel %vm899, %v2221, 0.0
        %v3772 = vsel %vm900, %v2222, 0.0
        %v3773 = vsel %vm901, %v2223, 0.0
        %v3774 = vsel %vm902, %v2224, 0.0
        %v3775 = vsel %vm903, %v2225, 0.0
        %v3776 = vsel %vm904, %v2226, 0.0
        %v3777 = vsel %vm905, %v2227, 0.0
        %v3778 = vsel %vm906, %v2228, 0.0
        %v3779 = vsel %vm907, %v2229, 0.0
        %v3780 = vsel %vm908, %v2230, 0.0
        %v3781 = vsel %vm909, %v2231, 0.0
        %v3782 = vsel %vm910, %v2232, 0.0
        %v3783 = vsel %vm911, %v2233, 0.0
        %v3784 = vsel %vm912, %v2234, 0.0
        %v3785 = vsel %vm913, %v2235, 0.0
        %v3786 = vsel %vm914, %v2236, 0.0
        %v3787 = vsel %vm915, %v2237, 0.0
        %v3788 = vsel %vm916, %v2238, 0.0
        %v3789 = vsel %vm917, %v2239, 0.0
        %v3790 = vsel %vm918, %v2240, 0.0
        %v3791 = vsel %vm919, %v2241, 0.0
        %v3792 = vsel %vm920, %v2828, 0.0
        %v3793 = vsel %vm921, %v2829, 0.0
        %v3794 = vsel %vm922, %v3296, 0.0
        %v3795 = vsel %vm923, %v3297, 0.0
        %v3796 = vsel %vm924, %v3764, 0.0
        %v3797 = vsel %vm925, %v3765, 0.0
        %v3798 = vld [vmem:[#allocation8 + $0xf] sm:$0x1]
        %v3799 = vperm.slane %v3798, 0
        %v3800 = vmul.f32 %v3766, %v3799
        %v3801 = vmul.f32 %v3767, %v3799
        %v3802 = vmul.f32 %v3768, %v3799
        %v3803 = vmul.f32 %v3769, %v3799
        %v3804 = vmul.f32 %v3770, %v3799
        %v3805 = vmul.f32 %v3771, %v3799
        %v3806 = vmul.f32 %v3772, %v3799
        %v3807 = vmul.f32 %v3773, %v3799
        %v3808 = vmul.f32 %v3774, %v3799
        %v3809 = vmul.f32 %v3775, %v3799
        %v3810 = vmul.f32 %v3776, %v3799
        %v3811 = vmul.f32 %v3777, %v3799
        %v3812 = vmul.f32 %v3778, %v3799
        %v3813 = vmul.f32 %v3779, %v3799
        %v3814 = vmul.f32 %v3780, %v3799
        %v3815 = vmul.f32 %v3781, %v3799
        %v3816 = vmul.f32 %v3782, %v3799
        %v3817 = vmul.f32 %v3783, %v3799
        %v3818 = vmul.f32 %v3784, %v3799
        %v3819 = vmul.f32 %v3785, %v3799
        %v3820 = vmul.f32 %v3786, %v3799
        %v3821 = vmul.f32 %v3787, %v3799
        %v3822 = vmul.f32 %v3788, %v3799
        %v3823 = vmul.f32 %v3789, %v3799
        %v3824 = vmul.f32 %v3790, %v3799
        %v3825 = vmul.f32 %v3791, %v3799
        %v3826 = vmul.f32 %v3792, %v3799
        %v3827 = vmul.f32 %v3793, %v3799
        %v3828 = vmul.f32 %v3794, %v3799
        %v3829 = vmul.f32 %v3795, %v3799
        %v3830 = vmul.f32 %v3796, %v3799
        %v3831 = vmul.f32 %v3797, %v3799
        %v3832 = vadd.f32 %v3732, %v3800
        %v3833 = vadd.f32 %v3733, %v3801
        %v3834 = vadd.f32 %v3734, %v3802
        %v3835 = vadd.f32 %v3735, %v3803
        %v3836 = vadd.f32 %v3736, %v3804
        %v3837 = vadd.f32 %v3737, %v3805
        %v3838 = vadd.f32 %v3738, %v3806
        %v3839 = vadd.f32 %v3739, %v3807
        %v3840 = vadd.f32 %v3740, %v3808
        %v3841 = vadd.f32 %v3741, %v3809
        %v3842 = vadd.f32 %v3742, %v3810
        %v3843 = vadd.f32 %v3743, %v3811
        %v3844 = vadd.f32 %v3744, %v3812
        %v3845 = vadd.f32 %v3745, %v3813
        %v3846 = vadd.f32 %v3746, %v3814
        %v3847 = vadd.f32 %v3747, %v3815
        %v3848 = vadd.f32 %v3748, %v3816
        %v3849 = vadd.f32 %v3749, %v3817
        %v3850 = vadd.f32 %v3750, %v3818
        %v3851 = vadd.f32 %v3751, %v3819
        %v3852 = vadd.f32 %v3752, %v3820
        %v3853 = vadd.f32 %v3753, %v3821
        %v3854 = vadd.f32 %v3754, %v3822
        %v3855 = vadd.f32 %v3755, %v3823
        %v3856 = vadd.f32 %v3756, %v3824
        %v3857 = vadd.f32 %v3757, %v3825
        %v3858 = vadd.f32 %v3758, %v3826
        %v3859 = vadd.f32 %v3759, %v3827
        %v3860 = vadd.f32 %v3760, %v3828
        %v3861 = vadd.f32 %v3761, %v3829
        %v3862 = vadd.f32 %v3762, %v3830
        %v3863 = vadd.f32 %v3763, %v3831
        %v3864 = vld [vmem:[#allocation2 + $0x127] sm:$0xff]
        %v3865 = vld [vmem:[#allocation2 + $0x12f] sm:$0xff]
        %v3866 = vsel %vm926, %v2346, 0.0
        %v3867 = vsel %vm927, %v2347, 0.0
        %v3868 = vsel %vm928, %v2348, 0.0
        %v3869 = vsel %vm929, %v2349, 0.0
        %v3870 = vsel %vm930, %v2350, 0.0
        %v3871 = vsel %vm931, %v2351, 0.0
        %v3872 = vsel %vm932, %v2352, 0.0
        %v3873 = vsel %vm933, %v2353, 0.0
        %v3874 = vsel %vm934, %v2354, 0.0
        %v3875 = vsel %vm935, %v2355, 0.0
        %v3876 = vsel %vm936, %v2356, 0.0
        %v3877 = vsel %vm937, %v2357, 0.0
        %v3878 = vsel %vm938, %v2358, 0.0
        %v3879 = vsel %vm939, %v2359, 0.0
        %v3880 = vsel %vm940, %v2360, 0.0
        %v3881 = vsel %vm941, %v2361, 0.0
        %v3882 = vsel %vm942, %v2362, 0.0
        %v3883 = vsel %vm943, %v2363, 0.0
        %v3884 = vsel %vm944, %v2364, 0.0
        %v3885 = vsel %vm945, %v2365, 0.0
        %v3886 = vsel %vm946, %v2366, 0.0
        %v3887 = vsel %vm947, %v2367, 0.0
        %v3888 = vsel %vm948, %v2368, 0.0
        %v3889 = vsel %vm949, %v2369, 0.0
        %v3890 = vsel %vm950, %v2370, 0.0
        %v3891 = vsel %vm951, %v2371, 0.0
        %v3892 = vsel %vm952, %v2928, 0.0
        %v3893 = vsel %vm953, %v2929, 0.0
        %v3894 = vsel %vm954, %v3396, 0.0
        %v3895 = vsel %vm955, %v3397, 0.0
        %v3896 = vsel %vm956, %v3864, 0.0
        %v3897 = vsel %vm957, %v3865, 0.0
        %v3898 = vld [vmem:[#allocation8 + $0x10] sm:$0x1]
        %v3899 = vperm.slane %v3898, 0
        %v3900 = vmul.f32 %v3866, %v3899
        %v3901 = vmul.f32 %v3867, %v3899
        %v3902 = vmul.f32 %v3868, %v3899
        %v3903 = vmul.f32 %v3869, %v3899
        %v3904 = vmul.f32 %v3870, %v3899
        %v3905 = vmul.f32 %v3871, %v3899
        %v3906 = vmul.f32 %v3872, %v3899
        %v3907 = vmul.f32 %v3873, %v3899
        %v3908 = vmul.f32 %v3874, %v3899
        %v3909 = vmul.f32 %v3875, %v3899
        %v3910 = vmul.f32 %v3876, %v3899
        %v3911 = vmul.f32 %v3877, %v3899
        %v3912 = vmul.f32 %v3878, %v3899
        %v3913 = vmul.f32 %v3879, %v3899
        %v3914 = vmul.f32 %v3880, %v3899
        %v3915 = vmul.f32 %v3881, %v3899
        %v3916 = vmul.f32 %v3882, %v3899
        %v3917 = vmul.f32 %v3883, %v3899
        %v3918 = vmul.f32 %v3884, %v3899
        %v3919 = vmul.f32 %v3885, %v3899
        %v3920 = vmul.f32 %v3886, %v3899
        %v3921 = vmul.f32 %v3887, %v3899
        %v3922 = vmul.f32 %v3888, %v3899
        %v3923 = vmul.f32 %v3889, %v3899
        %v3924 = vmul.f32 %v3890, %v3899
        %v3925 = vmul.f32 %v3891, %v3899
        %v3926 = vmul.f32 %v3892, %v3899
        %v3927 = vmul.f32 %v3893, %v3899
        %v3928 = vmul.f32 %v3894, %v3899
        %v3929 = vmul.f32 %v3895, %v3899
        %v3930 = vmul.f32 %v3896, %v3899
        %v3931 = vmul.f32 %v3897, %v3899
        %v3932 = vadd.f32 %v3832, %v3900
        %v3933 = vadd.f32 %v3833, %v3901
        %v3934 = vadd.f32 %v3834, %v3902
        %v3935 = vadd.f32 %v3835, %v3903
        %v3936 = vadd.f32 %v3836, %v3904
        %v3937 = vadd.f32 %v3837, %v3905
        %v3938 = vadd.f32 %v3838, %v3906
        %v3939 = vadd.f32 %v3839, %v3907
        %v3940 = vadd.f32 %v3840, %v3908
        %v3941 = vadd.f32 %v3841, %v3909
        %v3942 = vadd.f32 %v3842, %v3910
        %v3943 = vadd.f32 %v3843, %v3911
        %v3944 = vadd.f32 %v3844, %v3912
        %v3945 = vadd.f32 %v3845, %v3913
        %v3946 = vadd.f32 %v3846, %v3914
        %v3947 = vadd.f32 %v3847, %v3915
        %v3948 = vadd.f32 %v3848, %v3916
        %v3949 = vadd.f32 %v3849, %v3917
        %v3950 = vadd.f32 %v3850, %v3918
        %v3951 = vadd.f32 %v3851, %v3919
        %v3952 = vadd.f32 %v3852, %v3920
        %v3953 = vadd.f32 %v3853, %v3921
        %v3954 = vadd.f32 %v3854, %v3922
        %v3955 = vadd.f32 %v3855, %v3923
        %v3956 = vadd.f32 %v3856, %v3924
        %v3957 = vadd.f32 %v3857, %v3925
        %v3958 = vadd.f32 %v3858, %v3926
        %v3959 = vadd.f32 %v3859, %v3927
        %v3960 = vadd.f32 %v3860, %v3928
        %v3961 = vadd.f32 %v3861, %v3929
        %v3962 = vadd.f32 %v3862, %v3930
        %v3963 = vadd.f32 %v3863, %v3931
        %v3964 = vld [vmem:[#allocation2 + $0x128] sm:$0xff]
        %v3965 = vld [vmem:[#allocation2 + $0x130] sm:$0xff]
        %v3966 = vld [vmem:[#allocation8 + $0x11] sm:$0x1]
        %v3967 = vperm.slane %v3966, 0
        %v3968 = vmul.f32 %v2476, %v3967
        %v3969 = vmul.f32 %v2477, %v3967
        %v3970 = vmul.f32 %v2478, %v3967
        %v3971 = vmul.f32 %v2479, %v3967
        %v3972 = vmul.f32 %v2480, %v3967
        %v3973 = vmul.f32 %v2481, %v3967
        %v3974 = vmul.f32 %v2482, %v3967
        %v3975 = vmul.f32 %v2483, %v3967
        %v3976 = vmul.f32 %v2484, %v3967
        %v3977 = vmul.f32 %v2485, %v3967
        %v3978 = vmul.f32 %v2486, %v3967
        %v3979 = vmul.f32 %v2487, %v3967
        %v3980 = vmul.f32 %v2488, %v3967
        %v3981 = vmul.f32 %v2489, %v3967
        %v3982 = vmul.f32 %v2490, %v3967
        %v3983 = vmul.f32 %v2491, %v3967
        %v3984 = vmul.f32 %v2492, %v3967
        %v3985 = vmul.f32 %v2493, %v3967
        %v3986 = vmul.f32 %v2494, %v3967
        %v3987 = vmul.f32 %v2495, %v3967
        %v3988 = vmul.f32 %v2496, %v3967
        %v3989 = vmul.f32 %v2497, %v3967
        %v3990 = vmul.f32 %v2498, %v3967
        %v3991 = vmul.f32 %v2499, %v3967
        %v3992 = vmul.f32 %v2500, %v3967
        %v3993 = vmul.f32 %v2501, %v3967
        %v3994 = vmul.f32 %v3028, %v3967
        %v3995 = vmul.f32 %v3029, %v3967
        %v3996 = vmul.f32 %v3496, %v3967
        %v3997 = vmul.f32 %v3497, %v3967
        %v3998 = vmul.f32 %v3964, %v3967
        %v3999 = vmul.f32 %v3965, %v3967
        %v4000 = vadd.f32 %v3932, %v3968
        %v4001 = vadd.f32 %v3933, %v3969
        %v4002 = vadd.f32 %v3934, %v3970
        %v4003 = vadd.f32 %v3935, %v3971
        %v4004 = vadd.f32 %v3936, %v3972
        %v4005 = vadd.f32 %v3937, %v3973
        %v4006 = vadd.f32 %v3938, %v3974
        %v4007 = vadd.f32 %v3939, %v3975
        %v4008 = vadd.f32 %v3940, %v3976
        %v4009 = vadd.f32 %v3941, %v3977
        %v4010 = vadd.f32 %v3942, %v3978
        %v4011 = vadd.f32 %v3943, %v3979
        %v4012 = vadd.f32 %v3944, %v3980
        %v4013 = vadd.f32 %v3945, %v3981
        %v4014 = vadd.f32 %v3946, %v3982
        %v4015 = vadd.f32 %v3947, %v3983
        %v4016 = vadd.f32 %v3948, %v3984
        %v4017 = vadd.f32 %v3949, %v3985
        %v4018 = vadd.f32 %v3950, %v3986
        %v4019 = vadd.f32 %v3951, %v3987
        %v4020 = vadd.f32 %v3952, %v3988
        %v4021 = vadd.f32 %v3953, %v3989
        %v4022 = vadd.f32 %v3954, %v3990
        %v4023 = vadd.f32 %v3955, %v3991
        %v4024 = vadd.f32 %v3956, %v3992
        %v4025 = vadd.f32 %v3957, %v3993
        %v4026 = vadd.f32 %v3958, %v3994
        %v4027 = vadd.f32 %v3959, %v3995
        %v4028 = vadd.f32 %v3960, %v3996
        %v4029 = vadd.f32 %v3961, %v3997
        %v4030 = vadd.f32 %v3962, %v3998
        %v4031 = vadd.f32 %v3963, %v3999
        %v4032 = vld [vmem:[#allocation2 + $0x129] sm:$0xff]
        %v4033 = vld [vmem:[#allocation2 + $0x131] sm:$0xff]
        %v4034 = vsel %vm958, %v2574, 0.0
        %v4035 = vsel %vm959, %v2575, 0.0
        %v4036 = vsel %vm960, %v2576, 0.0
        %v4037 = vsel %vm961, %v2577, 0.0
        %v4038 = vsel %vm962, %v2578, 0.0
        %v4039 = vsel %vm963, %v2579, 0.0
        %v4040 = vsel %vm964, %v2580, 0.0
        %v4041 = vsel %vm965, %v2581, 0.0
        %v4042 = vsel %vm966, %v2582, 0.0
        %v4043 = vsel %vm967, %v2583, 0.0
        %v4044 = vsel %vm968, %v2584, 0.0
        %v4045 = vsel %vm969, %v2585, 0.0
        %v4046 = vsel %vm970, %v2586, 0.0
        %v4047 = vsel %vm971, %v2587, 0.0
        %v4048 = vsel %vm972, %v2588, 0.0
        %v4049 = vsel %vm973, %v2589, 0.0
        %v4050 = vsel %vm974, %v2590, 0.0
        %v4051 = vsel %vm975, %v2591, 0.0
        %v4052 = vsel %vm976, %v2592, 0.0
        %v4053 = vsel %vm977, %v2593, 0.0
        %v4054 = vsel %vm978, %v2594, 0.0
        %v4055 = vsel %vm979, %v2595, 0.0
        %v4056 = vsel %vm980, %v2596, 0.0
        %v4057 = vsel %vm981, %v2597, 0.0
        %v4058 = vsel %vm982, %v2598, 0.0
        %v4059 = vsel %vm983, %v2599, 0.0
        %v4060 = vsel %vm984, %v3096, 0.0
        %v4061 = vsel %vm985, %v3097, 0.0
        %v4062 = vsel %vm986, %v3564, 0.0
        %v4063 = vsel %vm987, %v3565, 0.0
        %v4064 = vsel %vm988, %v4032, 0.0
        %v4065 = vsel %vm989, %v4033, 0.0
        %v4066 = vld [vmem:[#allocation8 + $0x12] sm:$0x1]
        %v4067 = vperm.slane %v4066, 0
        %v4068 = vmul.f32 %v4034, %v4067
        %v4069 = vmul.f32 %v4035, %v4067
        %v4070 = vmul.f32 %v4036, %v4067
        %v4071 = vmul.f32 %v4037, %v4067
        %v4072 = vmul.f32 %v4038, %v4067
        %v4073 = vmul.f32 %v4039, %v4067
        %v4074 = vmul.f32 %v4040, %v4067
        %v4075 = vmul.f32 %v4041, %v4067
        %v4076 = vmul.f32 %v4042, %v4067
        %v4077 = vmul.f32 %v4043, %v4067
        %v4078 = vmul.f32 %v4044, %v4067
        %v4079 = vmul.f32 %v4045, %v4067
        %v4080 = vmul.f32 %v4046, %v4067
        %v4081 = vmul.f32 %v4047, %v4067
        %v4082 = vmul.f32 %v4048, %v4067
        %v4083 = vmul.f32 %v4049, %v4067
        %v4084 = vmul.f32 %v4050, %v4067
        %v4085 = vmul.f32 %v4051, %v4067
        %v4086 = vmul.f32 %v4052, %v4067
        %v4087 = vmul.f32 %v4053, %v4067
        %v4088 = vmul.f32 %v4054, %v4067
        %v4089 = vmul.f32 %v4055, %v4067
        %v4090 = vmul.f32 %v4056, %v4067
        %v4091 = vmul.f32 %v4057, %v4067
        %v4092 = vmul.f32 %v4058, %v4067
        %v4093 = vmul.f32 %v4059, %v4067
        %v4094 = vmul.f32 %v4060, %v4067
        %v4095 = vmul.f32 %v4061, %v4067
        %v4096 = vmul.f32 %v4062, %v4067
        %v4097 = vmul.f32 %v4063, %v4067
        %v4098 = vmul.f32 %v4064, %v4067
        %v4099 = vmul.f32 %v4065, %v4067
        %v4100 = vadd.f32 %v4000, %v4068
        %v4101 = vadd.f32 %v4001, %v4069
        %v4102 = vadd.f32 %v4002, %v4070
        %v4103 = vadd.f32 %v4003, %v4071
        %v4104 = vadd.f32 %v4004, %v4072
        %v4105 = vadd.f32 %v4005, %v4073
        %v4106 = vadd.f32 %v4006, %v4074
        %v4107 = vadd.f32 %v4007, %v4075
        %v4108 = vadd.f32 %v4008, %v4076
        %v4109 = vadd.f32 %v4009, %v4077
        %v4110 = vadd.f32 %v4010, %v4078
        %v4111 = vadd.f32 %v4011, %v4079
        %v4112 = vadd.f32 %v4012, %v4080
        %v4113 = vadd.f32 %v4013, %v4081
        %v4114 = vadd.f32 %v4014, %v4082
        %v4115 = vadd.f32 %v4015, %v4083
        %v4116 = vadd.f32 %v4016, %v4084
        %v4117 = vadd.f32 %v4017, %v4085
        %v4118 = vadd.f32 %v4018, %v4086
        %v4119 = vadd.f32 %v4019, %v4087
        %v4120 = vadd.f32 %v4020, %v4088
        %v4121 = vadd.f32 %v4021, %v4089
        %v4122 = vadd.f32 %v4022, %v4090
        %v4123 = vadd.f32 %v4023, %v4091
        %v4124 = vadd.f32 %v4024, %v4092
        %v4125 = vadd.f32 %v4025, %v4093
        %v4126 = vadd.f32 %v4026, %v4094
        %v4127 = vadd.f32 %v4027, %v4095
        %v4128 = vadd.f32 %v4028, %v4096
        %v4129 = vadd.f32 %v4029, %v4097
        %v4130 = vadd.f32 %v4030, %v4098
        %v4131 = vadd.f32 %v4031, %v4099
        %v4132 = vld [vmem:[#allocation2 + $0x12a] sm:$0xff]
        %v4133 = vld [vmem:[#allocation2 + $0x132] sm:$0xff]
        %v4134 = vsel %vm990, %v2704, 0.0
        %v4135 = vsel %vm991, %v2705, 0.0
        %v4136 = vsel %vm992, %v2706, 0.0
        %v4137 = vsel %vm993, %v2707, 0.0
        %v4138 = vsel %vm994, %v2708, 0.0
        %v4139 = vsel %vm995, %v2709, 0.0
        %v4140 = vsel %vm996, %v2710, 0.0
        %v4141 = vsel %vm997, %v2711, 0.0
        %v4142 = vsel %vm998, %v2712, 0.0
        %v4143 = vsel %vm999, %v2713, 0.0
        %v4144 = vsel %vm1000, %v2714, 0.0
        %v4145 = vsel %vm1001, %v2715, 0.0
        %v4146 = vsel %vm1002, %v2716, 0.0
        %v4147 = vsel %vm1003, %v2717, 0.0
        %v4148 = vsel %vm1004, %v2718, 0.0
        %v4149 = vsel %vm1005, %v2719, 0.0
        %v4150 = vsel %vm1006, %v2720, 0.0
        %v4151 = vsel %vm1007, %v2721, 0.0
        %v4152 = vsel %vm1008, %v2722, 0.0
        %v4153 = vsel %vm1009, %v2723, 0.0
        %v4154 = vsel %vm1010, %v2724, 0.0
        %v4155 = vsel %vm1011, %v2725, 0.0
        %v4156 = vsel %vm1012, %v2726, 0.0
        %v4157 = vsel %vm1013, %v2727, 0.0
        %v4158 = vsel %vm1014, %v2728, 0.0
        %v4159 = vsel %vm1015, %v2729, 0.0
        %v4160 = vsel %vm1016, %v3196, 0.0
        %v4161 = vsel %vm1017, %v3197, 0.0
        %v4162 = vsel %vm1018, %v3664, 0.0
        %v4163 = vsel %vm1019, %v3665, 0.0
        %v4164 = vsel %vm1020, %v4132, 0.0
        %v4165 = vsel %vm1021, %v4133, 0.0
        %v4166 = vld [vmem:[#allocation8 + $0x13] sm:$0x1]
        %v4167 = vperm.slane %v4166, 0
        %v4168 = vmul.f32 %v4134, %v4167
        %v4169 = vmul.f32 %v4135, %v4167
        %v4170 = vmul.f32 %v4136, %v4167
        %v4171 = vmul.f32 %v4137, %v4167
        %v4172 = vmul.f32 %v4138, %v4167
        %v4173 = vmul.f32 %v4139, %v4167
        %v4174 = vmul.f32 %v4140, %v4167
        %v4175 = vmul.f32 %v4141, %v4167
        %v4176 = vmul.f32 %v4142, %v4167
        %v4177 = vmul.f32 %v4143, %v4167
        %v4178 = vmul.f32 %v4144, %v4167
        %v4179 = vmul.f32 %v4145, %v4167
        %v4180 = vmul.f32 %v4146, %v4167
        %v4181 = vmul.f32 %v4147, %v4167
        %v4182 = vmul.f32 %v4148, %v4167
        %v4183 = vmul.f32 %v4149, %v4167
        %v4184 = vmul.f32 %v4150, %v4167
        %v4185 = vmul.f32 %v4151, %v4167
        %v4186 = vmul.f32 %v4152, %v4167
        %v4187 = vmul.f32 %v4153, %v4167
        %v4188 = vmul.f32 %v4154, %v4167
        %v4189 = vmul.f32 %v4155, %v4167
        %v4190 = vmul.f32 %v4156, %v4167
        %v4191 = vmul.f32 %v4157, %v4167
        %v4192 = vmul.f32 %v4158, %v4167
        %v4193 = vmul.f32 %v4159, %v4167
        %v4194 = vmul.f32 %v4160, %v4167
        %v4195 = vmul.f32 %v4161, %v4167
        %v4196 = vmul.f32 %v4162, %v4167
        %v4197 = vmul.f32 %v4163, %v4167
        %v4198 = vmul.f32 %v4164, %v4167
        %v4199 = vmul.f32 %v4165, %v4167
        %v4200 = vadd.f32 %v4100, %v4168
        %v4201 = vadd.f32 %v4101, %v4169
        %v4202 = vadd.f32 %v4102, %v4170
        %v4203 = vadd.f32 %v4103, %v4171
        %v4204 = vadd.f32 %v4104, %v4172
        %v4205 = vadd.f32 %v4105, %v4173
        %v4206 = vadd.f32 %v4106, %v4174
        %v4207 = vadd.f32 %v4107, %v4175
        %v4208 = vadd.f32 %v4108, %v4176
        %v4209 = vadd.f32 %v4109, %v4177
        %v4210 = vadd.f32 %v4110, %v4178
        %v4211 = vadd.f32 %v4111, %v4179
        %v4212 = vadd.f32 %v4112, %v4180
        %v4213 = vadd.f32 %v4113, %v4181
        %v4214 = vadd.f32 %v4114, %v4182
        %v4215 = vadd.f32 %v4115, %v4183
        %v4216 = vadd.f32 %v4116, %v4184
        %v4217 = vadd.f32 %v4117, %v4185
        %v4218 = vadd.f32 %v4118, %v4186
        %v4219 = vadd.f32 %v4119, %v4187
        %v4220 = vadd.f32 %v4120, %v4188
        %v4221 = vadd.f32 %v4121, %v4189
        %v4222 = vadd.f32 %v4122, %v4190
        %v4223 = vadd.f32 %v4123, %v4191
        %v4224 = vadd.f32 %v4124, %v4192
        %v4225 = vadd.f32 %v4125, %v4193
        %v4226 = vadd.f32 %v4126, %v4194
        %v4227 = vadd.f32 %v4127, %v4195
        %v4228 = vadd.f32 %v4128, %v4196
        %v4229 = vadd.f32 %v4129, %v4197
        %v4230 = vadd.f32 %v4130, %v4198
        %v4231 = vadd.f32 %v4131, %v4199
        %v4232 = vld [vmem:[#allocation2 + $0x136] sm:$0xff]
        %v4233 = vld [vmem:[#allocation2 + $0x13e] sm:$0xff]
        %v4234 = vsel %vm894, %v2218, 0.0
        %v4235 = vsel %vm895, %v2219, 0.0
        %v4236 = vsel %vm896, %v2220, 0.0
        %v4237 = vsel %vm897, %v2221, 0.0
        %v4238 = vsel %vm898, %v2222, 0.0
        %v4239 = vsel %vm899, %v2223, 0.0
        %v4240 = vsel %vm900, %v2224, 0.0
        %v4241 = vsel %vm901, %v2225, 0.0
        %v4242 = vsel %vm902, %v2226, 0.0
        %v4243 = vsel %vm903, %v2227, 0.0
        %v4244 = vsel %vm904, %v2228, 0.0
        %v4245 = vsel %vm905, %v2229, 0.0
        %v4246 = vsel %vm906, %v2230, 0.0
        %v4247 = vsel %vm907, %v2231, 0.0
        %v4248 = vsel %vm908, %v2232, 0.0
        %v4249 = vsel %vm909, %v2233, 0.0
        %v4250 = vsel %vm910, %v2234, 0.0
        %v4251 = vsel %vm911, %v2235, 0.0
        %v4252 = vsel %vm912, %v2236, 0.0
        %v4253 = vsel %vm913, %v2237, 0.0
        %v4254 = vsel %vm914, %v2238, 0.0
        %v4255 = vsel %vm915, %v2239, 0.0
        %v4256 = vsel %vm916, %v2240, 0.0
        %v4257 = vsel %vm917, %v2241, 0.0
        %v4258 = vsel %vm918, %v2828, 0.0
        %v4259 = vsel %vm919, %v2829, 0.0
        %v4260 = vsel %vm920, %v3296, 0.0
        %v4261 = vsel %vm921, %v3297, 0.0
        %v4262 = vsel %vm922, %v3764, 0.0
        %v4263 = vsel %vm923, %v3765, 0.0
        %v4264 = vsel %vm924, %v4232, 0.0
        %v4265 = vsel %vm925, %v4233, 0.0
        %v4266 = vld [vmem:[#allocation8 + $0x14] sm:$0x1]
        %v4267 = vperm.slane %v4266, 0
        %v4268 = vmul.f32 %v4234, %v4267
        %v4269 = vmul.f32 %v4235, %v4267
        %v4270 = vmul.f32 %v4236, %v4267
        %v4271 = vmul.f32 %v4237, %v4267
        %v4272 = vmul.f32 %v4238, %v4267
        %v4273 = vmul.f32 %v4239, %v4267
        %v4274 = vmul.f32 %v4240, %v4267
        %v4275 = vmul.f32 %v4241, %v4267
        %v4276 = vmul.f32 %v4242, %v4267
        %v4277 = vmul.f32 %v4243, %v4267
        %v4278 = vmul.f32 %v4244, %v4267
        %v4279 = vmul.f32 %v4245, %v4267
        %v4280 = vmul.f32 %v4246, %v4267
        %v4281 = vmul.f32 %v4247, %v4267
        %v4282 = vmul.f32 %v4248, %v4267
        %v4283 = vmul.f32 %v4249, %v4267
        %v4284 = vmul.f32 %v4250, %v4267
        %v4285 = vmul.f32 %v4251, %v4267
        %v4286 = vmul.f32 %v4252, %v4267
        %v4287 = vmul.f32 %v4253, %v4267
        %v4288 = vmul.f32 %v4254, %v4267
        %v4289 = vmul.f32 %v4255, %v4267
        %v4290 = vmul.f32 %v4256, %v4267
        %v4291 = vmul.f32 %v4257, %v4267
        %v4292 = vmul.f32 %v4258, %v4267
        %v4293 = vmul.f32 %v4259, %v4267
        %v4294 = vmul.f32 %v4260, %v4267
        %v4295 = vmul.f32 %v4261, %v4267
        %v4296 = vmul.f32 %v4262, %v4267
        %v4297 = vmul.f32 %v4263, %v4267
        %v4298 = vmul.f32 %v4264, %v4267
        %v4299 = vmul.f32 %v4265, %v4267
        %v4300 = vadd.f32 %v4200, %v4268
        %v4301 = vadd.f32 %v4201, %v4269
        %v4302 = vadd.f32 %v4202, %v4270
        %v4303 = vadd.f32 %v4203, %v4271
        %v4304 = vadd.f32 %v4204, %v4272
        %v4305 = vadd.f32 %v4205, %v4273
        %v4306 = vadd.f32 %v4206, %v4274
        %v4307 = vadd.f32 %v4207, %v4275
        %v4308 = vadd.f32 %v4208, %v4276
        %v4309 = vadd.f32 %v4209, %v4277
        %v4310 = vadd.f32 %v4210, %v4278
        %v4311 = vadd.f32 %v4211, %v4279
        %v4312 = vadd.f32 %v4212, %v4280
        %v4313 = vadd.f32 %v4213, %v4281
        %v4314 = vadd.f32 %v4214, %v4282
        %v4315 = vadd.f32 %v4215, %v4283
        %v4316 = vadd.f32 %v4216, %v4284
        %v4317 = vadd.f32 %v4217, %v4285
        %v4318 = vadd.f32 %v4218, %v4286
        %v4319 = vadd.f32 %v4219, %v4287
        %v4320 = vadd.f32 %v4220, %v4288
        %v4321 = vadd.f32 %v4221, %v4289
        %v4322 = vadd.f32 %v4222, %v4290
        %v4323 = vadd.f32 %v4223, %v4291
        %v4324 = vadd.f32 %v4224, %v4292
        %v4325 = vadd.f32 %v4225, %v4293
        %v4326 = vadd.f32 %v4226, %v4294
        %v4327 = vadd.f32 %v4227, %v4295
        %v4328 = vadd.f32 %v4228, %v4296
        %v4329 = vadd.f32 %v4229, %v4297
        %v4330 = vadd.f32 %v4230, %v4298
        %v4331 = vadd.f32 %v4231, %v4299
        %v4332 = vld [vmem:[#allocation2 + $0x137] sm:$0xff]
        %v4333 = vld [vmem:[#allocation2 + $0x13f] sm:$0xff]
        %v4334 = vsel %vm926, %v2348, 0.0
        %v4335 = vsel %vm927, %v2349, 0.0
        %v4336 = vsel %vm928, %v2350, 0.0
        %v4337 = vsel %vm929, %v2351, 0.0
        %v4338 = vsel %vm930, %v2352, 0.0
        %v4339 = vsel %vm931, %v2353, 0.0
        %v4340 = vsel %vm932, %v2354, 0.0
        %v4341 = vsel %vm933, %v2355, 0.0
        %v4342 = vsel %vm934, %v2356, 0.0
        %v4343 = vsel %vm935, %v2357, 0.0
        %v4344 = vsel %vm936, %v2358, 0.0
        %v4345 = vsel %vm937, %v2359, 0.0
        %v4346 = vsel %vm938, %v2360, 0.0
        %v4347 = vsel %vm939, %v2361, 0.0
        %v4348 = vsel %vm940, %v2362, 0.0
        %v4349 = vsel %vm941, %v2363, 0.0
        %v4350 = vsel %vm942, %v2364, 0.0
        %v4351 = vsel %vm943, %v2365, 0.0
        %v4352 = vsel %vm944, %v2366, 0.0
        %v4353 = vsel %vm945, %v2367, 0.0
        %v4354 = vsel %vm946, %v2368, 0.0
        %v4355 = vsel %vm947, %v2369, 0.0
        %v4356 = vsel %vm948, %v2370, 0.0
        %v4357 = vsel %vm949, %v2371, 0.0
        %v4358 = vsel %vm950, %v2928, 0.0
        %v4359 = vsel %vm951, %v2929, 0.0
        %v4360 = vsel %vm952, %v3396, 0.0
        %v4361 = vsel %vm953, %v3397, 0.0
        %v4362 = vsel %vm954, %v3864, 0.0
        %v4363 = vsel %vm955, %v3865, 0.0
        %v4364 = vsel %vm956, %v4332, 0.0
        %v4365 = vsel %vm957, %v4333, 0.0
        %v4366 = vld [vmem:[#allocation8 + $0x15] sm:$0x1]
        %v4367 = vperm.slane %v4366, 0
        %v4368 = vmul.f32 %v4334, %v4367
        %v4369 = vmul.f32 %v4335, %v4367
        %v4370 = vmul.f32 %v4336, %v4367
        %v4371 = vmul.f32 %v4337, %v4367
        %v4372 = vmul.f32 %v4338, %v4367
        %v4373 = vmul.f32 %v4339, %v4367
        %v4374 = vmul.f32 %v4340, %v4367
        %v4375 = vmul.f32 %v4341, %v4367
        %v4376 = vmul.f32 %v4342, %v4367
        %v4377 = vmul.f32 %v4343, %v4367
        %v4378 = vmul.f32 %v4344, %v4367
        %v4379 = vmul.f32 %v4345, %v4367
        %v4380 = vmul.f32 %v4346, %v4367
        %v4381 = vmul.f32 %v4347, %v4367
        %v4382 = vmul.f32 %v4348, %v4367
        %v4383 = vmul.f32 %v4349, %v4367
        %v4384 = vmul.f32 %v4350, %v4367
        %v4385 = vmul.f32 %v4351, %v4367
        %v4386 = vmul.f32 %v4352, %v4367
        %v4387 = vmul.f32 %v4353, %v4367
        %v4388 = vmul.f32 %v4354, %v4367
        %v4389 = vmul.f32 %v4355, %v4367
        %v4390 = vmul.f32 %v4356, %v4367
        %v4391 = vmul.f32 %v4357, %v4367
        %v4392 = vmul.f32 %v4358, %v4367
        %v4393 = vmul.f32 %v4359, %v4367
        %v4394 = vmul.f32 %v4360, %v4367
        %v4395 = vmul.f32 %v4361, %v4367
        %v4396 = vmul.f32 %v4362, %v4367
        %v4397 = vmul.f32 %v4363, %v4367
        %v4398 = vmul.f32 %v4364, %v4367
        %v4399 = vmul.f32 %v4365, %v4367
        %v4400 = vadd.f32 %v4300, %v4368
        %v4401 = vadd.f32 %v4301, %v4369
        %v4402 = vadd.f32 %v4302, %v4370
        %v4403 = vadd.f32 %v4303, %v4371
        %v4404 = vadd.f32 %v4304, %v4372
        %v4405 = vadd.f32 %v4305, %v4373
        %v4406 = vadd.f32 %v4306, %v4374
        %v4407 = vadd.f32 %v4307, %v4375
        %v4408 = vadd.f32 %v4308, %v4376
        %v4409 = vadd.f32 %v4309, %v4377
        %v4410 = vadd.f32 %v4310, %v4378
        %v4411 = vadd.f32 %v4311, %v4379
        %v4412 = vadd.f32 %v4312, %v4380
        %v4413 = vadd.f32 %v4313, %v4381
        %v4414 = vadd.f32 %v4314, %v4382
        %v4415 = vadd.f32 %v4315, %v4383
        %v4416 = vadd.f32 %v4316, %v4384
        %v4417 = vadd.f32 %v4317, %v4385
        %v4418 = vadd.f32 %v4318, %v4386
        %v4419 = vadd.f32 %v4319, %v4387
        %v4420 = vadd.f32 %v4320, %v4388
        %v4421 = vadd.f32 %v4321, %v4389
        %v4422 = vadd.f32 %v4322, %v4390
        %v4423 = vadd.f32 %v4323, %v4391
        %v4424 = vadd.f32 %v4324, %v4392
        %v4425 = vadd.f32 %v4325, %v4393
        %v4426 = vadd.f32 %v4326, %v4394
        %v4427 = vadd.f32 %v4327, %v4395
        %v4428 = vadd.f32 %v4328, %v4396
        %v4429 = vadd.f32 %v4329, %v4397
        %v4430 = vadd.f32 %v4330, %v4398
        %v4431 = vadd.f32 %v4331, %v4399
        %v4432 = vld [vmem:[#allocation2 + $0x138] sm:$0xff]
        %v4433 = vld [vmem:[#allocation2 + $0x140] sm:$0xff]
        %v4434 = vld [vmem:[#allocation8 + $0x16] sm:$0x1]
        %v4435 = vperm.slane %v4434, 0
        %v4436 = vmul.f32 %v2478, %v4435
        %v4437 = vmul.f32 %v2479, %v4435
        %v4438 = vmul.f32 %v2480, %v4435
        %v4439 = vmul.f32 %v2481, %v4435
        %v4440 = vmul.f32 %v2482, %v4435
        %v4441 = vmul.f32 %v2483, %v4435
        %v4442 = vmul.f32 %v2484, %v4435
        %v4443 = vmul.f32 %v2485, %v4435
        %v4444 = vmul.f32 %v2486, %v4435
        %v4445 = vmul.f32 %v2487, %v4435
        %v4446 = vmul.f32 %v2488, %v4435
        %v4447 = vmul.f32 %v2489, %v4435
        %v4448 = vmul.f32 %v2490, %v4435
        %v4449 = vmul.f32 %v2491, %v4435
        %v4450 = vmul.f32 %v2492, %v4435
        %v4451 = vmul.f32 %v2493, %v4435
        %v4452 = vmul.f32 %v2494, %v4435
        %v4453 = vmul.f32 %v2495, %v4435
        %v4454 = vmul.f32 %v2496, %v4435
        %v4455 = vmul.f32 %v2497, %v4435
        %v4456 = vmul.f32 %v2498, %v4435
        %v4457 = vmul.f32 %v2499, %v4435
        %v4458 = vmul.f32 %v2500, %v4435
        %v4459 = vmul.f32 %v2501, %v4435
        %v4460 = vmul.f32 %v3028, %v4435
        %v4461 = vmul.f32 %v3029, %v4435
        %v4462 = vmul.f32 %v3496, %v4435
        %v4463 = vmul.f32 %v3497, %v4435
        %v4464 = vmul.f32 %v3964, %v4435
        %v4465 = vmul.f32 %v3965, %v4435
        %v4466 = vmul.f32 %v4432, %v4435
        %v4467 = vmul.f32 %v4433, %v4435
        %v4468 = vadd.f32 %v4400, %v4436
        %v4469 = vadd.f32 %v4401, %v4437
        %v4470 = vadd.f32 %v4402, %v4438
        %v4471 = vadd.f32 %v4403, %v4439
        %v4472 = vadd.f32 %v4404, %v4440
        %v4473 = vadd.f32 %v4405, %v4441
        %v4474 = vadd.f32 %v4406, %v4442
        %v4475 = vadd.f32 %v4407, %v4443
        %v4476 = vadd.f32 %v4408, %v4444
        %v4477 = vadd.f32 %v4409, %v4445
        %v4478 = vadd.f32 %v4410, %v4446
        %v4479 = vadd.f32 %v4411, %v4447
        %v4480 = vadd.f32 %v4412, %v4448
        %v4481 = vadd.f32 %v4413, %v4449
        %v4482 = vadd.f32 %v4414, %v4450
        %v4483 = vadd.f32 %v4415, %v4451
        %v4484 = vadd.f32 %v4416, %v4452
        %v4485 = vadd.f32 %v4417, %v4453
        %v4486 = vadd.f32 %v4418, %v4454
        %v4487 = vadd.f32 %v4419, %v4455
        %v4488 = vadd.f32 %v4420, %v4456
        %v4489 = vadd.f32 %v4421, %v4457
        %v4490 = vadd.f32 %v4422, %v4458
        %v4491 = vadd.f32 %v4423, %v4459
        %v4492 = vadd.f32 %v4424, %v4460
        %v4493 = vadd.f32 %v4425, %v4461
        %v4494 = vadd.f32 %v4426, %v4462
        %v4495 = vadd.f32 %v4427, %v4463
        %v4496 = vadd.f32 %v4428, %v4464
        %v4497 = vadd.f32 %v4429, %v4465
        %v4498 = vadd.f32 %v4430, %v4466
        %v4499 = vadd.f32 %v4431, %v4467
        %v4500 = vld [vmem:[#allocation2 + $0x139] sm:$0xff]
        %v4501 = vld [vmem:[#allocation2 + $0x141] sm:$0xff]
        %v4502 = vsel %vm958, %v2576, 0.0
        %v4503 = vsel %vm959, %v2577, 0.0
        %v4504 = vsel %vm960, %v2578, 0.0
        %v4505 = vsel %vm961, %v2579, 0.0
        %v4506 = vsel %vm962, %v2580, 0.0
        %v4507 = vsel %vm963, %v2581, 0.0
        %v4508 = vsel %vm964, %v2582, 0.0
        %v4509 = vsel %vm965, %v2583, 0.0
        %v4510 = vsel %vm966, %v2584, 0.0
        %v4511 = vsel %vm967, %v2585, 0.0
        %v4512 = vsel %vm968, %v2586, 0.0
        %v4513 = vsel %vm969, %v2587, 0.0
        %v4514 = vsel %vm970, %v2588, 0.0
        %v4515 = vsel %vm971, %v2589, 0.0
        %v4516 = vsel %vm972, %v2590, 0.0
        %v4517 = vsel %vm973, %v2591, 0.0
        %v4518 = vsel %vm974, %v2592, 0.0
        %v4519 = vsel %vm975, %v2593, 0.0
        %v4520 = vsel %vm976, %v2594, 0.0
        %v4521 = vsel %vm977, %v2595, 0.0
        %v4522 = vsel %vm978, %v2596, 0.0
        %v4523 = vsel %vm979, %v2597, 0.0
        %v4524 = vsel %vm980, %v2598, 0.0
        %v4525 = vsel %vm981, %v2599, 0.0
        %v4526 = vsel %vm982, %v3096, 0.0
        %v4527 = vsel %vm983, %v3097, 0.0
        %v4528 = vsel %vm984, %v3564, 0.0
        %v4529 = vsel %vm985, %v3565, 0.0
        %v4530 = vsel %vm986, %v4032, 0.0
        %v4531 = vsel %vm987, %v4033, 0.0
        %v4532 = vsel %vm988, %v4500, 0.0
        %v4533 = vsel %vm989, %v4501, 0.0
        %v4534 = vld [vmem:[#allocation8 + $0x17] sm:$0x1]
        %v4535 = vperm.slane %v4534, 0
        %v4536 = vmul.f32 %v4502, %v4535
        %v4537 = vmul.f32 %v4503, %v4535
        %v4538 = vmul.f32 %v4504, %v4535
        %v4539 = vmul.f32 %v4505, %v4535
        %v4540 = vmul.f32 %v4506, %v4535
        %v4541 = vmul.f32 %v4507, %v4535
        %v4542 = vmul.f32 %v4508, %v4535
        %v4543 = vmul.f32 %v4509, %v4535
        %v4544 = vmul.f32 %v4510, %v4535
        %v4545 = vmul.f32 %v4511, %v4535
        %v4546 = vmul.f32 %v4512, %v4535
        %v4547 = vmul.f32 %v4513, %v4535
        %v4548 = vmul.f32 %v4514, %v4535
        %v4549 = vmul.f32 %v4515, %v4535
        %v4550 = vmul.f32 %v4516, %v4535
        %v4551 = vmul.f32 %v4517, %v4535
        %v4552 = vmul.f32 %v4518, %v4535
        %v4553 = vmul.f32 %v4519, %v4535
        %v4554 = vmul.f32 %v4520, %v4535
        %v4555 = vmul.f32 %v4521, %v4535
        %v4556 = vmul.f32 %v4522, %v4535
        %v4557 = vmul.f32 %v4523, %v4535
        %v4558 = vmul.f32 %v4524, %v4535
        %v4559 = vmul.f32 %v4525, %v4535
        %v4560 = vmul.f32 %v4526, %v4535
        %v4561 = vmul.f32 %v4527, %v4535
        %v4562 = vmul.f32 %v4528, %v4535
        %v4563 = vmul.f32 %v4529, %v4535
        %v4564 = vmul.f32 %v4530, %v4535
        %v4565 = vmul.f32 %v4531, %v4535
        %v4566 = vmul.f32 %v4532, %v4535
        %v4567 = vmul.f32 %v4533, %v4535
        %v4568 = vadd.f32 %v4468, %v4536
        %v4569 = vadd.f32 %v4469, %v4537
        %v4570 = vadd.f32 %v4470, %v4538
        %v4571 = vadd.f32 %v4471, %v4539
        %v4572 = vadd.f32 %v4472, %v4540
        %v4573 = vadd.f32 %v4473, %v4541
        %v4574 = vadd.f32 %v4474, %v4542
        %v4575 = vadd.f32 %v4475, %v4543
        %v4576 = vadd.f32 %v4476, %v4544
        %v4577 = vadd.f32 %v4477, %v4545
        %v4578 = vadd.f32 %v4478, %v4546
        %v4579 = vadd.f32 %v4479, %v4547
        %v4580 = vadd.f32 %v4480, %v4548
        %v4581 = vadd.f32 %v4481, %v4549
        %v4582 = vadd.f32 %v4482, %v4550
        %v4583 = vadd.f32 %v4483, %v4551
        %v4584 = vadd.f32 %v4484, %v4552
        %v4585 = vadd.f32 %v4485, %v4553
        %v4586 = vadd.f32 %v4486, %v4554
        %v4587 = vadd.f32 %v4487, %v4555
        %v4588 = vadd.f32 %v4488, %v4556
        %v4589 = vadd.f32 %v4489, %v4557
        %v4590 = vadd.f32 %v4490, %v4558
        %v4591 = vadd.f32 %v4491, %v4559
        %v4592 = vadd.f32 %v4492, %v4560
        %v4593 = vadd.f32 %v4493, %v4561
        %v4594 = vadd.f32 %v4494, %v4562
        %v4595 = vadd.f32 %v4495, %v4563
        %v4596 = vadd.f32 %v4496, %v4564
        %v4597 = vadd.f32 %v4497, %v4565
        %v4598 = vadd.f32 %v4498, %v4566
        %v4599 = vadd.f32 %v4499, %v4567
        %v4600 = vld [vmem:[#allocation2 + $0x13a] sm:$0xff]
        %v4601 = vld [vmem:[#allocation2 + $0x142] sm:$0xff]
        %v4602 = vsel %vm990, %v2706, 0.0
        %v4603 = vsel %vm991, %v2707, 0.0
        %v4604 = vsel %vm992, %v2708, 0.0
        %v4605 = vsel %vm993, %v2709, 0.0
        %v4606 = vsel %vm994, %v2710, 0.0
        %v4607 = vsel %vm995, %v2711, 0.0
        %v4608 = vsel %vm996, %v2712, 0.0
        %v4609 = vsel %vm997, %v2713, 0.0
        %v4610 = vsel %vm998, %v2714, 0.0
        %v4611 = vsel %vm999, %v2715, 0.0
        %v4612 = vsel %vm1000, %v2716, 0.0
        %v4613 = vsel %vm1001, %v2717, 0.0
        %v4614 = vsel %vm1002, %v2718, 0.0
        %v4615 = vsel %vm1003, %v2719, 0.0
        %v4616 = vsel %vm1004, %v2720, 0.0
        %v4617 = vsel %vm1005, %v2721, 0.0
        %v4618 = vsel %vm1006, %v2722, 0.0
        %v4619 = vsel %vm1007, %v2723, 0.0
        %v4620 = vsel %vm1008, %v2724, 0.0
        %v4621 = vsel %vm1009, %v2725, 0.0
        %v4622 = vsel %vm1010, %v2726, 0.0
        %v4623 = vsel %vm1011, %v2727, 0.0
        %v4624 = vsel %vm1012, %v2728, 0.0
        %v4625 = vsel %vm1013, %v2729, 0.0
        %v4626 = vsel %vm1014, %v3196, 0.0
        %v4627 = vsel %vm1015, %v3197, 0.0
        %v4628 = vsel %vm1016, %v3664, 0.0
        %v4629 = vsel %vm1017, %v3665, 0.0
        %v4630 = vsel %vm1018, %v4132, 0.0
        %v4631 = vsel %vm1019, %v4133, 0.0
        %v4632 = vsel %vm1020, %v4600, 0.0
        %v4633 = vsel %vm1021, %v4601, 0.0
        %v4634 = vld [vmem:[#allocation8 + $0x18] sm:$0x1]
        %v4635 = vperm.slane %v4634, 0
        %v4636 = vmul.f32 %v4602, %v4635
        %v4637 = vmul.f32 %v4603, %v4635
        %v4638 = vmul.f32 %v4604, %v4635
        %v4639 = vmul.f32 %v4605, %v4635
        %v4640 = vmul.f32 %v4606, %v4635
        %v4641 = vmul.f32 %v4607, %v4635
        %v4642 = vmul.f32 %v4608, %v4635
        %v4643 = vmul.f32 %v4609, %v4635
        %v4644 = vmul.f32 %v4610, %v4635
        %v4645 = vmul.f32 %v4611, %v4635
        %v4646 = vmul.f32 %v4612, %v4635
        %v4647 = vmul.f32 %v4613, %v4635
        %v4648 = vmul.f32 %v4614, %v4635
        %v4649 = vmul.f32 %v4615, %v4635
        %v4650 = vmul.f32 %v4616, %v4635
        %v4651 = vmul.f32 %v4617, %v4635
        %v4652 = vmul.f32 %v4618, %v4635
        %v4653 = vmul.f32 %v4619, %v4635
        %v4654 = vmul.f32 %v4620, %v4635
        %v4655 = vmul.f32 %v4621, %v4635
        %v4656 = vmul.f32 %v4622, %v4635
        %v4657 = vmul.f32 %v4623, %v4635
        %v4658 = vmul.f32 %v4624, %v4635
        %v4659 = vmul.f32 %v4625, %v4635
        %v4660 = vmul.f32 %v4626, %v4635
        %v4661 = vmul.f32 %v4627, %v4635
        %v4662 = vmul.f32 %v4628, %v4635
        %v4663 = vmul.f32 %v4629, %v4635
        %v4664 = vmul.f32 %v4630, %v4635
        %v4665 = vmul.f32 %v4631, %v4635
        %v4666 = vmul.f32 %v4632, %v4635
        %v4667 = vmul.f32 %v4633, %v4635
        %v4668 = vadd.f32 %v4568, %v4636
        %v4669 = vadd.f32 %v4569, %v4637
        %v4670 = vadd.f32 %v4570, %v4638
        %v4671 = vadd.f32 %v4571, %v4639
        %v4672 = vadd.f32 %v4572, %v4640
        %v4673 = vadd.f32 %v4573, %v4641
        %v4674 = vadd.f32 %v4574, %v4642
        %v4675 = vadd.f32 %v4575, %v4643
        %v4676 = vadd.f32 %v4576, %v4644
        %v4677 = vadd.f32 %v4577, %v4645
        %v4678 = vadd.f32 %v4578, %v4646
        %v4679 = vadd.f32 %v4579, %v4647
        %v4680 = vadd.f32 %v4580, %v4648
        %v4681 = vadd.f32 %v4581, %v4649
        %v4682 = vadd.f32 %v4582, %v4650
        %v4683 = vadd.f32 %v4583, %v4651
        %v4684 = vadd.f32 %v4584, %v4652
        %v4685 = vadd.f32 %v4585, %v4653
        %v4686 = vadd.f32 %v4586, %v4654
        %v4687 = vadd.f32 %v4587, %v4655
        %v4688 = vadd.f32 %v4588, %v4656
        %v4689 = vadd.f32 %v4589, %v4657
        %v4690 = vadd.f32 %v4590, %v4658
        %v4691 = vadd.f32 %v4591, %v4659
        %v4692 = vadd.f32 %v4592, %v4660
        %v4693 = vadd.f32 %v4593, %v4661
        %v4694 = vadd.f32 %v4594, %v4662
        %v4695 = vadd.f32 %v4595, %v4663
        %v4696 = vadd.f32 %v4596, %v4664
        %v4697 = vadd.f32 %v4597, %v4665
        %v4698 = vadd.f32 %v4598, %v4666
        %v4699 = vadd.f32 %v4599, %v4667
        %v4700 = vperm.slane %v2177, 0
        %v4701 = vadd.f32 %v4668, %v4700
        %v4702 = vadd.f32 %v4669, %v4700
        %v4703 = vadd.f32 %v4670, %v4700
        %v4704 = vadd.f32 %v4671, %v4700
        %v4705 = vadd.f32 %v4672, %v4700
        %v4706 = vadd.f32 %v4673, %v4700
        %v4707 = vadd.f32 %v4674, %v4700
        %v4708 = vadd.f32 %v4675, %v4700
        %v4709 = vadd.f32 %v4676, %v4700
        %v4710 = vadd.f32 %v4677, %v4700
        %v4711 = vadd.f32 %v4678, %v4700
        %v4712 = vadd.f32 %v4679, %v4700
        %v4713 = vadd.f32 %v4680, %v4700
        %v4714 = vadd.f32 %v4681, %v4700
        %v4715 = vadd.f32 %v4682, %v4700
        %v4716 = vadd.f32 %v4683, %v4700
        %v4717 = vadd.f32 %v4684, %v4700
        %v4718 = vadd.f32 %v4685, %v4700
        %v4719 = vadd.f32 %v4686, %v4700
        %v4720 = vadd.f32 %v4687, %v4700
        %v4721 = vadd.f32 %v4688, %v4700
        %v4722 = vadd.f32 %v4689, %v4700
        %v4723 = vadd.f32 %v4690, %v4700
        %v4724 = vadd.f32 %v4691, %v4700
        %v4725 = vadd.f32 %v4692, %v4700
        %v4726 = vadd.f32 %v4693, %v4700
        %v4727 = vadd.f32 %v4694, %v4700
        %v4728 = vadd.f32 %v4695, %v4700
        %v4729 = vadd.f32 %v4696, %v4700
        %v4730 = vadd.f32 %v4697, %v4700
        %v4731 = vadd.f32 %v4698, %v4700
        %v4732 = vadd.f32 %v4699, %v4700
        %v4733 = vld [vmem:[#allocation11] sm:$0xff]
        %v4734 = vld [vmem:[#allocation11 + $0x8] sm:$0xff]
        %v4735 = vld [vmem:[#allocation11 + $0x10] sm:$0xff]
        %v4736 = vld [vmem:[#allocation11 + $0x18] sm:$0xff]
        %v4737 = vld [vmem:[#allocation11 + $0x20] sm:$0xff]
        %v4738 = vld [vmem:[#allocation11 + $0x28] sm:$0xff]
        %v4739 = vld [vmem:[#allocation11 + $0x30] sm:$0xff]
        %v4740 = vld [vmem:[#allocation11 + $0x38] sm:$0xff]
        %v4741 = vld [vmem:[#allocation11 + $0x40] sm:$0xff]
        %v4742 = vld [vmem:[#allocation11 + $0x48] sm:$0xff]
        %v4743 = vld [vmem:[#allocation11 + $0x50] sm:$0xff]
        %v4744 = vld [vmem:[#allocation11 + $0x58] sm:$0xff]
        %v4745 = vld [vmem:[#allocation11 + $0x60] sm:$0xff]
        %v4746 = vld [vmem:[#allocation11 + $0x68] sm:$0xff]
        %v4747 = vld [vmem:[#allocation11 + $0x70] sm:$0xff]
        %v4748 = vld [vmem:[#allocation11 + $0x78] sm:$0xff]
        %v4749 = vld [vmem:[#allocation15 + $0x3] sm:$0x1]
        %v4750 = vperm.slane %v4749, 0
        %4751 = vmatpush.msra.mxu0 %v4748
        %4752 = vmatpush.msra.mxu0 %v4747
        %4753 = vmatpush.msra.mxu0 %v4746
        %4754 = vmatpush.msra.mxu0 %v4745
        %4755 = vmatpush.msra.mxu0 %v4744
        %4756 = vmatpush.msra.mxu0 %v4743
        %4757 = vmatpush.msra.mxu0 %v4742
        %4758 = vmatpush.msra.mxu0 %v4741
        %4759 = vmatpush.msra.mxu0 %v4740
        %4760 = vmatpush.msra.mxu0 %v4739
        %4761 = vmatpush.msra.mxu0 %v4738
        %4762 = vmatpush.msra.mxu0 %v4737
        %4763 = vmatpush.msra.mxu0 %v4736
        %4764 = vmatpush.msra.mxu0 %v4735
        %4765 = vmatpush.msra.mxu0 %v4734
        %4766 = vmatpush.msra.mxu0 %v4733
        %4767 = vmatmul.f32.gmra.mxu0 %v4701
        %v4768 = vpop.f32.mrf.mxu0
        %v4769 = vadd.f32 %v4750, %v4768
        %4770 = vmatmul.f32.gmra.mxu0 %v4702
        %v4771 = vpop.f32.mrf.mxu0
        %v4772 = vadd.f32 %v4750, %v4771
        %4773 = vmatmul.f32.gmra.mxu0 %v4703
        %v4774 = vpop.f32.mrf.mxu0
        %v4775 = vadd.f32 %v4750, %v4774
        %4776 = vmatmul.f32.gmra.mxu0 %v4704
        %v4777 = vpop.f32.mrf.mxu0
        %v4778 = vadd.f32 %v4750, %v4777
        %4779 = vmatmul.f32.gmra.mxu0 %v4705
        %v4780 = vpop.f32.mrf.mxu0
        %v4781 = vadd.f32 %v4750, %v4780
        %4782 = vmatmul.f32.gmra.mxu0 %v4706
        %v4783 = vpop.f32.mrf.mxu0
        %v4784 = vadd.f32 %v4750, %v4783
        %4785 = vmatmul.f32.gmra.mxu0 %v4707
        %v4786 = vpop.f32.mrf.mxu0
        %v4787 = vadd.f32 %v4750, %v4786
        %4788 = vmatmul.f32.gmra.mxu0 %v4708
        %v4789 = vpop.f32.mrf.mxu0
        %v4790 = vadd.f32 %v4750, %v4789
        %4791 = vmatmul.f32.gmra.mxu0 %v4709
        %v4792 = vpop.f32.mrf.mxu0
        %v4793 = vadd.f32 %v4750, %v4792
        %4794 = vmatmul.f32.gmra.mxu0 %v4710
        %v4795 = vpop.f32.mrf.mxu0
        %v4796 = vadd.f32 %v4750, %v4795
        %4797 = vmatmul.f32.gmra.mxu0 %v4711
        %v4798 = vpop.f32.mrf.mxu0
        %v4799 = vadd.f32 %v4750, %v4798
        %4800 = vmatmul.f32.gmra.mxu0 %v4712
        %v4801 = vpop.f32.mrf.mxu0
        %v4802 = vadd.f32 %v4750, %v4801
        %4803 = vmatmul.f32.gmra.mxu0 %v4713
        %v4804 = vpop.f32.mrf.mxu0
        %v4805 = vadd.f32 %v4750, %v4804
        %4806 = vmatmul.f32.gmra.mxu0 %v4714
        %v4807 = vpop.f32.mrf.mxu0
        %v4808 = vadd.f32 %v4750, %v4807
        %4809 = vmatmul.f32.gmra.mxu0 %v4715
        %v4810 = vpop.f32.mrf.mxu0
        %v4811 = vadd.f32 %v4750, %v4810
        %4812 = vmatmul.f32.gmra.mxu0 %v4716
        %v4813 = vpop.f32.mrf.mxu0
        %v4814 = vadd.f32 %v4750, %v4813
        %4815 = vmatmul.f32.gmra.mxu0 %v4717
        %v4816 = vpop.f32.mrf.mxu0
        %v4817 = vadd.f32 %v4750, %v4816
        %4818 = vmatmul.f32.gmra.mxu0 %v4718
        %v4819 = vpop.f32.mrf.mxu0
        %v4820 = vadd.f32 %v4750, %v4819
        %4821 = vmatmul.f32.gmra.mxu0 %v4719
        %v4822 = vpop.f32.mrf.mxu0
        %v4823 = vadd.f32 %v4750, %v4822
        %4824 = vmatmul.f32.gmra.mxu0 %v4720
        %v4825 = vpop.f32.mrf.mxu0
        %v4826 = vadd.f32 %v4750, %v4825
        %4827 = vmatmul.f32.gmra.mxu0 %v4721
        %v4828 = vpop.f32.mrf.mxu0
        %v4829 = vadd.f32 %v4750, %v4828
        %4830 = vmatmul.f32.gmra.mxu0 %v4722
        %v4831 = vpop.f32.mrf.mxu0
        %v4832 = vadd.f32 %v4750, %v4831
        %4833 = vmatmul.f32.gmra.mxu0 %v4723
        %v4834 = vpop.f32.mrf.mxu0
        %v4835 = vadd.f32 %v4750, %v4834
        %4836 = vmatmul.f32.gmra.mxu0 %v4724
        %v4837 = vpop.f32.mrf.mxu0
        %v4838 = vadd.f32 %v4750, %v4837
        %4839 = vmatmul.f32.gmra.mxu0 %v4725
        %v4840 = vpop.f32.mrf.mxu0
        %v4841 = vadd.f32 %v4750, %v4840
        %4842 = vmatmul.f32.gmra.mxu0 %v4726
        %v4843 = vpop.f32.mrf.mxu0
        %v4844 = vadd.f32 %v4750, %v4843
        %4845 = vmatmul.f32.gmra.mxu0 %v4727
        %v4846 = vpop.f32.mrf.mxu0
        %v4847 = vadd.f32 %v4750, %v4846
        %4848 = vmatmul.f32.gmra.mxu0 %v4728
        %v4849 = vpop.f32.mrf.mxu0
        %v4850 = vadd.f32 %v4750, %v4849
        %4851 = vmatmul.f32.gmra.mxu0 %v4729
        %v4852 = vpop.f32.mrf.mxu0
        %v4853 = vadd.f32 %v4750, %v4852
        %4854 = vmatmul.f32.gmra.mxu0 %v4730
        %v4855 = vpop.f32.mrf.mxu0
        %v4856 = vadd.f32 %v4750, %v4855
        %4857 = vmatmul.f32.gmra.mxu0 %v4731
        %v4858 = vpop.f32.mrf.mxu0
        %v4859 = vadd.f32 %v4750, %v4858
        %4860 = vmatmul.f32.gmra.mxu0 %v4732
        %v4861 = vpop.f32.mrf.mxu0
        %v4862 = vadd.f32 %v4750, %v4861
        %4863 = vdwg.mxu0
        %v4864 = vld [vmem:[#allocation15 + $0x4] sm:$0x1]
        %v4865 = vperm.slane %v4864, 0
        %v4866 = vmul.f32 %v4865, %v4769
        %v4867 = vmul.f32 %v4865, %v4772
        %v4868 = vmul.f32 %v4865, %v4775
        %v4869 = vmul.f32 %v4865, %v4778
        %v4870 = vmul.f32 %v4865, %v4781
        %v4871 = vmul.f32 %v4865, %v4784
        %v4872 = vmul.f32 %v4865, %v4787
        %v4873 = vmul.f32 %v4865, %v4790
        %v4874 = vmul.f32 %v4865, %v4793
        %v4875 = vmul.f32 %v4865, %v4796
        %v4876 = vmul.f32 %v4865, %v4799
        %v4877 = vmul.f32 %v4865, %v4802
        %v4878 = vmul.f32 %v4865, %v4805
        %v4879 = vmul.f32 %v4865, %v4808
        %v4880 = vmul.f32 %v4865, %v4811
        %v4881 = vmul.f32 %v4865, %v4814
        %v4882 = vmul.f32 %v4865, %v4817
        %v4883 = vmul.f32 %v4865, %v4820
        %v4884 = vmul.f32 %v4865, %v4823
        %v4885 = vmul.f32 %v4865, %v4826
        %v4886 = vmul.f32 %v4865, %v4829
        %v4887 = vmul.f32 %v4865, %v4832
        %v4888 = vmul.f32 %v4865, %v4835
        %v4889 = vmul.f32 %v4865, %v4838
        %v4890 = vmul.f32 %v4865, %v4841
        %v4891 = vmul.f32 %v4865, %v4844
        %v4892 = vmul.f32 %v4865, %v4847
        %v4893 = vmul.f32 %v4865, %v4850
        %v4894 = vmul.f32 %v4865, %v4853
        %v4895 = vmul.f32 %v4865, %v4856
        %v4896 = vmul.f32 %v4865, %v4859
        %v4897 = vmul.f32 %v4865, %v4862
        %v4898 = vadd.f32 %v2014, %v4866
        %v4899 = vadd.f32 %v2015, %v4867
        %v4900 = vadd.f32 %v2016, %v4868
        %v4901 = vadd.f32 %v2017, %v4869
        %v4902 = vadd.f32 %v2018, %v4870
        %v4903 = vadd.f32 %v2019, %v4871
        %v4904 = vadd.f32 %v2020, %v4872
        %v4905 = vadd.f32 %v2021, %v4873
        %v4906 = vadd.f32 %v2022, %v4874
        %v4907 = vadd.f32 %v2023, %v4875
        %v4908 = vadd.f32 %v2024, %v4876
        %v4909 = vadd.f32 %v2025, %v4877
        %v4910 = vadd.f32 %v2026, %v4878
        %v4911 = vadd.f32 %v2027, %v4879
        %v4912 = vadd.f32 %v2028, %v4880
        %v4913 = vadd.f32 %v2029, %v4881
        %v4914 = vadd.f32 %v2030, %v4882
        %v4915 = vadd.f32 %v2031, %v4883
        %v4916 = vadd.f32 %v2032, %v4884
        %v4917 = vadd.f32 %v2033, %v4885
        %v4918 = vadd.f32 %v2034, %v4886
        %v4919 = vadd.f32 %v2035, %v4887
        %v4920 = vadd.f32 %v2036, %v4888
        %v4921 = vadd.f32 %v2037, %v4889
        %v4922 = vadd.f32 %v2038, %v4890
        %v4923 = vadd.f32 %v2039, %v4891
        %v4924 = vadd.f32 %v2040, %v4892
        %v4925 = vadd.f32 %v2041, %v4893
        %v4926 = vadd.f32 %v2042, %v4894
        %v4927 = vadd.f32 %v2043, %v4895
        %v4928 = vadd.f32 %v2044, %v4896
        %v4929 = vadd.f32 %v2045, %v4897
        %v4930 = vld [vmem:[#allocation12] sm:$0xff]
        %v4931 = vld [vmem:[#allocation12 + $0x8] sm:$0xff]
        %v4932 = vld [vmem:[#allocation12 + $0x10] sm:$0xff]
        %v4933 = vld [vmem:[#allocation12 + $0x18] sm:$0xff]
        %v4934 = vld [vmem:[#allocation12 + $0x20] sm:$0xff]
        %v4935 = vld [vmem:[#allocation12 + $0x28] sm:$0xff]
        %v4936 = vld [vmem:[#allocation12 + $0x30] sm:$0xff]
        %v4937 = vld [vmem:[#allocation12 + $0x38] sm:$0xff]
        %v4938 = vld [vmem:[#allocation12 + $0x40] sm:$0xff]
        %v4939 = vld [vmem:[#allocation12 + $0x48] sm:$0xff]
        %v4940 = vld [vmem:[#allocation12 + $0x50] sm:$0xff]
        %v4941 = vld [vmem:[#allocation12 + $0x58] sm:$0xff]
        %v4942 = vld [vmem:[#allocation12 + $0x60] sm:$0xff]
        %v4943 = vld [vmem:[#allocation12 + $0x68] sm:$0xff]
        %v4944 = vld [vmem:[#allocation12 + $0x70] sm:$0xff]
        %v4945 = vld [vmem:[#allocation12 + $0x78] sm:$0xff]
        %v4946 = vld [vmem:[#allocation12 + $0x80] sm:$0xff]
        %v4947 = vld [vmem:[#allocation12 + $0x88] sm:$0xff]
        %v4948 = vld [vmem:[#allocation12 + $0x90] sm:$0xff]
        %v4949 = vld [vmem:[#allocation12 + $0x98] sm:$0xff]
        %v4950 = vld [vmem:[#allocation12 + $0xa0] sm:$0xff]
        %v4951 = vld [vmem:[#allocation12 + $0xa8] sm:$0xff]
        %v4952 = vld [vmem:[#allocation12 + $0xb0] sm:$0xff]
        %v4953 = vld [vmem:[#allocation12 + $0xb8] sm:$0xff]
        %v4954 = vld [vmem:[#allocation12 + $0xc0] sm:$0xff]
        %v4955 = vld [vmem:[#allocation12 + $0xc8] sm:$0xff]
        %v4956 = vld [vmem:[#allocation12 + $0xd0] sm:$0xff]
        %v4957 = vld [vmem:[#allocation12 + $0xd8] sm:$0xff]
        %v4958 = vld [vmem:[#allocation12 + $0xe0] sm:$0xff]
        %v4959 = vld [vmem:[#allocation12 + $0xe8] sm:$0xff]
        %v4960 = vld [vmem:[#allocation12 + $0xf0] sm:$0xff]
        %v4961 = vld [vmem:[#allocation12 + $0xf8] sm:$0xff]
        %v4962 = vld [vmem:[#allocation12 + $0x100] sm:$0xff]
        %v4963 = vld [vmem:[#allocation12 + $0x108] sm:$0xff]
        %v4964 = vld [vmem:[#allocation12 + $0x110] sm:$0xff]
        %v4965 = vld [vmem:[#allocation12 + $0x118] sm:$0xff]
        %v4966 = vld [vmem:[#allocation12 + $0x120] sm:$0xff]
        %v4967 = vld [vmem:[#allocation12 + $0x128] sm:$0xff]
        %v4968 = vld [vmem:[#allocation12 + $0x130] sm:$0xff]
        %v4969 = vld [vmem:[#allocation12 + $0x138] sm:$0xff]
        %v4970 = vld [vmem:[#allocation12 + $0x140] sm:$0xff]
        %v4971 = vld [vmem:[#allocation12 + $0x148] sm:$0xff]
        %v4972 = vld [vmem:[#allocation12 + $0x150] sm:$0xff]
        %v4973 = vld [vmem:[#allocation12 + $0x158] sm:$0xff]
        %v4974 = vld [vmem:[#allocation12 + $0x160] sm:$0xff]
        %v4975 = vld [vmem:[#allocation12 + $0x168] sm:$0xff]
        %v4976 = vld [vmem:[#allocation12 + $0x170] sm:$0xff]
        %v4977 = vld [vmem:[#allocation12 + $0x178] sm:$0xff]
        %v4978 = vld [vmem:[#allocation12 + $0x180] sm:$0xff]
        %v4979 = vld [vmem:[#allocation12 + $0x188] sm:$0xff]
        %v4980 = vld [vmem:[#allocation12 + $0x190] sm:$0xff]
        %v4981 = vld [vmem:[#allocation12 + $0x198] sm:$0xff]
        %v4982 = vld [vmem:[#allocation12 + $0x1a0] sm:$0xff]
        %v4983 = vld [vmem:[#allocation12 + $0x1a8] sm:$0xff]
        %v4984 = vld [vmem:[#allocation12 + $0x1b0] sm:$0xff]
        %v4985 = vld [vmem:[#allocation12 + $0x1b8] sm:$0xff]
        %v4986 = vld [vmem:[#allocation12 + $0x1c0] sm:$0xff]
        %v4987 = vld [vmem:[#allocation12 + $0x1c8] sm:$0xff]
        %v4988 = vld [vmem:[#allocation12 + $0x1d0] sm:$0xff]
        %v4989 = vld [vmem:[#allocation12 + $0x1d8] sm:$0xff]
        %v4990 = vld [vmem:[#allocation12 + $0x1e0] sm:$0xff]
        %v4991 = vld [vmem:[#allocation12 + $0x1e8] sm:$0xff]
        %v4992 = vld [vmem:[#allocation12 + $0x1f0] sm:$0xff]
        %v4993 = vld [vmem:[#allocation12 + $0x1f8] sm:$0xff]
        %v4994 = vld [vmem:[%s7] sm:$0xf]
        %v4996 = vperm.slane %v4994, 0
        %v4997 = vperm.slane %v4994, 1
        %v4998 = vperm.slane %v4994, 2
        %v4999 = vperm.slane %v4994, 3
        %5004 = vmatpush.msra.mxu0 %v4990
        %5005 = vmatpush.msra.mxu0 %v4986
        %5006 = vmatpush.msra.mxu0 %v4982
        %5007 = vmatpush.msra.mxu0 %v4978
        %5008 = vmatpush.msra.mxu0 %v4974
        %5009 = vmatpush.msra.mxu0 %v4970
        %5010 = vmatpush.msra.mxu0 %v4966
        %5011 = vmatpush.msra.mxu0 %v4962
        %5012 = vmatpush.msra.mxu0 %v4958
        %5013 = vmatpush.msra.mxu0 %v4954
        %5014 = vmatpush.msra.mxu0 %v4950
        %5015 = vmatpush.msra.mxu0 %v4946
        %5016 = vmatpush.msra.mxu0 %v4942
        %5017 = vmatpush.msra.mxu0 %v4938
        %5018 = vmatpush.msra.mxu0 %v4934
        %5019 = vmatpush.msra.mxu0 %v4930
        %5020 = vmatmul.f32.gmra.mxu0 %v4898
        %v5021 = vpop.f32.mrf.mxu0
        %v5022 = vadd.f32 %v4996, %v5021
        %5023 = vmatmul.f32.gmra.mxu0 %v4899
        %v5024 = vpop.f32.mrf.mxu0
        %v5025 = vadd.f32 %v4996, %v5024
        %5026 = vmatmul.f32.gmra.mxu0 %v4900
        %v5027 = vpop.f32.mrf.mxu0
        %v5028 = vadd.f32 %v4996, %v5027
        %5029 = vmatmul.f32.gmra.mxu0 %v4901
        %v5030 = vpop.f32.mrf.mxu0
        %v5031 = vadd.f32 %v4996, %v5030
        %5032 = vmatmul.f32.gmra.mxu0 %v4902
        %v5033 = vpop.f32.mrf.mxu0
        %v5034 = vadd.f32 %v4996, %v5033
        %5035 = vmatmul.f32.gmra.mxu0 %v4903
        %v5036 = vpop.f32.mrf.mxu0
        %v5037 = vadd.f32 %v4996, %v5036
        %5038 = vmatmul.f32.gmra.mxu0 %v4904
        %v5039 = vpop.f32.mrf.mxu0
        %v5040 = vadd.f32 %v4996, %v5039
        %5041 = vmatmul.f32.gmra.mxu0 %v4905
        %v5042 = vpop.f32.mrf.mxu0
        %v5043 = vadd.f32 %v4996, %v5042
        %5044 = vmatmul.f32.gmra.mxu0 %v4906
        %v5045 = vpop.f32.mrf.mxu0
        %v5046 = vadd.f32 %v4996, %v5045
        %5047 = vmatmul.f32.gmra.mxu0 %v4907
        %v5048 = vpop.f32.mrf.mxu0
        %v5049 = vadd.f32 %v4996, %v5048
        %5050 = vmatmul.f32.gmra.mxu0 %v4908
        %v5051 = vpop.f32.mrf.mxu0
        %v5052 = vadd.f32 %v4996, %v5051
        %5053 = vmatmul.f32.gmra.mxu0 %v4909
        %v5054 = vpop.f32.mrf.mxu0
        %v5055 = vadd.f32 %v4996, %v5054
        %5056 = vmatmul.f32.gmra.mxu0 %v4910
        %v5057 = vpop.f32.mrf.mxu0
        %v5058 = vadd.f32 %v4996, %v5057
        %5059 = vmatmul.f32.gmra.mxu0 %v4911
        %v5060 = vpop.f32.mrf.mxu0
        %v5061 = vadd.f32 %v4996, %v5060
        %5062 = vmatmul.f32.gmra.mxu0 %v4912
        %v5063 = vpop.f32.mrf.mxu0
        %v5064 = vadd.f32 %v4996, %v5063
        %5065 = vmatmul.f32.gmra.mxu0 %v4913
        %v5066 = vpop.f32.mrf.mxu0
        %v5067 = vadd.f32 %v4996, %v5066
        %5068 = vmatmul.f32.gmra.mxu0 %v4914
        %v5069 = vpop.f32.mrf.mxu0
        %v5070 = vadd.f32 %v4996, %v5069
        %5071 = vmatmul.f32.gmra.mxu0 %v4915
        %v5072 = vpop.f32.mrf.mxu0
        %v5073 = vadd.f32 %v4996, %v5072
        %5074 = vmatmul.f32.gmra.mxu0 %v4916
        %v5075 = vpop.f32.mrf.mxu0
        %v5076 = vadd.f32 %v4996, %v5075
        %5077 = vmatmul.f32.gmra.mxu0 %v4917
        %v5078 = vpop.f32.mrf.mxu0
        %v5079 = vadd.f32 %v4996, %v5078
        %5080 = vmatmul.f32.gmra.mxu0 %v4918
        %v5081 = vpop.f32.mrf.mxu0
        %v5082 = vadd.f32 %v4996, %v5081
        %5083 = vmatmul.f32.gmra.mxu0 %v4919
        %v5084 = vpop.f32.mrf.mxu0
        %v5085 = vadd.f32 %v4996, %v5084
        %5086 = vmatmul.f32.gmra.mxu0 %v4920
        %v5087 = vpop.f32.mrf.mxu0
        %v5088 = vadd.f32 %v4996, %v5087
        %5089 = vmatmul.f32.gmra.mxu0 %v4921
        %v5090 = vpop.f32.mrf.mxu0
        %v5091 = vadd.f32 %v4996, %v5090
        %5092 = vmatmul.f32.gmra.mxu0 %v4922
        %v5093 = vpop.f32.mrf.mxu0
        %v5094 = vadd.f32 %v4996, %v5093
        %5095 = vmatmul.f32.gmra.mxu0 %v4923
        %v5096 = vpop.f32.mrf.mxu0
        %v5097 = vadd.f32 %v4996, %v5096
        %5098 = vmatmul.f32.gmra.mxu0 %v4924
        %v5099 = vpop.f32.mrf.mxu0
        %v5100 = vadd.f32 %v4996, %v5099
        %5101 = vmatmul.f32.gmra.mxu0 %v4925
        %v5102 = vpop.f32.mrf.mxu0
        %v5103 = vadd.f32 %v4996, %v5102
        %5104 = vmatmul.f32.gmra.mxu0 %v4926
        %v5105 = vpop.f32.mrf.mxu0
        %v5106 = vadd.f32 %v4996, %v5105
        %5107 = vmatmul.f32.gmra.mxu0 %v4927
        %v5108 = vpop.f32.mrf.mxu0
        %v5109 = vadd.f32 %v4996, %v5108
        %5110 = vmatmul.f32.gmra.mxu0 %v4928
        %v5111 = vpop.f32.mrf.mxu0
        %v5112 = vadd.f32 %v4996, %v5111
        %5113 = vmatmul.f32.gmra.mxu0 %v4929
        %v5114 = vpop.f32.mrf.mxu0
        %v5115 = vadd.f32 %v4996, %v5114
        %5116 = vdwg.mxu0
        %5117 = vmatpush.msra.mxu0 %v4991
        %5118 = vmatpush.msra.mxu0 %v4987
        %5119 = vmatpush.msra.mxu0 %v4983
        %5120 = vmatpush.msra.mxu0 %v4979
        %5121 = vmatpush.msra.mxu0 %v4975
        %5122 = vmatpush.msra.mxu0 %v4971
        %5123 = vmatpush.msra.mxu0 %v4967
        %5124 = vmatpush.msra.mxu0 %v4963
        %5125 = vmatpush.msra.mxu0 %v4959
        %5126 = vmatpush.msra.mxu0 %v4955
        %5127 = vmatpush.msra.mxu0 %v4951
        %5128 = vmatpush.msra.mxu0 %v4947
        %5129 = vmatpush.msra.mxu0 %v4943
        %5130 = vmatpush.msra.mxu0 %v4939
        %5131 = vmatpush.msra.mxu0 %v4935
        %5132 = vmatpush.msra.mxu0 %v4931
        %5133 = vmatmul.f32.gmra.mxu0 %v4898
        %v5134 = vpop.f32.mrf.mxu0
        %v5135 = vadd.f32 %v4997, %v5134
        %5136 = vmatmul.f32.gmra.mxu0 %v4899
        %v5137 = vpop.f32.mrf.mxu0
        %v5138 = vadd.f32 %v4997, %v5137
        %5139 = vmatmul.f32.gmra.mxu0 %v4900
        %v5140 = vpop.f32.mrf.mxu0
        %v5141 = vadd.f32 %v4997, %v5140
        %5142 = vmatmul.f32.gmra.mxu0 %v4901
        %v5143 = vpop.f32.mrf.mxu0
        %v5144 = vadd.f32 %v4997, %v5143
        %5145 = vmatmul.f32.gmra.mxu0 %v4902
        %v5146 = vpop.f32.mrf.mxu0
        %v5147 = vadd.f32 %v4997, %v5146
        %5148 = vmatmul.f32.gmra.mxu0 %v4903
        %v5149 = vpop.f32.mrf.mxu0
        %v5150 = vadd.f32 %v4997, %v5149
        %5151 = vmatmul.f32.gmra.mxu0 %v4904
        %v5152 = vpop.f32.mrf.mxu0
        %v5153 = vadd.f32 %v4997, %v5152
        %5154 = vmatmul.f32.gmra.mxu0 %v4905
        %v5155 = vpop.f32.mrf.mxu0
        %v5156 = vadd.f32 %v4997, %v5155
        %5157 = vmatmul.f32.gmra.mxu0 %v4906
        %v5158 = vpop.f32.mrf.mxu0
        %v5159 = vadd.f32 %v4997, %v5158
        %5160 = vmatmul.f32.gmra.mxu0 %v4907
        %v5161 = vpop.f32.mrf.mxu0
        %v5162 = vadd.f32 %v4997, %v5161
        %5163 = vmatmul.f32.gmra.mxu0 %v4908
        %v5164 = vpop.f32.mrf.mxu0
        %v5165 = vadd.f32 %v4997, %v5164
        %5166 = vmatmul.f32.gmra.mxu0 %v4909
        %v5167 = vpop.f32.mrf.mxu0
        %v5168 = vadd.f32 %v4997, %v5167
        %5169 = vmatmul.f32.gmra.mxu0 %v4910
        %v5170 = vpop.f32.mrf.mxu0
        %v5171 = vadd.f32 %v4997, %v5170
        %5172 = vmatmul.f32.gmra.mxu0 %v4911
        %v5173 = vpop.f32.mrf.mxu0
        %v5174 = vadd.f32 %v4997, %v5173
        %5175 = vmatmul.f32.gmra.mxu0 %v4912
        %v5176 = vpop.f32.mrf.mxu0
        %v5177 = vadd.f32 %v4997, %v5176
        %5178 = vmatmul.f32.gmra.mxu0 %v4913
        %v5179 = vpop.f32.mrf.mxu0
        %v5180 = vadd.f32 %v4997, %v5179
        %5181 = vmatmul.f32.gmra.mxu0 %v4914
        %v5182 = vpop.f32.mrf.mxu0
        %v5183 = vadd.f32 %v4997, %v5182
        %5184 = vmatmul.f32.gmra.mxu0 %v4915
        %v5185 = vpop.f32.mrf.mxu0
        %v5186 = vadd.f32 %v4997, %v5185
        %5187 = vmatmul.f32.gmra.mxu0 %v4916
        %v5188 = vpop.f32.mrf.mxu0
        %v5189 = vadd.f32 %v4997, %v5188
        %5190 = vmatmul.f32.gmra.mxu0 %v4917
        %v5191 = vpop.f32.mrf.mxu0
        %v5192 = vadd.f32 %v4997, %v5191
        %5193 = vmatmul.f32.gmra.mxu0 %v4918
        %v5194 = vpop.f32.mrf.mxu0
        %v5195 = vadd.f32 %v4997, %v5194
        %5196 = vmatmul.f32.gmra.mxu0 %v4919
        %v5197 = vpop.f32.mrf.mxu0
        %v5198 = vadd.f32 %v4997, %v5197
        %5199 = vmatmul.f32.gmra.mxu0 %v4920
        %v5200 = vpop.f32.mrf.mxu0
        %v5201 = vadd.f32 %v4997, %v5200
        %5202 = vmatmul.f32.gmra.mxu0 %v4921
        %v5203 = vpop.f32.mrf.mxu0
        %v5204 = vadd.f32 %v4997, %v5203
        %5205 = vmatmul.f32.gmra.mxu0 %v4922
        %v5206 = vpop.f32.mrf.mxu0
        %v5207 = vadd.f32 %v4997, %v5206
        %5208 = vmatmul.f32.gmra.mxu0 %v4923
        %v5209 = vpop.f32.mrf.mxu0
        %v5210 = vadd.f32 %v4997, %v5209
        %5211 = vmatmul.f32.gmra.mxu0 %v4924
        %v5212 = vpop.f32.mrf.mxu0
        %v5213 = vadd.f32 %v4997, %v5212
        %5214 = vmatmul.f32.gmra.mxu0 %v4925
        %v5215 = vpop.f32.mrf.mxu0
        %v5216 = vadd.f32 %v4997, %v5215
        %5217 = vmatmul.f32.gmra.mxu0 %v4926
        %v5218 = vpop.f32.mrf.mxu0
        %v5219 = vadd.f32 %v4997, %v5218
        %5220 = vmatmul.f32.gmra.mxu0 %v4927
        %v5221 = vpop.f32.mrf.mxu0
        %v5222 = vadd.f32 %v4997, %v5221
        %5223 = vmatmul.f32.gmra.mxu0 %v4928
        %v5224 = vpop.f32.mrf.mxu0
        %v5225 = vadd.f32 %v4997, %v5224
        %5226 = vmatmul.f32.gmra.mxu0 %v4929
        %v5227 = vpop.f32.mrf.mxu0
        %v5228 = vadd.f32 %v4997, %v5227
        %5229 = vdwg.mxu0
        %5230 = vmatpush.msra.mxu0 %v4992
        %5231 = vmatpush.msra.mxu0 %v4988
        %5232 = vmatpush.msra.mxu0 %v4984
        %5233 = vmatpush.msra.mxu0 %v4980
        %5234 = vmatpush.msra.mxu0 %v4976
        %5235 = vmatpush.msra.mxu0 %v4972
        %5236 = vmatpush.msra.mxu0 %v4968
        %5237 = vmatpush.msra.mxu0 %v4964
        %5238 = vmatpush.msra.mxu0 %v4960
        %5239 = vmatpush.msra.mxu0 %v4956
        %5240 = vmatpush.msra.mxu0 %v4952
        %5241 = vmatpush.msra.mxu0 %v4948
        %5242 = vmatpush.msra.mxu0 %v4944
        %5243 = vmatpush.msra.mxu0 %v4940
        %5244 = vmatpush.msra.mxu0 %v4936
        %5245 = vmatpush.msra.mxu0 %v4932
        %5246 = vmatmul.f32.gmra.mxu0 %v4898
        %v5247 = vpop.f32.mrf.mxu0
        %v5248 = vadd.f32 %v4998, %v5247
        %5249 = vmatmul.f32.gmra.mxu0 %v4899
        %v5250 = vpop.f32.mrf.mxu0
        %v5251 = vadd.f32 %v4998, %v5250
        %5252 = vmatmul.f32.gmra.mxu0 %v4900
        %v5253 = vpop.f32.mrf.mxu0
        %v5254 = vadd.f32 %v4998, %v5253
        %5255 = vmatmul.f32.gmra.mxu0 %v4901
        %v5256 = vpop.f32.mrf.mxu0
        %v5257 = vadd.f32 %v4998, %v5256
        %5258 = vmatmul.f32.gmra.mxu0 %v4902
        %v5259 = vpop.f32.mrf.mxu0
        %v5260 = vadd.f32 %v4998, %v5259
        %5261 = vmatmul.f32.gmra.mxu0 %v4903
        %v5262 = vpop.f32.mrf.mxu0
        %v5263 = vadd.f32 %v4998, %v5262
        %5264 = vmatmul.f32.gmra.mxu0 %v4904
        %v5265 = vpop.f32.mrf.mxu0
        %v5266 = vadd.f32 %v4998, %v5265
        %5267 = vmatmul.f32.gmra.mxu0 %v4905
        %v5268 = vpop.f32.mrf.mxu0
        %v5269 = vadd.f32 %v4998, %v5268
        %5270 = vmatmul.f32.gmra.mxu0 %v4906
        %v5271 = vpop.f32.mrf.mxu0
        %v5272 = vadd.f32 %v4998, %v5271
        %5273 = vmatmul.f32.gmra.mxu0 %v4907
        %v5274 = vpop.f32.mrf.mxu0
        %v5275 = vadd.f32 %v4998, %v5274
        %5276 = vmatmul.f32.gmra.mxu0 %v4908
        %v5277 = vpop.f32.mrf.mxu0
        %v5278 = vadd.f32 %v4998, %v5277
        %5279 = vmatmul.f32.gmra.mxu0 %v4909
        %v5280 = vpop.f32.mrf.mxu0
        %v5281 = vadd.f32 %v4998, %v5280
        %5282 = vmatmul.f32.gmra.mxu0 %v4910
        %v5283 = vpop.f32.mrf.mxu0
        %v5284 = vadd.f32 %v4998, %v5283
        %5285 = vmatmul.f32.gmra.mxu0 %v4911
        %v5286 = vpop.f32.mrf.mxu0
        %v5287 = vadd.f32 %v4998, %v5286
        %5288 = vmatmul.f32.gmra.mxu0 %v4912
        %v5289 = vpop.f32.mrf.mxu0
        %v5290 = vadd.f32 %v4998, %v5289
        %5291 = vmatmul.f32.gmra.mxu0 %v4913
        %v5292 = vpop.f32.mrf.mxu0
        %v5293 = vadd.f32 %v4998, %v5292
        %5294 = vmatmul.f32.gmra.mxu0 %v4914
        %v5295 = vpop.f32.mrf.mxu0
        %v5296 = vadd.f32 %v4998, %v5295
        %5297 = vmatmul.f32.gmra.mxu0 %v4915
        %v5298 = vpop.f32.mrf.mxu0
        %v5299 = vadd.f32 %v4998, %v5298
        %5300 = vmatmul.f32.gmra.mxu0 %v4916
        %v5301 = vpop.f32.mrf.mxu0
        %v5302 = vadd.f32 %v4998, %v5301
        %5303 = vmatmul.f32.gmra.mxu0 %v4917
        %v5304 = vpop.f32.mrf.mxu0
        %v5305 = vadd.f32 %v4998, %v5304
        %5306 = vmatmul.f32.gmra.mxu0 %v4918
        %v5307 = vpop.f32.mrf.mxu0
        %v5308 = vadd.f32 %v4998, %v5307
        %5309 = vmatmul.f32.gmra.mxu0 %v4919
        %v5310 = vpop.f32.mrf.mxu0
        %v5311 = vadd.f32 %v4998, %v5310
        %5312 = vmatmul.f32.gmra.mxu0 %v4920
        %v5313 = vpop.f32.mrf.mxu0
        %v5314 = vadd.f32 %v4998, %v5313
        %5315 = vmatmul.f32.gmra.mxu0 %v4921
        %v5316 = vpop.f32.mrf.mxu0
        %v5317 = vadd.f32 %v4998, %v5316
        %5318 = vmatmul.f32.gmra.mxu0 %v4922
        %v5319 = vpop.f32.mrf.mxu0
        %v5320 = vadd.f32 %v4998, %v5319
        %5321 = vmatmul.f32.gmra.mxu0 %v4923
        %v5322 = vpop.f32.mrf.mxu0
        %v5323 = vadd.f32 %v4998, %v5322
        %5324 = vmatmul.f32.gmra.mxu0 %v4924
        %v5325 = vpop.f32.mrf.mxu0
        %v5326 = vadd.f32 %v4998, %v5325
        %5327 = vmatmul.f32.gmra.mxu0 %v4925
        %v5328 = vpop.f32.mrf.mxu0
        %v5329 = vadd.f32 %v4998, %v5328
        %5330 = vmatmul.f32.gmra.mxu0 %v4926
        %v5331 = vpop.f32.mrf.mxu0
        %v5332 = vadd.f32 %v4998, %v5331
        %5333 = vmatmul.f32.gmra.mxu0 %v4927
        %v5334 = vpop.f32.mrf.mxu0
        %v5335 = vadd.f32 %v4998, %v5334
        %5336 = vmatmul.f32.gmra.mxu0 %v4928
        %v5337 = vpop.f32.mrf.mxu0
        %v5338 = vadd.f32 %v4998, %v5337
        %5339 = vmatmul.f32.gmra.mxu0 %v4929
        %v5340 = vpop.f32.mrf.mxu0
        %v5341 = vadd.f32 %v4998, %v5340
        %5342 = vdwg.mxu0
        %5343 = vmatpush.msra.mxu0 %v4993
        %5344 = vmatpush.msra.mxu0 %v4989
        %5345 = vmatpush.msra.mxu0 %v4985
        %5346 = vmatpush.msra.mxu0 %v4981
        %5347 = vmatpush.msra.mxu0 %v4977
        %5348 = vmatpush.msra.mxu0 %v4973
        %5349 = vmatpush.msra.mxu0 %v4969
        %5350 = vmatpush.msra.mxu0 %v4965
        %5351 = vmatpush.msra.mxu0 %v4961
        %5352 = vmatpush.msra.mxu0 %v4957
        %5353 = vmatpush.msra.mxu0 %v4953
        %5354 = vmatpush.msra.mxu0 %v4949
        %5355 = vmatpush.msra.mxu0 %v4945
        %5356 = vmatpush.msra.mxu0 %v4941
        %5357 = vmatpush.msra.mxu0 %v4937
        %5358 = vmatpush.msra.mxu0 %v4933
        %5359 = vmatmul.f32.gmra.mxu0 %v4898
        %v5360 = vpop.f32.mrf.mxu0
        %v5361 = vadd.f32 %v4999, %v5360
        %5362 = vmatmul.f32.gmra.mxu0 %v4899
        %v5363 = vpop.f32.mrf.mxu0
        %v5364 = vadd.f32 %v4999, %v5363
        %5365 = vmatmul.f32.gmra.mxu0 %v4900
        %v5366 = vpop.f32.mrf.mxu0
        %v5367 = vadd.f32 %v4999, %v5366
        %5368 = vmatmul.f32.gmra.mxu0 %v4901
        %v5369 = vpop.f32.mrf.mxu0
        %v5370 = vadd.f32 %v4999, %v5369
        %5371 = vmatmul.f32.gmra.mxu0 %v4902
        %v5372 = vpop.f32.mrf.mxu0
        %v5373 = vadd.f32 %v4999, %v5372
        %5374 = vmatmul.f32.gmra.mxu0 %v4903
        %v5375 = vpop.f32.mrf.mxu0
        %v5376 = vadd.f32 %v4999, %v5375
        %5377 = vmatmul.f32.gmra.mxu0 %v4904
        %v5378 = vpop.f32.mrf.mxu0
        %v5379 = vadd.f32 %v4999, %v5378
        %5380 = vmatmul.f32.gmra.mxu0 %v4905
        %v5381 = vpop.f32.mrf.mxu0
        %v5382 = vadd.f32 %v4999, %v5381
        %5383 = vmatmul.f32.gmra.mxu0 %v4906
        %v5384 = vpop.f32.mrf.mxu0
        %v5385 = vadd.f32 %v4999, %v5384
        %5386 = vmatmul.f32.gmra.mxu0 %v4907
        %v5387 = vpop.f32.mrf.mxu0
        %v5388 = vadd.f32 %v4999, %v5387
        %5389 = vmatmul.f32.gmra.mxu0 %v4908
        %v5390 = vpop.f32.mrf.mxu0
        %v5391 = vadd.f32 %v4999, %v5390
        %5392 = vmatmul.f32.gmra.mxu0 %v4909
        %v5393 = vpop.f32.mrf.mxu0
        %v5394 = vadd.f32 %v4999, %v5393
        %5395 = vmatmul.f32.gmra.mxu0 %v4910
        %v5396 = vpop.f32.mrf.mxu0
        %v5397 = vadd.f32 %v4999, %v5396
        %5398 = vmatmul.f32.gmra.mxu0 %v4911
        %v5399 = vpop.f32.mrf.mxu0
        %v5400 = vadd.f32 %v4999, %v5399
        %5401 = vmatmul.f32.gmra.mxu0 %v4912
        %v5402 = vpop.f32.mrf.mxu0
        %v5403 = vadd.f32 %v4999, %v5402
        %5404 = vmatmul.f32.gmra.mxu0 %v4913
        %v5405 = vpop.f32.mrf.mxu0
        %v5406 = vadd.f32 %v4999, %v5405
        %5407 = vmatmul.f32.gmra.mxu0 %v4914
        %v5408 = vpop.f32.mrf.mxu0
        %v5409 = vadd.f32 %v4999, %v5408
        %5410 = vmatmul.f32.gmra.mxu0 %v4915
        %v5411 = vpop.f32.mrf.mxu0
        %v5412 = vadd.f32 %v4999, %v5411
        %5413 = vmatmul.f32.gmra.mxu0 %v4916
        %v5414 = vpop.f32.mrf.mxu0
        %v5415 = vadd.f32 %v4999, %v5414
        %5416 = vmatmul.f32.gmra.mxu0 %v4917
        %v5417 = vpop.f32.mrf.mxu0
        %v5418 = vadd.f32 %v4999, %v5417
        %5419 = vmatmul.f32.gmra.mxu0 %v4918
        %v5420 = vpop.f32.mrf.mxu0
        %v5421 = vadd.f32 %v4999, %v5420
        %5422 = vmatmul.f32.gmra.mxu0 %v4919
        %v5423 = vpop.f32.mrf.mxu0
        %v5424 = vadd.f32 %v4999, %v5423
        %5425 = vmatmul.f32.gmra.mxu0 %v4920
        %v5426 = vpop.f32.mrf.mxu0
        %v5427 = vadd.f32 %v4999, %v5426
        %5428 = vmatmul.f32.gmra.mxu0 %v4921
        %v5429 = vpop.f32.mrf.mxu0
        %v5430 = vadd.f32 %v4999, %v5429
        %5431 = vmatmul.f32.gmra.mxu0 %v4922
        %v5432 = vpop.f32.mrf.mxu0
        %v5433 = vadd.f32 %v4999, %v5432
        %5434 = vmatmul.f32.gmra.mxu0 %v4923
        %v5435 = vpop.f32.mrf.mxu0
        %v5436 = vadd.f32 %v4999, %v5435
        %5437 = vmatmul.f32.gmra.mxu0 %v4924
        %v5438 = vpop.f32.mrf.mxu0
        %v5439 = vadd.f32 %v4999, %v5438
        %5440 = vmatmul.f32.gmra.mxu0 %v4925
        %v5441 = vpop.f32.mrf.mxu0
        %v5442 = vadd.f32 %v4999, %v5441
        %5443 = vmatmul.f32.gmra.mxu0 %v4926
        %v5444 = vpop.f32.mrf.mxu0
        %v5445 = vadd.f32 %v4999, %v5444
        %5446 = vmatmul.f32.gmra.mxu0 %v4927
        %v5447 = vpop.f32.mrf.mxu0
        %v5448 = vadd.f32 %v4999, %v5447
        %5449 = vmatmul.f32.gmra.mxu0 %v4928
        %v5450 = vpop.f32.mrf.mxu0
        %v5451 = vadd.f32 %v4999, %v5450
        %5452 = vmatmul.f32.gmra.mxu0 %v4929
        %v5453 = vpop.f32.mrf.mxu0
        %v5454 = vadd.f32 %v4999, %v5453
        %5455 = vdwg.mxu0
        %v5456 = vmul.f32 %v5022, 0.5
        %v5457 = vmul.f32 %v5135, 0.5
        %v5458 = vmul.f32 %v5248, 0.5
        %v5459 = vmul.f32 %v5361, 0.5
        %v5460 = vmul.f32 %v5025, 0.5
        %v5461 = vmul.f32 %v5138, 0.5
        %v5462 = vmul.f32 %v5251, 0.5
        %v5463 = vmul.f32 %v5364, 0.5
        %v5464 = vmul.f32 %v5028, 0.5
        %v5465 = vmul.f32 %v5141, 0.5
        %v5466 = vmul.f32 %v5254, 0.5
        %v5467 = vmul.f32 %v5367, 0.5
        %v5468 = vmul.f32 %v5031, 0.5
        %v5469 = vmul.f32 %v5144, 0.5
        %v5470 = vmul.f32 %v5257, 0.5
        %v5471 = vmul.f32 %v5370, 0.5
        %v5472 = vmul.f32 %v5034, 0.5
        %v5473 = vmul.f32 %v5147, 0.5
        %v5474 = vmul.f32 %v5260, 0.5
        %v5475 = vmul.f32 %v5373, 0.5
        %v5476 = vmul.f32 %v5037, 0.5
        %v5477 = vmul.f32 %v5150, 0.5
        %v5478 = vmul.f32 %v5263, 0.5
        %v5479 = vmul.f32 %v5376, 0.5
        %v5480 = vmul.f32 %v5040, 0.5
        %v5481 = vmul.f32 %v5153, 0.5
        %v5482 = vmul.f32 %v5266, 0.5
        %v5483 = vmul.f32 %v5379, 0.5
        %v5484 = vmul.f32 %v5043, 0.5
        %v5485 = vmul.f32 %v5156, 0.5
        %v5486 = vmul.f32 %v5269, 0.5
        %v5487 = vmul.f32 %v5382, 0.5
        %v5488 = vmul.f32 %v5046, 0.5
        %v5489 = vmul.f32 %v5159, 0.5
        %v5490 = vmul.f32 %v5272, 0.5
        %v5491 = vmul.f32 %v5385, 0.5
        %v5492 = vmul.f32 %v5049, 0.5
        %v5493 = vmul.f32 %v5162, 0.5
        %v5494 = vmul.f32 %v5275, 0.5
        %v5495 = vmul.f32 %v5388, 0.5
        %v5496 = vmul.f32 %v5052, 0.5
        %v5497 = vmul.f32 %v5165, 0.5
        %v5498 = vmul.f32 %v5278, 0.5
        %v5499 = vmul.f32 %v5391, 0.5
        %v5500 = vmul.f32 %v5055, 0.5
        %v5501 = vmul.f32 %v5168, 0.5
        %v5502 = vmul.f32 %v5281, 0.5
        %v5503 = vmul.f32 %v5394, 0.5
        %v5504 = vmul.f32 %v5058, 0.5
        %v5505 = vmul.f32 %v5171, 0.5
        %v5506 = vmul.f32 %v5284, 0.5
        %v5507 = vmul.f32 %v5397, 0.5
        %v5508 = vmul.f32 %v5061, 0.5
        %v5509 = vmul.f32 %v5174, 0.5
        %v5510 = vmul.f32 %v5287, 0.5
        %v5511 = vmul.f32 %v5400, 0.5
        %v5512 = vmul.f32 %v5064, 0.5
        %v5513 = vmul.f32 %v5177, 0.5
        %v5514 = vmul.f32 %v5290, 0.5
        %v5515 = vmul.f32 %v5403, 0.5
        %v5516 = vmul.f32 %v5067, 0.5
        %v5517 = vmul.f32 %v5180, 0.5
        %v5518 = vmul.f32 %v5293, 0.5
        %v5519 = vmul.f32 %v5406, 0.5
        %v5520 = vmul.f32 %v5070, 0.5
        %v5521 = vmul.f32 %v5183, 0.5
        %v5522 = vmul.f32 %v5296, 0.5
        %v5523 = vmul.f32 %v5409, 0.5
        %v5524 = vmul.f32 %v5073, 0.5
        %v5525 = vmul.f32 %v5186, 0.5
        %v5526 = vmul.f32 %v5299, 0.5
        %v5527 = vmul.f32 %v5412, 0.5
        %v5528 = vmul.f32 %v5076, 0.5
        %v5529 = vmul.f32 %v5189, 0.5
        %v5530 = vmul.f32 %v5302, 0.5
        %v5531 = vmul.f32 %v5415, 0.5
        %v5532 = vmul.f32 %v5079, 0.5
        %v5533 = vmul.f32 %v5192, 0.5
        %v5534 = vmul.f32 %v5305, 0.5
        %v5535 = vmul.f32 %v5418, 0.5
        %v5536 = vmul.f32 %v5082, 0.5
        %v5537 = vmul.f32 %v5195, 0.5
        %v5538 = vmul.f32 %v5308, 0.5
        %v5539 = vmul.f32 %v5421, 0.5
        %v5540 = vmul.f32 %v5085, 0.5
        %v5541 = vmul.f32 %v5198, 0.5
        %v5542 = vmul.f32 %v5311, 0.5
        %v5543 = vmul.f32 %v5424, 0.5
        %v5544 = vmul.f32 %v5088, 0.5
        %v5545 = vmul.f32 %v5201, 0.5
        %v5546 = vmul.f32 %v5314, 0.5
        %v5547 = vmul.f32 %v5427, 0.5
        %v5548 = vmul.f32 %v5091, 0.5
        %v5549 = vmul.f32 %v5204, 0.5
        %v5550 = vmul.f32 %v5317, 0.5
        %v5551 = vmul.f32 %v5430, 0.5
        %v5552 = vmul.f32 %v5094, 0.5
        %v5553 = vmul.f32 %v5207, 0.5
        %v5554 = vmul.f32 %v5320, 0.5
        %v5555 = vmul.f32 %v5433, 0.5
        %v5556 = vmul.f32 %v5097, 0.5
        %v5557 = vmul.f32 %v5210, 0.5
        %v5558 = vmul.f32 %v5323, 0.5
        %v5559 = vmul.f32 %v5436, 0.5
        %v5560 = vmul.f32 %v5100, 0.5
        %v5561 = vmul.f32 %v5213, 0.5
        %v5562 = vmul.f32 %v5326, 0.5
        %v5563 = vmul.f32 %v5439, 0.5
        %v5564 = vmul.f32 %v5103, 0.5
        %v5565 = vmul.f32 %v5216, 0.5
        %v5566 = vmul.f32 %v5329, 0.5
        %v5567 = vmul.f32 %v5442, 0.5
        %v5568 = vmul.f32 %v5106, 0.5
        %v5569 = vmul.f32 %v5219, 0.5
        %v5570 = vmul.f32 %v5332, 0.5
        %v5571 = vmul.f32 %v5445, 0.5
        %v5572 = vmul.f32 %v5109, 0.5
        %v5573 = vmul.f32 %v5222, 0.5
        %v5574 = vmul.f32 %v5335, 0.5
        %v5575 = vmul.f32 %v5448, 0.5
        %v5576 = vmul.f32 %v5112, 0.5
        %v5577 = vmul.f32 %v5225, 0.5
        %v5578 = vmul.f32 %v5338, 0.5
        %v5579 = vmul.f32 %v5451, 0.5
        %v5580 = vmul.f32 %v5115, 0.5
        %v5581 = vmul.f32 %v5228, 0.5
        %v5582 = vmul.f32 %v5341, 0.5
        %v5583 = vmul.f32 %v5454, 0.5
        %v5584 = vmul.f32 %v5022, 0.7978846
        %v5585 = vmul.f32 %v5135, 0.7978846
        %v5586 = vmul.f32 %v5248, 0.7978846
        %v5587 = vmul.f32 %v5361, 0.7978846
        %v5588 = vmul.f32 %v5025, 0.7978846
        %v5589 = vmul.f32 %v5138, 0.7978846
        %v5590 = vmul.f32 %v5251, 0.7978846
        %v5591 = vmul.f32 %v5364, 0.7978846
        %v5592 = vmul.f32 %v5028, 0.7978846
        %v5593 = vmul.f32 %v5141, 0.7978846
        %v5594 = vmul.f32 %v5254, 0.7978846
        %v5595 = vmul.f32 %v5367, 0.7978846
        %v5596 = vmul.f32 %v5031, 0.7978846
        %v5597 = vmul.f32 %v5144, 0.7978846
        %v5598 = vmul.f32 %v5257, 0.7978846
        %v5599 = vmul.f32 %v5370, 0.7978846
        %v5600 = vmul.f32 %v5034, 0.7978846
        %v5601 = vmul.f32 %v5147, 0.7978846
        %v5602 = vmul.f32 %v5260, 0.7978846
        %v5603 = vmul.f32 %v5373, 0.7978846
        %v5604 = vmul.f32 %v5037, 0.7978846
        %v5605 = vmul.f32 %v5150, 0.7978846
        %v5606 = vmul.f32 %v5263, 0.7978846
        %v5607 = vmul.f32 %v5376, 0.7978846
        %v5608 = vmul.f32 %v5040, 0.7978846
        %v5609 = vmul.f32 %v5153, 0.7978846
        %v5610 = vmul.f32 %v5266, 0.7978846
        %v5611 = vmul.f32 %v5379, 0.7978846
        %v5612 = vmul.f32 %v5043, 0.7978846
        %v5613 = vmul.f32 %v5156, 0.7978846
        %v5614 = vmul.f32 %v5269, 0.7978846
        %v5615 = vmul.f32 %v5382, 0.7978846
        %v5616 = vmul.f32 %v5046, 0.7978846
        %v5617 = vmul.f32 %v5159, 0.7978846
        %v5618 = vmul.f32 %v5272, 0.7978846
        %v5619 = vmul.f32 %v5385, 0.7978846
        %v5620 = vmul.f32 %v5049, 0.7978846
        %v5621 = vmul.f32 %v5162, 0.7978846
        %v5622 = vmul.f32 %v5275, 0.7978846
        %v5623 = vmul.f32 %v5388, 0.7978846
        %v5624 = vmul.f32 %v5052, 0.7978846
        %v5625 = vmul.f32 %v5165, 0.7978846
        %v5626 = vmul.f32 %v5278, 0.7978846
        %v5627 = vmul.f32 %v5391, 0.7978846
        %v5628 = vmul.f32 %v5055, 0.7978846
        %v5629 = vmul.f32 %v5168, 0.7978846
        %v5630 = vmul.f32 %v5281, 0.7978846
        %v5631 = vmul.f32 %v5394, 0.7978846
        %v5632 = vmul.f32 %v5058, 0.7978846
        %v5633 = vmul.f32 %v5171, 0.7978846
        %v5634 = vmul.f32 %v5284, 0.7978846
        %v5635 = vmul.f32 %v5397, 0.7978846
        %v5636 = vmul.f32 %v5061, 0.7978846
        %v5637 = vmul.f32 %v5174, 0.7978846
        %v5638 = vmul.f32 %v5287, 0.7978846
        %v5639 = vmul.f32 %v5400, 0.7978846
        %v5640 = vmul.f32 %v5064, 0.7978846
        %v5641 = vmul.f32 %v5177, 0.7978846
        %v5642 = vmul.f32 %v5290, 0.7978846
        %v5643 = vmul.f32 %v5403, 0.7978846
        %v5644 = vmul.f32 %v5067, 0.7978846
        %v5645 = vmul.f32 %v5180, 0.7978846
        %v5646 = vmul.f32 %v5293, 0.7978846
        %v5647 = vmul.f32 %v5406, 0.7978846
        %v5648 = vmul.f32 %v5070, 0.7978846
        %v5649 = vmul.f32 %v5183, 0.7978846
        %v5650 = vmul.f32 %v5296, 0.7978846
        %v5651 = vmul.f32 %v5409, 0.7978846
        %v5652 = vmul.f32 %v5073, 0.7978846
        %v5653 = vmul.f32 %v5186, 0.7978846
        %v5654 = vmul.f32 %v5299, 0.7978846
        %v5655 = vmul.f32 %v5412, 0.7978846
        %v5656 = vmul.f32 %v5076, 0.7978846
        %v5657 = vmul.f32 %v5189, 0.7978846
        %v5658 = vmul.f32 %v5302, 0.7978846
        %v5659 = vmul.f32 %v5415, 0.7978846
        %v5660 = vmul.f32 %v5079, 0.7978846
        %v5661 = vmul.f32 %v5192, 0.7978846
        %v5662 = vmul.f32 %v5305, 0.7978846
        %v5663 = vmul.f32 %v5418, 0.7978846
        %v5664 = vmul.f32 %v5082, 0.7978846
        %v5665 = vmul.f32 %v5195, 0.7978846
        %v5666 = vmul.f32 %v5308, 0.7978846
        %v5667 = vmul.f32 %v5421, 0.7978846
        %v5668 = vmul.f32 %v5085, 0.7978846
        %v5669 = vmul.f32 %v5198, 0.7978846
        %v5670 = vmul.f32 %v5311, 0.7978846
        %v5671 = vmul.f32 %v5424, 0.7978846
        %v5672 = vmul.f32 %v5088, 0.7978846
        %v5673 = vmul.f32 %v5201, 0.7978846
        %v5674 = vmul.f32 %v5314, 0.7978846
        %v5675 = vmul.f32 %v5427, 0.7978846
        %v5676 = vmul.f32 %v5091, 0.7978846
        %v5677 = vmul.f32 %v5204, 0.7978846
        %v5678 = vmul.f32 %v5317, 0.7978846
        %v5679 = vmul.f32 %v5430, 0.7978846
        %v5680 = vmul.f32 %v5094, 0.7978846
        %v5681 = vmul.f32 %v5207, 0.7978846
        %v5682 = vmul.f32 %v5320, 0.7978846
        %v5683 = vmul.f32 %v5433, 0.7978846
        %v5684 = vmul.f32 %v5097, 0.7978846
        %v5685 = vmul.f32 %v5210, 0.7978846
        %v5686 = vmul.f32 %v5323, 0.7978846
        %v5687 = vmul.f32 %v5436, 0.7978846
        %v5688 = vmul.f32 %v5100, 0.7978846
        %v5689 = vmul.f32 %v5213, 0.7978846
        %v5690 = vmul.f32 %v5326, 0.7978846
        %v5691 = vmul.f32 %v5439, 0.7978846
        %v5692 = vmul.f32 %v5103, 0.7978846
        %v5693 = vmul.f32 %v5216, 0.7978846
        %v5694 = vmul.f32 %v5329, 0.7978846
        %v5695 = vmul.f32 %v5442, 0.7978846
        %v5696 = vmul.f32 %v5106, 0.7978846
        %v5697 = vmul.f32 %v5219, 0.7978846
        %v5698 = vmul.f32 %v5332, 0.7978846
        %v5699 = vmul.f32 %v5445, 0.7978846
        %v5700 = vmul.f32 %v5109, 0.7978846
        %v5701 = vmul.f32 %v5222, 0.7978846
        %v5702 = vmul.f32 %v5335, 0.7978846
        %v5703 = vmul.f32 %v5448, 0.7978846
        %v5704 = vmul.f32 %v5112, 0.7978846
        %v5705 = vmul.f32 %v5225, 0.7978846
        %v5706 = vmul.f32 %v5338, 0.7978846
        %v5707 = vmul.f32 %v5451, 0.7978846
        %v5708 = vmul.f32 %v5115, 0.7978846
        %v5709 = vmul.f32 %v5228, 0.7978846
        %v5710 = vmul.f32 %v5341, 0.7978846
        %v5711 = vmul.f32 %v5454, 0.7978846
        %v5712 = vmul.f32 %v5022, 0.044715
        %v5713 = vmul.f32 %v5135, 0.044715
        %v5714 = vmul.f32 %v5248, 0.044715
        %v5715 = vmul.f32 %v5361, 0.044715
        %v5716 = vmul.f32 %v5025, 0.044715
        %v5717 = vmul.f32 %v5138, 0.044715
        %v5718 = vmul.f32 %v5251, 0.044715
        %v5719 = vmul.f32 %v5364, 0.044715
        %v5720 = vmul.f32 %v5028, 0.044715
        %v5721 = vmul.f32 %v5141, 0.044715
        %v5722 = vmul.f32 %v5254, 0.044715
        %v5723 = vmul.f32 %v5367, 0.044715
        %v5724 = vmul.f32 %v5031, 0.044715
        %v5725 = vmul.f32 %v5144, 0.044715
        %v5726 = vmul.f32 %v5257, 0.044715
        %v5727 = vmul.f32 %v5370, 0.044715
        %v5728 = vmul.f32 %v5034, 0.044715
        %v5729 = vmul.f32 %v5147, 0.044715
        %v5730 = vmul.f32 %v5260, 0.044715
        %v5731 = vmul.f32 %v5373, 0.044715
        %v5732 = vmul.f32 %v5037, 0.044715
        %v5733 = vmul.f32 %v5150, 0.044715
        %v5734 = vmul.f32 %v5263, 0.044715
        %v5735 = vmul.f32 %v5376, 0.044715
        %v5736 = vmul.f32 %v5040, 0.044715
        %v5737 = vmul.f32 %v5153, 0.044715
        %v5738 = vmul.f32 %v5266, 0.044715
        %v5739 = vmul.f32 %v5379, 0.044715
        %v5740 = vmul.f32 %v5043, 0.044715
        %v5741 = vmul.f32 %v5156, 0.044715
        %v5742 = vmul.f32 %v5269, 0.044715
        %v5743 = vmul.f32 %v5382, 0.044715
        %v5744 = vmul.f32 %v5046, 0.044715
        %v5745 = vmul.f32 %v5159, 0.044715
        %v5746 = vmul.f32 %v5272, 0.044715
        %v5747 = vmul.f32 %v5385, 0.044715
        %v5748 = vmul.f32 %v5049, 0.044715
        %v5749 = vmul.f32 %v5162, 0.044715
        %v5750 = vmul.f32 %v5275, 0.044715
        %v5751 = vmul.f32 %v5388, 0.044715
        %v5752 = vmul.f32 %v5052, 0.044715
        %v5753 = vmul.f32 %v5165, 0.044715
        %v5754 = vmul.f32 %v5278, 0.044715
        %v5755 = vmul.f32 %v5391, 0.044715
        %v5756 = vmul.f32 %v5055, 0.044715
        %v5757 = vmul.f32 %v5168, 0.044715
        %v5758 = vmul.f32 %v5281, 0.044715
        %v5759 = vmul.f32 %v5394, 0.044715
        %v5760 = vmul.f32 %v5058, 0.044715
        %v5761 = vmul.f32 %v5171, 0.044715
        %v5762 = vmul.f32 %v5284, 0.044715
        %v5763 = vmul.f32 %v5397, 0.044715
        %v5764 = vmul.f32 %v5061, 0.044715
        %v5765 = vmul.f32 %v5174, 0.044715
        %v5766 = vmul.f32 %v5287, 0.044715
        %v5767 = vmul.f32 %v5400, 0.044715
        %v5768 = vmul.f32 %v5064, 0.044715
        %v5769 = vmul.f32 %v5177, 0.044715
        %v5770 = vmul.f32 %v5290, 0.044715
        %v5771 = vmul.f32 %v5403, 0.044715
        %v5772 = vmul.f32 %v5067, 0.044715
        %v5773 = vmul.f32 %v5180, 0.044715
        %v5774 = vmul.f32 %v5293, 0.044715
        %v5775 = vmul.f32 %v5406, 0.044715
        %v5776 = vmul.f32 %v5070, 0.044715
        %v5777 = vmul.f32 %v5183, 0.044715
        %v5778 = vmul.f32 %v5296, 0.044715
        %v5779 = vmul.f32 %v5409, 0.044715
        %v5780 = vmul.f32 %v5073, 0.044715
        %v5781 = vmul.f32 %v5186, 0.044715
        %v5782 = vmul.f32 %v5299, 0.044715
        %v5783 = vmul.f32 %v5412, 0.044715
        %v5784 = vmul.f32 %v5076, 0.044715
        %v5785 = vmul.f32 %v5189, 0.044715
        %v5786 = vmul.f32 %v5302, 0.044715
        %v5787 = vmul.f32 %v5415, 0.044715
        %v5788 = vmul.f32 %v5079, 0.044715
        %v5789 = vmul.f32 %v5192, 0.044715
        %v5790 = vmul.f32 %v5305, 0.044715
        %v5791 = vmul.f32 %v5418, 0.044715
        %v5792 = vmul.f32 %v5082, 0.044715
        %v5793 = vmul.f32 %v5195, 0.044715
        %v5794 = vmul.f32 %v5308, 0.044715
        %v5795 = vmul.f32 %v5421, 0.044715
        %v5796 = vmul.f32 %v5085, 0.044715
        %v5797 = vmul.f32 %v5198, 0.044715
        %v5798 = vmul.f32 %v5311, 0.044715
        %v5799 = vmul.f32 %v5424, 0.044715
        %v5800 = vmul.f32 %v5088, 0.044715
        %v5801 = vmul.f32 %v5201, 0.044715
        %v5802 = vmul.f32 %v5314, 0.044715
        %v5803 = vmul.f32 %v5427, 0.044715
        %v5804 = vmul.f32 %v5091, 0.044715
        %v5805 = vmul.f32 %v5204, 0.044715
        %v5806 = vmul.f32 %v5317, 0.044715
        %v5807 = vmul.f32 %v5430, 0.044715
        %v5808 = vmul.f32 %v5094, 0.044715
        %v5809 = vmul.f32 %v5207, 0.044715
        %v5810 = vmul.f32 %v5320, 0.044715
        %v5811 = vmul.f32 %v5433, 0.044715
        %v5812 = vmul.f32 %v5097, 0.044715
        %v5813 = vmul.f32 %v5210, 0.044715
        %v5814 = vmul.f32 %v5323, 0.044715
        %v5815 = vmul.f32 %v5436, 0.044715
        %v5816 = vmul.f32 %v5100, 0.044715
        %v5817 = vmul.f32 %v5213, 0.044715
        %v5818 = vmul.f32 %v5326, 0.044715
        %v5819 = vmul.f32 %v5439, 0.044715
        %v5820 = vmul.f32 %v5103, 0.044715
        %v5821 = vmul.f32 %v5216, 0.044715
        %v5822 = vmul.f32 %v5329, 0.044715
        %v5823 = vmul.f32 %v5442, 0.044715
        %v5824 = vmul.f32 %v5106, 0.044715
        %v5825 = vmul.f32 %v5219, 0.044715
        %v5826 = vmul.f32 %v5332, 0.044715
        %v5827 = vmul.f32 %v5445, 0.044715
        %v5828 = vmul.f32 %v5109, 0.044715
        %v5829 = vmul.f32 %v5222, 0.044715
        %v5830 = vmul.f32 %v5335, 0.044715
        %v5831 = vmul.f32 %v5448, 0.044715
        %v5832 = vmul.f32 %v5112, 0.044715
        %v5833 = vmul.f32 %v5225, 0.044715
        %v5834 = vmul.f32 %v5338, 0.044715
        %v5835 = vmul.f32 %v5451, 0.044715
        %v5836 = vmul.f32 %v5115, 0.044715
        %v5837 = vmul.f32 %v5228, 0.044715
        %v5838 = vmul.f32 %v5341, 0.044715
        %v5839 = vmul.f32 %v5454, 0.044715
        %v5840 = vmul.f32 %v5712, %v5022
        %v5841 = vmul.f32 %v5713, %v5135
        %v5842 = vmul.f32 %v5714, %v5248
        %v5843 = vmul.f32 %v5715, %v5361
        %v5844 = vmul.f32 %v5716, %v5025
        %v5845 = vmul.f32 %v5717, %v5138
        %v5846 = vmul.f32 %v5718, %v5251
        %v5847 = vmul.f32 %v5719, %v5364
        %v5848 = vmul.f32 %v5720, %v5028
        %v5849 = vmul.f32 %v5721, %v5141
        %v5850 = vmul.f32 %v5722, %v5254
        %v5851 = vmul.f32 %v5723, %v5367
        %v5852 = vmul.f32 %v5724, %v5031
        %v5853 = vmul.f32 %v5725, %v5144
        %v5854 = vmul.f32 %v5726, %v5257
        %v5855 = vmul.f32 %v5727, %v5370
        %v5856 = vmul.f32 %v5728, %v5034
        %v5857 = vmul.f32 %v5729, %v5147
        %v5858 = vmul.f32 %v5730, %v5260
        %v5859 = vmul.f32 %v5731, %v5373
        %v5860 = vmul.f32 %v5732, %v5037
        %v5861 = vmul.f32 %v5733, %v5150
        %v5862 = vmul.f32 %v5734, %v5263
        %v5863 = vmul.f32 %v5735, %v5376
        %v5864 = vmul.f32 %v5736, %v5040
        %v5865 = vmul.f32 %v5737, %v5153
        %v5866 = vmul.f32 %v5738, %v5266
        %v5867 = vmul.f32 %v5739, %v5379
        %v5868 = vmul.f32 %v5740, %v5043
        %v5869 = vmul.f32 %v5741, %v5156
        %v5870 = vmul.f32 %v5742, %v5269
        %v5871 = vmul.f32 %v5743, %v5382
        %v5872 = vmul.f32 %v5744, %v5046
        %v5873 = vmul.f32 %v5745, %v5159
        %v5874 = vmul.f32 %v5746, %v5272
        %v5875 = vmul.f32 %v5747, %v5385
        %v5876 = vmul.f32 %v5748, %v5049
        %v5877 = vmul.f32 %v5749, %v5162
        %v5878 = vmul.f32 %v5750, %v5275
        %v5879 = vmul.f32 %v5751, %v5388
        %v5880 = vmul.f32 %v5752, %v5052
        %v5881 = vmul.f32 %v5753, %v5165
        %v5882 = vmul.f32 %v5754, %v5278
        %v5883 = vmul.f32 %v5755, %v5391
        %v5884 = vmul.f32 %v5756, %v5055
        %v5885 = vmul.f32 %v5757, %v5168
        %v5886 = vmul.f32 %v5758, %v5281
        %v5887 = vmul.f32 %v5759, %v5394
        %v5888 = vmul.f32 %v5760, %v5058
        %v5889 = vmul.f32 %v5761, %v5171
        %v5890 = vmul.f32 %v5762, %v5284
        %v5891 = vmul.f32 %v5763, %v5397
        %v5892 = vmul.f32 %v5764, %v5061
        %v5893 = vmul.f32 %v5765, %v5174
        %v5894 = vmul.f32 %v5766, %v5287
        %v5895 = vmul.f32 %v5767, %v5400
        %v5896 = vmul.f32 %v5768, %v5064
        %v5897 = vmul.f32 %v5769, %v5177
        %v5898 = vmul.f32 %v5770, %v5290
        %v5899 = vmul.f32 %v5771, %v5403
        %v5900 = vmul.f32 %v5772, %v5067
        %v5901 = vmul.f32 %v5773, %v5180
        %v5902 = vmul.f32 %v5774, %v5293
        %v5903 = vmul.f32 %v5775, %v5406
        %v5904 = vmul.f32 %v5776, %v5070
        %v5905 = vmul.f32 %v5777, %v5183
        %v5906 = vmul.f32 %v5778, %v5296
        %v5907 = vmul.f32 %v5779, %v5409
        %v5908 = vmul.f32 %v5780, %v5073
        %v5909 = vmul.f32 %v5781, %v5186
        %v5910 = vmul.f32 %v5782, %v5299
        %v5911 = vmul.f32 %v5783, %v5412
        %v5912 = vmul.f32 %v5784, %v5076
        %v5913 = vmul.f32 %v5785, %v5189
        %v5914 = vmul.f32 %v5786, %v5302
        %v5915 = vmul.f32 %v5787, %v5415
        %v5916 = vmul.f32 %v5788, %v5079
        %v5917 = vmul.f32 %v5789, %v5192
        %v5918 = vmul.f32 %v5790, %v5305
        %v5919 = vmul.f32 %v5791, %v5418
        %v5920 = vmul.f32 %v5792, %v5082
        %v5921 = vmul.f32 %v5793, %v5195
        %v5922 = vmul.f32 %v5794, %v5308
        %v5923 = vmul.f32 %v5795, %v5421
        %v5924 = vmul.f32 %v5796, %v5085
        %v5925 = vmul.f32 %v5797, %v5198
        %v5926 = vmul.f32 %v5798, %v5311
        %v5927 = vmul.f32 %v5799, %v5424
        %v5928 = vmul.f32 %v5800, %v5088
        %v5929 = vmul.f32 %v5801, %v5201
        %v5930 = vmul.f32 %v5802, %v5314
        %v5931 = vmul.f32 %v5803, %v5427
        %v5932 = vmul.f32 %v5804, %v5091
        %v5933 = vmul.f32 %v5805, %v5204
        %v5934 = vmul.f32 %v5806, %v5317
        %v5935 = vmul.f32 %v5807, %v5430
        %v5936 = vmul.f32 %v5808, %v5094
        %v5937 = vmul.f32 %v5809, %v5207
        %v5938 = vmul.f32 %v5810, %v5320
        %v5939 = vmul.f32 %v5811, %v5433
        %v5940 = vmul.f32 %v5812, %v5097
        %v5941 = vmul.f32 %v5813, %v5210
        %v5942 = vmul.f32 %v5814, %v5323
        %v5943 = vmul.f32 %v5815, %v5436
        %v5944 = vmul.f32 %v5816, %v5100
        %v5945 = vmul.f32 %v5817, %v5213
        %v5946 = vmul.f32 %v5818, %v5326
        %v5947 = vmul.f32 %v5819, %v5439
        %v5948 = vmul.f32 %v5820, %v5103
        %v5949 = vmul.f32 %v5821, %v5216
        %v5950 = vmul.f32 %v5822, %v5329
        %v5951 = vmul.f32 %v5823, %v5442
        %v5952 = vmul.f32 %v5824, %v5106
        %v5953 = vmul.f32 %v5825, %v5219
        %v5954 = vmul.f32 %v5826, %v5332
        %v5955 = vmul.f32 %v5827, %v5445
        %v5956 = vmul.f32 %v5828, %v5109
        %v5957 = vmul.f32 %v5829, %v5222
        %v5958 = vmul.f32 %v5830, %v5335
        %v5959 = vmul.f32 %v5831, %v5448
        %v5960 = vmul.f32 %v5832, %v5112
        %v5961 = vmul.f32 %v5833, %v5225
        %v5962 = vmul.f32 %v5834, %v5338
        %v5963 = vmul.f32 %v5835, %v5451
        %v5964 = vmul.f32 %v5836, %v5115
        %v5965 = vmul.f32 %v5837, %v5228
        %v5966 = vmul.f32 %v5838, %v5341
        %v5967 = vmul.f32 %v5839, %v5454
        %v5968 = vadd.f32 %v5840, 1.0
        %v5969 = vadd.f32 %v5841, 1.0
        %v5970 = vadd.f32 %v5842, 1.0
        %v5971 = vadd.f32 %v5843, 1.0
        %v5972 = vadd.f32 %v5844, 1.0
        %v5973 = vadd.f32 %v5845, 1.0
        %v5974 = vadd.f32 %v5846, 1.0
        %v5975 = vadd.f32 %v5847, 1.0
        %v5976 = vadd.f32 %v5848, 1.0
        %v5977 = vadd.f32 %v5849, 1.0
        %v5978 = vadd.f32 %v5850, 1.0
        %v5979 = vadd.f32 %v5851, 1.0
        %v5980 = vadd.f32 %v5852, 1.0
        %v5981 = vadd.f32 %v5853, 1.0
        %v5982 = vadd.f32 %v5854, 1.0
        %v5983 = vadd.f32 %v5855, 1.0
        %v5984 = vadd.f32 %v5856, 1.0
        %v5985 = vadd.f32 %v5857, 1.0
        %v5986 = vadd.f32 %v5858, 1.0
        %v5987 = vadd.f32 %v5859, 1.0
        %v5988 = vadd.f32 %v5860, 1.0
        %v5989 = vadd.f32 %v5861, 1.0
        %v5990 = vadd.f32 %v5862, 1.0
        %v5991 = vadd.f32 %v5863, 1.0
        %v5992 = vadd.f32 %v5864, 1.0
        %v5993 = vadd.f32 %v5865, 1.0
        %v5994 = vadd.f32 %v5866, 1.0
        %v5995 = vadd.f32 %v5867, 1.0
        %v5996 = vadd.f32 %v5868, 1.0
        %v5997 = vadd.f32 %v5869, 1.0
        %v5998 = vadd.f32 %v5870, 1.0
        %v5999 = vadd.f32 %v5871, 1.0
        %v6000 = vadd.f32 %v5872, 1.0
        %v6001 = vadd.f32 %v5873, 1.0
        %v6002 = vadd.f32 %v5874, 1.0
        %v6003 = vadd.f32 %v5875, 1.0
        %v6004 = vadd.f32 %v5876, 1.0
        %v6005 = vadd.f32 %v5877, 1.0
        %v6006 = vadd.f32 %v5878, 1.0
        %v6007 = vadd.f32 %v5879, 1.0
        %v6008 = vadd.f32 %v5880, 1.0
        %v6009 = vadd.f32 %v5881, 1.0
        %v6010 = vadd.f32 %v5882, 1.0
        %v6011 = vadd.f32 %v5883, 1.0
        %v6012 = vadd.f32 %v5884, 1.0
        %v6013 = vadd.f32 %v5885, 1.0
        %v6014 = vadd.f32 %v5886, 1.0
        %v6015 = vadd.f32 %v5887, 1.0
        %v6016 = vadd.f32 %v5888, 1.0
        %v6017 = vadd.f32 %v5889, 1.0
        %v6018 = vadd.f32 %v5890, 1.0
        %v6019 = vadd.f32 %v5891, 1.0
        %v6020 = vadd.f32 %v5892, 1.0
        %v6021 = vadd.f32 %v5893, 1.0
        %v6022 = vadd.f32 %v5894, 1.0
        %v6023 = vadd.f32 %v5895, 1.0
        %v6024 = vadd.f32 %v5896, 1.0
        %v6025 = vadd.f32 %v5897, 1.0
        %v6026 = vadd.f32 %v5898, 1.0
        %v6027 = vadd.f32 %v5899, 1.0
        %v6028 = vadd.f32 %v5900, 1.0
        %v6029 = vadd.f32 %v5901, 1.0
        %v6030 = vadd.f32 %v5902, 1.0
        %v6031 = vadd.f32 %v5903, 1.0
        %v6032 = vadd.f32 %v5904, 1.0
        %v6033 = vadd.f32 %v5905, 1.0
        %v6034 = vadd.f32 %v5906, 1.0
        %v6035 = vadd.f32 %v5907, 1.0
        %v6036 = vadd.f32 %v5908, 1.0
        %v6037 = vadd.f32 %v5909, 1.0
        %v6038 = vadd.f32 %v5910, 1.0
        %v6039 = vadd.f32 %v5911, 1.0
        %v6040 = vadd.f32 %v5912, 1.0
        %v6041 = vadd.f32 %v5913, 1.0
        %v6042 = vadd.f32 %v5914, 1.0
        %v6043 = vadd.f32 %v5915, 1.0
        %v6044 = vadd.f32 %v5916, 1.0
        %v6045 = vadd.f32 %v5917, 1.0
        %v6046 = vadd.f32 %v5918, 1.0
        %v6047 = vadd.f32 %v5919, 1.0
        %v6048 = vadd.f32 %v5920, 1.0
        %v6049 = vadd.f32 %v5921, 1.0
        %v6050 = vadd.f32 %v5922, 1.0
        %v6051 = vadd.f32 %v5923, 1.0
        %v6052 = vadd.f32 %v5924, 1.0
        %v6053 = vadd.f32 %v5925, 1.0
        %v6054 = vadd.f32 %v5926, 1.0
        %v6055 = vadd.f32 %v5927, 1.0
        %v6056 = vadd.f32 %v5928, 1.0
        %v6057 = vadd.f32 %v5929, 1.0
        %v6058 = vadd.f32 %v5930, 1.0
        %v6059 = vadd.f32 %v5931, 1.0
        %v6060 = vadd.f32 %v5932, 1.0
        %v6061 = vadd.f32 %v5933, 1.0
        %v6062 = vadd.f32 %v5934, 1.0
        %v6063 = vadd.f32 %v5935, 1.0
        %v6064 = vadd.f32 %v5936, 1.0
        %v6065 = vadd.f32 %v5937, 1.0
        %v6066 = vadd.f32 %v5938, 1.0
        %v6067 = vadd.f32 %v5939, 1.0
        %v6068 = vadd.f32 %v5940, 1.0
        %v6069 = vadd.f32 %v5941, 1.0
        %v6070 = vadd.f32 %v5942, 1.0
        %v6071 = vadd.f32 %v5943, 1.0
        %v6072 = vadd.f32 %v5944, 1.0
        %v6073 = vadd.f32 %v5945, 1.0
        %v6074 = vadd.f32 %v5946, 1.0
        %v6075 = vadd.f32 %v5947, 1.0
        %v6076 = vadd.f32 %v5948, 1.0
        %v6077 = vadd.f32 %v5949, 1.0
        %v6078 = vadd.f32 %v5950, 1.0
        %v6079 = vadd.f32 %v5951, 1.0
        %v6080 = vadd.f32 %v5952, 1.0
        %v6081 = vadd.f32 %v5953, 1.0
        %v6082 = vadd.f32 %v5954, 1.0
        %v6083 = vadd.f32 %v5955, 1.0
        %v6084 = vadd.f32 %v5956, 1.0
        %v6085 = vadd.f32 %v5957, 1.0
        %v6086 = vadd.f32 %v5958, 1.0
        %v6087 = vadd.f32 %v5959, 1.0
        %v6088 = vadd.f32 %v5960, 1.0
        %v6089 = vadd.f32 %v5961, 1.0
        %v6090 = vadd.f32 %v5962, 1.0
        %v6091 = vadd.f32 %v5963, 1.0
        %v6092 = vadd.f32 %v5964, 1.0
        %v6093 = vadd.f32 %v5965, 1.0
        %v6094 = vadd.f32 %v5966, 1.0
        %v6095 = vadd.f32 %v5967, 1.0
        %v6096 = vmul.f32 %v5584, %v5968
        %v6097 = vmul.f32 %v5585, %v5969
        %v6098 = vmul.f32 %v5586, %v5970
        %v6099 = vmul.f32 %v5587, %v5971
        %v6100 = vmul.f32 %v5588, %v5972
        %v6101 = vmul.f32 %v5589, %v5973
        %v6102 = vmul.f32 %v5590, %v5974
        %v6103 = vmul.f32 %v5591, %v5975
        %v6104 = vmul.f32 %v5592, %v5976
        %v6105 = vmul.f32 %v5593, %v5977
        %v6106 = vmul.f32 %v5594, %v5978
        %v6107 = vmul.f32 %v5595, %v5979
        %v6108 = vmul.f32 %v5596, %v5980
        %v6109 = vmul.f32 %v5597, %v5981
        %v6110 = vmul.f32 %v5598, %v5982
        %v6111 = vmul.f32 %v5599, %v5983
        %v6112 = vmul.f32 %v5600, %v5984
        %v6113 = vmul.f32 %v5601, %v5985
        %v6114 = vmul.f32 %v5602, %v5986
        %v6115 = vmul.f32 %v5603, %v5987
        %v6116 = vmul.f32 %v5604, %v5988
        %v6117 = vmul.f32 %v5605, %v5989
        %v6118 = vmul.f32 %v5606, %v5990
        %v6119 = vmul.f32 %v5607, %v5991
        %v6120 = vmul.f32 %v5608, %v5992
        %v6121 = vmul.f32 %v5609, %v5993
        %v6122 = vmul.f32 %v5610, %v5994
        %v6123 = vmul.f32 %v5611, %v5995
        %v6124 = vmul.f32 %v5612, %v5996
        %v6125 = vmul.f32 %v5613, %v5997
        %v6126 = vmul.f32 %v5614, %v5998
        %v6127 = vmul.f32 %v5615, %v5999
        %v6128 = vmul.f32 %v5616, %v6000
        %v6129 = vmul.f32 %v5617, %v6001
        %v6130 = vmul.f32 %v5618, %v6002
        %v6131 = vmul.f32 %v5619, %v6003
        %v6132 = vmul.f32 %v5620, %v6004
        %v6133 = vmul.f32 %v5621, %v6005
        %v6134 = vmul.f32 %v5622, %v6006
        %v6135 = vmul.f32 %v5623, %v6007
        %v6136 = vmul.f32 %v5624, %v6008
        %v6137 = vmul.f32 %v5625, %v6009
        %v6138 = vmul.f32 %v5626, %v6010
        %v6139 = vmul.f32 %v5627, %v6011
        %v6140 = vmul.f32 %v5628, %v6012
        %v6141 = vmul.f32 %v5629, %v6013
        %v6142 = vmul.f32 %v5630, %v6014
        %v6143 = vmul.f32 %v5631, %v6015
        %v6144 = vmul.f32 %v5632, %v6016
        %v6145 = vmul.f32 %v5633, %v6017
        %v6146 = vmul.f32 %v5634, %v6018
        %v6147 = vmul.f32 %v5635, %v6019
        %v6148 = vmul.f32 %v5636, %v6020
        %v6149 = vmul.f32 %v5637, %v6021
        %v6150 = vmul.f32 %v5638, %v6022
        %v6151 = vmul.f32 %v5639, %v6023
        %v6152 = vmul.f32 %v5640, %v6024
        %v6153 = vmul.f32 %v5641, %v6025
        %v6154 = vmul.f32 %v5642, %v6026
        %v6155 = vmul.f32 %v5643, %v6027
        %v6156 = vmul.f32 %v5644, %v6028
        %v6157 = vmul.f32 %v5645, %v6029
        %v6158 = vmul.f32 %v5646, %v6030
        %v6159 = vmul.f32 %v5647, %v6031
        %v6160 = vmul.f32 %v5648, %v6032
        %v6161 = vmul.f32 %v5649, %v6033
        %v6162 = vmul.f32 %v5650, %v6034
        %v6163 = vmul.f32 %v5651, %v6035
        %v6164 = vmul.f32 %v5652, %v6036
        %v6165 = vmul.f32 %v5653, %v6037
        %v6166 = vmul.f32 %v5654, %v6038
        %v6167 = vmul.f32 %v5655, %v6039
        %v6168 = vmul.f32 %v5656, %v6040
        %v6169 = vmul.f32 %v5657, %v6041
        %v6170 = vmul.f32 %v5658, %v6042
        %v6171 = vmul.f32 %v5659, %v6043
        %v6172 = vmul.f32 %v5660, %v6044
        %v6173 = vmul.f32 %v5661, %v6045
        %v6174 = vmul.f32 %v5662, %v6046
        %v6175 = vmul.f32 %v5663, %v6047
        %v6176 = vmul.f32 %v5664, %v6048
        %v6177 = vmul.f32 %v5665, %v6049
        %v6178 = vmul.f32 %v5666, %v6050
        %v6179 = vmul.f32 %v5667, %v6051
        %v6180 = vmul.f32 %v5668, %v6052
        %v6181 = vmul.f32 %v5669, %v6053
        %v6182 = vmul.f32 %v5670, %v6054
        %v6183 = vmul.f32 %v5671, %v6055
        %v6184 = vmul.f32 %v5672, %v6056
        %v6185 = vmul.f32 %v5673, %v6057
        %v6186 = vmul.f32 %v5674, %v6058
        %v6187 = vmul.f32 %v5675, %v6059
        %v6188 = vmul.f32 %v5676, %v6060
        %v6189 = vmul.f32 %v5677, %v6061
        %v6190 = vmul.f32 %v5678, %v6062
        %v6191 = vmul.f32 %v5679, %v6063
        %v6192 = vmul.f32 %v5680, %v6064
        %v6193 = vmul.f32 %v5681, %v6065
        %v6194 = vmul.f32 %v5682, %v6066
        %v6195 = vmul.f32 %v5683, %v6067
        %v6196 = vmul.f32 %v5684, %v6068
        %v6197 = vmul.f32 %v5685, %v6069
        %v6198 = vmul.f32 %v5686, %v6070
        %v6199 = vmul.f32 %v5687, %v6071
        %v6200 = vmul.f32 %v5688, %v6072
        %v6201 = vmul.f32 %v5689, %v6073
        %v6202 = vmul.f32 %v5690, %v6074
        %v6203 = vmul.f32 %v5691, %v6075
        %v6204 = vmul.f32 %v5692, %v6076
        %v6205 = vmul.f32 %v5693, %v6077
        %v6206 = vmul.f32 %v5694, %v6078
        %v6207 = vmul.f32 %v5695, %v6079
        %v6208 = vmul.f32 %v5696, %v6080
        %v6209 = vmul.f32 %v5697, %v6081
        %v6210 = vmul.f32 %v5698, %v6082
        %v6211 = vmul.f32 %v5699, %v6083
        %v6212 = vmul.f32 %v5700, %v6084
        %v6213 = vmul.f32 %v5701, %v6085
        %v6214 = vmul.f32 %v5702, %v6086
        %v6215 = vmul.f32 %v5703, %v6087
        %v6216 = vmul.f32 %v5704, %v6088
        %v6217 = vmul.f32 %v5705, %v6089
        %v6218 = vmul.f32 %v5706, %v6090
        %v6219 = vmul.f32 %v5707, %v6091
        %v6220 = vmul.f32 %v5708, %v6092
        %v6221 = vmul.f32 %v5709, %v6093
        %v6222 = vmul.f32 %v5710, %v6094
        %v6223 = vmul.f32 %v5711, %v6095
        %v6224 = vtanh.pop %v6096
        %v6225 = vtanh.pop %v6097
        %v6226 = vtanh.pop %v6098
        %v6227 = vtanh.pop %v6099
        %v6228 = vtanh.pop %v6100
        %v6229 = vtanh.pop %v6101
        %v6230 = vtanh.pop %v6102
        %v6231 = vtanh.pop %v6103
        %v6232 = vtanh.pop %v6104
        %v6233 = vtanh.pop %v6105
        %v6234 = vtanh.pop %v6106
        %v6235 = vtanh.pop %v6107
        %v6236 = vtanh.pop %v6108
        %v6237 = vtanh.pop %v6109
        %v6238 = vtanh.pop %v6110
        %v6239 = vtanh.pop %v6111
        %v6240 = vtanh.pop %v6112
        %v6241 = vtanh.pop %v6113
        %v6242 = vtanh.pop %v6114
        %v6243 = vtanh.pop %v6115
        %v6244 = vtanh.pop %v6116
        %v6245 = vtanh.pop %v6117
        %v6246 = vtanh.pop %v6118
        %v6247 = vtanh.pop %v6119
        %v6248 = vtanh.pop %v6120
        %v6249 = vtanh.pop %v6121
        %v6250 = vtanh.pop %v6122
        %v6251 = vtanh.pop %v6123
        %v6252 = vtanh.pop %v6124
        %v6253 = vtanh.pop %v6125
        %v6254 = vtanh.pop %v6126
        %v6255 = vtanh.pop %v6127
        %v6256 = vtanh.pop %v6128
        %v6257 = vtanh.pop %v6129
        %v6258 = vtanh.pop %v6130
        %v6259 = vtanh.pop %v6131
        %v6260 = vtanh.pop %v6132
        %v6261 = vtanh.pop %v6133
        %v6262 = vtanh.pop %v6134
        %v6263 = vtanh.pop %v6135
        %v6264 = vtanh.pop %v6136
        %v6265 = vtanh.pop %v6137
        %v6266 = vtanh.pop %v6138
        %v6267 = vtanh.pop %v6139
        %v6268 = vtanh.pop %v6140
        %v6269 = vtanh.pop %v6141
        %v6270 = vtanh.pop %v6142
        %v6271 = vtanh.pop %v6143
        %v6272 = vtanh.pop %v6144
        %v6273 = vtanh.pop %v6145
        %v6274 = vtanh.pop %v6146
        %v6275 = vtanh.pop %v6147
        %v6276 = vtanh.pop %v6148
        %v6277 = vtanh.pop %v6149
        %v6278 = vtanh.pop %v6150
        %v6279 = vtanh.pop %v6151
        %v6280 = vtanh.pop %v6152
        %v6281 = vtanh.pop %v6153
        %v6282 = vtanh.pop %v6154
        %v6283 = vtanh.pop %v6155
        %v6284 = vtanh.pop %v6156
        %v6285 = vtanh.pop %v6157
        %v6286 = vtanh.pop %v6158
        %v6287 = vtanh.pop %v6159
        %v6288 = vtanh.pop %v6160
        %v6289 = vtanh.pop %v6161
        %v6290 = vtanh.pop %v6162
        %v6291 = vtanh.pop %v6163
        %v6292 = vtanh.pop %v6164
        %v6293 = vtanh.pop %v6165
        %v6294 = vtanh.pop %v6166
        %v6295 = vtanh.pop %v6167
        %v6296 = vtanh.pop %v6168
        %v6297 = vtanh.pop %v6169
        %v6298 = vtanh.pop %v6170
        %v6299 = vtanh.pop %v6171
        %v6300 = vtanh.pop %v6172
        %v6301 = vtanh.pop %v6173
        %v6302 = vtanh.pop %v6174
        %v6303 = vtanh.pop %v6175
        %v6304 = vtanh.pop %v6176
        %v6305 = vtanh.pop %v6177
        %v6306 = vtanh.pop %v6178
        %v6307 = vtanh.pop %v6179
        %v6308 = vtanh.pop %v6180
        %v6309 = vtanh.pop %v6181
        %v6310 = vtanh.pop %v6182
        %v6311 = vtanh.pop %v6183
        %v6312 = vtanh.pop %v6184
        %v6313 = vtanh.pop %v6185
        %v6314 = vtanh.pop %v6186
        %v6315 = vtanh.pop %v6187
        %v6316 = vtanh.pop %v6188
        %v6317 = vtanh.pop %v6189
        %v6318 = vtanh.pop %v6190
        %v6319 = vtanh.pop %v6191
        %v6320 = vtanh.pop %v6192
        %v6321 = vtanh.pop %v6193
        %v6322 = vtanh.pop %v6194
        %v6323 = vtanh.pop %v6195
        %v6324 = vtanh.pop %v6196
        %v6325 = vtanh.pop %v6197
        %v6326 = vtanh.pop %v6198
        %v6327 = vtanh.pop %v6199
        %v6328 = vtanh.pop %v6200
        %v6329 = vtanh.pop %v6201
        %v6330 = vtanh.pop %v6202
        %v6331 = vtanh.pop %v6203
        %v6332 = vtanh.pop %v6204
        %v6333 = vtanh.pop %v6205
        %v6334 = vtanh.pop %v6206
        %v6335 = vtanh.pop %v6207
        %v6336 = vtanh.pop %v6208
        %v6337 = vtanh.pop %v6209
        %v6338 = vtanh.pop %v6210
        %v6339 = vtanh.pop %v6211
        %v6340 = vtanh.pop %v6212
        %v6341 = vtanh.pop %v6213
        %v6342 = vtanh.pop %v6214
        %v6343 = vtanh.pop %v6215
        %v6344 = vtanh.pop %v6216
        %v6345 = vtanh.pop %v6217
        %v6346 = vtanh.pop %v6218
        %v6347 = vtanh.pop %v6219
        %v6348 = vtanh.pop %v6220
        %v6349 = vtanh.pop %v6221
        %v6350 = vtanh.pop %v6222
        %v6351 = vtanh.pop %v6223
        %v6352 = vadd.f32 %v6224, 1.0
        %v6353 = vadd.f32 %v6225, 1.0
        %v6354 = vadd.f32 %v6226, 1.0
        %v6355 = vadd.f32 %v6227, 1.0
        %v6356 = vadd.f32 %v6228, 1.0
        %v6357 = vadd.f32 %v6229, 1.0
        %v6358 = vadd.f32 %v6230, 1.0
        %v6359 = vadd.f32 %v6231, 1.0
        %v6360 = vadd.f32 %v6232, 1.0
        %v6361 = vadd.f32 %v6233, 1.0
        %v6362 = vadd.f32 %v6234, 1.0
        %v6363 = vadd.f32 %v6235, 1.0
        %v6364 = vadd.f32 %v6236, 1.0
        %v6365 = vadd.f32 %v6237, 1.0
        %v6366 = vadd.f32 %v6238, 1.0
        %v6367 = vadd.f32 %v6239, 1.0
        %v6368 = vadd.f32 %v6240, 1.0
        %v6369 = vadd.f32 %v6241, 1.0
        %v6370 = vadd.f32 %v6242, 1.0
        %v6371 = vadd.f32 %v6243, 1.0
        %v6372 = vadd.f32 %v6244, 1.0
        %v6373 = vadd.f32 %v6245, 1.0
        %v6374 = vadd.f32 %v6246, 1.0
        %v6375 = vadd.f32 %v6247, 1.0
        %v6376 = vadd.f32 %v6248, 1.0
        %v6377 = vadd.f32 %v6249, 1.0
        %v6378 = vadd.f32 %v6250, 1.0
        %v6379 = vadd.f32 %v6251, 1.0
        %v6380 = vadd.f32 %v6252, 1.0
        %v6381 = vadd.f32 %v6253, 1.0
        %v6382 = vadd.f32 %v6254, 1.0
        %v6383 = vadd.f32 %v6255, 1.0
        %v6384 = vadd.f32 %v6256, 1.0
        %v6385 = vadd.f32 %v6257, 1.0
        %v6386 = vadd.f32 %v6258, 1.0
        %v6387 = vadd.f32 %v6259, 1.0
        %v6388 = vadd.f32 %v6260, 1.0
        %v6389 = vadd.f32 %v6261, 1.0
        %v6390 = vadd.f32 %v6262, 1.0
        %v6391 = vadd.f32 %v6263, 1.0
        %v6392 = vadd.f32 %v6264, 1.0
        %v6393 = vadd.f32 %v6265, 1.0
        %v6394 = vadd.f32 %v6266, 1.0
        %v6395 = vadd.f32 %v6267, 1.0
        %v6396 = vadd.f32 %v6268, 1.0
        %v6397 = vadd.f32 %v6269, 1.0
        %v6398 = vadd.f32 %v6270, 1.0
        %v6399 = vadd.f32 %v6271, 1.0
        %v6400 = vadd.f32 %v6272, 1.0
        %v6401 = vadd.f32 %v6273, 1.0
        %v6402 = vadd.f32 %v6274, 1.0
        %v6403 = vadd.f32 %v6275, 1.0
        %v6404 = vadd.f32 %v6276, 1.0
        %v6405 = vadd.f32 %v6277, 1.0
        %v6406 = vadd.f32 %v6278, 1.0
        %v6407 = vadd.f32 %v6279, 1.0
        %v6408 = vadd.f32 %v6280, 1.0
        %v6409 = vadd.f32 %v6281, 1.0
        %v6410 = vadd.f32 %v6282, 1.0
        %v6411 = vadd.f32 %v6283, 1.0
        %v6412 = vadd.f32 %v6284, 1.0
        %v6413 = vadd.f32 %v6285, 1.0
        %v6414 = vadd.f32 %v6286, 1.0
        %v6415 = vadd.f32 %v6287, 1.0
        %v6416 = vadd.f32 %v6288, 1.0
        %v6417 = vadd.f32 %v6289, 1.0
        %v6418 = vadd.f32 %v6290, 1.0
        %v6419 = vadd.f32 %v6291, 1.0
        %v6420 = vadd.f32 %v6292, 1.0
        %v6421 = vadd.f32 %v6293, 1.0
        %v6422 = vadd.f32 %v6294, 1.0
        %v6423 = vadd.f32 %v6295, 1.0
        %v6424 = vadd.f32 %v6296, 1.0
        %v6425 = vadd.f32 %v6297, 1.0
        %v6426 = vadd.f32 %v6298, 1.0
        %v6427 = vadd.f32 %v6299, 1.0
        %v6428 = vadd.f32 %v6300, 1.0
        %v6429 = vadd.f32 %v6301, 1.0
        %v6430 = vadd.f32 %v6302, 1.0
        %v6431 = vadd.f32 %v6303, 1.0
        %v6432 = vadd.f32 %v6304, 1.0
        %v6433 = vadd.f32 %v6305, 1.0
        %v6434 = vadd.f32 %v6306, 1.0
        %v6435 = vadd.f32 %v6307, 1.0
        %v6436 = vadd.f32 %v6308, 1.0
        %v6437 = vadd.f32 %v6309, 1.0
        %v6438 = vadd.f32 %v6310, 1.0
        %v6439 = vadd.f32 %v6311, 1.0
        %v6440 = vadd.f32 %v6312, 1.0
        %v6441 = vadd.f32 %v6313, 1.0
        %v6442 = vadd.f32 %v6314, 1.0
        %v6443 = vadd.f32 %v6315, 1.0
        %v6444 = vadd.f32 %v6316, 1.0
        %v6445 = vadd.f32 %v6317, 1.0
        %v6446 = vadd.f32 %v6318, 1.0
        %v6447 = vadd.f32 %v6319, 1.0
        %v6448 = vadd.f32 %v6320, 1.0
        %v6449 = vadd.f32 %v6321, 1.0
        %v6450 = vadd.f32 %v6322, 1.0
        %v6451 = vadd.f32 %v6323, 1.0
        %v6452 = vadd.f32 %v6324, 1.0
        %v6453 = vadd.f32 %v6325, 1.0
        %v6454 = vadd.f32 %v6326, 1.0
        %v6455 = vadd.f32 %v6327, 1.0
        %v6456 = vadd.f32 %v6328, 1.0
        %v6457 = vadd.f32 %v6329, 1.0
        %v6458 = vadd.f32 %v6330, 1.0
        %v6459 = vadd.f32 %v6331, 1.0
        %v6460 = vadd.f32 %v6332, 1.0
        %v6461 = vadd.f32 %v6333, 1.0
        %v6462 = vadd.f32 %v6334, 1.0
        %v6463 = vadd.f32 %v6335, 1.0
        %v6464 = vadd.f32 %v6336, 1.0
        %v6465 = vadd.f32 %v6337, 1.0
        %v6466 = vadd.f32 %v6338, 1.0
        %v6467 = vadd.f32 %v6339, 1.0
        %v6468 = vadd.f32 %v6340, 1.0
        %v6469 = vadd.f32 %v6341, 1.0
        %v6470 = vadd.f32 %v6342, 1.0
        %v6471 = vadd.f32 %v6343, 1.0
        %v6472 = vadd.f32 %v6344, 1.0
        %v6473 = vadd.f32 %v6345, 1.0
        %v6474 = vadd.f32 %v6346, 1.0
        %v6475 = vadd.f32 %v6347, 1.0
        %v6476 = vadd.f32 %v6348, 1.0
        %v6477 = vadd.f32 %v6349, 1.0
        %v6478 = vadd.f32 %v6350, 1.0
        %v6479 = vadd.f32 %v6351, 1.0
        %v6480 = vmul.f32 %v5456, %v6352
        %v6481 = vmul.f32 %v5457, %v6353
        %v6482 = vmul.f32 %v5458, %v6354
        %v6483 = vmul.f32 %v5459, %v6355
        %v6484 = vmul.f32 %v5460, %v6356
        %v6485 = vmul.f32 %v5461, %v6357
        %v6486 = vmul.f32 %v5462, %v6358
        %v6487 = vmul.f32 %v5463, %v6359
        %v6488 = vmul.f32 %v5464, %v6360
        %v6489 = vmul.f32 %v5465, %v6361
        %v6490 = vmul.f32 %v5466, %v6362
        %v6491 = vmul.f32 %v5467, %v6363
        %v6492 = vmul.f32 %v5468, %v6364
        %v6493 = vmul.f32 %v5469, %v6365
        %v6494 = vmul.f32 %v5470, %v6366
        %v6495 = vmul.f32 %v5471, %v6367
        %v6496 = vmul.f32 %v5472, %v6368
        %v6497 = vmul.f32 %v5473, %v6369
        %v6498 = vmul.f32 %v5474, %v6370
        %v6499 = vmul.f32 %v5475, %v6371
        %v6500 = vmul.f32 %v5476, %v6372
        %v6501 = vmul.f32 %v5477, %v6373
        %v6502 = vmul.f32 %v5478, %v6374
        %v6503 = vmul.f32 %v5479, %v6375
        %v6504 = vmul.f32 %v5480, %v6376
        %v6505 = vmul.f32 %v5481, %v6377
        %v6506 = vmul.f32 %v5482, %v6378
        %v6507 = vmul.f32 %v5483, %v6379
        %v6508 = vmul.f32 %v5484, %v6380
        %v6509 = vmul.f32 %v5485, %v6381
        %v6510 = vmul.f32 %v5486, %v6382
        %v6511 = vmul.f32 %v5487, %v6383
        %v6512 = vmul.f32 %v5488, %v6384
        %v6513 = vmul.f32 %v5489, %v6385
        %v6514 = vmul.f32 %v5490, %v6386
        %v6515 = vmul.f32 %v5491, %v6387
        %v6516 = vmul.f32 %v5492, %v6388
        %v6517 = vmul.f32 %v5493, %v6389
        %v6518 = vmul.f32 %v5494, %v6390
        %v6519 = vmul.f32 %v5495, %v6391
        %v6520 = vmul.f32 %v5496, %v6392
        %v6521 = vmul.f32 %v5497, %v6393
        %v6522 = vmul.f32 %v5498, %v6394
        %v6523 = vmul.f32 %v5499, %v6395
        %v6524 = vmul.f32 %v5500, %v6396
        %v6525 = vmul.f32 %v5501, %v6397
        %v6526 = vmul.f32 %v5502, %v6398
        %v6527 = vmul.f32 %v5503, %v6399
        %v6528 = vmul.f32 %v5504, %v6400
        %v6529 = vmul.f32 %v5505, %v6401
        %v6530 = vmul.f32 %v5506, %v6402
        %v6531 = vmul.f32 %v5507, %v6403
        %v6532 = vmul.f32 %v5508, %v6404
        %v6533 = vmul.f32 %v5509, %v6405
        %v6534 = vmul.f32 %v5510, %v6406
        %v6535 = vmul.f32 %v5511, %v6407
        %v6536 = vmul.f32 %v5512, %v6408
        %v6537 = vmul.f32 %v5513, %v6409
        %v6538 = vmul.f32 %v5514, %v6410
        %v6539 = vmul.f32 %v5515, %v6411
        %v6540 = vmul.f32 %v5516, %v6412
        %v6541 = vmul.f32 %v5517, %v6413
        %v6542 = vmul.f32 %v5518, %v6414
        %v6543 = vmul.f32 %v5519, %v6415
        %v6544 = vmul.f32 %v5520, %v6416
        %v6545 = vmul.f32 %v5521, %v6417
        %v6546 = vmul.f32 %v5522, %v6418
        %v6547 = vmul.f32 %v5523, %v6419
        %v6548 = vmul.f32 %v5524, %v6420
        %v6549 = vmul.f32 %v5525, %v6421
        %v6550 = vmul.f32 %v5526, %v6422
        %v6551 = vmul.f32 %v5527, %v6423
        %v6552 = vmul.f32 %v5528, %v6424
        %v6553 = vmul.f32 %v5529, %v6425
        %v6554 = vmul.f32 %v5530, %v6426
        %v6555 = vmul.f32 %v5531, %v6427
        %v6556 = vmul.f32 %v5532, %v6428
        %v6557 = vmul.f32 %v5533, %v6429
        %v6558 = vmul.f32 %v5534, %v6430
        %v6559 = vmul.f32 %v5535, %v6431
        %v6560 = vmul.f32 %v5536, %v6432
        %v6561 = vmul.f32 %v5537, %v6433
        %v6562 = vmul.f32 %v5538, %v6434
        %v6563 = vmul.f32 %v5539, %v6435
        %v6564 = vmul.f32 %v5540, %v6436
        %v6565 = vmul.f32 %v5541, %v6437
        %v6566 = vmul.f32 %v5542, %v6438
        %v6567 = vmul.f32 %v5543, %v6439
        %v6568 = vmul.f32 %v5544, %v6440
        %v6569 = vmul.f32 %v5545, %v6441
        %v6570 = vmul.f32 %v5546, %v6442
        %v6571 = vmul.f32 %v5547, %v6443
        %v6572 = vmul.f32 %v5548, %v6444
        %v6573 = vmul.f32 %v5549, %v6445
        %v6574 = vmul.f32 %v5550, %v6446
        %v6575 = vmul.f32 %v5551, %v6447
        %v6576 = vmul.f32 %v5552, %v6448
        %v6577 = vmul.f32 %v5553, %v6449
        %v6578 = vmul.f32 %v5554, %v6450
        %v6579 = vmul.f32 %v5555, %v6451
        %v6580 = vmul.f32 %v5556, %v6452
        %v6581 = vmul.f32 %v5557, %v6453
        %v6582 = vmul.f32 %v5558, %v6454
        %v6583 = vmul.f32 %v5559, %v6455
        %v6584 = vmul.f32 %v5560, %v6456
        %v6585 = vmul.f32 %v5561, %v6457
        %v6586 = vmul.f32 %v5562, %v6458
        %v6587 = vmul.f32 %v5563, %v6459
        %v6588 = vmul.f32 %v5564, %v6460
        %v6589 = vmul.f32 %v5565, %v6461
        %v6590 = vmul.f32 %v5566, %v6462
        %v6591 = vmul.f32 %v5567, %v6463
        %v6592 = vmul.f32 %v5568, %v6464
        %v6593 = vmul.f32 %v5569, %v6465
        %v6594 = vmul.f32 %v5570, %v6466
        %v6595 = vmul.f32 %v5571, %v6467
        %v6596 = vmul.f32 %v5572, %v6468
        %v6597 = vmul.f32 %v5573, %v6469
        %v6598 = vmul.f32 %v5574, %v6470
        %v6599 = vmul.f32 %v5575, %v6471
        %v6600 = vmul.f32 %v5576, %v6472
        %v6601 = vmul.f32 %v5577, %v6473
        %v6602 = vmul.f32 %v5578, %v6474
        %v6603 = vmul.f32 %v5579, %v6475
        %v6604 = vmul.f32 %v5580, %v6476
        %v6605 = vmul.f32 %v5581, %v6477
        %v6606 = vmul.f32 %v5582, %v6478
        %v6607 = vmul.f32 %v5583, %v6479
        %v6608 = vld [vmem:[#allocation14] sm:$0xff]
        %v6609 = vld [vmem:[#allocation14 + $0x8] sm:$0xff]
        %v6610 = vld [vmem:[#allocation14 + $0x10] sm:$0xff]
        %v6611 = vld [vmem:[#allocation14 + $0x18] sm:$0xff]
        %v6612 = vld [vmem:[#allocation14 + $0x20] sm:$0xff]
        %v6613 = vld [vmem:[#allocation14 + $0x28] sm:$0xff]
        %v6614 = vld [vmem:[#allocation14 + $0x30] sm:$0xff]
        %v6615 = vld [vmem:[#allocation14 + $0x38] sm:$0xff]
        %v6616 = vld [vmem:[#allocation14 + $0x40] sm:$0xff]
        %v6617 = vld [vmem:[#allocation14 + $0x48] sm:$0xff]
        %v6618 = vld [vmem:[#allocation14 + $0x50] sm:$0xff]
        %v6619 = vld [vmem:[#allocation14 + $0x58] sm:$0xff]
        %v6620 = vld [vmem:[#allocation14 + $0x60] sm:$0xff]
        %v6621 = vld [vmem:[#allocation14 + $0x68] sm:$0xff]
        %v6622 = vld [vmem:[#allocation14 + $0x70] sm:$0xff]
        %v6623 = vld [vmem:[#allocation14 + $0x78] sm:$0xff]
        %v6624 = vld [vmem:[#allocation14 + $0x80] sm:$0xff]
        %v6625 = vld [vmem:[#allocation14 + $0x88] sm:$0xff]
        %v6626 = vld [vmem:[#allocation14 + $0x90] sm:$0xff]
        %v6627 = vld [vmem:[#allocation14 + $0x98] sm:$0xff]
        %v6628 = vld [vmem:[#allocation14 + $0xa0] sm:$0xff]
        %v6629 = vld [vmem:[#allocation14 + $0xa8] sm:$0xff]
        %v6630 = vld [vmem:[#allocation14 + $0xb0] sm:$0xff]
        %v6631 = vld [vmem:[#allocation14 + $0xb8] sm:$0xff]
        %v6632 = vld [vmem:[#allocation14 + $0xc0] sm:$0xff]
        %v6633 = vld [vmem:[#allocation14 + $0xc8] sm:$0xff]
        %v6634 = vld [vmem:[#allocation14 + $0xd0] sm:$0xff]
        %v6635 = vld [vmem:[#allocation14 + $0xd8] sm:$0xff]
        %v6636 = vld [vmem:[#allocation14 + $0xe0] sm:$0xff]
        %v6637 = vld [vmem:[#allocation14 + $0xe8] sm:$0xff]
        %v6638 = vld [vmem:[#allocation14 + $0xf0] sm:$0xff]
        %v6639 = vld [vmem:[#allocation14 + $0xf8] sm:$0xff]
        %v6640 = vld [vmem:[#allocation14 + $0x100] sm:$0xff]
        %v6641 = vld [vmem:[#allocation14 + $0x108] sm:$0xff]
        %v6642 = vld [vmem:[#allocation14 + $0x110] sm:$0xff]
        %v6643 = vld [vmem:[#allocation14 + $0x118] sm:$0xff]
        %v6644 = vld [vmem:[#allocation14 + $0x120] sm:$0xff]
        %v6645 = vld [vmem:[#allocation14 + $0x128] sm:$0xff]
        %v6646 = vld [vmem:[#allocation14 + $0x130] sm:$0xff]
        %v6647 = vld [vmem:[#allocation14 + $0x138] sm:$0xff]
        %v6648 = vld [vmem:[#allocation14 + $0x140] sm:$0xff]
        %v6649 = vld [vmem:[#allocation14 + $0x148] sm:$0xff]
        %v6650 = vld [vmem:[#allocation14 + $0x150] sm:$0xff]
        %v6651 = vld [vmem:[#allocation14 + $0x158] sm:$0xff]
        %v6652 = vld [vmem:[#allocation14 + $0x160] sm:$0xff]
        %v6653 = vld [vmem:[#allocation14 + $0x168] sm:$0xff]
        %v6654 = vld [vmem:[#allocation14 + $0x170] sm:$0xff]
        %v6655 = vld [vmem:[#allocation14 + $0x178] sm:$0xff]
        %v6656 = vld [vmem:[#allocation14 + $0x180] sm:$0xff]
        %v6657 = vld [vmem:[#allocation14 + $0x188] sm:$0xff]
        %v6658 = vld [vmem:[#allocation14 + $0x190] sm:$0xff]
        %v6659 = vld [vmem:[#allocation14 + $0x198] sm:$0xff]
        %v6660 = vld [vmem:[#allocation14 + $0x1a0] sm:$0xff]
        %v6661 = vld [vmem:[#allocation14 + $0x1a8] sm:$0xff]
        %v6662 = vld [vmem:[#allocation14 + $0x1b0] sm:$0xff]
        %v6663 = vld [vmem:[#allocation14 + $0x1b8] sm:$0xff]
        %v6664 = vld [vmem:[#allocation14 + $0x1c0] sm:$0xff]
        %v6665 = vld [vmem:[#allocation14 + $0x1c8] sm:$0xff]
        %v6666 = vld [vmem:[#allocation14 + $0x1d0] sm:$0xff]
        %v6667 = vld [vmem:[#allocation14 + $0x1d8] sm:$0xff]
        %v6668 = vld [vmem:[#allocation14 + $0x1e0] sm:$0xff]
        %v6669 = vld [vmem:[#allocation14 + $0x1e8] sm:$0xff]
        %v6670 = vld [vmem:[#allocation14 + $0x1f0] sm:$0xff]
        %v6671 = vld [vmem:[#allocation14 + $0x1f8] sm:$0xff]
        %v6672 = vld [vmem:[#allocation15 + $0x5] sm:$0x1]
        %v6673 = vperm.slane %v6672, 0
        %6674 = vmatpush.msra.mxu0 %v6623
        %6675 = vmatpush.msra.mxu0 %v6622
        %6676 = vmatpush.msra.mxu0 %v6621
        %6677 = vmatpush.msra.mxu0 %v6620
        %6678 = vmatpush.msra.mxu0 %v6619
        %6679 = vmatpush.msra.mxu0 %v6618
        %6680 = vmatpush.msra.mxu0 %v6617
        %6681 = vmatpush.msra.mxu0 %v6616
        %6682 = vmatpush.msra.mxu0 %v6615
        %6683 = vmatpush.msra.mxu0 %v6614
        %6684 = vmatpush.msra.mxu0 %v6613
        %6685 = vmatpush.msra.mxu0 %v6612
        %6686 = vmatpush.msra.mxu0 %v6611
        %6687 = vmatpush.msra.mxu0 %v6610
        %6688 = vmatpush.msra.mxu0 %v6609
        %6689 = vmatpush.msra.mxu0 %v6608
        %6690 = vmatmul.f32.gmra.mxu0 %v6480
        %v6691 = vpop.f32.mrf.mxu0
        %v6692 = vadd.f32 %v6673, %v6691
        %6693 = vmatmul.f32.gmra.mxu0 %v6484
        %v6694 = vpop.f32.mrf.mxu0
        %v6695 = vadd.f32 %v6673, %v6694
        %6696 = vmatmul.f32.gmra.mxu0 %v6488
        %v6697 = vpop.f32.mrf.mxu0
        %v6698 = vadd.f32 %v6673, %v6697
        %6699 = vmatmul.f32.gmra.mxu0 %v6492
        %v6700 = vpop.f32.mrf.mxu0
        %v6701 = vadd.f32 %v6673, %v6700
        %6702 = vmatmul.f32.gmra.mxu0 %v6496
        %v6703 = vpop.f32.mrf.mxu0
        %v6704 = vadd.f32 %v6673, %v6703
        %6705 = vmatmul.f32.gmra.mxu0 %v6500
        %v6706 = vpop.f32.mrf.mxu0
        %v6707 = vadd.f32 %v6673, %v6706
        %6708 = vmatmul.f32.gmra.mxu0 %v6504
        %v6709 = vpop.f32.mrf.mxu0
        %v6710 = vadd.f32 %v6673, %v6709
        %6711 = vmatmul.f32.gmra.mxu0 %v6508
        %v6712 = vpop.f32.mrf.mxu0
        %v6713 = vadd.f32 %v6673, %v6712
        %6714 = vmatmul.f32.gmra.mxu0 %v6512
        %v6715 = vpop.f32.mrf.mxu0
        %v6716 = vadd.f32 %v6673, %v6715
        %6717 = vmatmul.f32.gmra.mxu0 %v6516
        %v6718 = vpop.f32.mrf.mxu0
        %v6719 = vadd.f32 %v6673, %v6718
        %6720 = vmatmul.f32.gmra.mxu0 %v6520
        %v6721 = vpop.f32.mrf.mxu0
        %v6722 = vadd.f32 %v6673, %v6721
        %6723 = vmatmul.f32.gmra.mxu0 %v6524
        %v6724 = vpop.f32.mrf.mxu0
        %v6725 = vadd.f32 %v6673, %v6724
        %6726 = vmatmul.f32.gmra.mxu0 %v6528
        %v6727 = vpop.f32.mrf.mxu0
        %v6728 = vadd.f32 %v6673, %v6727
        %6729 = vmatmul.f32.gmra.mxu0 %v6532
        %v6730 = vpop.f32.mrf.mxu0
        %v6731 = vadd.f32 %v6673, %v6730
        %6732 = vmatmul.f32.gmra.mxu0 %v6536
        %v6733 = vpop.f32.mrf.mxu0
        %v6734 = vadd.f32 %v6673, %v6733
        %6735 = vmatmul.f32.gmra.mxu0 %v6540
        %v6736 = vpop.f32.mrf.mxu0
        %v6737 = vadd.f32 %v6673, %v6736
        %6738 = vmatmul.f32.gmra.mxu0 %v6544
        %v6739 = vpop.f32.mrf.mxu0
        %v6740 = vadd.f32 %v6673, %v6739
        %6741 = vmatmul.f32.gmra.mxu0 %v6548
        %v6742 = vpop.f32.mrf.mxu0
        %v6743 = vadd.f32 %v6673, %v6742
        %6744 = vmatmul.f32.gmra.mxu0 %v6552
        %v6745 = vpop.f32.mrf.mxu0
        %v6746 = vadd.f32 %v6673, %v6745
        %6747 = vmatmul.f32.gmra.mxu0 %v6556
        %v6748 = vpop.f32.mrf.mxu0
        %v6749 = vadd.f32 %v6673, %v6748
        %6750 = vmatmul.f32.gmra.mxu0 %v6560
        %v6751 = vpop.f32.mrf.mxu0
        %v6752 = vadd.f32 %v6673, %v6751
        %6753 = vmatmul.f32.gmra.mxu0 %v6564
        %v6754 = vpop.f32.mrf.mxu0
        %v6755 = vadd.f32 %v6673, %v6754
        %6756 = vmatmul.f32.gmra.mxu0 %v6568
        %v6757 = vpop.f32.mrf.mxu0
        %v6758 = vadd.f32 %v6673, %v6757
        %6759 = vmatmul.f32.gmra.mxu0 %v6572
        %v6760 = vpop.f32.mrf.mxu0
        %v6761 = vadd.f32 %v6673, %v6760
        %6762 = vmatmul.f32.gmra.mxu0 %v6576
        %v6763 = vpop.f32.mrf.mxu0
        %v6764 = vadd.f32 %v6673, %v6763
        %6765 = vmatmul.f32.gmra.mxu0 %v6580
        %v6766 = vpop.f32.mrf.mxu0
        %v6767 = vadd.f32 %v6673, %v6766
        %6768 = vmatmul.f32.gmra.mxu0 %v6584
        %v6769 = vpop.f32.mrf.mxu0
        %v6770 = vadd.f32 %v6673, %v6769
        %6771 = vmatmul.f32.gmra.mxu0 %v6588
        %v6772 = vpop.f32.mrf.mxu0
        %v6773 = vadd.f32 %v6673, %v6772
        %6774 = vmatmul.f32.gmra.mxu0 %v6592
        %v6775 = vpop.f32.mrf.mxu0
        %v6776 = vadd.f32 %v6673, %v6775
        %6777 = vmatmul.f32.gmra.mxu0 %v6596
        %v6778 = vpop.f32.mrf.mxu0
        %v6779 = vadd.f32 %v6673, %v6778
        %6780 = vmatmul.f32.gmra.mxu0 %v6600
        %v6781 = vpop.f32.mrf.mxu0
        %v6782 = vadd.f32 %v6673, %v6781
        %6783 = vmatmul.f32.gmra.mxu0 %v6604
        %v6784 = vpop.f32.mrf.mxu0
        %v6785 = vadd.f32 %v6673, %v6784
        %6786 = vdwg.mxu0
        %6787 = vmatpush.msra.mxu0 %v6639
        %6788 = vmatpush.msra.mxu0 %v6638
        %6789 = vmatpush.msra.mxu0 %v6637
        %6790 = vmatpush.msra.mxu0 %v6636
        %6791 = vmatpush.msra.mxu0 %v6635
        %6792 = vmatpush.msra.mxu0 %v6634
        %6793 = vmatpush.msra.mxu0 %v6633
        %6794 = vmatpush.msra.mxu0 %v6632
        %6795 = vmatpush.msra.mxu0 %v6631
        %6796 = vmatpush.msra.mxu0 %v6630
        %6797 = vmatpush.msra.mxu0 %v6629
        %6798 = vmatpush.msra.mxu0 %v6628
        %6799 = vmatpush.msra.mxu0 %v6627
        %6800 = vmatpush.msra.mxu0 %v6626
        %6801 = vmatpush.msra.mxu0 %v6625
        %6802 = vmatpush.msra.mxu0 %v6624
        %6803 = vmatmul.f32.gmra.mxu0 %v6481
        %v6804 = vpop.f32.mrf.mxu0
        %v6805 = vadd.f32 %v6692, %v6804
        %6806 = vmatmul.f32.gmra.mxu0 %v6485
        %v6807 = vpop.f32.mrf.mxu0
        %v6808 = vadd.f32 %v6695, %v6807
        %6809 = vmatmul.f32.gmra.mxu0 %v6489
        %v6810 = vpop.f32.mrf.mxu0
        %v6811 = vadd.f32 %v6698, %v6810
        %6812 = vmatmul.f32.gmra.mxu0 %v6493
        %v6813 = vpop.f32.mrf.mxu0
        %v6814 = vadd.f32 %v6701, %v6813
        %6815 = vmatmul.f32.gmra.mxu0 %v6497
        %v6816 = vpop.f32.mrf.mxu0
        %v6817 = vadd.f32 %v6704, %v6816
        %6818 = vmatmul.f32.gmra.mxu0 %v6501
        %v6819 = vpop.f32.mrf.mxu0
        %v6820 = vadd.f32 %v6707, %v6819
        %6821 = vmatmul.f32.gmra.mxu0 %v6505
        %v6822 = vpop.f32.mrf.mxu0
        %v6823 = vadd.f32 %v6710, %v6822
        %6824 = vmatmul.f32.gmra.mxu0 %v6509
        %v6825 = vpop.f32.mrf.mxu0
        %v6826 = vadd.f32 %v6713, %v6825
        %6827 = vmatmul.f32.gmra.mxu0 %v6513
        %v6828 = vpop.f32.mrf.mxu0
        %v6829 = vadd.f32 %v6716, %v6828
        %6830 = vmatmul.f32.gmra.mxu0 %v6517
        %v6831 = vpop.f32.mrf.mxu0
        %v6832 = vadd.f32 %v6719, %v6831
        %6833 = vmatmul.f32.gmra.mxu0 %v6521
        %v6834 = vpop.f32.mrf.mxu0
        %v6835 = vadd.f32 %v6722, %v6834
        %6836 = vmatmul.f32.gmra.mxu0 %v6525
        %v6837 = vpop.f32.mrf.mxu0
        %v6838 = vadd.f32 %v6725, %v6837
        %6839 = vmatmul.f32.gmra.mxu0 %v6529
        %v6840 = vpop.f32.mrf.mxu0
        %v6841 = vadd.f32 %v6728, %v6840
        %6842 = vmatmul.f32.gmra.mxu0 %v6533
        %v6843 = vpop.f32.mrf.mxu0
        %v6844 = vadd.f32 %v6731, %v6843
        %6845 = vmatmul.f32.gmra.mxu0 %v6537
        %v6846 = vpop.f32.mrf.mxu0
        %v6847 = vadd.f32 %v6734, %v6846
        %6848 = vmatmul.f32.gmra.mxu0 %v6541
        %v6849 = vpop.f32.mrf.mxu0
        %v6850 = vadd.f32 %v6737, %v6849
        %6851 = vmatmul.f32.gmra.mxu0 %v6545
        %v6852 = vpop.f32.mrf.mxu0
        %v6853 = vadd.f32 %v6740, %v6852
        %6854 = vmatmul.f32.gmra.mxu0 %v6549
        %v6855 = vpop.f32.mrf.mxu0
        %v6856 = vadd.f32 %v6743, %v6855
        %6857 = vmatmul.f32.gmra.mxu0 %v6553
        %v6858 = vpop.f32.mrf.mxu0
        %v6859 = vadd.f32 %v6746, %v6858
        %6860 = vmatmul.f32.gmra.mxu0 %v6557
        %v6861 = vpop.f32.mrf.mxu0
        %v6862 = vadd.f32 %v6749, %v6861
        %6863 = vmatmul.f32.gmra.mxu0 %v6561
        %v6864 = vpop.f32.mrf.mxu0
        %v6865 = vadd.f32 %v6752, %v6864
        %6866 = vmatmul.f32.gmra.mxu0 %v6565
        %v6867 = vpop.f32.mrf.mxu0
        %v6868 = vadd.f32 %v6755, %v6867
        %6869 = vmatmul.f32.gmra.mxu0 %v6569
        %v6870 = vpop.f32.mrf.mxu0
        %v6871 = vadd.f32 %v6758, %v6870
        %6872 = vmatmul.f32.gmra.mxu0 %v6573
        %v6873 = vpop.f32.mrf.mxu0
        %v6874 = vadd.f32 %v6761, %v6873
        %6875 = vmatmul.f32.gmra.mxu0 %v6577
        %v6876 = vpop.f32.mrf.mxu0
        %v6877 = vadd.f32 %v6764, %v6876
        %6878 = vmatmul.f32.gmra.mxu0 %v6581
        %v6879 = vpop.f32.mrf.mxu0
        %v6880 = vadd.f32 %v6767, %v6879
        %6881 = vmatmul.f32.gmra.mxu0 %v6585
        %v6882 = vpop.f32.mrf.mxu0
        %v6883 = vadd.f32 %v6770, %v6882
        %6884 = vmatmul.f32.gmra.mxu0 %v6589
        %v6885 = vpop.f32.mrf.mxu0
        %v6886 = vadd.f32 %v6773, %v6885
        %6887 = vmatmul.f32.gmra.mxu0 %v6593
        %v6888 = vpop.f32.mrf.mxu0
        %v6889 = vadd.f32 %v6776, %v6888
        %6890 = vmatmul.f32.gmra.mxu0 %v6597
        %v6891 = vpop.f32.mrf.mxu0
        %v6892 = vadd.f32 %v6779, %v6891
        %6893 = vmatmul.f32.gmra.mxu0 %v6601
        %v6894 = vpop.f32.mrf.mxu0
        %v6895 = vadd.f32 %v6782, %v6894
        %6896 = vmatmul.f32.gmra.mxu0 %v6605
        %v6897 = vpop.f32.mrf.mxu0
        %v6898 = vadd.f32 %v6785, %v6897
        %6899 = vdwg.mxu0
        %6900 = vmatpush.msra.mxu0 %v6655
        %6901 = vmatpush.msra.mxu0 %v6654
        %6902 = vmatpush.msra.mxu0 %v6653
        %6903 = vmatpush.msra.mxu0 %v6652
        %6904 = vmatpush.msra.mxu0 %v6651
        %6905 = vmatpush.msra.mxu0 %v6650
        %6906 = vmatpush.msra.mxu0 %v6649
        %6907 = vmatpush.msra.mxu0 %v6648
        %6908 = vmatpush.msra.mxu0 %v6647
        %6909 = vmatpush.msra.mxu0 %v6646
        %6910 = vmatpush.msra.mxu0 %v6645
        %6911 = vmatpush.msra.mxu0 %v6644
        %6912 = vmatpush.msra.mxu0 %v6643
        %6913 = vmatpush.msra.mxu0 %v6642
        %6914 = vmatpush.msra.mxu0 %v6641
        %6915 = vmatpush.msra.mxu0 %v6640
        %6916 = vmatmul.f32.gmra.mxu0 %v6482
        %v6917 = vpop.f32.mrf.mxu0
        %v6918 = vadd.f32 %v6805, %v6917
        %6919 = vmatmul.f32.gmra.mxu0 %v6486
        %v6920 = vpop.f32.mrf.mxu0
        %v6921 = vadd.f32 %v6808, %v6920
        %6922 = vmatmul.f32.gmra.mxu0 %v6490
        %v6923 = vpop.f32.mrf.mxu0
        %v6924 = vadd.f32 %v6811, %v6923
        %6925 = vmatmul.f32.gmra.mxu0 %v6494
        %v6926 = vpop.f32.mrf.mxu0
        %v6927 = vadd.f32 %v6814, %v6926
        %6928 = vmatmul.f32.gmra.mxu0 %v6498
        %v6929 = vpop.f32.mrf.mxu0
        %v6930 = vadd.f32 %v6817, %v6929
        %6931 = vmatmul.f32.gmra.mxu0 %v6502
        %v6932 = vpop.f32.mrf.mxu0
        %v6933 = vadd.f32 %v6820, %v6932
        %6934 = vmatmul.f32.gmra.mxu0 %v6506
        %v6935 = vpop.f32.mrf.mxu0
        %v6936 = vadd.f32 %v6823, %v6935
        %6937 = vmatmul.f32.gmra.mxu0 %v6510
        %v6938 = vpop.f32.mrf.mxu0
        %v6939 = vadd.f32 %v6826, %v6938
        %6940 = vmatmul.f32.gmra.mxu0 %v6514
        %v6941 = vpop.f32.mrf.mxu0
        %v6942 = vadd.f32 %v6829, %v6941
        %6943 = vmatmul.f32.gmra.mxu0 %v6518
        %v6944 = vpop.f32.mrf.mxu0
        %v6945 = vadd.f32 %v6832, %v6944
        %6946 = vmatmul.f32.gmra.mxu0 %v6522
        %v6947 = vpop.f32.mrf.mxu0
        %v6948 = vadd.f32 %v6835, %v6947
        %6949 = vmatmul.f32.gmra.mxu0 %v6526
        %v6950 = vpop.f32.mrf.mxu0
        %v6951 = vadd.f32 %v6838, %v6950
        %6952 = vmatmul.f32.gmra.mxu0 %v6530
        %v6953 = vpop.f32.mrf.mxu0
        %v6954 = vadd.f32 %v6841, %v6953
        %6955 = vmatmul.f32.gmra.mxu0 %v6534
        %v6956 = vpop.f32.mrf.mxu0
        %v6957 = vadd.f32 %v6844, %v6956
        %6958 = vmatmul.f32.gmra.mxu0 %v6538
        %v6959 = vpop.f32.mrf.mxu0
        %v6960 = vadd.f32 %v6847, %v6959
        %6961 = vmatmul.f32.gmra.mxu0 %v6542
        %v6962 = vpop.f32.mrf.mxu0
        %v6963 = vadd.f32 %v6850, %v6962
        %6964 = vmatmul.f32.gmra.mxu0 %v6546
        %v6965 = vpop.f32.mrf.mxu0
        %v6966 = vadd.f32 %v6853, %v6965
        %6967 = vmatmul.f32.gmra.mxu0 %v6550
        %v6968 = vpop.f32.mrf.mxu0
        %v6969 = vadd.f32 %v6856, %v6968
        %6970 = vmatmul.f32.gmra.mxu0 %v6554
        %v6971 = vpop.f32.mrf.mxu0
        %v6972 = vadd.f32 %v6859, %v6971
        %6973 = vmatmul.f32.gmra.mxu0 %v6558
        %v6974 = vpop.f32.mrf.mxu0
        %v6975 = vadd.f32 %v6862, %v6974
        %6976 = vmatmul.f32.gmra.mxu0 %v6562
        %v6977 = vpop.f32.mrf.mxu0
        %v6978 = vadd.f32 %v6865, %v6977
        %6979 = vmatmul.f32.gmra.mxu0 %v6566
        %v6980 = vpop.f32.mrf.mxu0
        %v6981 = vadd.f32 %v6868, %v6980
        %6982 = vmatmul.f32.gmra.mxu0 %v6570
        %v6983 = vpop.f32.mrf.mxu0
        %v6984 = vadd.f32 %v6871, %v6983
        %6985 = vmatmul.f32.gmra.mxu0 %v6574
        %v6986 = vpop.f32.mrf.mxu0
        %v6987 = vadd.f32 %v6874, %v6986
        %6988 = vmatmul.f32.gmra.mxu0 %v6578
        %v6989 = vpop.f32.mrf.mxu0
        %v6990 = vadd.f32 %v6877, %v6989
        %6991 = vmatmul.f32.gmra.mxu0 %v6582
        %v6992 = vpop.f32.mrf.mxu0
        %v6993 = vadd.f32 %v6880, %v6992
        %6994 = vmatmul.f32.gmra.mxu0 %v6586
        %v6995 = vpop.f32.mrf.mxu0
        %v6996 = vadd.f32 %v6883, %v6995
        %6997 = vmatmul.f32.gmra.mxu0 %v6590
        %v6998 = vpop.f32.mrf.mxu0
        %v6999 = vadd.f32 %v6886, %v6998
        %7000 = vmatmul.f32.gmra.mxu0 %v6594
        %v7001 = vpop.f32.mrf.mxu0
        %v7002 = vadd.f32 %v6889, %v7001
        %7003 = vmatmul.f32.gmra.mxu0 %v6598
        %v7004 = vpop.f32.mrf.mxu0
        %v7005 = vadd.f32 %v6892, %v7004
        %7006 = vmatmul.f32.gmra.mxu0 %v6602
        %v7007 = vpop.f32.mrf.mxu0
        %v7008 = vadd.f32 %v6895, %v7007
        %7009 = vmatmul.f32.gmra.mxu0 %v6606
        %v7010 = vpop.f32.mrf.mxu0
        %v7011 = vadd.f32 %v6898, %v7010
        %7012 = vdwg.mxu0
        %7013 = vmatpush.msra.mxu0 %v6671
        %7014 = vmatpush.msra.mxu0 %v6670
        %7015 = vmatpush.msra.mxu0 %v6669
        %7016 = vmatpush.msra.mxu0 %v6668
        %7017 = vmatpush.msra.mxu0 %v6667
        %7018 = vmatpush.msra.mxu0 %v6666
        %7019 = vmatpush.msra.mxu0 %v6665
        %7020 = vmatpush.msra.mxu0 %v6664
        %7021 = vmatpush.msra.mxu0 %v6663
        %7022 = vmatpush.msra.mxu0 %v6662
        %7023 = vmatpush.msra.mxu0 %v6661
        %7024 = vmatpush.msra.mxu0 %v6660
        %7025 = vmatpush.msra.mxu0 %v6659
        %7026 = vmatpush.msra.mxu0 %v6658
        %7027 = vmatpush.msra.mxu0 %v6657
        %7028 = vmatpush.msra.mxu0 %v6656
        %7029 = vmatmul.f32.gmra.mxu0 %v6483
        %v7030 = vpop.f32.mrf.mxu0
        %v7031 = vadd.f32 %v6918, %v7030
        %7032 = vmatmul.f32.gmra.mxu0 %v6487
        %v7033 = vpop.f32.mrf.mxu0
        %v7034 = vadd.f32 %v6921, %v7033
        %7035 = vmatmul.f32.gmra.mxu0 %v6491
        %v7036 = vpop.f32.mrf.mxu0
        %v7037 = vadd.f32 %v6924, %v7036
        %7038 = vmatmul.f32.gmra.mxu0 %v6495
        %v7039 = vpop.f32.mrf.mxu0
        %v7040 = vadd.f32 %v6927, %v7039
        %7041 = vmatmul.f32.gmra.mxu0 %v6499
        %v7042 = vpop.f32.mrf.mxu0
        %v7043 = vadd.f32 %v6930, %v7042
        %7044 = vmatmul.f32.gmra.mxu0 %v6503
        %v7045 = vpop.f32.mrf.mxu0
        %v7046 = vadd.f32 %v6933, %v7045
        %7047 = vmatmul.f32.gmra.mxu0 %v6507
        %v7048 = vpop.f32.mrf.mxu0
        %v7049 = vadd.f32 %v6936, %v7048
        %7050 = vmatmul.f32.gmra.mxu0 %v6511
        %v7051 = vpop.f32.mrf.mxu0
        %v7052 = vadd.f32 %v6939, %v7051
        %7053 = vmatmul.f32.gmra.mxu0 %v6515
        %v7054 = vpop.f32.mrf.mxu0
        %v7055 = vadd.f32 %v6942, %v7054
        %7056 = vmatmul.f32.gmra.mxu0 %v6519
        %v7057 = vpop.f32.mrf.mxu0
        %v7058 = vadd.f32 %v6945, %v7057
        %7059 = vmatmul.f32.gmra.mxu0 %v6523
        %v7060 = vpop.f32.mrf.mxu0
        %v7061 = vadd.f32 %v6948, %v7060
        %7062 = vmatmul.f32.gmra.mxu0 %v6527
        %v7063 = vpop.f32.mrf.mxu0
        %v7064 = vadd.f32 %v6951, %v7063
        %7065 = vmatmul.f32.gmra.mxu0 %v6531
        %v7066 = vpop.f32.mrf.mxu0
        %v7067 = vadd.f32 %v6954, %v7066
        %7068 = vmatmul.f32.gmra.mxu0 %v6535
        %v7069 = vpop.f32.mrf.mxu0
        %v7070 = vadd.f32 %v6957, %v7069
        %7071 = vmatmul.f32.gmra.mxu0 %v6539
        %v7072 = vpop.f32.mrf.mxu0
        %v7073 = vadd.f32 %v6960, %v7072
        %7074 = vmatmul.f32.gmra.mxu0 %v6543
        %v7075 = vpop.f32.mrf.mxu0
        %v7076 = vadd.f32 %v6963, %v7075
        %7077 = vmatmul.f32.gmra.mxu0 %v6547
        %v7078 = vpop.f32.mrf.mxu0
        %v7079 = vadd.f32 %v6966, %v7078
        %7080 = vmatmul.f32.gmra.mxu0 %v6551
        %v7081 = vpop.f32.mrf.mxu0
        %v7082 = vadd.f32 %v6969, %v7081
        %7083 = vmatmul.f32.gmra.mxu0 %v6555
        %v7084 = vpop.f32.mrf.mxu0
        %v7085 = vadd.f32 %v6972, %v7084
        %7086 = vmatmul.f32.gmra.mxu0 %v6559
        %v7087 = vpop.f32.mrf.mxu0
        %v7088 = vadd.f32 %v6975, %v7087
        %7089 = vmatmul.f32.gmra.mxu0 %v6563
        %v7090 = vpop.f32.mrf.mxu0
        %v7091 = vadd.f32 %v6978, %v7090
        %7092 = vmatmul.f32.gmra.mxu0 %v6567
        %v7093 = vpop.f32.mrf.mxu0
        %v7094 = vadd.f32 %v6981, %v7093
        %7095 = vmatmul.f32.gmra.mxu0 %v6571
        %v7096 = vpop.f32.mrf.mxu0
        %v7097 = vadd.f32 %v6984, %v7096
        %7098 = vmatmul.f32.gmra.mxu0 %v6575
        %v7099 = vpop.f32.mrf.mxu0
        %v7100 = vadd.f32 %v6987, %v7099
        %7101 = vmatmul.f32.gmra.mxu0 %v6579
        %v7102 = vpop.f32.mrf.mxu0
        %v7103 = vadd.f32 %v6990, %v7102
        %7104 = vmatmul.f32.gmra.mxu0 %v6583
        %v7105 = vpop.f32.mrf.mxu0
        %v7106 = vadd.f32 %v6993, %v7105
        %7107 = vmatmul.f32.gmra.mxu0 %v6587
        %v7108 = vpop.f32.mrf.mxu0
        %v7109 = vadd.f32 %v6996, %v7108
        %7110 = vmatmul.f32.gmra.mxu0 %v6591
        %v7111 = vpop.f32.mrf.mxu0
        %v7112 = vadd.f32 %v6999, %v7111
        %7113 = vmatmul.f32.gmra.mxu0 %v6595
        %v7114 = vpop.f32.mrf.mxu0
        %v7115 = vadd.f32 %v7002, %v7114
        %7116 = vmatmul.f32.gmra.mxu0 %v6599
        %v7117 = vpop.f32.mrf.mxu0
        %v7118 = vadd.f32 %v7005, %v7117
        %7119 = vmatmul.f32.gmra.mxu0 %v6603
        %v7120 = vpop.f32.mrf.mxu0
        %v7121 = vadd.f32 %v7008, %v7120
        %7122 = vmatmul.f32.gmra.mxu0 %v6607
        %v7123 = vpop.f32.mrf.mxu0
        %v7124 = vadd.f32 %v7011, %v7123
        %7125 = vdwg.mxu0
        %v7126 = vld [vmem:[#allocation15 + $0x6] sm:$0x1]
        %v7127 = vperm.slane %v7126, 0
        %v7128 = vmul.f32 %v7127, %v7031
        %v7129 = vmul.f32 %v7127, %v7034
        %v7130 = vmul.f32 %v7127, %v7037
        %v7131 = vmul.f32 %v7127, %v7040
        %v7132 = vmul.f32 %v7127, %v7043
        %v7133 = vmul.f32 %v7127, %v7046
        %v7134 = vmul.f32 %v7127, %v7049
        %v7135 = vmul.f32 %v7127, %v7052
        %v7136 = vmul.f32 %v7127, %v7055
        %v7137 = vmul.f32 %v7127, %v7058
        %v7138 = vmul.f32 %v7127, %v7061
        %v7139 = vmul.f32 %v7127, %v7064
        %v7140 = vmul.f32 %v7127, %v7067
        %v7141 = vmul.f32 %v7127, %v7070
        %v7142 = vmul.f32 %v7127, %v7073
        %v7143 = vmul.f32 %v7127, %v7076
        %v7144 = vmul.f32 %v7127, %v7079
        %v7145 = vmul.f32 %v7127, %v7082
        %v7146 = vmul.f32 %v7127, %v7085
        %v7147 = vmul.f32 %v7127, %v7088
        %v7148 = vmul.f32 %v7127, %v7091
        %v7149 = vmul.f32 %v7127, %v7094
        %v7150 = vmul.f32 %v7127, %v7097
        %v7151 = vmul.f32 %v7127, %v7100
        %v7152 = vmul.f32 %v7127, %v7103
        %v7153 = vmul.f32 %v7127, %v7106
        %v7154 = vmul.f32 %v7127, %v7109
        %v7155 = vmul.f32 %v7127, %v7112
        %v7156 = vmul.f32 %v7127, %v7115
        %v7157 = vmul.f32 %v7127, %v7118
        %v7158 = vmul.f32 %v7127, %v7121
        %v7159 = vmul.f32 %v7127, %v7124
        %v7160 = vadd.f32 %v4898, %v7128
        %v7161 = vadd.f32 %v4899, %v7129
        %v7162 = vadd.f32 %v4900, %v7130
        %v7163 = vadd.f32 %v4901, %v7131
        %v7164 = vadd.f32 %v4902, %v7132
        %v7165 = vadd.f32 %v4903, %v7133
        %v7166 = vadd.f32 %v4904, %v7134
        %v7167 = vadd.f32 %v4905, %v7135
        %v7168 = vadd.f32 %v4906, %v7136
        %v7169 = vadd.f32 %v4907, %v7137
        %v7170 = vadd.f32 %v4908, %v7138
        %v7171 = vadd.f32 %v4909, %v7139
        %v7172 = vadd.f32 %v4910, %v7140
        %v7173 = vadd.f32 %v4911, %v7141
        %v7174 = vadd.f32 %v4912, %v7142
        %v7175 = vadd.f32 %v4913, %v7143
        %v7176 = vadd.f32 %v4914, %v7144
        %v7177 = vadd.f32 %v4915, %v7145
        %v7178 = vadd.f32 %v4916, %v7146
        %v7179 = vadd.f32 %v4917, %v7147
        %v7180 = vadd.f32 %v4918, %v7148
        %v7181 = vadd.f32 %v4919, %v7149
        %v7182 = vadd.f32 %v4920, %v7150
        %v7183 = vadd.f32 %v4921, %v7151
        %v7184 = vadd.f32 %v4922, %v7152
        %v7185 = vadd.f32 %v4923, %v7153
        %v7186 = vadd.f32 %v4924, %v7154
        %v7187 = vadd.f32 %v4925, %v7155
        %v7188 = vadd.f32 %v4926, %v7156
        %v7189 = vadd.f32 %v4927, %v7157
        %v7190 = vadd.f32 %v4928, %v7158
        %v7191 = vadd.f32 %v4929, %v7159
        %7192 = vst [vmem:[%s466] sm:$0xff] %v7160
        %7193 = vst [vmem:[%s466 + $0x8] sm:$0xff] %v7161
        %7194 = vst [vmem:[%s466 + $0x10] sm:$0xff] %v7162
        %7195 = vst [vmem:[%s466 + $0x18] sm:$0xff] %v7163
        %7196 = vst [vmem:[%s466 + $0x20] sm:$0xff] %v7164
        %7197 = vst [vmem:[%s466 + $0x28] sm:$0xff] %v7165
        %7198 = vst [vmem:[%s466 + $0x30] sm:$0xff] %v7166
        %7199 = vst [vmem:[%s466 + $0x38] sm:$0xff] %v7167
        %7200 = vst [vmem:[%s466 + $0x40] sm:$0xff] %v7168
        %7201 = vst [vmem:[%s466 + $0x48] sm:$0xff] %v7169
        %7202 = vst [vmem:[%s466 + $0x50] sm:$0xff] %v7170
        %7203 = vst [vmem:[%s466 + $0x58] sm:$0xff] %v7171
        %7204 = vst [vmem:[%s466 + $0x60] sm:$0xff] %v7172
        %7205 = vst [vmem:[%s466 + $0x68] sm:$0xff] %v7173
        %7206 = vst [vmem:[%s466 + $0x70] sm:$0xff] %v7174
        %7207 = vst [vmem:[%s466 + $0x78] sm:$0xff] %v7175
        %7208 = vst [vmem:[%s466 + $0x80] sm:$0xff] %v7176
        %7209 = vst [vmem:[%s466 + $0x88] sm:$0xff] %v7177
        %7210 = vst [vmem:[%s466 + $0x90] sm:$0xff] %v7178
        %7211 = vst [vmem:[%s466 + $0x98] sm:$0xff] %v7179
        %7212 = vst [vmem:[%s466 + $0xa0] sm:$0xff] %v7180
        %7213 = vst [vmem:[%s466 + $0xa8] sm:$0xff] %v7181
        %7214 = vst [vmem:[%s466 + $0xb0] sm:$0xff] %v7182
        %7215 = vst [vmem:[%s466 + $0xb8] sm:$0xff] %v7183
        %7216 = vst [vmem:[%s466 + $0xc0] sm:$0xff] %v7184
        %7217 = vst [vmem:[%s466 + $0xc8] sm:$0xff] %v7185
        %7218 = vst [vmem:[%s466 + $0xd0] sm:$0xff] %v7186
        %7219 = vst [vmem:[%s466 + $0xd8] sm:$0xff] %v7187
        %7220 = vst [vmem:[%s466 + $0xe0] sm:$0xff] %v7188
        %7221 = vst [vmem:[%s466 + $0xe8] sm:$0xff] %v7189
        %7222 = vst [vmem:[%s466 + $0xf0] sm:$0xff] %v7190
        %7223 = vst [vmem:[%s466 + $0xf8] sm:$0xff] %v7191
        %s7224 = sand.u32 %s232, 1
        %s7225 = scalar_lea.sflag [#allocation5], %s7224
        %s7226 = sand.u32 %s232, 1
        %s7227 = smul.addr %s7226, 256
        %s7228 = scalar_lea.vmem [#allocation17], %s7227
        // Predicated region
        $region89: #{tpu_custom_call.1} parent=55 // pred_check
          %p7229 = pneg %p242
        $region90: #{tpu_custom_call.1} parent=55 // pred_check_branch
          %7231 = sbr.rel (%p7229) target = $region92
        $region91: #{tpu_custom_call.1} parent=55 // pred_region
          %7233 = vsyncadd %s7225, 0
          %s7234 = smul.addr %s30, 32
          %s7235 = smul.addr %s7234, 8
          %s7236 = scalar_lea.hbm %s9, %s7235
          %s7237 = sshll.u32 %s7228, 4
          %s7238 = int_to_ptr.vmem [resolvable:$true] %s7237
          %s7239 = sshll.u32 %s7236, 4
          %s7240 = int_to_ptr.hbm [resolvable:$true] %s7239
          %7245 = dma.vmem_to_hbm [thread:$0]  %s7238, 4096, %s7240, %s7225, 128, 128, 8
        $region92: #{tpu_custom_call.1} parent=55 // pred_fallthru
          _
      $region56: #{tpu_custom_call.1} parent=5 // pred_fallthru
        _
      %p7246 = scmp.le.s32.totalorder 2, %s25
      // Predicated region
      $region93: #{tpu_custom_call.1} parent=5 // pred_check
        %p7247 = pneg %p7246
      $region94: #{tpu_custom_call.1} parent=5 // pred_check_branch
        %7249 = sbr.rel (%p7247) target = $region96
      $region95: #{tpu_custom_call.1} parent=5 // pred_region
        %s7250 = ssub.s32 %s25, 2
        // Predicated region
        $region97: #{tpu_custom_call.1} parent=95 // pred_check
          %p7251 = pneg %p248
        $region98: #{tpu_custom_call.1} parent=95 // pred_check_branch
          %7253 = sbr.rel (%p7251) target = $region100
        $region99: #{tpu_custom_call.1} parent=95 // pred_region
          %s7254 = sand.u32 %s233, 1
          %s7255 = scalar_lea.sflag [#allocation5], %s7254
          %s7256 = sand.u32 %s233, 1
          %s7257 = smul.addr %s7256, 256
          %s7258 = scalar_lea.vmem [#allocation17], %s7257
          %7260 = dma.done %s7255, 4096
        $region100: #{tpu_custom_call.1} parent=95 // pred_fallthru
          _
      $region96: #{tpu_custom_call.1} parent=5 // pred_fallthru
        _
    $region6: #{tpu_custom_call.1} parent=1 // loop_footer
      %s29 = sadd.s32 1, %s25
    $region7: #{tpu_custom_call.1} parent=1 // loop_footer_branch
      %24 = sbr.rel target = $region3
    $region8: #{tpu_custom_call.1} parent=1 // loop_exit
      _
    %7261 = vsyncpa [#allocation4], 1
    %s7262 = scalar_lea.sflag [#allocation4], 1
    %7263 = vsyncpa %s7262, 1
    %7264 = vsyncpa [#allocation7], 1
    %7265 = vsyncpa [#allocation10], 1
    %7266 = vsyncpa [#allocation13], 1
    %7267 = vsyncpa [#allocation16], 1
    %7268 = vsyncpa [#allocation5], 1
    %s7269 = scalar_lea.sflag [#allocation5], 1
    %7270 = vsyncpa %s7269, 1

</llo_original>
